<compile_context>
chip_gen: v5e
topology: v5e:2x2
jax: 0.10.0
libtpu: 0.0.40
codegen_flags: <defaults>
</compile_context>

<pallas_src>
import functools
import math

import numpy as np

import jax
import jax.numpy as jnp
from jax import lax
from jax.experimental import pallas as pl
from jax.experimental.pallas import tpu as pltpu

NUM_OPS = 6
BN_EPS = 1e-5


def _mixed_op_kernel(alpha_ref, xf_ref, xb_ref, w_ref, o_ref, cols_ref, *, H, W, K5, K3):
    Cin, NHWp = xf_ref.shape          # full-channel padded input
    TC, NHW = o_ref.shape             # this Cout block
    PAD = (NHWp - NHW) // 2
    HW = H * W
    p5, p3 = K5 // 2, K3 // 2
    NEG = float(np.finfo(np.float32).min)   # safe: center tap always valid -> NEG never wins
    cnt_inv = 1.0 / float(NHW)              # BN count = N*H*W (batch+spatial on the lane axis)

    # softmax(alpha) over the 6 ops (ZeroOp stays in the denominator).
    a = alpha_ref[...]                                    # (1, NUM_OPS)
    a = a - jnp.max(a, axis=-1, keepdims=True)
    e = jnp.exp(a)
    wgt = e / jnp.sum(e, axis=-1, keepdims=True)

    def wsel(k):                                          # (1,1) weight of op k
        return wgt[:, k:k + 1]

    # Hoisted boundary masks, built once from in-kernel iota (H, W powers of two).
    flat = lax.broadcasted_iota(jnp.int32, (1, NHW), 1)
    col = flat & (W - 1)            # column index within the image
    inimg = flat & (HW - 1)         # flat index within the image (per-image row mask)

    def wvalid(dw):
        if dw == 0:
            return None
        return (col < (W - dw)) if dw > 0 else (col >= (-dw))

    def hvalid(dh):
        if dh == 0:
            return None
        return (inimg < (H - dh) * W) if dh > 0 else (inimg >= (-dh) * W)

    wmasks = {dw: wvalid(dw) for dw in range(-p5, p5 + 1)}
    hmasks = {dh: hvalid(dh) for dh in range(-p5, p5 + 1)}

    def combine(hm, wm):
        if hm is None:
            return wm
        if wm is None:
            return hm
        return jnp.logical_and(hm, wm)

    x_id = None
    mx = None
    # Single sweep over the 5x5 neighbourhood: each masked shifted view is
    # written once into the im2col scratch; the inner 3x3 subset also feeds
    # maxpool / identity (depthwise, on this Cout block's own channels).
    for dh in range(-p5, p5 + 1):
        hm = hmasks[dh]
        for dw in range(-p5, p5 + 1):
            st = PAD + dh * W + dw
            vm = combine(hm, wmasks[dw])
            raw = xf_ref[:, st:st + NHW]                   # (Cin, NHW)
            shz = raw if vm is None else jnp.where(vm, raw, 0.0)   # zero-pad semantics
            t = (dh + p5) * K5 + (dw + p5)
            cols_ref[t * Cin:(t + 1) * Cin, :] = shz       # tap-major im2col rows

            if abs(dh) <= p3 and abs(dw) <= p3:
                raw_b = xb_ref[:, st:st + NHW]             # (TC, NHW) depthwise taps
                if dh == 0 and dw == 0:
                    x_id = raw_b
                m = raw_b if vm is None else jnp.where(vm, raw_b, NEG)
                mx = m if mx is None else jnp.maximum(mx, m)

    # Channel contraction on the MXU; conv5 / conv3 / avgpool share one im2col.
    # TODO(synk): on v7x the per-tap dots could instead accumulate in the MRB.
    conv5 = jnp.dot(w_ref[0], cols_ref[...], preferred_element_type=jnp.float32,
                    precision=lax.Precision.HIGHEST)
    conv3 = jnp.dot(w_ref[1], cols_ref[...], preferred_element_type=jnp.float32,
                    precision=lax.Precision.HIGHEST)
    avg = jnp.dot(w_ref[2], cols_ref[...], preferred_element_type=jnp.float32,
                  precision=lax.Precision.HIGHEST)

    def bn_w(y, k):
        # training-mode BatchNorm2d(affine=False): two-pass per-channel stats over
        # the single (N*H*W) lane axis; softmax weight folded into the scale.
        mean = jnp.sum(y, axis=1, keepdims=True) * cnt_inv      # (TC, 1)
        d = y - mean
        var = jnp.sum(d * d, axis=1, keepdims=True) * cnt_inv
        return d * (wsel(k) * lax.rsqrt(var + BN_EPS))

    # op 0 (ZeroOp) contributes exactly 0, so it is omitted from the sum.
    out = wsel(1) * x_id                 # identity
    out = out + bn_w(mx, 2)              # maxpool3 + BN
    out = out + bn_w(avg, 3)             # avgpool3 + BN
    out = out + bn_w(conv3, 4)           # conv3 + BN
    out = out + bn_w(conv5, 5)           # conv5 + BN
    o_ref[...] = out


def mixed_op_pallas(x_nchw, alpha, w3_oihw, w5_oihw):
    """MixedOp.forward(x, alpha).  x: NCHW float32, alpha: (NUM_OPS,)."""
    N, C, H, W = x_nchw.shape
    HW = H * W
    NHW = N * HW
    K3 = w3_oihw.shape[-1]
    K5 = w5_oihw.shape[-1]
    p3, p5 = K3 // 2, K5 // 2
    taps = K5 * K5
    Kdim = taps * C
    PAD = p5 * W + p5                                    # max |dh*W + dw|
    NHWp = NHW + 2 * PAD

    # In-kernel masks use bitwise AND on iota.
    # TODO(synk): support non-power-of-two H/W (needs lax.rem-based masks).
    assert (H & (H - 1)) == 0 and (W & (W - 1)) == 0, "H and W must be powers of two"

    # channels-on-sublanes, batch*spatial-on-lanes layout (lane dim multiple of 128).
    xf = x_nchw.astype(jnp.float32).transpose(1, 0, 2, 3).reshape(C, NHW)
    xp = jnp.pad(xf, ((0, 0), (PAD, PAD)))               # zero pad along flat spatial

    # Combined MXU weight: parts [conv5 | conv3 embedded in 5x5 | avgpool 1/9 depthwise],
    # columns tap-major (tap*Cin + ci) to match the im2col scratch layout.
    d = p5 - p3
    w5t = w5_oihw.astype(jnp.float32).transpose(0, 2, 3, 1)          # (O, Kh, Kw, I)
    w3t = w3_oihw.astype(jnp.float32).transpose(0, 2, 3, 1)
    w3e = jnp.pad(w3t, ((0, 0), (d, d), (d, d), (0, 0)))             # (O, K5, K5, I)
    avg_np = np.zeros((C, K5, K5, C), np.float32)
    for c in range(C):
        avg_np[c, d:d + K3, d:d + K3, c] = 1.0 / (K3 * K3)           # count_include_pad=True
    wcomb = jnp.stack([w5t.reshape(C, Kdim), w3e.reshape(C, Kdim),
                       jnp.asarray(avg_np.reshape(C, Kdim))], axis=0)  # (3, C, Kdim)

    alpha2 = alpha.astype(jnp.float32).reshape(1, NUM_OPS)

    # Cout-tiled grid: BN stats are per-channel so blocks are independent; trivially
    # (1,) at toy sizes but bounds VMEM and shards across TensorCores at real sizes.
    if C % 8 == 0:
        tc = 8
        while tc * 2 <= 32 and C % (tc * 2) == 0:
            tc *= 2
    else:
        tc = C
    grid = (C // tc,)

    kernel = functools.partial(_mixed_op_kernel, H=H, W=W, K5=K5, K3=K3)
    # TODO(synk): at realistic DARTS sizes also tile the N*H*W lane axis (keeping the
    # tile a multiple of 128) so the resident input + im2col scratch fit VMEM on v7x.
    y = pl.pallas_call(
        kernel,
        out_shape=jax.ShapeDtypeStruct((C, NHW), jnp.float32),
        grid=grid,
        in_specs=[
            pl.BlockSpec((1, NUM_OPS), lambda j: (0, 0)),       # alpha
            pl.BlockSpec((C, NHWp), lambda j: (0, 0)),          # full-channel input (resident)
            pl.BlockSpec((tc, NHWp), lambda j: (j, 0)),         # this block's channels
            pl.BlockSpec((3, tc, Kdim), lambda j: (0, j, 0)),   # this block's weight rows
        ],
        out_specs=pl.BlockSpec((tc, NHW), lambda j: (j, 0)),
        scratch_shapes=[pltpu.VMEM((taps * C, NHW), jnp.float32)],   # im2col matrix
        compiler_params=pltpu.CompilerParams(
            dimension_semantics=("parallel",),
            vmem_limit_bytes=32 * 1024 * 1024,
        ),
    )(alpha2, xp, xp, wcomb)

    return y.reshape(C, N, H, W).transpose(1, 0, 2, 3)


def mixed_op_reference(x_nchw, alpha, w3, w5):
    """Pure-JAX reference with identical semantics (for verification)."""
    x = x_nchw.astype(jnp.float32)
    wgt = jax.nn.softmax(alpha.astype(jnp.float32), axis=-1)

    def bn(y):
        mean = jnp.mean(y, axis=(0, 2, 3), keepdims=True)
        var = jnp.mean((y - mean) ** 2, axis=(0, 2, 3), keepdims=True)
        return (y - mean) / jnp.sqrt(var + BN_EPS)

    def conv(y, w, K):
        return lax.conv_general_dilated(
            y, w, (1, 1), [(K // 2, K // 2)] * 2,
            dimension_numbers=('NCHW', 'OIHW', 'NCHW'),
            precision=lax.Precision.HIGHEST)

    def maxpool(y, K):
        return lax.reduce_window(y, -jnp.inf, lax.max, (1, 1, K, K), (1, 1, 1, 1),
                                 [(0, 0), (0, 0), (K // 2, K // 2), (K // 2, K // 2)])

    def avgpool(y, K):
        s = lax.reduce_window(y, 0.0, lax.add, (1, 1, K, K), (1, 1, 1, 1),
                              [(0, 0), (0, 0), (K // 2, K // 2), (K // 2, K // 2)])
        return s / (K * K)

    ops = [jnp.zeros_like(x), x, bn(maxpool(x, 3)), bn(avgpool(x, 3)),
           bn(conv(x, w3, 3)), bn(conv(x, w5, 5))]
    return sum(w * o for w, o in zip(list(wgt), ops))


if __name__ == "__main__":
    key = jax.random.PRNGKey(0)
    kx, ka, k3, k5 = jax.random.split(key, 4)
    N, C, H, W = 2, 4, 16, 16
    x = jax.random.normal(kx, (N, C, H, W), dtype=jnp.float32)
    alpha = jax.random.normal(ka, (NUM_OPS,), dtype=jnp.float32)
    # Deterministic Conv2d-style weights (kaiming-ish scale), bias=False.
    w3 = jax.random.normal(k3, (C, C, 3, 3), dtype=jnp.float32) * (1.0 / math.sqrt(C * 9))
    w5 = jax.random.normal(k5, (C, C, 5, 5), dtype=jnp.float32) * (1.0 / math.sqrt(C * 25))

    y = jax.jit(mixed_op_pallas)(x, alpha, w3, w5)
    y = jax.block_until_ready(y)

    y_ref = mixed_op_reference(x, alpha, w3, w5)
    assert y.shape == (N, C, H, W)
    np.testing.assert_allclose(np.asarray(y), np.asarray(y_ref), rtol=5e-3, atol=5e-3)
    print("KERNEL_OK")
</pallas_src>

<mosaic_0001>
module attributes {stable_mosaic.version = 11 : i64} {
  func.func @_mixed_op_kernel(%arg0: i32, %arg1: memref<1x6xf32, #tpu.memory_space<vmem>>, %arg2: memref<4x580xf32, #tpu.memory_space<vmem>>, %arg3: memref<4x580xf32, #tpu.memory_space<vmem>>, %arg4: memref<3x4x100xf32, #tpu.memory_space<vmem>>, %arg5: memref<4x512xf32, #tpu.memory_space<vmem>>, %arg6: memref<100x512xf32, #tpu.memory_space<vmem>>) attributes {dimension_semantics = [#tpu.dimension_semantics<parallel>], iteration_bounds = array<i64: 1>, scalar_prefetch = 0 : i64, scratch_operands = 1 : i64, tpu.core_type = #tpu.core_type<tc>, window_params = [{pipeline_mode = #tpu.pipeline_mode<synchronous>, transform_indices = @transform_0, window_bounds = array<i64: 1, 6>}, {pipeline_mode = #tpu.pipeline_mode<synchronous>, transform_indices = @transform_1, window_bounds = array<i64: 4, 580>}, {transform_indices = @transform_2, window_bounds = array<i64: 4, 580>}, {transform_indices = @transform_3, window_bounds = array<i64: 3, 4, 100>}, {transform_indices = @transform_4, window_bounds = array<i64: 4, 512>}]} {
    %c0 = arith.constant 0 : index
    %c0_0 = arith.constant 0 : index
    %0 = vector.load %arg1[%c0, %c0_0] : memref<1x6xf32, #tpu.memory_space<vmem>>, vector<1x6xf32>
    %cst = arith.constant dense<0xFF800000> : vector<1xf32>
    %1 = vector.multi_reduction <maximumf>, %0, %cst [1] : vector<1x6xf32> to vector<1xf32>
    %2 = vector.shape_cast %1 : vector<1xf32> to vector<1x1xf32>
    %3 = vector.broadcast %2 : vector<1x1xf32> to vector<1x6xf32>
    %4 = arith.subf %0, %3 : vector<1x6xf32>
    %5 = math.exp %4 : vector<1x6xf32>
    %cst_1 = arith.constant dense<0.000000e+00> : vector<1xf32>
    %6 = vector.multi_reduction <add>, %5, %cst_1 [1] : vector<1x6xf32> to vector<1xf32>
    %7 = vector.shape_cast %6 : vector<1xf32> to vector<1x1xf32>
    %8 = vector.broadcast %7 : vector<1x1xf32> to vector<1x6xf32>
    %9 = arith.divf %5, %8 : vector<1x6xf32>
    %10 = tpu.iota {dimensions = array<i32: 1>} : vector<1x512xi32>
    %c15_i32 = arith.constant 15 : i32
    %11 = vector.broadcast %c15_i32 : i32 to vector<1x512xi32>
    %12 = arith.andi %10, %11 : vector<1x512xi32>
    %c255_i32 = arith.constant 255 : i32
    %13 = vector.broadcast %c255_i32 : i32 to vector<1x512xi32>
    %14 = arith.andi %10, %13 : vector<1x512xi32>
    %c2_i32 = arith.constant 2 : i32
    %15 = vector.broadcast %c2_i32 : i32 to vector<1x512xi32>
    %16 = arith.cmpi sge, %12, %15 : vector<1x512xi32>
    %c1_i32 = arith.constant 1 : i32
    %17 = vector.broadcast %c1_i32 : i32 to vector<1x512xi32>
    %18 = arith.cmpi sge, %12, %17 : vector<1x512xi32>
    %c15_i32_2 = arith.constant 15 : i32
    %19 = vector.broadcast %c15_i32_2 : i32 to vector<1x512xi32>
    %20 = arith.cmpi slt, %12, %19 : vector<1x512xi32>
    %c14_i32 = arith.constant 14 : i32
    %21 = vector.broadcast %c14_i32 : i32 to vector<1x512xi32>
    %22 = arith.cmpi slt, %12, %21 : vector<1x512xi32>
    %c32_i32 = arith.constant 32 : i32
    %23 = vector.broadcast %c32_i32 : i32 to vector<1x512xi32>
    %24 = arith.cmpi sge, %14, %23 : vector<1x512xi32>
    %c16_i32 = arith.constant 16 : i32
    %25 = vector.broadcast %c16_i32 : i32 to vector<1x512xi32>
    %26 = arith.cmpi sge, %14, %25 : vector<1x512xi32>
    %c240_i32 = arith.constant 240 : i32
    %27 = vector.broadcast %c240_i32 : i32 to vector<1x512xi32>
    %28 = arith.cmpi slt, %14, %27 : vector<1x512xi32>
    %c224_i32 = arith.constant 224 : i32
    %29 = vector.broadcast %c224_i32 : i32 to vector<1x512xi32>
    %30 = arith.cmpi slt, %14, %29 : vector<1x512xi32>
    %31 = arith.andi %24, %16 : vector<1x512xi1>
    %c0_3 = arith.constant 0 : index
    %c0_4 = arith.constant 0 : index
    %32 = vector.load %arg2[%c0_3, %c0_4] : memref<4x580xf32, #tpu.memory_space<vmem>>, vector<4x512xf32>
    %cst_5 = arith.constant 0.000000e+00 : f32
    %33 = vector.shape_cast %31 : vector<1x512xi1> to vector<1x512xi1>
    %34 = vector.broadcast %33 : vector<1x512xi1> to vector<4x512xi1>
    %35 = vector.broadcast %cst_5 : f32 to vector<4x512xf32>
    %36 = arith.select %34, %32, %35 : vector<4x512xi1>, vector<4x512xf32>
    %c0_6 = arith.constant 0 : index
    %c0_7 = arith.constant 0 : index
    %37 = vector.load %arg6[%c0_6, %c0_7] : memref<100x512xf32, #tpu.memory_space<vmem>>, vector<4x512xf32>
    tpu.vector_store %arg6[%c0_6, %c0_7], %36 {strides = array<i32>} : memref<100x512xf32, #tpu.memory_space<vmem>>, vector<4x512xf32>,
    %38 = arith.andi %24, %18 : vector<1x512xi1>
    %c0_8 = arith.constant 0 : index
    %c1 = arith.constant 1 : index
    %39 = vector.load %arg2[%c0_8, %c1] : memref<4x580xf32, #tpu.memory_space<vmem>>, vector<4x512xf32>
    %cst_9 = arith.constant 0.000000e+00 : f32
    %40 = vector.shape_cast %38 : vector<1x512xi1> to vector<1x512xi1>
    %41 = vector.broadcast %40 : vector<1x512xi1> to vector<4x512xi1>
    %42 = vector.broadcast %cst_9 : f32 to vector<4x512xf32>
    %43 = arith.select %41, %39, %42 : vector<4x512xi1>, vector<4x512xf32>
    %c4 = arith.constant 4 : index
    %c0_10 = arith.constant 0 : index
    %44 = vector.load %arg6[%c4, %c0_10] : memref<100x512xf32, #tpu.memory_space<vmem>>, vector<4x512xf32>
    tpu.vector_store %arg6[%c4, %c0_10], %43 {strides = array<i32>} : memref<100x512xf32, #tpu.memory_space<vmem>>, vector<4x512xf32>,
    %c0_11 = arith.constant 0 : index
    %c2 = arith.constant 2 : index
    %45 = vector.load %arg2[%c0_11, %c2] : memref<4x580xf32, #tpu.memory_space<vmem>>, vector<4x512xf32>
    %cst_12 = arith.constant 0.000000e+00 : f32
    %46 = vector.shape_cast %24 : vector<1x512xi1> to vector<1x512xi1>
    %47 = vector.broadcast %46 : vector<1x512xi1> to vector<4x512xi1>
    %48 = vector.broadcast %cst_12 : f32 to vector<4x512xf32>
    %49 = arith.select %47, %45, %48 : vector<4x512xi1>, vector<4x512xf32>
    %c8 = arith.constant 8 : index
    %c0_13 = arith.constant 0 : index
    %50 = vector.load %arg6[%c8, %c0_13] : memref<100x512xf32, #tpu.memory_space<vmem>>, vector<4x512xf32>
    tpu.vector_store %arg6[%c8, %c0_13], %49 {strides = array<i32>} : memref<100x512xf32, #tpu.memory_space<vmem>>, vector<4x512xf32>,
    %51 = arith.andi %24, %20 : vector<1x512xi1>
    %c0_14 = arith.constant 0 : index
    %c3 = arith.constant 3 : index
    %52 = vector.load %arg2[%c0_14, %c3] : memref<4x580xf32, #tpu.memory_space<vmem>>, vector<4x512xf32>
    %cst_15 = arith.constant 0.000000e+00 : f32
    %53 = vector.shape_cast %51 : vector<1x512xi1> to vector<1x512xi1>
    %54 = vector.broadcast %53 : vector<1x512xi1> to vector<4x512xi1>
    %55 = vector.broadcast %cst_15 : f32 to vector<4x512xf32>
    %56 = arith.select %54, %52, %55 : vector<4x512xi1>, vector<4x512xf32>
    %c12 = arith.constant 12 : index
    %c0_16 = arith.constant 0 : index
    %57 = vector.load %arg6[%c12, %c0_16] : memref<100x512xf32, #tpu.memory_space<vmem>>, vector<4x512xf32>
    tpu.vector_store %arg6[%c12, %c0_16], %56 {strides = array<i32>} : memref<100x512xf32, #tpu.memory_space<vmem>>, vector<4x512xf32>,
    %58 = arith.andi %24, %22 : vector<1x512xi1>
    %c0_17 = arith.constant 0 : index
    %c4_18 = arith.constant 4 : index
    %59 = vector.load %arg2[%c0_17, %c4_18] : memref<4x580xf32, #tpu.memory_space<vmem>>, vector<4x512xf32>
    %cst_19 = arith.constant 0.000000e+00 : f32
    %60 = vector.shape_cast %58 : vector<1x512xi1> to vector<1x512xi1>
    %61 = vector.broadcast %60 : vector<1x512xi1> to vector<4x512xi1>
    %62 = vector.broadcast %cst_19 : f32 to vector<4x512xf32>
    %63 = arith.select %61, %59, %62 : vector<4x512xi1>, vector<4x512xf32>
    %c16 = arith.constant 16 : index
    %c0_20 = arith.constant 0 : index
    %64 = vector.load %arg6[%c16, %c0_20] : memref<100x512xf32, #tpu.memory_space<vmem>>, vector<4x512xf32>
    tpu.vector_store %arg6[%c16, %c0_20], %63 {strides = array<i32>} : memref<100x512xf32, #tpu.memory_space<vmem>>, vector<4x512xf32>,
    %65 = arith.andi %26, %16 : vector<1x512xi1>
    %c0_21 = arith.constant 0 : index
    %c16_22 = arith.constant 16 : index
    %66 = vector.load %arg2[%c0_21, %c16_22] : memref<4x580xf32, #tpu.memory_space<vmem>>, vector<4x512xf32>
    %cst_23 = arith.constant 0.000000e+00 : f32
    %67 = vector.shape_cast %65 : vector<1x512xi1> to vector<1x512xi1>
    %68 = vector.broadcast %67 : vector<1x512xi1> to vector<4x512xi1>
    %69 = vector.broadcast %cst_23 : f32 to vector<4x512xf32>
    %70 = arith.select %68, %66, %69 : vector<4x512xi1>, vector<4x512xf32>
    %c20 = arith.constant 20 : index
    %c0_24 = arith.constant 0 : index
    %71 = vector.load %arg6[%c20, %c0_24] : memref<100x512xf32, #tpu.memory_space<vmem>>, vector<4x512xf32>
    tpu.vector_store %arg6[%c20, %c0_24], %70 {strides = array<i32>} : memref<100x512xf32, #tpu.memory_space<vmem>>, vector<4x512xf32>,
    %72 = arith.andi %26, %18 : vector<1x512xi1>
    %c0_25 = arith.constant 0 : index
    %c17 = arith.constant 17 : index
    %73 = vector.load %arg2[%c0_25, %c17] : memref<4x580xf32, #tpu.memory_space<vmem>>, vector<4x512xf32>
    %cst_26 = arith.constant 0.000000e+00 : f32
    %74 = vector.shape_cast %72 : vector<1x512xi1> to vector<1x512xi1>
    %75 = vector.broadcast %74 : vector<1x512xi1> to vector<4x512xi1>
    %76 = vector.broadcast %cst_26 : f32 to vector<4x512xf32>
    %77 = arith.select %75, %73, %76 : vector<4x512xi1>, vector<4x512xf32>
    %c24 = arith.constant 24 : index
    %c0_27 = arith.constant 0 : index
    %78 = vector.load %arg6[%c24, %c0_27] : memref<100x512xf32, #tpu.memory_space<vmem>>, vector<4x512xf32>
    tpu.vector_store %arg6[%c24, %c0_27], %77 {strides = array<i32>} : memref<100x512xf32, #tpu.memory_space<vmem>>, vector<4x512xf32>,
    %c0_28 = arith.constant 0 : index
    %c17_29 = arith.constant 17 : index
    %79 = vector.load %arg3[%c0_28, %c17_29] : memref<4x580xf32, #tpu.memory_space<vmem>>, vector<4x512xf32>
    %cst_30 = arith.constant -3.40282347E+38 : f32
    %80 = vector.shape_cast %72 : vector<1x512xi1> to vector<1x512xi1>
    %81 = vector.broadcast %80 : vector<1x512xi1> to vector<4x512xi1>
    %82 = vector.broadcast %cst_30 : f32 to vector<4x512xf32>
    %83 = arith.select %81, %79, %82 : vector<4x512xi1>, vector<4x512xf32>
    %c0_31 = arith.constant 0 : index
    %c18 = arith.constant 18 : index
    %84 = vector.load %arg2[%c0_31, %c18] : memref<4x580xf32, #tpu.memory_space<vmem>>, vector<4x512xf32>
    %cst_32 = arith.constant 0.000000e+00 : f32
    %85 = vector.shape_cast %26 : vector<1x512xi1> to vector<1x512xi1>
    %86 = vector.broadcast %85 : vector<1x512xi1> to vector<4x512xi1>
    %87 = vector.broadcast %cst_32 : f32 to vector<4x512xf32>
    %88 = arith.select %86, %84, %87 : vector<4x512xi1>, vector<4x512xf32>
    %c28 = arith.constant 28 : index
    %c0_33 = arith.constant 0 : index
    %89 = vector.load %arg6[%c28, %c0_33] : memref<100x512xf32, #tpu.memory_space<vmem>>, vector<4x512xf32>
    tpu.vector_store %arg6[%c28, %c0_33], %88 {strides = array<i32>} : memref<100x512xf32, #tpu.memory_space<vmem>>, vector<4x512xf32>,
    %c0_34 = arith.constant 0 : index
    %c18_35 = arith.constant 18 : index
    %90 = vector.load %arg3[%c0_34, %c18_35] : memref<4x580xf32, #tpu.memory_space<vmem>>, vector<4x512xf32>
    %cst_36 = arith.constant -3.40282347E+38 : f32
    %91 = vector.shape_cast %26 : vector<1x512xi1> to vector<1x512xi1>
    %92 = vector.broadcast %91 : vector<1x512xi1> to vector<4x512xi1>
    %93 = vector.broadcast %cst_36 : f32 to vector<4x512xf32>
    %94 = arith.select %92, %90, %93 : vector<4x512xi1>, vector<4x512xf32>
    %95 = arith.maximumf %83, %94 : vector<4x512xf32>
    %96 = arith.andi %26, %20 : vector<1x512xi1>
    %c0_37 = arith.constant 0 : index
    %c19 = arith.constant 19 : index
    %97 = vector.load %arg2[%c0_37, %c19] : memref<4x580xf32, #tpu.memory_space<vmem>>, vector<4x512xf32>
    %cst_38 = arith.constant 0.000000e+00 : f32
    %98 = vector.shape_cast %96 : vector<1x512xi1> to vector<1x512xi1>
    %99 = vector.broadcast %98 : vector<1x512xi1> to vector<4x512xi1>
    %100 = vector.broadcast %cst_38 : f32 to vector<4x512xf32>
    %101 = arith.select %99, %97, %100 : vector<4x512xi1>, vector<4x512xf32>
    %c32 = arith.constant 32 : index
    %c0_39 = arith.constant 0 : index
    %102 = vector.load %arg6[%c32, %c0_39] : memref<100x512xf32, #tpu.memory_space<vmem>>, vector<4x512xf32>
    tpu.vector_store %arg6[%c32, %c0_39], %101 {strides = array<i32>} : memref<100x512xf32, #tpu.memory_space<vmem>>, vector<4x512xf32>,
    %c0_40 = arith.constant 0 : index
    %c19_41 = arith.constant 19 : index
    %103 = vector.load %arg3[%c0_40, %c19_41] : memref<4x580xf32, #tpu.memory_space<vmem>>, vector<4x512xf32>
    %cst_42 = arith.constant -3.40282347E+38 : f32
    %104 = vector.shape_cast %96 : vector<1x512xi1> to vector<1x512xi1>
    %105 = vector.broadcast %104 : vector<1x512xi1> to vector<4x512xi1>
    %106 = vector.broadcast %cst_42 : f32 to vector<4x512xf32>
    %107 = arith.select %105, %103, %106 : vector<4x512xi1>, vector<4x512xf32>
    %108 = arith.maximumf %95, %107 : vector<4x512xf32>
    %109 = arith.andi %26, %22 : vector<1x512xi1>
    %c0_43 = arith.constant 0 : index
    %c20_44 = arith.constant 20 : index
    %110 = vector.load %arg2[%c0_43, %c20_44] : memref<4x580xf32, #tpu.memory_space<vmem>>, vector<4x512xf32>
    %cst_45 = arith.constant 0.000000e+00 : f32
    %111 = vector.shape_cast %109 : vector<1x512xi1> to vector<1x512xi1>
    %112 = vector.broadcast %111 : vector<1x512xi1> to vector<4x512xi1>
    %113 = vector.broadcast %cst_45 : f32 to vector<4x512xf32>
    %114 = arith.select %112, %110, %113 : vector<4x512xi1>, vector<4x512xf32>
    %c36 = arith.constant 36 : index
    %c0_46 = arith.constant 0 : index
    %115 = vector.load %arg6[%c36, %c0_46] : memref<100x512xf32, #tpu.memory_space<vmem>>, vector<4x512xf32>
    tpu.vector_store %arg6[%c36, %c0_46], %114 {strides = array<i32>} : memref<100x512xf32, #tpu.memory_space<vmem>>, vector<4x512xf32>,
    %c0_47 = arith.constant 0 : index
    %c32_48 = arith.constant 32 : index
    %116 = vector.load %arg2[%c0_47, %c32_48] : memref<4x580xf32, #tpu.memory_space<vmem>>, vector<4x512xf32>
    %cst_49 = arith.constant 0.000000e+00 : f32
    %117 = vector.shape_cast %16 : vector<1x512xi1> to vector<1x512xi1>
    %118 = vector.broadcast %117 : vector<1x512xi1> to vector<4x512xi1>
    %119 = vector.broadcast %cst_49 : f32 to vector<4x512xf32>
    %120 = arith.select %118, %116, %119 : vector<4x512xi1>, vector<4x512xf32>
    %c40 = arith.constant 40 : index
    %c0_50 = arith.constant 0 : index
    %121 = vector.load %arg6[%c40, %c0_50] : memref<100x512xf32, #tpu.memory_space<vmem>>, vector<4x512xf32>
    tpu.vector_store %arg6[%c40, %c0_50], %120 {strides = array<i32>} : memref<100x512xf32, #tpu.memory_space<vmem>>, vector<4x512xf32>,
    %c0_51 = arith.constant 0 : index
    %c33 = arith.constant 33 : index
    %122 = vector.load %arg2[%c0_51, %c33] : memref<4x580xf32, #tpu.memory_space<vmem>>, vector<4x512xf32>
    %cst_52 = arith.constant 0.000000e+00 : f32
    %123 = vector.shape_cast %18 : vector<1x512xi1> to vector<1x512xi1>
    %124 = vector.broadcast %123 : vector<1x512xi1> to vector<4x512xi1>
    %125 = vector.broadcast %cst_52 : f32 to vector<4x512xf32>
    %126 = arith.select %124, %122, %125 : vector<4x512xi1>, vector<4x512xf32>
    %c44 = arith.constant 44 : index
    %c0_53 = arith.constant 0 : index
    %127 = vector.load %arg6[%c44, %c0_53] : memref<100x512xf32, #tpu.memory_space<vmem>>, vector<4x512xf32>
    tpu.vector_store %arg6[%c44, %c0_53], %126 {strides = array<i32>} : memref<100x512xf32, #tpu.memory_space<vmem>>, vector<4x512xf32>,
    %c0_54 = arith.constant 0 : index
    %c33_55 = arith.constant 33 : index
    %128 = vector.load %arg3[%c0_54, %c33_55] : memref<4x580xf32, #tpu.memory_space<vmem>>, vector<4x512xf32>
    %cst_56 = arith.constant -3.40282347E+38 : f32
    %129 = vector.shape_cast %18 : vector<1x512xi1> to vector<1x512xi1>
    %130 = vector.broadcast %129 : vector<1x512xi1> to vector<4x512xi1>
    %131 = vector.broadcast %cst_56 : f32 to vector<4x512xf32>
    %132 = arith.select %130, %128, %131 : vector<4x512xi1>, vector<4x512xf32>
    %133 = arith.maximumf %108, %132 : vector<4x512xf32>
    %c0_57 = arith.constant 0 : index
    %c34 = arith.constant 34 : index
    %134 = vector.load %arg2[%c0_57, %c34] : memref<4x580xf32, #tpu.memory_space<vmem>>, vector<4x512xf32>
    %c48 = arith.constant 48 : index
    %c0_58 = arith.constant 0 : index
    %135 = vector.load %arg6[%c48, %c0_58] : memref<100x512xf32, #tpu.memory_space<vmem>>, vector<4x512xf32>
    tpu.vector_store %arg6[%c48, %c0_58], %134 {strides = array<i32>} : memref<100x512xf32, #tpu.memory_space<vmem>>, vector<4x512xf32>,
    %c0_59 = arith.constant 0 : index
    %c34_60 = arith.constant 34 : index
    %136 = vector.load %arg3[%c0_59, %c34_60] : memref<4x580xf32, #tpu.memory_space<vmem>>, vector<4x512xf32>
    %137 = arith.maximumf %133, %136 : vector<4x512xf32>
    %c0_61 = arith.constant 0 : index
    %c35 = arith.constant 35 : index
    %138 = vector.load %arg2[%c0_61, %c35] : memref<4x580xf32, #tpu.memory_space<vmem>>, vector<4x512xf32>
    %cst_62 = arith.constant 0.000000e+00 : f32
    %139 = vector.shape_cast %20 : vector<1x512xi1> to vector<1x512xi1>
    %140 = vector.broadcast %139 : vector<1x512xi1> to vector<4x512xi1>
    %141 = vector.broadcast %cst_62 : f32 to vector<4x512xf32>
    %142 = arith.select %140, %138, %141 : vector<4x512xi1>, vector<4x512xf32>
    %c52 = arith.constant 52 : index
    %c0_63 = arith.constant 0 : index
    %143 = vector.load %arg6[%c52, %c0_63] : memref<100x512xf32, #tpu.memory_space<vmem>>, vector<4x512xf32>
    tpu.vector_store %arg6[%c52, %c0_63], %142 {strides = array<i32>} : memref<100x512xf32, #tpu.memory_space<vmem>>, vector<4x512xf32>,
    %c0_64 = arith.constant 0 : index
    %c35_65 = arith.constant 35 : index
    %144 = vector.load %arg3[%c0_64, %c35_65] : memref<4x580xf32, #tpu.memory_space<vmem>>, vector<4x512xf32>
    %cst_66 = arith.constant -3.40282347E+38 : f32
    %145 = vector.shape_cast %20 : vector<1x512xi1> to vector<1x512xi1>
    %146 = vector.broadcast %145 : vector<1x512xi1> to vector<4x512xi1>
    %147 = vector.broadcast %cst_66 : f32 to vector<4x512xf32>
    %148 = arith.select %146, %144, %147 : vector<4x512xi1>, vector<4x512xf32>
    %149 = arith.maximumf %137, %148 : vector<4x512xf32>
    %c0_67 = arith.constant 0 : index
    %c36_68 = arith.constant 36 : index
    %150 = vector.load %arg2[%c0_67, %c36_68] : memref<4x580xf32, #tpu.memory_space<vmem>>, vector<4x512xf32>
    %cst_69 = arith.constant 0.000000e+00 : f32
    %151 = vector.shape_cast %22 : vector<1x512xi1> to vector<1x512xi1>
    %152 = vector.broadcast %151 : vector<1x512xi1> to vector<4x512xi1>
    %153 = vector.broadcast %cst_69 : f32 to vector<4x512xf32>
    %154 = arith.select %152, %150, %153 : vector<4x512xi1>, vector<4x512xf32>
    %c56 = arith.constant 56 : index
    %c0_70 = arith.constant 0 : index
    %155 = vector.load %arg6[%c56, %c0_70] : memref<100x512xf32, #tpu.memory_space<vmem>>, vector<4x512xf32>
    tpu.vector_store %arg6[%c56, %c0_70], %154 {strides = array<i32>} : memref<100x512xf32, #tpu.memory_space<vmem>>, vector<4x512xf32>,
    %156 = arith.andi %28, %16 : vector<1x512xi1>
    %c0_71 = arith.constant 0 : index
    %c48_72 = arith.constant 48 : index
    %157 = vector.load %arg2[%c0_71, %c48_72] : memref<4x580xf32, #tpu.memory_space<vmem>>, vector<4x512xf32>
    %cst_73 = arith.constant 0.000000e+00 : f32
    %158 = vector.shape_cast %156 : vector<1x512xi1> to vector<1x512xi1>
    %159 = vector.broadcast %158 : vector<1x512xi1> to vector<4x512xi1>
    %160 = vector.broadcast %cst_73 : f32 to vector<4x512xf32>
    %161 = arith.select %159, %157, %160 : vector<4x512xi1>, vector<4x512xf32>
    %c60 = arith.constant 60 : index
    %c0_74 = arith.constant 0 : index
    %162 = vector.load %arg6[%c60, %c0_74] : memref<100x512xf32, #tpu.memory_space<vmem>>, vector<4x512xf32>
    tpu.vector_store %arg6[%c60, %c0_74], %161 {strides = array<i32>} : memref<100x512xf32, #tpu.memory_space<vmem>>, vector<4x512xf32>,
    %163 = arith.andi %28, %18 : vector<1x512xi1>
    %c0_75 = arith.constant 0 : index
    %c49 = arith.constant 49 : index
    %164 = vector.load %arg2[%c0_75, %c49] : memref<4x580xf32, #tpu.memory_space<vmem>>, vector<4x512xf32>
    %cst_76 = arith.constant 0.000000e+00 : f32
    %165 = vector.shape_cast %163 : vector<1x512xi1> to vector<1x512xi1>
    %166 = vector.broadcast %165 : vector<1x512xi1> to vector<4x512xi1>
    %167 = vector.broadcast %cst_76 : f32 to vector<4x512xf32>
    %168 = arith.select %166, %164, %167 : vector<4x512xi1>, vector<4x512xf32>
    %c64 = arith.constant 64 : index
    %c0_77 = arith.constant 0 : index
    %169 = vector.load %arg6[%c64, %c0_77] : memref<100x512xf32, #tpu.memory_space<vmem>>, vector<4x512xf32>
    tpu.vector_store %arg6[%c64, %c0_77], %168 {strides = array<i32>} : memref<100x512xf32, #tpu.memory_space<vmem>>, vector<4x512xf32>,
    %c0_78 = arith.constant 0 : index
    %c49_79 = arith.constant 49 : index
    %170 = vector.load %arg3[%c0_78, %c49_79] : memref<4x580xf32, #tpu.memory_space<vmem>>, vector<4x512xf32>
    %cst_80 = arith.constant -3.40282347E+38 : f32
    %171 = vector.shape_cast %163 : vector<1x512xi1> to vector<1x512xi1>
    %172 = vector.broadcast %171 : vector<1x512xi1> to vector<4x512xi1>
    %173 = vector.broadcast %cst_80 : f32 to vector<4x512xf32>
    %174 = arith.select %172, %170, %173 : vector<4x512xi1>, vector<4x512xf32>
    %175 = arith.maximumf %149, %174 : vector<4x512xf32>
    %c0_81 = arith.constant 0 : index
    %c50 = arith.constant 50 : index
    %176 = vector.load %arg2[%c0_81, %c50] : memref<4x580xf32, #tpu.memory_space<vmem>>, vector<4x512xf32>
    %cst_82 = arith.constant 0.000000e+00 : f32
    %177 = vector.shape_cast %28 : vector<1x512xi1> to vector<1x512xi1>
    %178 = vector.broadcast %177 : vector<1x512xi1> to vector<4x512xi1>
    %179 = vector.broadcast %cst_82 : f32 to vector<4x512xf32>
    %180 = arith.select %178, %176, %179 : vector<4x512xi1>, vector<4x512xf32>
    %c68 = arith.constant 68 : index
    %c0_83 = arith.constant 0 : index
    %181 = vector.load %arg6[%c68, %c0_83] : memref<100x512xf32, #tpu.memory_space<vmem>>, vector<4x512xf32>
    tpu.vector_store %arg6[%c68, %c0_83], %180 {strides = array<i32>} : memref<100x512xf32, #tpu.memory_space<vmem>>, vector<4x512xf32>,
    %c0_84 = arith.constant 0 : index
    %c50_85 = arith.constant 50 : index
    %182 = vector.load %arg3[%c0_84, %c50_85] : memref<4x580xf32, #tpu.memory_space<vmem>>, vector<4x512xf32>
    %cst_86 = arith.constant -3.40282347E+38 : f32
    %183 = vector.shape_cast %28 : vector<1x512xi1> to vector<1x512xi1>
    %184 = vector.broadcast %183 : vector<1x512xi1> to vector<4x512xi1>
    %185 = vector.broadcast %cst_86 : f32 to vector<4x512xf32>
    %186 = arith.select %184, %182, %185 : vector<4x512xi1>, vector<4x512xf32>
    %187 = arith.maximumf %175, %186 : vector<4x512xf32>
    %188 = arith.andi %28, %20 : vector<1x512xi1>
    %c0_87 = arith.constant 0 : index
    %c51 = arith.constant 51 : index
    %189 = vector.load %arg2[%c0_87, %c51] : memref<4x580xf32, #tpu.memory_space<vmem>>, vector<4x512xf32>
    %cst_88 = arith.constant 0.000000e+00 : f32
    %190 = vector.shape_cast %188 : vector<1x512xi1> to vector<1x512xi1>
    %191 = vector.broadcast %190 : vector<1x512xi1> to vector<4x512xi1>
    %192 = vector.broadcast %cst_88 : f32 to vector<4x512xf32>
    %193 = arith.select %191, %189, %192 : vector<4x512xi1>, vector<4x512xf32>
    %c72 = arith.constant 72 : index
    %c0_89 = arith.constant 0 : index
    %194 = vector.load %arg6[%c72, %c0_89] : memref<100x512xf32, #tpu.memory_space<vmem>>, vector<4x512xf32>
    tpu.vector_store %arg6[%c72, %c0_89], %193 {strides = array<i32>} : memref<100x512xf32, #tpu.memory_space<vmem>>, vector<4x512xf32>,
    %c0_90 = arith.constant 0 : index
    %c51_91 = arith.constant 51 : index
    %195 = vector.load %arg3[%c0_90, %c51_91] : memref<4x580xf32, #tpu.memory_space<vmem>>, vector<4x512xf32>
    %cst_92 = arith.constant -3.40282347E+38 : f32
    %196 = vector.shape_cast %188 : vector<1x512xi1> to vector<1x512xi1>
    %197 = vector.broadcast %196 : vector<1x512xi1> to vector<4x512xi1>
    %198 = vector.broadcast %cst_92 : f32 to vector<4x512xf32>
    %199 = arith.select %197, %195, %198 : vector<4x512xi1>, vector<4x512xf32>
    %200 = arith.maximumf %187, %199 : vector<4x512xf32>
    %201 = arith.andi %28, %22 : vector<1x512xi1>
    %c0_93 = arith.constant 0 : index
    %c52_94 = arith.constant 52 : index
    %202 = vector.load %arg2[%c0_93, %c52_94] : memref<4x580xf32, #tpu.memory_space<vmem>>, vector<4x512xf32>
    %cst_95 = arith.constant 0.000000e+00 : f32
    %203 = vector.shape_cast %201 : vector<1x512xi1> to vector<1x512xi1>
    %204 = vector.broadcast %203 : vector<1x512xi1> to vector<4x512xi1>
    %205 = vector.broadcast %cst_95 : f32 to vector<4x512xf32>
    %206 = arith.select %204, %202, %205 : vector<4x512xi1>, vector<4x512xf32>
    %c76 = arith.constant 76 : index
    %c0_96 = arith.constant 0 : index
    %207 = vector.load %arg6[%c76, %c0_96] : memref<100x512xf32, #tpu.memory_space<vmem>>, vector<4x512xf32>
    tpu.vector_store %arg6[%c76, %c0_96], %206 {strides = array<i32>} : memref<100x512xf32, #tpu.memory_space<vmem>>, vector<4x512xf32>,
    %208 = arith.andi %30, %16 : vector<1x512xi1>
    %c0_97 = arith.constant 0 : index
    %c64_98 = arith.constant 64 : index
    %209 = vector.load %arg2[%c0_97, %c64_98] : memref<4x580xf32, #tpu.memory_space<vmem>>, vector<4x512xf32>
    %cst_99 = arith.constant 0.000000e+00 : f32
    %210 = vector.shape_cast %208 : vector<1x512xi1> to vector<1x512xi1>
    %211 = vector.broadcast %210 : vector<1x512xi1> to vector<4x512xi1>
    %212 = vector.broadcast %cst_99 : f32 to vector<4x512xf32>
    %213 = arith.select %211, %209, %212 : vector<4x512xi1>, vector<4x512xf32>
    %c80 = arith.constant 80 : index
    %c0_100 = arith.constant 0 : index
    %214 = vector.load %arg6[%c80, %c0_100] : memref<100x512xf32, #tpu.memory_space<vmem>>, vector<4x512xf32>
    tpu.vector_store %arg6[%c80, %c0_100], %213 {strides = array<i32>} : memref<100x512xf32, #tpu.memory_space<vmem>>, vector<4x512xf32>,
    %215 = arith.andi %30, %18 : vector<1x512xi1>
    %c0_101 = arith.constant 0 : index
    %c65 = arith.constant 65 : index
    %216 = vector.load %arg2[%c0_101, %c65] : memref<4x580xf32, #tpu.memory_space<vmem>>, vector<4x512xf32>
    %cst_102 = arith.constant 0.000000e+00 : f32
    %217 = vector.shape_cast %215 : vector<1x512xi1> to vector<1x512xi1>
    %218 = vector.broadcast %217 : vector<1x512xi1> to vector<4x512xi1>
    %219 = vector.broadcast %cst_102 : f32 to vector<4x512xf32>
    %220 = arith.select %218, %216, %219 : vector<4x512xi1>, vector<4x512xf32>
    %c84 = arith.constant 84 : index
    %c0_103 = arith.constant 0 : index
    %221 = vector.load %arg6[%c84, %c0_103] : memref<100x512xf32, #tpu.memory_space<vmem>>, vector<4x512xf32>
    tpu.vector_store %arg6[%c84, %c0_103], %220 {strides = array<i32>} : memref<100x512xf32, #tpu.memory_space<vmem>>, vector<4x512xf32>,
    %c0_104 = arith.constant 0 : index
    %c66 = arith.constant 66 : index
    %222 = vector.load %arg2[%c0_104, %c66] : memref<4x580xf32, #tpu.memory_space<vmem>>, vector<4x512xf32>
    %cst_105 = arith.constant 0.000000e+00 : f32
    %223 = vector.shape_cast %30 : vector<1x512xi1> to vector<1x512xi1>
    %224 = vector.broadcast %223 : vector<1x512xi1> to vector<4x512xi1>
    %225 = vector.broadcast %cst_105 : f32 to vector<4x512xf32>
    %226 = arith.select %224, %222, %225 : vector<4x512xi1>, vector<4x512xf32>
    %c88 = arith.constant 88 : index
    %c0_106 = arith.constant 0 : index
    %227 = vector.load %arg6[%c88, %c0_106] : memref<100x512xf32, #tpu.memory_space<vmem>>, vector<4x512xf32>
    tpu.vector_store %arg6[%c88, %c0_106], %226 {strides = array<i32>} : memref<100x512xf32, #tpu.memory_space<vmem>>, vector<4x512xf32>,
    %228 = arith.andi %30, %20 : vector<1x512xi1>
    %c0_107 = arith.constant 0 : index
    %c67 = arith.constant 67 : index
    %229 = vector.load %arg2[%c0_107, %c67] : memref<4x580xf32, #tpu.memory_space<vmem>>, vector<4x512xf32>
    %cst_108 = arith.constant 0.000000e+00 : f32
    %230 = vector.shape_cast %228 : vector<1x512xi1> to vector<1x512xi1>
    %231 = vector.broadcast %230 : vector<1x512xi1> to vector<4x512xi1>
    %232 = vector.broadcast %cst_108 : f32 to vector<4x512xf32>
    %233 = arith.select %231, %229, %232 : vector<4x512xi1>, vector<4x512xf32>
    %c92 = arith.constant 92 : index
    %c0_109 = arith.constant 0 : index
    %234 = vector.load %arg6[%c92, %c0_109] : memref<100x512xf32, #tpu.memory_space<vmem>>, vector<4x512xf32>
    tpu.vector_store %arg6[%c92, %c0_109], %233 {strides = array<i32>} : memref<100x512xf32, #tpu.memory_space<vmem>>, vector<4x512xf32>,
    %235 = arith.andi %30, %22 : vector<1x512xi1>
    %c0_110 = arith.constant 0 : index
    %c68_111 = arith.constant 68 : index
    %236 = vector.load %arg2[%c0_110, %c68_111] : memref<4x580xf32, #tpu.memory_space<vmem>>, vector<4x512xf32>
    %cst_112 = arith.constant 0.000000e+00 : f32
    %237 = vector.shape_cast %235 : vector<1x512xi1> to vector<1x512xi1>
    %238 = vector.broadcast %237 : vector<1x512xi1> to vector<4x512xi1>
    %239 = vector.broadcast %cst_112 : f32 to vector<4x512xf32>
    %240 = arith.select %238, %236, %239 : vector<4x512xi1>, vector<4x512xf32>
    %c96 = arith.constant 96 : index
    %c0_113 = arith.constant 0 : index
    %241 = vector.load %arg6[%c96, %c0_113] : memref<100x512xf32, #tpu.memory_space<vmem>>, vector<4x512xf32>
    tpu.vector_store %arg6[%c96, %c0_113], %240 {strides = array<i32>} : memref<100x512xf32, #tpu.memory_space<vmem>>, vector<4x512xf32>,
    %c0_114 = arith.constant 0 : index
    %c0_115 = arith.constant 0 : index
    %c0_116 = arith.constant 0 : index
    %242 = vector.load %arg4[%c0_114, %c0_115, %c0_116] : memref<3x4x100xf32, #tpu.memory_space<vmem>>, vector<1x4x100xf32>
    %243 = vector.shape_cast %242 : vector<1x4x100xf32> to vector<4x100xf32>
    %c0_117 = arith.constant 0 : index
    %c0_118 = arith.constant 0 : index
    %244 = vector.load %arg6[%c0_117, %c0_118] : memref<100x512xf32, #tpu.memory_space<vmem>>, vector<100x512xf32>
    %cst_119 = arith.constant dense<0.000000e+00> : vector<4x512xf32>
    %245 = tpu.matmul %243, %244, %cst_119 {dimension_numbers = #tpu.dot_dimension_numbers<[1], [0], [0], [1], [0, 0, 1, 1], [], []>, precision = #tpu.contract_precision<fp32>} : vector<4x100xf32>, vector<100x512xf32>, vector<4x512xf32> -> vector<4x512xf32>
    %c1_120 = arith.constant 1 : index
    %c0_121 = arith.constant 0 : index
    %c0_122 = arith.constant 0 : index
    %246 = vector.load %arg4[%c1_120, %c0_121, %c0_122] : memref<3x4x100xf32, #tpu.memory_space<vmem>>, vector<1x4x100xf32>
    %247 = vector.shape_cast %246 : vector<1x4x100xf32> to vector<4x100xf32>
    %c0_123 = arith.constant 0 : index
    %c0_124 = arith.constant 0 : index
    %248 = vector.load %arg6[%c0_123, %c0_124] : memref<100x512xf32, #tpu.memory_space<vmem>>, vector<100x512xf32>
    %cst_125 = arith.constant dense<0.000000e+00> : vector<4x512xf32>
    %249 = tpu.matmul %247, %248, %cst_125 {dimension_numbers = #tpu.dot_dimension_numbers<[1], [0], [0], [1], [0, 0, 1, 1], [], []>, precision = #tpu.contract_precision<fp32>} : vector<4x100xf32>, vector<100x512xf32>, vector<4x512xf32> -> vector<4x512xf32>
    %c2_126 = arith.constant 2 : index
    %c0_127 = arith.constant 0 : index
    %c0_128 = arith.constant 0 : index
    %250 = vector.load %arg4[%c2_126, %c0_127, %c0_128] : memref<3x4x100xf32, #tpu.memory_space<vmem>>, vector<1x4x100xf32>
    %251 = vector.shape_cast %250 : vector<1x4x100xf32> to vector<4x100xf32>
    %c0_129 = arith.constant 0 : index
    %c0_130 = arith.constant 0 : index
    %252 = vector.load %arg6[%c0_129, %c0_130] : memref<100x512xf32, #tpu.memory_space<vmem>>, vector<100x512xf32>
    %cst_131 = arith.constant dense<0.000000e+00> : vector<4x512xf32>
    %253 = tpu.matmul %251, %252, %cst_131 {dimension_numbers = #tpu.dot_dimension_numbers<[1], [0], [0], [1], [0, 0, 1, 1], [], []>, precision = #tpu.contract_precision<fp32>} : vector<4x100xf32>, vector<100x512xf32>, vector<4x512xf32> -> vector<4x512xf32>
    %254 = vector.extract_strided_slice %9 {offsets = [0, 1], sizes = [1, 1], strides = [1, 1]} : vector<1x6xf32> to vector<1x1xf32>
    %255 = vector.broadcast %254 : vector<1x1xf32> to vector<4x512xf32>
    %256 = arith.mulf %255, %136 : vector<4x512xf32>
    %cst_132 = arith.constant dense<0.000000e+00> : vector<4xf32>
    %257 = vector.multi_reduction <add>, %200, %cst_132 [1] : vector<4x512xf32> to vector<4xf32>
    %258 = vector.shape_cast %257 : vector<4xf32> to vector<4x1xf32>
    %cst_133 = arith.constant 0.001953125 : f32
    %259 = vector.broadcast %cst_133 : f32 to vector<4x1xf32>
    %260 = arith.mulf %258, %259 : vector<4x1xf32>
    %261 = vector.broadcast %260 : vector<4x1xf32> to vector<4x512xf32>
    %262 = arith.subf %200, %261 : vector<4x512xf32>
    %263 = arith.mulf %262, %262 : vector<4x512xf32>
    %cst_134 = arith.constant dense<0.000000e+00> : vector<4xf32>
    %264 = vector.multi_reduction <add>, %263, %cst_134 [1] : vector<4x512xf32> to vector<4xf32>
    %265 = vector.shape_cast %264 : vector<4xf32> to vector<4x1xf32>
    %cst_135 = arith.constant 0.001953125 : f32
    %266 = vector.broadcast %cst_135 : f32 to vector<4x1xf32>
    %267 = arith.mulf %265, %266 : vector<4x1xf32>
    %268 = vector.extract_strided_slice %9 {offsets = [0, 2], sizes = [1, 1], strides = [1, 1]} : vector<1x6xf32> to vector<1x1xf32>
    %cst_136 = arith.constant 9.99999974E-6 : f32
    %269 = vector.broadcast %cst_136 : f32 to vector<4x1xf32>
    %270 = arith.addf %267, %269 : vector<4x1xf32>
    %271 = math.rsqrt %270 : vector<4x1xf32>
    %272 = vector.broadcast %268 : vector<1x1xf32> to vector<4x1xf32>
    %273 = arith.mulf %272, %271 : vector<4x1xf32>
    %274 = vector.broadcast %273 : vector<4x1xf32> to vector<4x512xf32>
    %275 = arith.mulf %262, %274 : vector<4x512xf32>
    %276 = arith.addf %256, %275 : vector<4x512xf32>
    %cst_137 = arith.constant dense<0.000000e+00> : vector<4xf32>
    %277 = vector.multi_reduction <add>, %253, %cst_137 [1] : vector<4x512xf32> to vector<4xf32>
    %278 = vector.shape_cast %277 : vector<4xf32> to vector<4x1xf32>
    %cst_138 = arith.constant 0.001953125 : f32
    %279 = vector.broadcast %cst_138 : f32 to vector<4x1xf32>
    %280 = arith.mulf %278, %279 : vector<4x1xf32>
    %281 = vector.broadcast %280 : vector<4x1xf32> to vector<4x512xf32>
    %282 = arith.subf %253, %281 : vector<4x512xf32>
    %283 = arith.mulf %282, %282 : vector<4x512xf32>
    %cst_139 = arith.constant dense<0.000000e+00> : vector<4xf32>
    %284 = vector.multi_reduction <add>, %283, %cst_139 [1] : vector<4x512xf32> to vector<4xf32>
    %285 = vector.shape_cast %284 : vector<4xf32> to vector<4x1xf32>
    %cst_140 = arith.constant 0.001953125 : f32
    %286 = vector.broadcast %cst_140 : f32 to vector<4x1xf32>
    %287 = arith.mulf %285, %286 : vector<4x1xf32>
    %288 = vector.extract_strided_slice %9 {offsets = [0, 3], sizes = [1, 1], strides = [1, 1]} : vector<1x6xf32> to vector<1x1xf32>
    %cst_141 = arith.constant 9.99999974E-6 : f32
    %289 = vector.broadcast %cst_141 : f32 to vector<4x1xf32>
    %290 = arith.addf %287, %289 : vector<4x1xf32>
    %291 = math.rsqrt %290 : vector<4x1xf32>
    %292 = vector.broadcast %288 : vector<1x1xf32> to vector<4x1xf32>
    %293 = arith.mulf %292, %291 : vector<4x1xf32>
    %294 = vector.broadcast %293 : vector<4x1xf32> to vector<4x512xf32>
    %295 = arith.mulf %282, %294 : vector<4x512xf32>
    %296 = arith.addf %276, %295 : vector<4x512xf32>
    %cst_142 = arith.constant dense<0.000000e+00> : vector<4xf32>
    %297 = vector.multi_reduction <add>, %249, %cst_142 [1] : vector<4x512xf32> to vector<4xf32>
    %298 = vector.shape_cast %297 : vector<4xf32> to vector<4x1xf32>
    %cst_143 = arith.constant 0.001953125 : f32
    %299 = vector.broadcast %cst_143 : f32 to vector<4x1xf32>
    %300 = arith.mulf %298, %299 : vector<4x1xf32>
    %301 = vector.broadcast %300 : vector<4x1xf32> to vector<4x512xf32>
    %302 = arith.subf %249, %301 : vector<4x512xf32>
    %303 = arith.mulf %302, %302 : vector<4x512xf32>
    %cst_144 = arith.constant dense<0.000000e+00> : vector<4xf32>
    %304 = vector.multi_reduction <add>, %303, %cst_144 [1] : vector<4x512xf32> to vector<4xf32>
    %305 = vector.shape_cast %304 : vector<4xf32> to vector<4x1xf32>
    %cst_145 = arith.constant 0.001953125 : f32
    %306 = vector.broadcast %cst_145 : f32 to vector<4x1xf32>
    %307 = arith.mulf %305, %306 : vector<4x1xf32>
    %308 = vector.extract_strided_slice %9 {offsets = [0, 4], sizes = [1, 1], strides = [1, 1]} : vector<1x6xf32> to vector<1x1xf32>
    %cst_146 = arith.constant 9.99999974E-6 : f32
    %309 = vector.broadcast %cst_146 : f32 to vector<4x1xf32>
    %310 = arith.addf %307, %309 : vector<4x1xf32>
    %311 = math.rsqrt %310 : vector<4x1xf32>
    %312 = vector.broadcast %308 : vector<1x1xf32> to vector<4x1xf32>
    %313 = arith.mulf %312, %311 : vector<4x1xf32>
    %314 = vector.broadcast %313 : vector<4x1xf32> to vector<4x512xf32>
    %315 = arith.mulf %302, %314 : vector<4x512xf32>
    %316 = arith.addf %296, %315 : vector<4x512xf32>
    %cst_147 = arith.constant dense<0.000000e+00> : vector<4xf32>
    %317 = vector.multi_reduction <add>, %245, %cst_147 [1] : vector<4x512xf32> to vector<4xf32>
    %318 = vector.shape_cast %317 : vector<4xf32> to vector<4x1xf32>
    %cst_148 = arith.constant 0.001953125 : f32
    %319 = vector.broadcast %cst_148 : f32 to vector<4x1xf32>
    %320 = arith.mulf %318, %319 : vector<4x1xf32>
    %321 = vector.broadcast %320 : vector<4x1xf32> to vector<4x512xf32>
    %322 = arith.subf %245, %321 : vector<4x512xf32>
    %323 = arith.mulf %322, %322 : vector<4x512xf32>
    %cst_149 = arith.constant dense<0.000000e+00> : vector<4xf32>
    %324 = vector.multi_reduction <add>, %323, %cst_149 [1] : vector<4x512xf32> to vector<4xf32>
    %325 = vector.shape_cast %324 : vector<4xf32> to vector<4x1xf32>
    %cst_150 = arith.constant 0.001953125 : f32
    %326 = vector.broadcast %cst_150 : f32 to vector<4x1xf32>
    %327 = arith.mulf %325, %326 : vector<4x1xf32>
    %328 = vector.extract_strided_slice %9 {offsets = [0, 5], sizes = [1, 1], strides = [1, 1]} : vector<1x6xf32> to vector<1x1xf32>
    %cst_151 = arith.constant 9.99999974E-6 : f32
    %329 = vector.broadcast %cst_151 : f32 to vector<4x1xf32>
    %330 = arith.addf %327, %329 : vector<4x1xf32>
    %331 = math.rsqrt %330 : vector<4x1xf32>
    %332 = vector.broadcast %328 : vector<1x1xf32> to vector<4x1xf32>
    %333 = arith.mulf %332, %331 : vector<4x1xf32>
    %334 = vector.broadcast %333 : vector<4x1xf32> to vector<4x512xf32>
    %335 = arith.mulf %322, %334 : vector<4x512xf32>
    %336 = arith.addf %316, %335 : vector<4x512xf32>
    %c0_152 = arith.constant 0 : index
    %c0_153 = arith.constant 0 : index
    %337 = vector.load %arg5[%c0_152, %c0_153] : memref<4x512xf32, #tpu.memory_space<vmem>>, vector<4x512xf32>
    tpu.vector_store %arg5[%c0_152, %c0_153], %336 {strides = array<i32>} : memref<4x512xf32, #tpu.memory_space<vmem>>, vector<4x512xf32>,
    return
  }
  func.func @transform_0(%arg0: i32) -> (i32, i32) {
    %c0_i32 = arith.constant 0 : i32
    %c0_i32_0 = arith.constant 0 : i32
    %c0_i32_1 = arith.constant 0 : i32
    return %c0_i32, %c0_i32_0 : i32, i32
  }
  func.func @transform_1(%arg0: i32) -> (i32, i32) {
    %c0_i32 = arith.constant 0 : i32
    %c0_i32_0 = arith.constant 0 : i32
    %c0_i32_1 = arith.constant 0 : i32
    return %c0_i32, %c0_i32_0 : i32, i32
  }
  func.func @transform_2(%arg0: i32) -> (i32, i32) {
    %c0_i32 = arith.constant 0 : i32
    %c0_i32_0 = arith.constant 0 : i32
    return %arg0, %c0_i32 : i32, i32
  }
  func.func @transform_3(%arg0: i32) -> (i32, i32, i32) {
    %c0_i32 = arith.constant 0 : i32
    %c0_i32_0 = arith.constant 0 : i32
    %c0_i32_1 = arith.constant 0 : i32
    return %c0_i32, %arg0, %c0_i32_0 : i32, i32, i32
  }
  func.func @transform_4(%arg0: i32) -> (i32, i32) {
    %c0_i32 = arith.constant 0 : i32
    %c0_i32_0 = arith.constant 0 : i32
    return %arg0, %c0_i32 : i32, i32
  }
}

</mosaic_0001>

<llo_original>
// kernel: mixed_op_pallas.1
$region0: #{mixed_op_pallas.1}
  #allocation0 [shape = 'u32[]', space=smem, size = 0x4, offset = 0x4, fixed_abs, tag = 'smem constant byte address 0x4 - core index']
  #allocation1 [shape = 'u32[72,128]{1,0:T(1,128)}', space=vmem, size = 0x9000, scoped, tag = 'internal scratch']
  #allocation2 [shape = 'f32[100,512]{1,0:T(8,128)}', space=vmem, size = 0x34000, scoped, tag = 'scratch operand']
  %s0 = inlined_call_operand.vmem [shape: f32[1,6], index: 0, kind: input, shape index: {}]
  %s1 = inlined_call_operand.vmem [shape: f32[4,580], index: 1, kind: input, shape index: {}, may-alias: {1,2}]
  %s2 = inlined_call_operand.vmem [shape: f32[4,580], index: 2, kind: input, shape index: {}, may-alias: {1,2}]
  %s3 = inlined_call_operand.vmem [shape: f32[3,4,100], index: 3, kind: input, shape index: {}]
  %s4 = inlined_call_operand.vmem [shape: f32[4,512], index: 4, kind: output, shape index: {}]
  %s5 = sld [smem:[#allocation0]]
  $region26: #{mixed_op_pallas.1} parent=0
    _
  %s7 = ssub.s32 1, %s5
  %s8 = scalar_select 0, %s7, %s5
  // Predicated region
  $region2: #{mixed_op_pallas.1} parent=0 // pred_check
    _
  $region3: #{mixed_op_pallas.1} parent=0 // pred_check_branch
    %10 = sbr.rel (0) target = $region5
  $region4: #{mixed_op_pallas.1} parent=0 // pred_region
    _
  $region5: #{mixed_op_pallas.1} parent=0 // pred_fallthru
    _
  // Predicated region
  $region6: #{mixed_op_pallas.1} parent=0 // pred_check
    _
  $region7: #{mixed_op_pallas.1} parent=0 // pred_check_branch
    %12 = sbr.rel (0) target = $region9
  $region8: #{mixed_op_pallas.1} parent=0 // pred_region
    _
  $region9: #{mixed_op_pallas.1} parent=0 // pred_fallthru
    _
  // Predicated region
  $region10: #{mixed_op_pallas.1} parent=0 // pred_check
    _
  $region11: #{mixed_op_pallas.1} parent=0 // pred_check_branch
    %14 = sbr.rel (0) target = $region13
  $region12: #{mixed_op_pallas.1} parent=0 // pred_region
    _
  $region13: #{mixed_op_pallas.1} parent=0 // pred_fallthru
    _
  // Predicated region
  $region14: #{mixed_op_pallas.1} parent=0 // pred_check
    _
  $region15: #{mixed_op_pallas.1} parent=0 // pred_check_branch
    %16 = sbr.rel (0) target = $region17
  $region16: #{mixed_op_pallas.1} parent=0 // pred_region
    _
  $region17: #{mixed_op_pallas.1} parent=0 // pred_fallthru
    _
  %v17 = vld [vmem:[%s0] sm:$0x1]
  %vm18 = vcmask 40960
  %v19 = vsel %vm18, %v17, -inf
  %20 = vmax.xlane.f32.xlu0 %v19
  %v21 = vpop.xlane.xlu0 %20
  %v22 = vsub.f32 %v17, %v21
  %v23 = vmul.f32 %v22, 1.442695
  %v24 = vpow.pop %v23
  %v25 = vsel %vm18, %v24, 0.0
  %26 = vadd.xlane.f32.xlu0 %v25
  %v27 = vpop.xlane.xlu0 %26
  %v28 = vrcp.pop %v27
  %v29 = vmul.f32 %v27, %v28
  %v30 = vsub.f32 1.0, %v29
  %v31 = vmul.f32 %v28, %v30
  %v32 = vadd.f32 %v28, %v31
  %vm33 = vweird.f32 %v27
  %vm34 = vweird.f32 %v28
  %vm35 = vmor %vm33, %vm34
  %v36 = vsel %vm35, %v28, %v32
  %v37 = vand.u32 2147483647, %v27
  %vm38 = vcmp.eq.f32.partialorder %v37, 8.507059e+37
  %v39 = vand.u32 %v27, 2147483648
  %v40 = vor.u32 1.1754944e-38, %v39
  %v41 = vsel %vm38, %v40, %v36
  %v42 = vmul.f32 %v24, %v41
  %v43 = vlaneseq
  %v44 = vand.u32 %v43, 127
  %v45 = vadd.s32 %v44, 128
  %v46 = vadd.s32 %v44, 256
  %v47 = vadd.s32 %v44, 384
  %v48 = vand.u32 %v44, 15
  %v49 = vand.u32 %v45, 15
  %v50 = vand.u32 %v46, 15
  %v51 = vand.u32 %v47, 15
  %v52 = vand.u32 %v44, 255
  %v53 = vand.u32 %v45, 255
  %v54 = vand.u32 %v46, 255
  %v55 = vand.u32 %v47, 255
  %vm56 = vcmp.ge.s32.totalorder %v48, 2
  %vm57 = vcmp.ge.s32.totalorder %v49, 2
  %vm58 = vcmp.ge.s32.totalorder %v50, 2
  %vm59 = vcmp.ge.s32.totalorder %v51, 2
  %vm60 = vcmp.ge.s32.totalorder %v48, 1
  %vm61 = vcmp.ge.s32.totalorder %v49, 1
  %vm62 = vcmp.ge.s32.totalorder %v50, 1
  %vm63 = vcmp.ge.s32.totalorder %v51, 1
  %vm64 = vcmp.lt.s32.totalorder %v48, 15
  %vm65 = vcmp.lt.s32.totalorder %v49, 15
  %vm66 = vcmp.lt.s32.totalorder %v50, 15
  %vm67 = vcmp.lt.s32.totalorder %v51, 15
  %vm68 = vcmp.lt.s32.totalorder %v48, 14
  %vm69 = vcmp.lt.s32.totalorder %v49, 14
  %vm70 = vcmp.lt.s32.totalorder %v50, 14
  %vm71 = vcmp.lt.s32.totalorder %v51, 14
  %vm72 = vcmp.ge.s32.totalorder %v52, 32
  %vm73 = vcmp.ge.s32.totalorder %v53, 32
  %vm74 = vcmp.ge.s32.totalorder %v54, 32
  %vm75 = vcmp.ge.s32.totalorder %v55, 32
  %vm76 = vcmp.ge.s32.totalorder %v52, 16
  %vm77 = vcmp.ge.s32.totalorder %v53, 16
  %vm78 = vcmp.ge.s32.totalorder %v54, 16
  %vm79 = vcmp.ge.s32.totalorder %v55, 16
  %vm80 = vcmp.lt.s32.totalorder %v52, 240
  %vm81 = vcmp.lt.s32.totalorder %v53, 240
  %vm82 = vcmp.lt.s32.totalorder %v54, 240
  %vm83 = vcmp.lt.s32.totalorder %v55, 240
  %vm84 = vcmp.lt.s32.totalorder %v52, 224
  %vm85 = vcmp.lt.s32.totalorder %v53, 224
  %vm86 = vcmp.lt.s32.totalorder %v54, 224
  %vm87 = vcmp.lt.s32.totalorder %v55, 224
  %vm88 = vmand %vm72, %vm56
  %vm89 = vmand %vm73, %vm57
  %vm90 = vmand %vm74, %vm58
  %vm91 = vmand %vm75, %vm59
  %v92 = vld [vmem:[%s1] sm:$0xff]
  %v93 = vld [vmem:[%s1 + $0x8] sm:$0xff]
  %v94 = vsel %vm88, 1, 0
  %v95 = vsel %vm89, 1, 0
  %v96 = vsel %vm90, 1, 0
  %v97 = vsel %vm91, 1, 0
  %vm98 = vcmp.eq.s32.totalorder %v94, 1
  %vm99 = vcmp.eq.s32.totalorder %v95, 1
  %vm100 = vcmp.eq.s32.totalorder %v96, 1
  %vm101 = vcmp.eq.s32.totalorder %v97, 1
  %104 = vst [vmem:[#allocation1] ss:$2 sm:$0xff] %v92
  %s105 = scalar_lea.vmem [#allocation1], 16
  %106 = vst [vmem:[%s105] ss:$2 sm:$0xff] %v93
  %v107 = vld.sshfl [vmem:[#allocation1] sm:$0xff pattern:$0x75316420]
  %v108 = vld.sshfl [vmem:[#allocation1 + $0x8] sm:$0xff pattern:$0x75316420]
  %v109 = vld.sshfl [vmem:[#allocation1 + $0x10] sm:$0xff pattern:$0x75316420]
  %v110 = vld.sshfl [vmem:[#allocation1 + $0x18] sm:$0xff pattern:$0x75316420]
  %v115 = vsel %vm98, %v107, 0.0
  %v116 = vsel %vm99, %v108, 0.0
  %v117 = vsel %vm100, %v109, 0.0
  %v118 = vsel %vm101, %v110, 0.0
  %119 = vst [vmem:[#allocation2] sm:$0xf] %v115
  %120 = vst [vmem:[#allocation2 + $0x8] sm:$0xf] %v116
  %121 = vst [vmem:[#allocation2 + $0x10] sm:$0xf] %v117
  %122 = vst [vmem:[#allocation2 + $0x18] sm:$0xf] %v118
  %vm123 = vmand %vm72, %vm60
  %vm124 = vmand %vm73, %vm61
  %vm125 = vmand %vm74, %vm62
  %vm126 = vmand %vm75, %vm63
  %v127 = vld [vmem:[%s1] sm:$0xff]
  %v128 = vld [vmem:[%s1 + $0x8] sm:$0xff]
  %v129 = vld [vmem:[%s1 + $0x10] sm:$0xf]
  %v130 = vsel %vm123, 1, 0
  %v131 = vsel %vm124, 1, 0
  %v132 = vsel %vm125, 1, 0
  %v133 = vsel %vm126, 1, 0
  %vm134 = vcmp.eq.s32.totalorder %v130, 1
  %vm135 = vcmp.eq.s32.totalorder %v131, 1
  %vm136 = vcmp.eq.s32.totalorder %v132, 1
  %vm137 = vcmp.eq.s32.totalorder %v133, 1
  %141 = vst [vmem:[#allocation1] ss:$2 sm:$0xff] %v127
  %s142 = scalar_lea.vmem [#allocation1], 16
  %143 = vst [vmem:[%s142] ss:$2 sm:$0xff] %v128
  %s144 = scalar_lea.vmem [#allocation1], 32
  %145 = vst [vmem:[%s144] ss:$2 sm:$0xff] %v129
  %v146 = vld.sshfl [vmem:[#allocation1] sm:$0xff pattern:$0x75316420]
  %v147 = vld.sshfl [vmem:[#allocation1 + $0x8] sm:$0xff pattern:$0x75316420]
  %v148 = vld.sshfl [vmem:[#allocation1 + $0x10] sm:$0xff pattern:$0x75316420]
  %v149 = vld.sshfl [vmem:[#allocation1 + $0x18] sm:$0xff pattern:$0x75316420]
  %v150 = vld.sshfl [vmem:[#allocation1 + $0x20] sm:$0xff pattern:$0x75316420]
  %151 = vrot.lane.b32.xlu0 %v146, 127
  %v152 = vpop.permute.xlu0 %151
  %153 = vrot.lane.b32.xlu0 %v147, 127
  %v154 = vpop.permute.xlu0 %153
  %155 = vrot.lane.b32.xlu0 %v148, 127
  %v156 = vpop.permute.xlu0 %155
  %157 = vrot.lane.b32.xlu0 %v149, 127
  %v158 = vpop.permute.xlu0 %157
  %159 = vrot.lane.b32.xlu0 %v150, 127
  %v160 = vpop.permute.xlu0 %159
  %vm161 = vcmask 1039360
  %v162 = vsel %vm161, %v152, %v154
  %v163 = vsel %vm161, %v154, %v156
  %v164 = vsel %vm161, %v156, %v158
  %v165 = vsel %vm161, %v158, %v160
  %v170 = vsel %vm134, %v162, 0.0
  %v171 = vsel %vm135, %v163, 0.0
  %v172 = vsel %vm136, %v164, 0.0
  %v173 = vsel %vm137, %v165, 0.0
  %v178 = vrot.slane %v170, 4
  %v179 = vrot.slane %v171, 4
  %v180 = vrot.slane %v172, 4
  %v181 = vrot.slane %v173, 4
  %186 = vst [vmem:[#allocation2] sm:$0xf0] %v178
  %187 = vst [vmem:[#allocation2 + $0x8] sm:$0xf0] %v179
  %188 = vst [vmem:[#allocation2 + $0x10] sm:$0xf0] %v180
  %189 = vst [vmem:[#allocation2 + $0x18] sm:$0xf0] %v181
  %v190 = vld [vmem:[%s1] sm:$0xff]
  %v191 = vld [vmem:[%s1 + $0x8] sm:$0xff]
  %v192 = vld [vmem:[%s1 + $0x10] sm:$0xf]
  %v193 = vsel %vm72, 1, 0
  %v194 = vsel %vm73, 1, 0
  %v195 = vsel %vm74, 1, 0
  %v196 = vsel %vm75, 1, 0
  %vm197 = vcmp.eq.s32.totalorder %v193, 1
  %vm198 = vcmp.eq.s32.totalorder %v194, 1
  %vm199 = vcmp.eq.s32.totalorder %v195, 1
  %vm200 = vcmp.eq.s32.totalorder %v196, 1
  %204 = vst [vmem:[#allocation1] ss:$2 sm:$0xff] %v190
  %s205 = scalar_lea.vmem [#allocation1], 16
  %206 = vst [vmem:[%s205] ss:$2 sm:$0xff] %v191
  %s207 = scalar_lea.vmem [#allocation1], 32
  %208 = vst [vmem:[%s207] ss:$2 sm:$0xff] %v192
  %v209 = vld.sshfl [vmem:[#allocation1] sm:$0xff pattern:$0x75316420]
  %v210 = vld.sshfl [vmem:[#allocation1 + $0x8] sm:$0xff pattern:$0x75316420]
  %v211 = vld.sshfl [vmem:[#allocation1 + $0x10] sm:$0xff pattern:$0x75316420]
  %v212 = vld.sshfl [vmem:[#allocation1 + $0x18] sm:$0xff pattern:$0x75316420]
  %v213 = vld.sshfl [vmem:[#allocation1 + $0x20] sm:$0xff pattern:$0x75316420]
  %214 = vrot.lane.b32.xlu0 %v209, 126
  %v215 = vpop.permute.xlu0 %214
  %216 = vrot.lane.b32.xlu0 %v210, 126
  %v217 = vpop.permute.xlu0 %216
  %218 = vrot.lane.b32.xlu0 %v211, 126
  %v219 = vpop.permute.xlu0 %218
  %220 = vrot.lane.b32.xlu0 %v212, 126
  %v221 = vpop.permute.xlu0 %220
  %222 = vrot.lane.b32.xlu0 %v213, 126
  %v223 = vpop.permute.xlu0 %222
  %vm224 = vcmask 1031168
  %v225 = vsel %vm224, %v215, %v217
  %v226 = vsel %vm224, %v217, %v219
  %v227 = vsel %vm224, %v219, %v221
  %v228 = vsel %vm224, %v221, %v223
  %v233 = vsel %vm197, %v225, 0.0
  %v234 = vsel %vm198, %v226, 0.0
  %v235 = vsel %vm199, %v227, 0.0
  %v236 = vsel %vm200, %v228, 0.0
  %237 = vst [vmem:[#allocation2 + $0x20] sm:$0xf] %v233
  %238 = vst [vmem:[#allocation2 + $0x28] sm:$0xf] %v234
  %239 = vst [vmem:[#allocation2 + $0x30] sm:$0xf] %v235
  %240 = vst [vmem:[#allocation2 + $0x38] sm:$0xf] %v236
  %vm241 = vmand %vm72, %vm64
  %vm242 = vmand %vm73, %vm65
  %vm243 = vmand %vm74, %vm66
  %vm244 = vmand %vm75, %vm67
  %v245 = vld [vmem:[%s1] sm:$0xff]
  %v246 = vld [vmem:[%s1 + $0x8] sm:$0xff]
  %v247 = vld [vmem:[%s1 + $0x10] sm:$0xf]
  %v248 = vsel %vm241, 1, 0
  %v249 = vsel %vm242, 1, 0
  %v250 = vsel %vm243, 1, 0
  %v251 = vsel %vm244, 1, 0
  %vm252 = vcmp.eq.s32.totalorder %v248, 1
  %vm253 = vcmp.eq.s32.totalorder %v249, 1
  %vm254 = vcmp.eq.s32.totalorder %v250, 1
  %vm255 = vcmp.eq.s32.totalorder %v251, 1
  %259 = vst [vmem:[#allocation1] ss:$2 sm:$0xff] %v245
  %s260 = scalar_lea.vmem [#allocation1], 16
  %261 = vst [vmem:[%s260] ss:$2 sm:$0xff] %v246
  %s262 = scalar_lea.vmem [#allocation1], 32
  %263 = vst [vmem:[%s262] ss:$2 sm:$0xff] %v247
  %v264 = vld.sshfl [vmem:[#allocation1] sm:$0xff pattern:$0x75316420]
  %v265 = vld.sshfl [vmem:[#allocation1 + $0x8] sm:$0xff pattern:$0x75316420]
  %v266 = vld.sshfl [vmem:[#allocation1 + $0x10] sm:$0xff pattern:$0x75316420]
  %v267 = vld.sshfl [vmem:[#allocation1 + $0x18] sm:$0xff pattern:$0x75316420]
  %v268 = vld.sshfl [vmem:[#allocation1 + $0x20] sm:$0xff pattern:$0x75316420]
  %269 = vrot.lane.b32.xlu0 %v264, 125
  %v270 = vpop.permute.xlu0 %269
  %271 = vrot.lane.b32.xlu0 %v265, 125
  %v272 = vpop.permute.xlu0 %271
  %273 = vrot.lane.b32.xlu0 %v266, 125
  %v274 = vpop.permute.xlu0 %273
  %275 = vrot.lane.b32.xlu0 %v267, 125
  %v276 = vpop.permute.xlu0 %275
  %277 = vrot.lane.b32.xlu0 %v268, 125
  %v278 = vpop.permute.xlu0 %277
  %vm279 = vcmask 1022976
  %v280 = vsel %vm279, %v270, %v272
  %v281 = vsel %vm279, %v272, %v274
  %v282 = vsel %vm279, %v274, %v276
  %v283 = vsel %vm279, %v276, %v278
  %v288 = vsel %vm252, %v280, 0.0
  %v289 = vsel %vm253, %v281, 0.0
  %v290 = vsel %vm254, %v282, 0.0
  %v291 = vsel %vm255, %v283, 0.0
  %v296 = vrot.slane %v288, 4
  %v297 = vrot.slane %v289, 4
  %v298 = vrot.slane %v290, 4
  %v299 = vrot.slane %v291, 4
  %304 = vst [vmem:[#allocation2 + $0x20] sm:$0xf0] %v296
  %305 = vst [vmem:[#allocation2 + $0x28] sm:$0xf0] %v297
  %306 = vst [vmem:[#allocation2 + $0x30] sm:$0xf0] %v298
  %307 = vst [vmem:[#allocation2 + $0x38] sm:$0xf0] %v299
  %vm308 = vmand %vm72, %vm68
  %vm309 = vmand %vm73, %vm69
  %vm310 = vmand %vm74, %vm70
  %vm311 = vmand %vm75, %vm71
  %v312 = vld [vmem:[%s1] sm:$0xff]
  %v313 = vld [vmem:[%s1 + $0x8] sm:$0xff]
  %v314 = vld [vmem:[%s1 + $0x10] sm:$0xf]
  %v315 = vsel %vm308, 1, 0
  %v316 = vsel %vm309, 1, 0
  %v317 = vsel %vm310, 1, 0
  %v318 = vsel %vm311, 1, 0
  %vm319 = vcmp.eq.s32.totalorder %v315, 1
  %vm320 = vcmp.eq.s32.totalorder %v316, 1
  %vm321 = vcmp.eq.s32.totalorder %v317, 1
  %vm322 = vcmp.eq.s32.totalorder %v318, 1
  %326 = vst [vmem:[#allocation1] ss:$2 sm:$0xff] %v312
  %s327 = scalar_lea.vmem [#allocation1], 16
  %328 = vst [vmem:[%s327] ss:$2 sm:$0xff] %v313
  %s329 = scalar_lea.vmem [#allocation1], 32
  %330 = vst [vmem:[%s329] ss:$2 sm:$0xff] %v314
  %v331 = vld.sshfl [vmem:[#allocation1] sm:$0xff pattern:$0x75316420]
  %v332 = vld.sshfl [vmem:[#allocation1 + $0x8] sm:$0xff pattern:$0x75316420]
  %v333 = vld.sshfl [vmem:[#allocation1 + $0x10] sm:$0xff pattern:$0x75316420]
  %v334 = vld.sshfl [vmem:[#allocation1 + $0x18] sm:$0xff pattern:$0x75316420]
  %v335 = vld.sshfl [vmem:[#allocation1 + $0x20] sm:$0xff pattern:$0x75316420]
  %336 = vrot.lane.b32.xlu0 %v331, 124
  %v337 = vpop.permute.xlu0 %336
  %338 = vrot.lane.b32.xlu0 %v332, 124
  %v339 = vpop.permute.xlu0 %338
  %340 = vrot.lane.b32.xlu0 %v333, 124
  %v341 = vpop.permute.xlu0 %340
  %342 = vrot.lane.b32.xlu0 %v334, 124
  %v343 = vpop.permute.xlu0 %342
  %344 = vrot.lane.b32.xlu0 %v335, 124
  %v345 = vpop.permute.xlu0 %344
  %vm346 = vcmask 1014784
  %v347 = vsel %vm346, %v337, %v339
  %v348 = vsel %vm346, %v339, %v341
  %v349 = vsel %vm346, %v341, %v343
  %v350 = vsel %vm346, %v343, %v345
  %v355 = vsel %vm319, %v347, 0.0
  %v356 = vsel %vm320, %v348, 0.0
  %v357 = vsel %vm321, %v349, 0.0
  %v358 = vsel %vm322, %v350, 0.0
  %359 = vst [vmem:[#allocation2 + $0x40] sm:$0xf] %v355
  %360 = vst [vmem:[#allocation2 + $0x48] sm:$0xf] %v356
  %361 = vst [vmem:[#allocation2 + $0x50] sm:$0xf] %v357
  %362 = vst [vmem:[#allocation2 + $0x58] sm:$0xf] %v358
  %vm363 = vmand %vm76, %vm56
  %vm364 = vmand %vm77, %vm57
  %vm365 = vmand %vm78, %vm58
  %vm366 = vmand %vm79, %vm59
  %v367 = vld [vmem:[%s1] sm:$0xff]
  %v368 = vld [vmem:[%s1 + $0x8] sm:$0xff]
  %v369 = vld [vmem:[%s1 + $0x10] sm:$0xf]
  %v370 = vsel %vm363, 1, 0
  %v371 = vsel %vm364, 1, 0
  %v372 = vsel %vm365, 1, 0
  %v373 = vsel %vm366, 1, 0
  %vm374 = vcmp.eq.s32.totalorder %v370, 1
  %vm375 = vcmp.eq.s32.totalorder %v371, 1
  %vm376 = vcmp.eq.s32.totalorder %v372, 1
  %vm377 = vcmp.eq.s32.totalorder %v373, 1
  %381 = vst [vmem:[#allocation1] ss:$2 sm:$0xff] %v367
  %s382 = scalar_lea.vmem [#allocation1], 16
  %383 = vst [vmem:[%s382] ss:$2 sm:$0xff] %v368
  %s384 = scalar_lea.vmem [#allocation1], 32
  %385 = vst [vmem:[%s384] ss:$2 sm:$0xff] %v369
  %v386 = vld.sshfl [vmem:[#allocation1] sm:$0xff pattern:$0x75316420]
  %v387 = vld.sshfl [vmem:[#allocation1 + $0x8] sm:$0xff pattern:$0x75316420]
  %v388 = vld.sshfl [vmem:[#allocation1 + $0x10] sm:$0xff pattern:$0x75316420]
  %v389 = vld.sshfl [vmem:[#allocation1 + $0x18] sm:$0xff pattern:$0x75316420]
  %v390 = vld.sshfl [vmem:[#allocation1 + $0x20] sm:$0xff pattern:$0x75316420]
  %391 = vrot.lane.b32.xlu0 %v386, 112
  %v392 = vpop.permute.xlu0 %391
  %393 = vrot.lane.b32.xlu0 %v387, 112
  %v394 = vpop.permute.xlu0 %393
  %395 = vrot.lane.b32.xlu0 %v388, 112
  %v396 = vpop.permute.xlu0 %395
  %397 = vrot.lane.b32.xlu0 %v389, 112
  %v398 = vpop.permute.xlu0 %397
  %399 = vrot.lane.b32.xlu0 %v390, 112
  %v400 = vpop.permute.xlu0 %399
  %vm401 = vcmask 916480
  %v402 = vsel %vm401, %v392, %v394
  %v403 = vsel %vm401, %v394, %v396
  %v404 = vsel %vm401, %v396, %v398
  %v405 = vsel %vm401, %v398, %v400
  %v410 = vsel %vm374, %v402, 0.0
  %v411 = vsel %vm375, %v403, 0.0
  %v412 = vsel %vm376, %v404, 0.0
  %v413 = vsel %vm377, %v405, 0.0
  %v418 = vrot.slane %v410, 4
  %v419 = vrot.slane %v411, 4
  %v420 = vrot.slane %v412, 4
  %v421 = vrot.slane %v413, 4
  %426 = vst [vmem:[#allocation2 + $0x40] sm:$0xf0] %v418
  %427 = vst [vmem:[#allocation2 + $0x48] sm:$0xf0] %v419
  %428 = vst [vmem:[#allocation2 + $0x50] sm:$0xf0] %v420
  %429 = vst [vmem:[#allocation2 + $0x58] sm:$0xf0] %v421
  %vm430 = vmand %vm76, %vm60
  %vm431 = vmand %vm77, %vm61
  %vm432 = vmand %vm78, %vm62
  %vm433 = vmand %vm79, %vm63
  %v434 = vld [vmem:[%s1] sm:$0xff]
  %v435 = vld [vmem:[%s1 + $0x8] sm:$0xff]
  %v436 = vld [vmem:[%s1 + $0x10] sm:$0xf]
  %v437 = vsel %vm430, 1, 0
  %v438 = vsel %vm431, 1, 0
  %v439 = vsel %vm432, 1, 0
  %v440 = vsel %vm433, 1, 0
  %vm441 = vcmp.eq.s32.totalorder %v437, 1
  %vm442 = vcmp.eq.s32.totalorder %v438, 1
  %vm443 = vcmp.eq.s32.totalorder %v439, 1
  %vm444 = vcmp.eq.s32.totalorder %v440, 1
  %448 = vst [vmem:[#allocation1] ss:$2 sm:$0xff] %v434
  %s449 = scalar_lea.vmem [#allocation1], 16
  %450 = vst [vmem:[%s449] ss:$2 sm:$0xff] %v435
  %s451 = scalar_lea.vmem [#allocation1], 32
  %452 = vst [vmem:[%s451] ss:$2 sm:$0xff] %v436
  %v453 = vld.sshfl [vmem:[#allocation1] sm:$0xff pattern:$0x75316420]
  %v454 = vld.sshfl [vmem:[#allocation1 + $0x8] sm:$0xff pattern:$0x75316420]
  %v455 = vld.sshfl [vmem:[#allocation1 + $0x10] sm:$0xff pattern:$0x75316420]
  %v456 = vld.sshfl [vmem:[#allocation1 + $0x18] sm:$0xff pattern:$0x75316420]
  %v457 = vld.sshfl [vmem:[#allocation1 + $0x20] sm:$0xff pattern:$0x75316420]
  %458 = vrot.lane.b32.xlu0 %v453, 111
  %v459 = vpop.permute.xlu0 %458
  %460 = vrot.lane.b32.xlu0 %v454, 111
  %v461 = vpop.permute.xlu0 %460
  %462 = vrot.lane.b32.xlu0 %v455, 111
  %v463 = vpop.permute.xlu0 %462
  %464 = vrot.lane.b32.xlu0 %v456, 111
  %v465 = vpop.permute.xlu0 %464
  %466 = vrot.lane.b32.xlu0 %v457, 111
  %v467 = vpop.permute.xlu0 %466
  %vm468 = vcmask 908288
  %v469 = vsel %vm468, %v459, %v461
  %v470 = vsel %vm468, %v461, %v463
  %v471 = vsel %vm468, %v463, %v465
  %v472 = vsel %vm468, %v465, %v467
  %v477 = vsel %vm441, %v469, 0.0
  %v478 = vsel %vm442, %v470, 0.0
  %v479 = vsel %vm443, %v471, 0.0
  %v480 = vsel %vm444, %v472, 0.0
  %481 = vst [vmem:[#allocation2 + $0x60] sm:$0xf] %v477
  %482 = vst [vmem:[#allocation2 + $0x68] sm:$0xf] %v478
  %483 = vst [vmem:[#allocation2 + $0x70] sm:$0xf] %v479
  %484 = vst [vmem:[#allocation2 + $0x78] sm:$0xf] %v480
  %v485 = vld [vmem:[%s2] sm:$0xff]
  %v486 = vld [vmem:[%s2 + $0x8] sm:$0xff]
  %v487 = vld [vmem:[%s2 + $0x10] sm:$0xf]
  %491 = vst [vmem:[#allocation1] ss:$2 sm:$0xff] %v485
  %s492 = scalar_lea.vmem [#allocation1], 16
  %493 = vst [vmem:[%s492] ss:$2 sm:$0xff] %v486
  %s494 = scalar_lea.vmem [#allocation1], 32
  %495 = vst [vmem:[%s494] ss:$2 sm:$0xff] %v487
  %v496 = vld.sshfl [vmem:[#allocation1] sm:$0xff pattern:$0x75316420]
  %v497 = vld.sshfl [vmem:[#allocation1 + $0x8] sm:$0xff pattern:$0x75316420]
  %v498 = vld.sshfl [vmem:[#allocation1 + $0x10] sm:$0xff pattern:$0x75316420]
  %v499 = vld.sshfl [vmem:[#allocation1 + $0x18] sm:$0xff pattern:$0x75316420]
  %v500 = vld.sshfl [vmem:[#allocation1 + $0x20] sm:$0xff pattern:$0x75316420]
  %501 = vrot.lane.b32.xlu0 %v496, 111
  %v502 = vpop.permute.xlu0 %501
  %503 = vrot.lane.b32.xlu0 %v497, 111
  %v504 = vpop.permute.xlu0 %503
  %505 = vrot.lane.b32.xlu0 %v498, 111
  %v506 = vpop.permute.xlu0 %505
  %507 = vrot.lane.b32.xlu0 %v499, 111
  %v508 = vpop.permute.xlu0 %507
  %509 = vrot.lane.b32.xlu0 %v500, 111
  %v510 = vpop.permute.xlu0 %509
  %v511 = vsel %vm468, %v502, %v504
  %v512 = vsel %vm468, %v504, %v506
  %v513 = vsel %vm468, %v506, %v508
  %v514 = vsel %vm468, %v508, %v510
  %v519 = vsel %vm441, %v511, -3.4028235e+38
  %v520 = vsel %vm442, %v512, -3.4028235e+38
  %v521 = vsel %vm443, %v513, -3.4028235e+38
  %v522 = vsel %vm444, %v514, -3.4028235e+38
  %v523 = vld [vmem:[%s1] sm:$0xff]
  %v524 = vld [vmem:[%s1 + $0x8] sm:$0xff]
  %v525 = vld [vmem:[%s1 + $0x10] sm:$0xf]
  %v526 = vsel %vm76, 1, 0
  %v527 = vsel %vm77, 1, 0
  %v528 = vsel %vm78, 1, 0
  %v529 = vsel %vm79, 1, 0
  %vm530 = vcmp.eq.s32.totalorder %v526, 1
  %vm531 = vcmp.eq.s32.totalorder %v527, 1
  %vm532 = vcmp.eq.s32.totalorder %v528, 1
  %vm533 = vcmp.eq.s32.totalorder %v529, 1
  %537 = vst [vmem:[#allocation1] ss:$2 sm:$0xff] %v523
  %s538 = scalar_lea.vmem [#allocation1], 16
  %539 = vst [vmem:[%s538] ss:$2 sm:$0xff] %v524
  %s540 = scalar_lea.vmem [#allocation1], 32
  %541 = vst [vmem:[%s540] ss:$2 sm:$0xff] %v525
  %v542 = vld.sshfl [vmem:[#allocation1] sm:$0xff pattern:$0x75316420]
  %v543 = vld.sshfl [vmem:[#allocation1 + $0x8] sm:$0xff pattern:$0x75316420]
  %v544 = vld.sshfl [vmem:[#allocation1 + $0x10] sm:$0xff pattern:$0x75316420]
  %v545 = vld.sshfl [vmem:[#allocation1 + $0x18] sm:$0xff pattern:$0x75316420]
  %v546 = vld.sshfl [vmem:[#allocation1 + $0x20] sm:$0xff pattern:$0x75316420]
  %547 = vrot.lane.b32.xlu0 %v542, 110
  %v548 = vpop.permute.xlu0 %547
  %549 = vrot.lane.b32.xlu0 %v543, 110
  %v550 = vpop.permute.xlu0 %549
  %551 = vrot.lane.b32.xlu0 %v544, 110
  %v552 = vpop.permute.xlu0 %551
  %553 = vrot.lane.b32.xlu0 %v545, 110
  %v554 = vpop.permute.xlu0 %553
  %555 = vrot.lane.b32.xlu0 %v546, 110
  %v556 = vpop.permute.xlu0 %555
  %vm557 = vcmask 900096
  %v558 = vsel %vm557, %v548, %v550
  %v559 = vsel %vm557, %v550, %v552
  %v560 = vsel %vm557, %v552, %v554
  %v561 = vsel %vm557, %v554, %v556
  %v566 = vsel %vm530, %v558, 0.0
  %v567 = vsel %vm531, %v559, 0.0
  %v568 = vsel %vm532, %v560, 0.0
  %v569 = vsel %vm533, %v561, 0.0
  %v574 = vrot.slane %v566, 4
  %v575 = vrot.slane %v567, 4
  %v576 = vrot.slane %v568, 4
  %v577 = vrot.slane %v569, 4
  %582 = vst [vmem:[#allocation2 + $0x60] sm:$0xf0] %v574
  %583 = vst [vmem:[#allocation2 + $0x68] sm:$0xf0] %v575
  %584 = vst [vmem:[#allocation2 + $0x70] sm:$0xf0] %v576
  %585 = vst [vmem:[#allocation2 + $0x78] sm:$0xf0] %v577
  %v586 = vld [vmem:[%s2] sm:$0xff]
  %v587 = vld [vmem:[%s2 + $0x8] sm:$0xff]
  %v588 = vld [vmem:[%s2 + $0x10] sm:$0xf]
  %592 = vst [vmem:[#allocation1] ss:$2 sm:$0xff] %v586
  %s593 = scalar_lea.vmem [#allocation1], 16
  %594 = vst [vmem:[%s593] ss:$2 sm:$0xff] %v587
  %s595 = scalar_lea.vmem [#allocation1], 32
  %596 = vst [vmem:[%s595] ss:$2 sm:$0xff] %v588
  %v597 = vld.sshfl [vmem:[#allocation1] sm:$0xff pattern:$0x75316420]
  %v598 = vld.sshfl [vmem:[#allocation1 + $0x8] sm:$0xff pattern:$0x75316420]
  %v599 = vld.sshfl [vmem:[#allocation1 + $0x10] sm:$0xff pattern:$0x75316420]
  %v600 = vld.sshfl [vmem:[#allocation1 + $0x18] sm:$0xff pattern:$0x75316420]
  %v601 = vld.sshfl [vmem:[#allocation1 + $0x20] sm:$0xff pattern:$0x75316420]
  %602 = vrot.lane.b32.xlu0 %v597, 110
  %v603 = vpop.permute.xlu0 %602
  %604 = vrot.lane.b32.xlu0 %v598, 110
  %v605 = vpop.permute.xlu0 %604
  %606 = vrot.lane.b32.xlu0 %v599, 110
  %v607 = vpop.permute.xlu0 %606
  %608 = vrot.lane.b32.xlu0 %v600, 110
  %v609 = vpop.permute.xlu0 %608
  %610 = vrot.lane.b32.xlu0 %v601, 110
  %v611 = vpop.permute.xlu0 %610
  %v612 = vsel %vm557, %v603, %v605
  %v613 = vsel %vm557, %v605, %v607
  %v614 = vsel %vm557, %v607, %v609
  %v615 = vsel %vm557, %v609, %v611
  %v620 = vsel %vm530, %v612, -3.4028235e+38
  %v621 = vsel %vm531, %v613, -3.4028235e+38
  %v622 = vsel %vm532, %v614, -3.4028235e+38
  %v623 = vsel %vm533, %v615, -3.4028235e+38
  %v624 = vmax.f32 %v519, %v620
  %v625 = vmax.f32 %v520, %v621
  %v626 = vmax.f32 %v521, %v622
  %v627 = vmax.f32 %v522, %v623
  %vm628 = vmand %vm76, %vm64
  %vm629 = vmand %vm77, %vm65
  %vm630 = vmand %vm78, %vm66
  %vm631 = vmand %vm79, %vm67
  %v632 = vld [vmem:[%s1] sm:$0xff]
  %v633 = vld [vmem:[%s1 + $0x8] sm:$0xff]
  %v634 = vld [vmem:[%s1 + $0x10] sm:$0xf]
  %v635 = vsel %vm628, 1, 0
  %v636 = vsel %vm629, 1, 0
  %v637 = vsel %vm630, 1, 0
  %v638 = vsel %vm631, 1, 0
  %vm639 = vcmp.eq.s32.totalorder %v635, 1
  %vm640 = vcmp.eq.s32.totalorder %v636, 1
  %vm641 = vcmp.eq.s32.totalorder %v637, 1
  %vm642 = vcmp.eq.s32.totalorder %v638, 1
  %646 = vst [vmem:[#allocation1] ss:$2 sm:$0xff] %v632
  %s647 = scalar_lea.vmem [#allocation1], 16
  %648 = vst [vmem:[%s647] ss:$2 sm:$0xff] %v633
  %s649 = scalar_lea.vmem [#allocation1], 32
  %650 = vst [vmem:[%s649] ss:$2 sm:$0xff] %v634
  %v651 = vld.sshfl [vmem:[#allocation1] sm:$0xff pattern:$0x75316420]
  %v652 = vld.sshfl [vmem:[#allocation1 + $0x8] sm:$0xff pattern:$0x75316420]
  %v653 = vld.sshfl [vmem:[#allocation1 + $0x10] sm:$0xff pattern:$0x75316420]
  %v654 = vld.sshfl [vmem:[#allocation1 + $0x18] sm:$0xff pattern:$0x75316420]
  %v655 = vld.sshfl [vmem:[#allocation1 + $0x20] sm:$0xff pattern:$0x75316420]
  %656 = vrot.lane.b32.xlu0 %v651, 109
  %v657 = vpop.permute.xlu0 %656
  %658 = vrot.lane.b32.xlu0 %v652, 109
  %v659 = vpop.permute.xlu0 %658
  %660 = vrot.lane.b32.xlu0 %v653, 109
  %v661 = vpop.permute.xlu0 %660
  %662 = vrot.lane.b32.xlu0 %v654, 109
  %v663 = vpop.permute.xlu0 %662
  %664 = vrot.lane.b32.xlu0 %v655, 109
  %v665 = vpop.permute.xlu0 %664
  %vm666 = vcmask 891904
  %v667 = vsel %vm666, %v657, %v659
  %v668 = vsel %vm666, %v659, %v661
  %v669 = vsel %vm666, %v661, %v663
  %v670 = vsel %vm666, %v663, %v665
  %v675 = vsel %vm639, %v667, 0.0
  %v676 = vsel %vm640, %v668, 0.0
  %v677 = vsel %vm641, %v669, 0.0
  %v678 = vsel %vm642, %v670, 0.0
  %679 = vst [vmem:[#allocation2 + $0x80] sm:$0xf] %v675
  %680 = vst [vmem:[#allocation2 + $0x88] sm:$0xf] %v676
  %681 = vst [vmem:[#allocation2 + $0x90] sm:$0xf] %v677
  %682 = vst [vmem:[#allocation2 + $0x98] sm:$0xf] %v678
  %v683 = vld [vmem:[%s2] sm:$0xff]
  %v684 = vld [vmem:[%s2 + $0x8] sm:$0xff]
  %v685 = vld [vmem:[%s2 + $0x10] sm:$0xf]
  %689 = vst [vmem:[#allocation1] ss:$2 sm:$0xff] %v683
  %s690 = scalar_lea.vmem [#allocation1], 16
  %691 = vst [vmem:[%s690] ss:$2 sm:$0xff] %v684
  %s692 = scalar_lea.vmem [#allocation1], 32
  %693 = vst [vmem:[%s692] ss:$2 sm:$0xff] %v685
  %v694 = vld.sshfl [vmem:[#allocation1] sm:$0xff pattern:$0x75316420]
  %v695 = vld.sshfl [vmem:[#allocation1 + $0x8] sm:$0xff pattern:$0x75316420]
  %v696 = vld.sshfl [vmem:[#allocation1 + $0x10] sm:$0xff pattern:$0x75316420]
  %v697 = vld.sshfl [vmem:[#allocation1 + $0x18] sm:$0xff pattern:$0x75316420]
  %v698 = vld.sshfl [vmem:[#allocation1 + $0x20] sm:$0xff pattern:$0x75316420]
  %699 = vrot.lane.b32.xlu0 %v694, 109
  %v700 = vpop.permute.xlu0 %699
  %701 = vrot.lane.b32.xlu0 %v695, 109
  %v702 = vpop.permute.xlu0 %701
  %703 = vrot.lane.b32.xlu0 %v696, 109
  %v704 = vpop.permute.xlu0 %703
  %705 = vrot.lane.b32.xlu0 %v697, 109
  %v706 = vpop.permute.xlu0 %705
  %707 = vrot.lane.b32.xlu0 %v698, 109
  %v708 = vpop.permute.xlu0 %707
  %v709 = vsel %vm666, %v700, %v702
  %v710 = vsel %vm666, %v702, %v704
  %v711 = vsel %vm666, %v704, %v706
  %v712 = vsel %vm666, %v706, %v708
  %v717 = vsel %vm639, %v709, -3.4028235e+38
  %v718 = vsel %vm640, %v710, -3.4028235e+38
  %v719 = vsel %vm641, %v711, -3.4028235e+38
  %v720 = vsel %vm642, %v712, -3.4028235e+38
  %v721 = vmax.f32 %v624, %v717
  %v722 = vmax.f32 %v625, %v718
  %v723 = vmax.f32 %v626, %v719
  %v724 = vmax.f32 %v627, %v720
  %vm725 = vmand %vm76, %vm68
  %vm726 = vmand %vm77, %vm69
  %vm727 = vmand %vm78, %vm70
  %vm728 = vmand %vm79, %vm71
  %v729 = vld [vmem:[%s1] sm:$0xff]
  %v730 = vld [vmem:[%s1 + $0x8] sm:$0xff]
  %v731 = vld [vmem:[%s1 + $0x10] sm:$0xf]
  %v732 = vsel %vm725, 1, 0
  %v733 = vsel %vm726, 1, 0
  %v734 = vsel %vm727, 1, 0
  %v735 = vsel %vm728, 1, 0
  %vm736 = vcmp.eq.s32.totalorder %v732, 1
  %vm737 = vcmp.eq.s32.totalorder %v733, 1
  %vm738 = vcmp.eq.s32.totalorder %v734, 1
  %vm739 = vcmp.eq.s32.totalorder %v735, 1
  %743 = vst [vmem:[#allocation1] ss:$2 sm:$0xff] %v729
  %s744 = scalar_lea.vmem [#allocation1], 16
  %745 = vst [vmem:[%s744] ss:$2 sm:$0xff] %v730
  %s746 = scalar_lea.vmem [#allocation1], 32
  %747 = vst [vmem:[%s746] ss:$2 sm:$0xff] %v731
  %v748 = vld.sshfl [vmem:[#allocation1] sm:$0xff pattern:$0x75316420]
  %v749 = vld.sshfl [vmem:[#allocation1 + $0x8] sm:$0xff pattern:$0x75316420]
  %v750 = vld.sshfl [vmem:[#allocation1 + $0x10] sm:$0xff pattern:$0x75316420]
  %v751 = vld.sshfl [vmem:[#allocation1 + $0x18] sm:$0xff pattern:$0x75316420]
  %v752 = vld.sshfl [vmem:[#allocation1 + $0x20] sm:$0xff pattern:$0x75316420]
  %753 = vrot.lane.b32.xlu0 %v748, 108
  %v754 = vpop.permute.xlu0 %753
  %755 = vrot.lane.b32.xlu0 %v749, 108
  %v756 = vpop.permute.xlu0 %755
  %757 = vrot.lane.b32.xlu0 %v750, 108
  %v758 = vpop.permute.xlu0 %757
  %759 = vrot.lane.b32.xlu0 %v751, 108
  %v760 = vpop.permute.xlu0 %759
  %761 = vrot.lane.b32.xlu0 %v752, 108
  %v762 = vpop.permute.xlu0 %761
  %vm763 = vcmask 883712
  %v764 = vsel %vm763, %v754, %v756
  %v765 = vsel %vm763, %v756, %v758
  %v766 = vsel %vm763, %v758, %v760
  %v767 = vsel %vm763, %v760, %v762
  %v772 = vsel %vm736, %v764, 0.0
  %v773 = vsel %vm737, %v765, 0.0
  %v774 = vsel %vm738, %v766, 0.0
  %v775 = vsel %vm739, %v767, 0.0
  %v780 = vrot.slane %v772, 4
  %v781 = vrot.slane %v773, 4
  %v782 = vrot.slane %v774, 4
  %v783 = vrot.slane %v775, 4
  %788 = vst [vmem:[#allocation2 + $0x80] sm:$0xf0] %v780
  %789 = vst [vmem:[#allocation2 + $0x88] sm:$0xf0] %v781
  %790 = vst [vmem:[#allocation2 + $0x90] sm:$0xf0] %v782
  %791 = vst [vmem:[#allocation2 + $0x98] sm:$0xf0] %v783
  %v792 = vld [vmem:[%s1] sm:$0xff]
  %v793 = vld [vmem:[%s1 + $0x8] sm:$0xff]
  %v794 = vld [vmem:[%s1 + $0x10] sm:$0xf]
  %v795 = vsel %vm56, 1, 0
  %v796 = vsel %vm57, 1, 0
  %v797 = vsel %vm58, 1, 0
  %v798 = vsel %vm59, 1, 0
  %vm799 = vcmp.eq.s32.totalorder %v795, 1
  %vm800 = vcmp.eq.s32.totalorder %v796, 1
  %vm801 = vcmp.eq.s32.totalorder %v797, 1
  %vm802 = vcmp.eq.s32.totalorder %v798, 1
  %806 = vst [vmem:[#allocation1] ss:$2 sm:$0xff] %v792
  %s807 = scalar_lea.vmem [#allocation1], 16
  %808 = vst [vmem:[%s807] ss:$2 sm:$0xff] %v793
  %s809 = scalar_lea.vmem [#allocation1], 32
  %810 = vst [vmem:[%s809] ss:$2 sm:$0xff] %v794
  %v811 = vld.sshfl [vmem:[#allocation1] sm:$0xff pattern:$0x75316420]
  %v812 = vld.sshfl [vmem:[#allocation1 + $0x8] sm:$0xff pattern:$0x75316420]
  %v813 = vld.sshfl [vmem:[#allocation1 + $0x10] sm:$0xff pattern:$0x75316420]
  %v814 = vld.sshfl [vmem:[#allocation1 + $0x18] sm:$0xff pattern:$0x75316420]
  %v815 = vld.sshfl [vmem:[#allocation1 + $0x20] sm:$0xff pattern:$0x75316420]
  %816 = vrot.lane.b32.xlu0 %v811, 96
  %v817 = vpop.permute.xlu0 %816
  %818 = vrot.lane.b32.xlu0 %v812, 96
  %v819 = vpop.permute.xlu0 %818
  %820 = vrot.lane.b32.xlu0 %v813, 96
  %v821 = vpop.permute.xlu0 %820
  %822 = vrot.lane.b32.xlu0 %v814, 96
  %v823 = vpop.permute.xlu0 %822
  %824 = vrot.lane.b32.xlu0 %v815, 96
  %v825 = vpop.permute.xlu0 %824
  %vm826 = vcmask 785408
  %v827 = vsel %vm826, %v817, %v819
  %v828 = vsel %vm826, %v819, %v821
  %v829 = vsel %vm826, %v821, %v823
  %v830 = vsel %vm826, %v823, %v825
  %v835 = vsel %vm799, %v827, 0.0
  %v836 = vsel %vm800, %v828, 0.0
  %v837 = vsel %vm801, %v829, 0.0
  %v838 = vsel %vm802, %v830, 0.0
  %839 = vst [vmem:[#allocation2 + $0xa0] sm:$0xf] %v835
  %840 = vst [vmem:[#allocation2 + $0xa8] sm:$0xf] %v836
  %841 = vst [vmem:[#allocation2 + $0xb0] sm:$0xf] %v837
  %842 = vst [vmem:[#allocation2 + $0xb8] sm:$0xf] %v838
  %v843 = vld [vmem:[%s1] sm:$0xff]
  %v844 = vld [vmem:[%s1 + $0x8] sm:$0xff]
  %v845 = vld [vmem:[%s1 + $0x10] sm:$0xf]
  %v846 = vsel %vm60, 1, 0
  %v847 = vsel %vm61, 1, 0
  %v848 = vsel %vm62, 1, 0
  %v849 = vsel %vm63, 1, 0
  %vm850 = vcmp.eq.s32.totalorder %v846, 1
  %vm851 = vcmp.eq.s32.totalorder %v847, 1
  %vm852 = vcmp.eq.s32.totalorder %v848, 1
  %vm853 = vcmp.eq.s32.totalorder %v849, 1
  %857 = vst [vmem:[#allocation1] ss:$2 sm:$0xff] %v843
  %s858 = scalar_lea.vmem [#allocation1], 16
  %859 = vst [vmem:[%s858] ss:$2 sm:$0xff] %v844
  %s860 = scalar_lea.vmem [#allocation1], 32
  %861 = vst [vmem:[%s860] ss:$2 sm:$0xff] %v845
  %v862 = vld.sshfl [vmem:[#allocation1] sm:$0xff pattern:$0x75316420]
  %v863 = vld.sshfl [vmem:[#allocation1 + $0x8] sm:$0xff pattern:$0x75316420]
  %v864 = vld.sshfl [vmem:[#allocation1 + $0x10] sm:$0xff pattern:$0x75316420]
  %v865 = vld.sshfl [vmem:[#allocation1 + $0x18] sm:$0xff pattern:$0x75316420]
  %v866 = vld.sshfl [vmem:[#allocation1 + $0x20] sm:$0xff pattern:$0x75316420]
  %867 = vrot.lane.b32.xlu0 %v862, 95
  %v868 = vpop.permute.xlu0 %867
  %869 = vrot.lane.b32.xlu0 %v863, 95
  %v870 = vpop.permute.xlu0 %869
  %871 = vrot.lane.b32.xlu0 %v864, 95
  %v872 = vpop.permute.xlu0 %871
  %873 = vrot.lane.b32.xlu0 %v865, 95
  %v874 = vpop.permute.xlu0 %873
  %875 = vrot.lane.b32.xlu0 %v866, 95
  %v876 = vpop.permute.xlu0 %875
  %vm877 = vcmask 777216
  %v878 = vsel %vm877, %v868, %v870
  %v879 = vsel %vm877, %v870, %v872
  %v880 = vsel %vm877, %v872, %v874
  %v881 = vsel %vm877, %v874, %v876
  %v886 = vsel %vm850, %v878, 0.0
  %v887 = vsel %vm851, %v879, 0.0
  %v888 = vsel %vm852, %v880, 0.0
  %v889 = vsel %vm853, %v881, 0.0
  %v894 = vrot.slane %v886, 4
  %v895 = vrot.slane %v887, 4
  %v896 = vrot.slane %v888, 4
  %v897 = vrot.slane %v889, 4
  %902 = vst [vmem:[#allocation2 + $0xa0] sm:$0xf0] %v894
  %903 = vst [vmem:[#allocation2 + $0xa8] sm:$0xf0] %v895
  %904 = vst [vmem:[#allocation2 + $0xb0] sm:$0xf0] %v896
  %905 = vst [vmem:[#allocation2 + $0xb8] sm:$0xf0] %v897
  %v906 = vld [vmem:[%s2] sm:$0xff]
  %v907 = vld [vmem:[%s2 + $0x8] sm:$0xff]
  %v908 = vld [vmem:[%s2 + $0x10] sm:$0xf]
  %912 = vst [vmem:[#allocation1] ss:$2 sm:$0xff] %v906
  %s913 = scalar_lea.vmem [#allocation1], 16
  %914 = vst [vmem:[%s913] ss:$2 sm:$0xff] %v907
  %s915 = scalar_lea.vmem [#allocation1], 32
  %916 = vst [vmem:[%s915] ss:$2 sm:$0xff] %v908
  %v917 = vld.sshfl [vmem:[#allocation1] sm:$0xff pattern:$0x75316420]
  %v918 = vld.sshfl [vmem:[#allocation1 + $0x8] sm:$0xff pattern:$0x75316420]
  %v919 = vld.sshfl [vmem:[#allocation1 + $0x10] sm:$0xff pattern:$0x75316420]
  %v920 = vld.sshfl [vmem:[#allocation1 + $0x18] sm:$0xff pattern:$0x75316420]
  %v921 = vld.sshfl [vmem:[#allocation1 + $0x20] sm:$0xff pattern:$0x75316420]
  %922 = vrot.lane.b32.xlu0 %v917, 95
  %v923 = vpop.permute.xlu0 %922
  %924 = vrot.lane.b32.xlu0 %v918, 95
  %v925 = vpop.permute.xlu0 %924
  %926 = vrot.lane.b32.xlu0 %v919, 95
  %v927 = vpop.permute.xlu0 %926
  %928 = vrot.lane.b32.xlu0 %v920, 95
  %v929 = vpop.permute.xlu0 %928
  %930 = vrot.lane.b32.xlu0 %v921, 95
  %v931 = vpop.permute.xlu0 %930
  %v932 = vsel %vm877, %v923, %v925
  %v933 = vsel %vm877, %v925, %v927
  %v934 = vsel %vm877, %v927, %v929
  %v935 = vsel %vm877, %v929, %v931
  %v940 = vsel %vm850, %v932, -3.4028235e+38
  %v941 = vsel %vm851, %v933, -3.4028235e+38
  %v942 = vsel %vm852, %v934, -3.4028235e+38
  %v943 = vsel %vm853, %v935, -3.4028235e+38
  %v944 = vmax.f32 %v721, %v940
  %v945 = vmax.f32 %v722, %v941
  %v946 = vmax.f32 %v723, %v942
  %v947 = vmax.f32 %v724, %v943
  %v948 = vld [vmem:[%s1] sm:$0xff]
  %v949 = vld [vmem:[%s1 + $0x8] sm:$0xff]
  %v950 = vld [vmem:[%s1 + $0x10] sm:$0xf]
  %954 = vst [vmem:[#allocation1] ss:$2 sm:$0xff] %v948
  %s955 = scalar_lea.vmem [#allocation1], 16
  %956 = vst [vmem:[%s955] ss:$2 sm:$0xff] %v949
  %s957 = scalar_lea.vmem [#allocation1], 32
  %958 = vst [vmem:[%s957] ss:$2 sm:$0xff] %v950
  %v959 = vld.sshfl [vmem:[#allocation1] sm:$0xff pattern:$0x75316420]
  %v960 = vld.sshfl [vmem:[#allocation1 + $0x8] sm:$0xff pattern:$0x75316420]
  %v961 = vld.sshfl [vmem:[#allocation1 + $0x10] sm:$0xff pattern:$0x75316420]
  %v962 = vld.sshfl [vmem:[#allocation1 + $0x18] sm:$0xff pattern:$0x75316420]
  %v963 = vld.sshfl [vmem:[#allocation1 + $0x20] sm:$0xff pattern:$0x75316420]
  %964 = vrot.lane.b32.xlu0 %v959, 94
  %v965 = vpop.permute.xlu0 %964
  %966 = vrot.lane.b32.xlu0 %v960, 94
  %v967 = vpop.permute.xlu0 %966
  %968 = vrot.lane.b32.xlu0 %v961, 94
  %v969 = vpop.permute.xlu0 %968
  %970 = vrot.lane.b32.xlu0 %v962, 94
  %v971 = vpop.permute.xlu0 %970
  %972 = vrot.lane.b32.xlu0 %v963, 94
  %v973 = vpop.permute.xlu0 %972
  %vm974 = vcmask 769024
  %v975 = vsel %vm974, %v965, %v967
  %v976 = vsel %vm974, %v967, %v969
  %v977 = vsel %vm974, %v969, %v971
  %v978 = vsel %vm974, %v971, %v973
  %983 = vst [vmem:[#allocation2 + $0xc0] sm:$0xf] %v975
  %984 = vst [vmem:[#allocation2 + $0xc8] sm:$0xf] %v976
  %985 = vst [vmem:[#allocation2 + $0xd0] sm:$0xf] %v977
  %986 = vst [vmem:[#allocation2 + $0xd8] sm:$0xf] %v978
  %v987 = vld [vmem:[%s2] sm:$0xff]
  %v988 = vld [vmem:[%s2 + $0x8] sm:$0xff]
  %v989 = vld [vmem:[%s2 + $0x10] sm:$0xf]
  %993 = vst [vmem:[#allocation1] ss:$2 sm:$0xff] %v987
  %s994 = scalar_lea.vmem [#allocation1], 16
  %995 = vst [vmem:[%s994] ss:$2 sm:$0xff] %v988
  %s996 = scalar_lea.vmem [#allocation1], 32
  %997 = vst [vmem:[%s996] ss:$2 sm:$0xff] %v989
  %v998 = vld.sshfl [vmem:[#allocation1] sm:$0xff pattern:$0x75316420]
  %v999 = vld.sshfl [vmem:[#allocation1 + $0x8] sm:$0xff pattern:$0x75316420]
  %v1000 = vld.sshfl [vmem:[#allocation1 + $0x10] sm:$0xff pattern:$0x75316420]
  %v1001 = vld.sshfl [vmem:[#allocation1 + $0x18] sm:$0xff pattern:$0x75316420]
  %v1002 = vld.sshfl [vmem:[#allocation1 + $0x20] sm:$0xff pattern:$0x75316420]
  %1003 = vrot.lane.b32.xlu0 %v998, 94
  %v1004 = vpop.permute.xlu0 %1003
  %1005 = vrot.lane.b32.xlu0 %v999, 94
  %v1006 = vpop.permute.xlu0 %1005
  %1007 = vrot.lane.b32.xlu0 %v1000, 94
  %v1008 = vpop.permute.xlu0 %1007
  %1009 = vrot.lane.b32.xlu0 %v1001, 94
  %v1010 = vpop.permute.xlu0 %1009
  %1011 = vrot.lane.b32.xlu0 %v1002, 94
  %v1012 = vpop.permute.xlu0 %1011
  %v1013 = vsel %vm974, %v1004, %v1006
  %v1014 = vsel %vm974, %v1006, %v1008
  %v1015 = vsel %vm974, %v1008, %v1010
  %v1016 = vsel %vm974, %v1010, %v1012
  %v1021 = vmax.f32 %v944, %v1013
  %v1022 = vmax.f32 %v945, %v1014
  %v1023 = vmax.f32 %v946, %v1015
  %v1024 = vmax.f32 %v947, %v1016
  %v1025 = vld [vmem:[%s1] sm:$0xff]
  %v1026 = vld [vmem:[%s1 + $0x8] sm:$0xff]
  %v1027 = vld [vmem:[%s1 + $0x10] sm:$0xf]
  %v1028 = vsel %vm64, 1, 0
  %v1029 = vsel %vm65, 1, 0
  %v1030 = vsel %vm66, 1, 0
  %v1031 = vsel %vm67, 1, 0
  %vm1032 = vcmp.eq.s32.totalorder %v1028, 1
  %vm1033 = vcmp.eq.s32.totalorder %v1029, 1
  %vm1034 = vcmp.eq.s32.totalorder %v1030, 1
  %vm1035 = vcmp.eq.s32.totalorder %v1031, 1
  %1039 = vst [vmem:[#allocation1] ss:$2 sm:$0xff] %v1025
  %s1040 = scalar_lea.vmem [#allocation1], 16
  %1041 = vst [vmem:[%s1040] ss:$2 sm:$0xff] %v1026
  %s1042 = scalar_lea.vmem [#allocation1], 32
  %1043 = vst [vmem:[%s1042] ss:$2 sm:$0xff] %v1027
  %v1044 = vld.sshfl [vmem:[#allocation1] sm:$0xff pattern:$0x75316420]
  %v1045 = vld.sshfl [vmem:[#allocation1 + $0x8] sm:$0xff pattern:$0x75316420]
  %v1046 = vld.sshfl [vmem:[#allocation1 + $0x10] sm:$0xff pattern:$0x75316420]
  %v1047 = vld.sshfl [vmem:[#allocation1 + $0x18] sm:$0xff pattern:$0x75316420]
  %v1048 = vld.sshfl [vmem:[#allocation1 + $0x20] sm:$0xff pattern:$0x75316420]
  %1049 = vrot.lane.b32.xlu0 %v1044, 93
  %v1050 = vpop.permute.xlu0 %1049
  %1051 = vrot.lane.b32.xlu0 %v1045, 93
  %v1052 = vpop.permute.xlu0 %1051
  %1053 = vrot.lane.b32.xlu0 %v1046, 93
  %v1054 = vpop.permute.xlu0 %1053
  %1055 = vrot.lane.b32.xlu0 %v1047, 93
  %v1056 = vpop.permute.xlu0 %1055
  %1057 = vrot.lane.b32.xlu0 %v1048, 93
  %v1058 = vpop.permute.xlu0 %1057
  %vm1059 = vcmask 760832
  %v1060 = vsel %vm1059, %v1050, %v1052
  %v1061 = vsel %vm1059, %v1052, %v1054
  %v1062 = vsel %vm1059, %v1054, %v1056
  %v1063 = vsel %vm1059, %v1056, %v1058
  %v1068 = vsel %vm1032, %v1060, 0.0
  %v1069 = vsel %vm1033, %v1061, 0.0
  %v1070 = vsel %vm1034, %v1062, 0.0
  %v1071 = vsel %vm1035, %v1063, 0.0
  %v1076 = vrot.slane %v1068, 4
  %v1077 = vrot.slane %v1069, 4
  %v1078 = vrot.slane %v1070, 4
  %v1079 = vrot.slane %v1071, 4
  %1084 = vst [vmem:[#allocation2 + $0xc0] sm:$0xf0] %v1076
  %1085 = vst [vmem:[#allocation2 + $0xc8] sm:$0xf0] %v1077
  %1086 = vst [vmem:[#allocation2 + $0xd0] sm:$0xf0] %v1078
  %1087 = vst [vmem:[#allocation2 + $0xd8] sm:$0xf0] %v1079
  %v1088 = vld [vmem:[%s2] sm:$0xff]
  %v1089 = vld [vmem:[%s2 + $0x8] sm:$0xff]
  %v1090 = vld [vmem:[%s2 + $0x10] sm:$0xf]
  %1094 = vst [vmem:[#allocation1] ss:$2 sm:$0xff] %v1088
  %s1095 = scalar_lea.vmem [#allocation1], 16
  %1096 = vst [vmem:[%s1095] ss:$2 sm:$0xff] %v1089
  %s1097 = scalar_lea.vmem [#allocation1], 32
  %1098 = vst [vmem:[%s1097] ss:$2 sm:$0xff] %v1090
  %v1099 = vld.sshfl [vmem:[#allocation1] sm:$0xff pattern:$0x75316420]
  %v1100 = vld.sshfl [vmem:[#allocation1 + $0x8] sm:$0xff pattern:$0x75316420]
  %v1101 = vld.sshfl [vmem:[#allocation1 + $0x10] sm:$0xff pattern:$0x75316420]
  %v1102 = vld.sshfl [vmem:[#allocation1 + $0x18] sm:$0xff pattern:$0x75316420]
  %v1103 = vld.sshfl [vmem:[#allocation1 + $0x20] sm:$0xff pattern:$0x75316420]
  %1104 = vrot.lane.b32.xlu0 %v1099, 93
  %v1105 = vpop.permute.xlu0 %1104
  %1106 = vrot.lane.b32.xlu0 %v1100, 93
  %v1107 = vpop.permute.xlu0 %1106
  %1108 = vrot.lane.b32.xlu0 %v1101, 93
  %v1109 = vpop.permute.xlu0 %1108
  %1110 = vrot.lane.b32.xlu0 %v1102, 93
  %v1111 = vpop.permute.xlu0 %1110
  %1112 = vrot.lane.b32.xlu0 %v1103, 93
  %v1113 = vpop.permute.xlu0 %1112
  %v1114 = vsel %vm1059, %v1105, %v1107
  %v1115 = vsel %vm1059, %v1107, %v1109
  %v1116 = vsel %vm1059, %v1109, %v1111
  %v1117 = vsel %vm1059, %v1111, %v1113
  %v1122 = vsel %vm1032, %v1114, -3.4028235e+38
  %v1123 = vsel %vm1033, %v1115, -3.4028235e+38
  %v1124 = vsel %vm1034, %v1116, -3.4028235e+38
  %v1125 = vsel %vm1035, %v1117, -3.4028235e+38
  %v1126 = vmax.f32 %v1021, %v1122
  %v1127 = vmax.f32 %v1022, %v1123
  %v1128 = vmax.f32 %v1023, %v1124
  %v1129 = vmax.f32 %v1024, %v1125
  %v1130 = vld [vmem:[%s1] sm:$0xff]
  %v1131 = vld [vmem:[%s1 + $0x8] sm:$0xff]
  %v1132 = vld [vmem:[%s1 + $0x10] sm:$0xf]
  %v1133 = vsel %vm68, 1, 0
  %v1134 = vsel %vm69, 1, 0
  %v1135 = vsel %vm70, 1, 0
  %v1136 = vsel %vm71, 1, 0
  %vm1137 = vcmp.eq.s32.totalorder %v1133, 1
  %vm1138 = vcmp.eq.s32.totalorder %v1134, 1
  %vm1139 = vcmp.eq.s32.totalorder %v1135, 1
  %vm1140 = vcmp.eq.s32.totalorder %v1136, 1
  %1144 = vst [vmem:[#allocation1] ss:$2 sm:$0xff] %v1130
  %s1145 = scalar_lea.vmem [#allocation1], 16
  %1146 = vst [vmem:[%s1145] ss:$2 sm:$0xff] %v1131
  %s1147 = scalar_lea.vmem [#allocation1], 32
  %1148 = vst [vmem:[%s1147] ss:$2 sm:$0xff] %v1132
  %v1149 = vld.sshfl [vmem:[#allocation1] sm:$0xff pattern:$0x75316420]
  %v1150 = vld.sshfl [vmem:[#allocation1 + $0x8] sm:$0xff pattern:$0x75316420]
  %v1151 = vld.sshfl [vmem:[#allocation1 + $0x10] sm:$0xff pattern:$0x75316420]
  %v1152 = vld.sshfl [vmem:[#allocation1 + $0x18] sm:$0xff pattern:$0x75316420]
  %v1153 = vld.sshfl [vmem:[#allocation1 + $0x20] sm:$0xff pattern:$0x75316420]
  %1154 = vrot.lane.b32.xlu0 %v1149, 92
  %v1155 = vpop.permute.xlu0 %1154
  %1156 = vrot.lane.b32.xlu0 %v1150, 92
  %v1157 = vpop.permute.xlu0 %1156
  %1158 = vrot.lane.b32.xlu0 %v1151, 92
  %v1159 = vpop.permute.xlu0 %1158
  %1160 = vrot.lane.b32.xlu0 %v1152, 92
  %v1161 = vpop.permute.xlu0 %1160
  %1162 = vrot.lane.b32.xlu0 %v1153, 92
  %v1163 = vpop.permute.xlu0 %1162
  %vm1164 = vcmask 752640
  %v1165 = vsel %vm1164, %v1155, %v1157
  %v1166 = vsel %vm1164, %v1157, %v1159
  %v1167 = vsel %vm1164, %v1159, %v1161
  %v1168 = vsel %vm1164, %v1161, %v1163
  %v1173 = vsel %vm1137, %v1165, 0.0
  %v1174 = vsel %vm1138, %v1166, 0.0
  %v1175 = vsel %vm1139, %v1167, 0.0
  %v1176 = vsel %vm1140, %v1168, 0.0
  %1177 = vst [vmem:[#allocation2 + $0xe0] sm:$0xf] %v1173
  %1178 = vst [vmem:[#allocation2 + $0xe8] sm:$0xf] %v1174
  %1179 = vst [vmem:[#allocation2 + $0xf0] sm:$0xf] %v1175
  %1180 = vst [vmem:[#allocation2 + $0xf8] sm:$0xf] %v1176
  %vm1181 = vmand %vm80, %vm56
  %vm1182 = vmand %vm81, %vm57
  %vm1183 = vmand %vm82, %vm58
  %vm1184 = vmand %vm83, %vm59
  %v1185 = vld [vmem:[%s1] sm:$0xff]
  %v1186 = vld [vmem:[%s1 + $0x8] sm:$0xff]
  %v1187 = vld [vmem:[%s1 + $0x10] sm:$0xf]
  %v1188 = vsel %vm1181, 1, 0
  %v1189 = vsel %vm1182, 1, 0
  %v1190 = vsel %vm1183, 1, 0
  %v1191 = vsel %vm1184, 1, 0
  %vm1192 = vcmp.eq.s32.totalorder %v1188, 1
  %vm1193 = vcmp.eq.s32.totalorder %v1189, 1
  %vm1194 = vcmp.eq.s32.totalorder %v1190, 1
  %vm1195 = vcmp.eq.s32.totalorder %v1191, 1
  %1199 = vst [vmem:[#allocation1] ss:$2 sm:$0xff] %v1185
  %s1200 = scalar_lea.vmem [#allocation1], 16
  %1201 = vst [vmem:[%s1200] ss:$2 sm:$0xff] %v1186
  %s1202 = scalar_lea.vmem [#allocation1], 32
  %1203 = vst [vmem:[%s1202] ss:$2 sm:$0xff] %v1187
  %v1204 = vld.sshfl [vmem:[#allocation1] sm:$0xff pattern:$0x75316420]
  %v1205 = vld.sshfl [vmem:[#allocation1 + $0x8] sm:$0xff pattern:$0x75316420]
  %v1206 = vld.sshfl [vmem:[#allocation1 + $0x10] sm:$0xff pattern:$0x75316420]
  %v1207 = vld.sshfl [vmem:[#allocation1 + $0x18] sm:$0xff pattern:$0x75316420]
  %v1208 = vld.sshfl [vmem:[#allocation1 + $0x20] sm:$0xff pattern:$0x75316420]
  %1209 = vrot.lane.b32.xlu0 %v1204, 80
  %v1210 = vpop.permute.xlu0 %1209
  %1211 = vrot.lane.b32.xlu0 %v1205, 80
  %v1212 = vpop.permute.xlu0 %1211
  %1213 = vrot.lane.b32.xlu0 %v1206, 80
  %v1214 = vpop.permute.xlu0 %1213
  %1215 = vrot.lane.b32.xlu0 %v1207, 80
  %v1216 = vpop.permute.xlu0 %1215
  %1217 = vrot.lane.b32.xlu0 %v1208, 80
  %v1218 = vpop.permute.xlu0 %1217
  %vm1219 = vcmask 654336
  %v1220 = vsel %vm1219, %v1210, %v1212
  %v1221 = vsel %vm1219, %v1212, %v1214
  %v1222 = vsel %vm1219, %v1214, %v1216
  %v1223 = vsel %vm1219, %v1216, %v1218
  %v1228 = vsel %vm1192, %v1220, 0.0
  %v1229 = vsel %vm1193, %v1221, 0.0
  %v1230 = vsel %vm1194, %v1222, 0.0
  %v1231 = vsel %vm1195, %v1223, 0.0
  %v1236 = vrot.slane %v1228, 4
  %v1237 = vrot.slane %v1229, 4
  %v1238 = vrot.slane %v1230, 4
  %v1239 = vrot.slane %v1231, 4
  %1244 = vst [vmem:[#allocation2 + $0xe0] sm:$0xf0] %v1236
  %1245 = vst [vmem:[#allocation2 + $0xe8] sm:$0xf0] %v1237
  %1246 = vst [vmem:[#allocation2 + $0xf0] sm:$0xf0] %v1238
  %1247 = vst [vmem:[#allocation2 + $0xf8] sm:$0xf0] %v1239
  %vm1248 = vmand %vm80, %vm60
  %vm1249 = vmand %vm81, %vm61
  %vm1250 = vmand %vm82, %vm62
  %vm1251 = vmand %vm83, %vm63
  %v1252 = vld [vmem:[%s1] sm:$0xff]
  %v1253 = vld [vmem:[%s1 + $0x8] sm:$0xff]
  %v1254 = vld [vmem:[%s1 + $0x10] sm:$0xf]
  %v1255 = vsel %vm1248, 1, 0
  %v1256 = vsel %vm1249, 1, 0
  %v1257 = vsel %vm1250, 1, 0
  %v1258 = vsel %vm1251, 1, 0
  %vm1259 = vcmp.eq.s32.totalorder %v1255, 1
  %vm1260 = vcmp.eq.s32.totalorder %v1256, 1
  %vm1261 = vcmp.eq.s32.totalorder %v1257, 1
  %vm1262 = vcmp.eq.s32.totalorder %v1258, 1
  %1266 = vst [vmem:[#allocation1] ss:$2 sm:$0xff] %v1252
  %s1267 = scalar_lea.vmem [#allocation1], 16
  %1268 = vst [vmem:[%s1267] ss:$2 sm:$0xff] %v1253
  %s1269 = scalar_lea.vmem [#allocation1], 32
  %1270 = vst [vmem:[%s1269] ss:$2 sm:$0xff] %v1254
  %v1271 = vld.sshfl [vmem:[#allocation1] sm:$0xff pattern:$0x75316420]
  %v1272 = vld.sshfl [vmem:[#allocation1 + $0x8] sm:$0xff pattern:$0x75316420]
  %v1273 = vld.sshfl [vmem:[#allocation1 + $0x10] sm:$0xff pattern:$0x75316420]
  %v1274 = vld.sshfl [vmem:[#allocation1 + $0x18] sm:$0xff pattern:$0x75316420]
  %v1275 = vld.sshfl [vmem:[#allocation1 + $0x20] sm:$0xff pattern:$0x75316420]
  %1276 = vrot.lane.b32.xlu0 %v1271, 79
  %v1277 = vpop.permute.xlu0 %1276
  %1278 = vrot.lane.b32.xlu0 %v1272, 79
  %v1279 = vpop.permute.xlu0 %1278
  %1280 = vrot.lane.b32.xlu0 %v1273, 79
  %v1281 = vpop.permute.xlu0 %1280
  %1282 = vrot.lane.b32.xlu0 %v1274, 79
  %v1283 = vpop.permute.xlu0 %1282
  %1284 = vrot.lane.b32.xlu0 %v1275, 79
  %v1285 = vpop.permute.xlu0 %1284
  %vm1286 = vcmask 646144
  %v1287 = vsel %vm1286, %v1277, %v1279
  %v1288 = vsel %vm1286, %v1279, %v1281
  %v1289 = vsel %vm1286, %v1281, %v1283
  %v1290 = vsel %vm1286, %v1283, %v1285
  %v1295 = vsel %vm1259, %v1287, 0.0
  %v1296 = vsel %vm1260, %v1288, 0.0
  %v1297 = vsel %vm1261, %v1289, 0.0
  %v1298 = vsel %vm1262, %v1290, 0.0
  %1299 = vst [vmem:[#allocation2 + $0x100] sm:$0xf] %v1295
  %1300 = vst [vmem:[#allocation2 + $0x108] sm:$0xf] %v1296
  %1301 = vst [vmem:[#allocation2 + $0x110] sm:$0xf] %v1297
  %1302 = vst [vmem:[#allocation2 + $0x118] sm:$0xf] %v1298
  %v1303 = vld [vmem:[%s2] sm:$0xff]
  %v1304 = vld [vmem:[%s2 + $0x8] sm:$0xff]
  %v1305 = vld [vmem:[%s2 + $0x10] sm:$0xf]
  %1309 = vst [vmem:[#allocation1] ss:$2 sm:$0xff] %v1303
  %s1310 = scalar_lea.vmem [#allocation1], 16
  %1311 = vst [vmem:[%s1310] ss:$2 sm:$0xff] %v1304
  %s1312 = scalar_lea.vmem [#allocation1], 32
  %1313 = vst [vmem:[%s1312] ss:$2 sm:$0xff] %v1305
  %v1314 = vld.sshfl [vmem:[#allocation1] sm:$0xff pattern:$0x75316420]
  %v1315 = vld.sshfl [vmem:[#allocation1 + $0x8] sm:$0xff pattern:$0x75316420]
  %v1316 = vld.sshfl [vmem:[#allocation1 + $0x10] sm:$0xff pattern:$0x75316420]
  %v1317 = vld.sshfl [vmem:[#allocation1 + $0x18] sm:$0xff pattern:$0x75316420]
  %v1318 = vld.sshfl [vmem:[#allocation1 + $0x20] sm:$0xff pattern:$0x75316420]
  %1319 = vrot.lane.b32.xlu0 %v1314, 79
  %v1320 = vpop.permute.xlu0 %1319
  %1321 = vrot.lane.b32.xlu0 %v1315, 79
  %v1322 = vpop.permute.xlu0 %1321
  %1323 = vrot.lane.b32.xlu0 %v1316, 79
  %v1324 = vpop.permute.xlu0 %1323
  %1325 = vrot.lane.b32.xlu0 %v1317, 79
  %v1326 = vpop.permute.xlu0 %1325
  %1327 = vrot.lane.b32.xlu0 %v1318, 79
  %v1328 = vpop.permute.xlu0 %1327
  %v1329 = vsel %vm1286, %v1320, %v1322
  %v1330 = vsel %vm1286, %v1322, %v1324
  %v1331 = vsel %vm1286, %v1324, %v1326
  %v1332 = vsel %vm1286, %v1326, %v1328
  %v1337 = vsel %vm1259, %v1329, -3.4028235e+38
  %v1338 = vsel %vm1260, %v1330, -3.4028235e+38
  %v1339 = vsel %vm1261, %v1331, -3.4028235e+38
  %v1340 = vsel %vm1262, %v1332, -3.4028235e+38
  %v1341 = vmax.f32 %v1126, %v1337
  %v1342 = vmax.f32 %v1127, %v1338
  %v1343 = vmax.f32 %v1128, %v1339
  %v1344 = vmax.f32 %v1129, %v1340
  %v1345 = vld [vmem:[%s1] sm:$0xff]
  %v1346 = vld [vmem:[%s1 + $0x8] sm:$0xff]
  %v1347 = vld [vmem:[%s1 + $0x10] sm:$0xf]
  %v1348 = vsel %vm80, 1, 0
  %v1349 = vsel %vm81, 1, 0
  %v1350 = vsel %vm82, 1, 0
  %v1351 = vsel %vm83, 1, 0
  %vm1352 = vcmp.eq.s32.totalorder %v1348, 1
  %vm1353 = vcmp.eq.s32.totalorder %v1349, 1
  %vm1354 = vcmp.eq.s32.totalorder %v1350, 1
  %vm1355 = vcmp.eq.s32.totalorder %v1351, 1
  %1359 = vst [vmem:[#allocation1] ss:$2 sm:$0xff] %v1345
  %s1360 = scalar_lea.vmem [#allocation1], 16
  %1361 = vst [vmem:[%s1360] ss:$2 sm:$0xff] %v1346
  %s1362 = scalar_lea.vmem [#allocation1], 32
  %1363 = vst [vmem:[%s1362] ss:$2 sm:$0xff] %v1347
  %v1364 = vld.sshfl [vmem:[#allocation1] sm:$0xff pattern:$0x75316420]
  %v1365 = vld.sshfl [vmem:[#allocation1 + $0x8] sm:$0xff pattern:$0x75316420]
  %v1366 = vld.sshfl [vmem:[#allocation1 + $0x10] sm:$0xff pattern:$0x75316420]
  %v1367 = vld.sshfl [vmem:[#allocation1 + $0x18] sm:$0xff pattern:$0x75316420]
  %v1368 = vld.sshfl [vmem:[#allocation1 + $0x20] sm:$0xff pattern:$0x75316420]
  %1369 = vrot.lane.b32.xlu0 %v1364, 78
  %v1370 = vpop.permute.xlu0 %1369
  %1371 = vrot.lane.b32.xlu0 %v1365, 78
  %v1372 = vpop.permute.xlu0 %1371
  %1373 = vrot.lane.b32.xlu0 %v1366, 78
  %v1374 = vpop.permute.xlu0 %1373
  %1375 = vrot.lane.b32.xlu0 %v1367, 78
  %v1376 = vpop.permute.xlu0 %1375
  %1377 = vrot.lane.b32.xlu0 %v1368, 78
  %v1378 = vpop.permute.xlu0 %1377
  %vm1379 = vcmask 637952
  %v1380 = vsel %vm1379, %v1370, %v1372
  %v1381 = vsel %vm1379, %v1372, %v1374
  %v1382 = vsel %vm1379, %v1374, %v1376
  %v1383 = vsel %vm1379, %v1376, %v1378
  %v1388 = vsel %vm1352, %v1380, 0.0
  %v1389 = vsel %vm1353, %v1381, 0.0
  %v1390 = vsel %vm1354, %v1382, 0.0
  %v1391 = vsel %vm1355, %v1383, 0.0
  %v1396 = vrot.slane %v1388, 4
  %v1397 = vrot.slane %v1389, 4
  %v1398 = vrot.slane %v1390, 4
  %v1399 = vrot.slane %v1391, 4
  %1404 = vst [vmem:[#allocation2 + $0x100] sm:$0xf0] %v1396
  %1405 = vst [vmem:[#allocation2 + $0x108] sm:$0xf0] %v1397
  %1406 = vst [vmem:[#allocation2 + $0x110] sm:$0xf0] %v1398
  %1407 = vst [vmem:[#allocation2 + $0x118] sm:$0xf0] %v1399
  %v1408 = vld [vmem:[%s2] sm:$0xff]
  %v1409 = vld [vmem:[%s2 + $0x8] sm:$0xff]
  %v1410 = vld [vmem:[%s2 + $0x10] sm:$0xf]
  %1414 = vst [vmem:[#allocation1] ss:$2 sm:$0xff] %v1408
  %s1415 = scalar_lea.vmem [#allocation1], 16
  %1416 = vst [vmem:[%s1415] ss:$2 sm:$0xff] %v1409
  %s1417 = scalar_lea.vmem [#allocation1], 32
  %1418 = vst [vmem:[%s1417] ss:$2 sm:$0xff] %v1410
  %v1419 = vld.sshfl [vmem:[#allocation1] sm:$0xff pattern:$0x75316420]
  %v1420 = vld.sshfl [vmem:[#allocation1 + $0x8] sm:$0xff pattern:$0x75316420]
  %v1421 = vld.sshfl [vmem:[#allocation1 + $0x10] sm:$0xff pattern:$0x75316420]
  %v1422 = vld.sshfl [vmem:[#allocation1 + $0x18] sm:$0xff pattern:$0x75316420]
  %v1423 = vld.sshfl [vmem:[#allocation1 + $0x20] sm:$0xff pattern:$0x75316420]
  %1424 = vrot.lane.b32.xlu0 %v1419, 78
  %v1425 = vpop.permute.xlu0 %1424
  %1426 = vrot.lane.b32.xlu0 %v1420, 78
  %v1427 = vpop.permute.xlu0 %1426
  %1428 = vrot.lane.b32.xlu0 %v1421, 78
  %v1429 = vpop.permute.xlu0 %1428
  %1430 = vrot.lane.b32.xlu0 %v1422, 78
  %v1431 = vpop.permute.xlu0 %1430
  %1432 = vrot.lane.b32.xlu0 %v1423, 78
  %v1433 = vpop.permute.xlu0 %1432
  %v1434 = vsel %vm1379, %v1425, %v1427
  %v1435 = vsel %vm1379, %v1427, %v1429
  %v1436 = vsel %vm1379, %v1429, %v1431
  %v1437 = vsel %vm1379, %v1431, %v1433
  %v1442 = vsel %vm1352, %v1434, -3.4028235e+38
  %v1443 = vsel %vm1353, %v1435, -3.4028235e+38
  %v1444 = vsel %vm1354, %v1436, -3.4028235e+38
  %v1445 = vsel %vm1355, %v1437, -3.4028235e+38
  %v1446 = vmax.f32 %v1341, %v1442
  %v1447 = vmax.f32 %v1342, %v1443
  %v1448 = vmax.f32 %v1343, %v1444
  %v1449 = vmax.f32 %v1344, %v1445
  %vm1450 = vmand %vm80, %vm64
  %vm1451 = vmand %vm81, %vm65
  %vm1452 = vmand %vm82, %vm66
  %vm1453 = vmand %vm83, %vm67
  %v1454 = vld [vmem:[%s1] sm:$0xff]
  %v1455 = vld [vmem:[%s1 + $0x8] sm:$0xff]
  %v1456 = vld [vmem:[%s1 + $0x10] sm:$0xf]
  %v1457 = vsel %vm1450, 1, 0
  %v1458 = vsel %vm1451, 1, 0
  %v1459 = vsel %vm1452, 1, 0
  %v1460 = vsel %vm1453, 1, 0
  %vm1461 = vcmp.eq.s32.totalorder %v1457, 1
  %vm1462 = vcmp.eq.s32.totalorder %v1458, 1
  %vm1463 = vcmp.eq.s32.totalorder %v1459, 1
  %vm1464 = vcmp.eq.s32.totalorder %v1460, 1
  %1468 = vst [vmem:[#allocation1] ss:$2 sm:$0xff] %v1454
  %s1469 = scalar_lea.vmem [#allocation1], 16
  %1470 = vst [vmem:[%s1469] ss:$2 sm:$0xff] %v1455
  %s1471 = scalar_lea.vmem [#allocation1], 32
  %1472 = vst [vmem:[%s1471] ss:$2 sm:$0xff] %v1456
  %v1473 = vld.sshfl [vmem:[#allocation1] sm:$0xff pattern:$0x75316420]
  %v1474 = vld.sshfl [vmem:[#allocation1 + $0x8] sm:$0xff pattern:$0x75316420]
  %v1475 = vld.sshfl [vmem:[#allocation1 + $0x10] sm:$0xff pattern:$0x75316420]
  %v1476 = vld.sshfl [vmem:[#allocation1 + $0x18] sm:$0xff pattern:$0x75316420]
  %v1477 = vld.sshfl [vmem:[#allocation1 + $0x20] sm:$0xff pattern:$0x75316420]
  %1478 = vrot.lane.b32.xlu0 %v1473, 77
  %v1479 = vpop.permute.xlu0 %1478
  %1480 = vrot.lane.b32.xlu0 %v1474, 77
  %v1481 = vpop.permute.xlu0 %1480
  %1482 = vrot.lane.b32.xlu0 %v1475, 77
  %v1483 = vpop.permute.xlu0 %1482
  %1484 = vrot.lane.b32.xlu0 %v1476, 77
  %v1485 = vpop.permute.xlu0 %1484
  %1486 = vrot.lane.b32.xlu0 %v1477, 77
  %v1487 = vpop.permute.xlu0 %1486
  %vm1488 = vcmask 629760
  %v1489 = vsel %vm1488, %v1479, %v1481
  %v1490 = vsel %vm1488, %v1481, %v1483
  %v1491 = vsel %vm1488, %v1483, %v1485
  %v1492 = vsel %vm1488, %v1485, %v1487
  %v1497 = vsel %vm1461, %v1489, 0.0
  %v1498 = vsel %vm1462, %v1490, 0.0
  %v1499 = vsel %vm1463, %v1491, 0.0
  %v1500 = vsel %vm1464, %v1492, 0.0
  %1501 = vst [vmem:[#allocation2 + $0x120] sm:$0xf] %v1497
  %1502 = vst [vmem:[#allocation2 + $0x128] sm:$0xf] %v1498
  %1503 = vst [vmem:[#allocation2 + $0x130] sm:$0xf] %v1499
  %1504 = vst [vmem:[#allocation2 + $0x138] sm:$0xf] %v1500
  %v1505 = vld [vmem:[%s2] sm:$0xff]
  %v1506 = vld [vmem:[%s2 + $0x8] sm:$0xff]
  %v1507 = vld [vmem:[%s2 + $0x10] sm:$0xf]
  %1511 = vst [vmem:[#allocation1] ss:$2 sm:$0xff] %v1505
  %s1512 = scalar_lea.vmem [#allocation1], 16
  %1513 = vst [vmem:[%s1512] ss:$2 sm:$0xff] %v1506
  %s1514 = scalar_lea.vmem [#allocation1], 32
  %1515 = vst [vmem:[%s1514] ss:$2 sm:$0xff] %v1507
  %v1516 = vld.sshfl [vmem:[#allocation1] sm:$0xff pattern:$0x75316420]
  %v1517 = vld.sshfl [vmem:[#allocation1 + $0x8] sm:$0xff pattern:$0x75316420]
  %v1518 = vld.sshfl [vmem:[#allocation1 + $0x10] sm:$0xff pattern:$0x75316420]
  %v1519 = vld.sshfl [vmem:[#allocation1 + $0x18] sm:$0xff pattern:$0x75316420]
  %v1520 = vld.sshfl [vmem:[#allocation1 + $0x20] sm:$0xff pattern:$0x75316420]
  %1521 = vrot.lane.b32.xlu0 %v1516, 77
  %v1522 = vpop.permute.xlu0 %1521
  %1523 = vrot.lane.b32.xlu0 %v1517, 77
  %v1524 = vpop.permute.xlu0 %1523
  %1525 = vrot.lane.b32.xlu0 %v1518, 77
  %v1526 = vpop.permute.xlu0 %1525
  %1527 = vrot.lane.b32.xlu0 %v1519, 77
  %v1528 = vpop.permute.xlu0 %1527
  %1529 = vrot.lane.b32.xlu0 %v1520, 77
  %v1530 = vpop.permute.xlu0 %1529
  %v1531 = vsel %vm1488, %v1522, %v1524
  %v1532 = vsel %vm1488, %v1524, %v1526
  %v1533 = vsel %vm1488, %v1526, %v1528
  %v1534 = vsel %vm1488, %v1528, %v1530
  %v1539 = vsel %vm1461, %v1531, -3.4028235e+38
  %v1540 = vsel %vm1462, %v1532, -3.4028235e+38
  %v1541 = vsel %vm1463, %v1533, -3.4028235e+38
  %v1542 = vsel %vm1464, %v1534, -3.4028235e+38
  %v1543 = vmax.f32 %v1446, %v1539
  %v1544 = vmax.f32 %v1447, %v1540
  %v1545 = vmax.f32 %v1448, %v1541
  %v1546 = vmax.f32 %v1449, %v1542
  %vm1547 = vmand %vm80, %vm68
  %vm1548 = vmand %vm81, %vm69
  %vm1549 = vmand %vm82, %vm70
  %vm1550 = vmand %vm83, %vm71
  %v1551 = vld [vmem:[%s1] sm:$0xff]
  %v1552 = vld [vmem:[%s1 + $0x8] sm:$0xff]
  %v1553 = vld [vmem:[%s1 + $0x10] sm:$0xf]
  %v1554 = vsel %vm1547, 1, 0
  %v1555 = vsel %vm1548, 1, 0
  %v1556 = vsel %vm1549, 1, 0
  %v1557 = vsel %vm1550, 1, 0
  %vm1558 = vcmp.eq.s32.totalorder %v1554, 1
  %vm1559 = vcmp.eq.s32.totalorder %v1555, 1
  %vm1560 = vcmp.eq.s32.totalorder %v1556, 1
  %vm1561 = vcmp.eq.s32.totalorder %v1557, 1
  %1565 = vst [vmem:[#allocation1] ss:$2 sm:$0xff] %v1551
  %s1566 = scalar_lea.vmem [#allocation1], 16
  %1567 = vst [vmem:[%s1566] ss:$2 sm:$0xff] %v1552
  %s1568 = scalar_lea.vmem [#allocation1], 32
  %1569 = vst [vmem:[%s1568] ss:$2 sm:$0xff] %v1553
  %v1570 = vld.sshfl [vmem:[#allocation1] sm:$0xff pattern:$0x75316420]
  %v1571 = vld.sshfl [vmem:[#allocation1 + $0x8] sm:$0xff pattern:$0x75316420]
  %v1572 = vld.sshfl [vmem:[#allocation1 + $0x10] sm:$0xff pattern:$0x75316420]
  %v1573 = vld.sshfl [vmem:[#allocation1 + $0x18] sm:$0xff pattern:$0x75316420]
  %v1574 = vld.sshfl [vmem:[#allocation1 + $0x20] sm:$0xff pattern:$0x75316420]
  %1575 = vrot.lane.b32.xlu0 %v1570, 76
  %v1576 = vpop.permute.xlu0 %1575
  %1577 = vrot.lane.b32.xlu0 %v1571, 76
  %v1578 = vpop.permute.xlu0 %1577
  %1579 = vrot.lane.b32.xlu0 %v1572, 76
  %v1580 = vpop.permute.xlu0 %1579
  %1581 = vrot.lane.b32.xlu0 %v1573, 76
  %v1582 = vpop.permute.xlu0 %1581
  %1583 = vrot.lane.b32.xlu0 %v1574, 76
  %v1584 = vpop.permute.xlu0 %1583
  %vm1585 = vcmask 621568
  %v1586 = vsel %vm1585, %v1576, %v1578
  %v1587 = vsel %vm1585, %v1578, %v1580
  %v1588 = vsel %vm1585, %v1580, %v1582
  %v1589 = vsel %vm1585, %v1582, %v1584
  %v1594 = vsel %vm1558, %v1586, 0.0
  %v1595 = vsel %vm1559, %v1587, 0.0
  %v1596 = vsel %vm1560, %v1588, 0.0
  %v1597 = vsel %vm1561, %v1589, 0.0
  %v1602 = vrot.slane %v1594, 4
  %v1603 = vrot.slane %v1595, 4
  %v1604 = vrot.slane %v1596, 4
  %v1605 = vrot.slane %v1597, 4
  %1610 = vst [vmem:[#allocation2 + $0x120] sm:$0xf0] %v1602
  %1611 = vst [vmem:[#allocation2 + $0x128] sm:$0xf0] %v1603
  %1612 = vst [vmem:[#allocation2 + $0x130] sm:$0xf0] %v1604
  %1613 = vst [vmem:[#allocation2 + $0x138] sm:$0xf0] %v1605
  %vm1614 = vmand %vm84, %vm56
  %vm1615 = vmand %vm85, %vm57
  %vm1616 = vmand %vm86, %vm58
  %vm1617 = vmand %vm87, %vm59
  %v1618 = vld [vmem:[%s1] sm:$0xff]
  %v1619 = vld [vmem:[%s1 + $0x8] sm:$0xff]
  %v1620 = vld [vmem:[%s1 + $0x10] sm:$0xf]
  %v1621 = vsel %vm1614, 1, 0
  %v1622 = vsel %vm1615, 1, 0
  %v1623 = vsel %vm1616, 1, 0
  %v1624 = vsel %vm1617, 1, 0
  %vm1625 = vcmp.eq.s32.totalorder %v1621, 1
  %vm1626 = vcmp.eq.s32.totalorder %v1622, 1
  %vm1627 = vcmp.eq.s32.totalorder %v1623, 1
  %vm1628 = vcmp.eq.s32.totalorder %v1624, 1
  %1632 = vst [vmem:[#allocation1] ss:$2 sm:$0xff] %v1618
  %s1633 = scalar_lea.vmem [#allocation1], 16
  %1634 = vst [vmem:[%s1633] ss:$2 sm:$0xff] %v1619
  %s1635 = scalar_lea.vmem [#allocation1], 32
  %1636 = vst [vmem:[%s1635] ss:$2 sm:$0xff] %v1620
  %v1637 = vld.sshfl [vmem:[#allocation1] sm:$0xff pattern:$0x75316420]
  %v1638 = vld.sshfl [vmem:[#allocation1 + $0x8] sm:$0xff pattern:$0x75316420]
  %v1639 = vld.sshfl [vmem:[#allocation1 + $0x10] sm:$0xff pattern:$0x75316420]
  %v1640 = vld.sshfl [vmem:[#allocation1 + $0x18] sm:$0xff pattern:$0x75316420]
  %v1641 = vld.sshfl [vmem:[#allocation1 + $0x20] sm:$0xff pattern:$0x75316420]
  %1642 = vrot.lane.b32.xlu0 %v1637, 64
  %v1643 = vpop.permute.xlu0 %1642
  %1644 = vrot.lane.b32.xlu0 %v1638, 64
  %v1645 = vpop.permute.xlu0 %1644
  %1646 = vrot.lane.b32.xlu0 %v1639, 64
  %v1647 = vpop.permute.xlu0 %1646
  %1648 = vrot.lane.b32.xlu0 %v1640, 64
  %v1649 = vpop.permute.xlu0 %1648
  %1650 = vrot.lane.b32.xlu0 %v1641, 64
  %v1651 = vpop.permute.xlu0 %1650
  %vm1652 = vcmask 523264
  %v1653 = vsel %vm1652, %v1643, %v1645
  %v1654 = vsel %vm1652, %v1645, %v1647
  %v1655 = vsel %vm1652, %v1647, %v1649
  %v1656 = vsel %vm1652, %v1649, %v1651
  %v1661 = vsel %vm1625, %v1653, 0.0
  %v1662 = vsel %vm1626, %v1654, 0.0
  %v1663 = vsel %vm1627, %v1655, 0.0
  %v1664 = vsel %vm1628, %v1656, 0.0
  %1665 = vst [vmem:[#allocation2 + $0x140] sm:$0xf] %v1661
  %1666 = vst [vmem:[#allocation2 + $0x148] sm:$0xf] %v1662
  %1667 = vst [vmem:[#allocation2 + $0x150] sm:$0xf] %v1663
  %1668 = vst [vmem:[#allocation2 + $0x158] sm:$0xf] %v1664
  %vm1669 = vmand %vm84, %vm60
  %vm1670 = vmand %vm85, %vm61
  %vm1671 = vmand %vm86, %vm62
  %vm1672 = vmand %vm87, %vm63
  %v1673 = vld [vmem:[%s1] sm:$0xff]
  %v1674 = vld [vmem:[%s1 + $0x8] sm:$0xff]
  %v1675 = vld [vmem:[%s1 + $0x10] sm:$0xf]
  %v1676 = vsel %vm1669, 1, 0
  %v1677 = vsel %vm1670, 1, 0
  %v1678 = vsel %vm1671, 1, 0
  %v1679 = vsel %vm1672, 1, 0
  %vm1680 = vcmp.eq.s32.totalorder %v1676, 1
  %vm1681 = vcmp.eq.s32.totalorder %v1677, 1
  %vm1682 = vcmp.eq.s32.totalorder %v1678, 1
  %vm1683 = vcmp.eq.s32.totalorder %v1679, 1
  %1687 = vst [vmem:[#allocation1] ss:$2 sm:$0xff] %v1673
  %s1688 = scalar_lea.vmem [#allocation1], 16
  %1689 = vst [vmem:[%s1688] ss:$2 sm:$0xff] %v1674
  %s1690 = scalar_lea.vmem [#allocation1], 32
  %1691 = vst [vmem:[%s1690] ss:$2 sm:$0xff] %v1675
  %v1692 = vld.sshfl [vmem:[#allocation1] sm:$0xff pattern:$0x75316420]
  %v1693 = vld.sshfl [vmem:[#allocation1 + $0x8] sm:$0xff pattern:$0x75316420]
  %v1694 = vld.sshfl [vmem:[#allocation1 + $0x10] sm:$0xff pattern:$0x75316420]
  %v1695 = vld.sshfl [vmem:[#allocation1 + $0x18] sm:$0xff pattern:$0x75316420]
  %v1696 = vld.sshfl [vmem:[#allocation1 + $0x20] sm:$0xff pattern:$0x75316420]
  %1697 = vrot.lane.b32.xlu0 %v1692, 63
  %v1698 = vpop.permute.xlu0 %1697
  %1699 = vrot.lane.b32.xlu0 %v1693, 63
  %v1700 = vpop.permute.xlu0 %1699
  %1701 = vrot.lane.b32.xlu0 %v1694, 63
  %v1702 = vpop.permute.xlu0 %1701
  %1703 = vrot.lane.b32.xlu0 %v1695, 63
  %v1704 = vpop.permute.xlu0 %1703
  %1705 = vrot.lane.b32.xlu0 %v1696, 63
  %v1706 = vpop.permute.xlu0 %1705
  %vm1707 = vcmask 515072
  %v1708 = vsel %vm1707, %v1698, %v1700
  %v1709 = vsel %vm1707, %v1700, %v1702
  %v1710 = vsel %vm1707, %v1702, %v1704
  %v1711 = vsel %vm1707, %v1704, %v1706
  %v1716 = vsel %vm1680, %v1708, 0.0
  %v1717 = vsel %vm1681, %v1709, 0.0
  %v1718 = vsel %vm1682, %v1710, 0.0
  %v1719 = vsel %vm1683, %v1711, 0.0
  %v1724 = vrot.slane %v1716, 4
  %v1725 = vrot.slane %v1717, 4
  %v1726 = vrot.slane %v1718, 4
  %v1727 = vrot.slane %v1719, 4
  %1732 = vst [vmem:[#allocation2 + $0x140] sm:$0xf0] %v1724
  %1733 = vst [vmem:[#allocation2 + $0x148] sm:$0xf0] %v1725
  %1734 = vst [vmem:[#allocation2 + $0x150] sm:$0xf0] %v1726
  %1735 = vst [vmem:[#allocation2 + $0x158] sm:$0xf0] %v1727
  %v1736 = vld [vmem:[%s1] sm:$0xff]
  %v1737 = vld [vmem:[%s1 + $0x8] sm:$0xff]
  %v1738 = vld [vmem:[%s1 + $0x10] sm:$0xf]
  %v1739 = vsel %vm84, 1, 0
  %v1740 = vsel %vm85, 1, 0
  %v1741 = vsel %vm86, 1, 0
  %v1742 = vsel %vm87, 1, 0
  %vm1743 = vcmp.eq.s32.totalorder %v1739, 1
  %vm1744 = vcmp.eq.s32.totalorder %v1740, 1
  %vm1745 = vcmp.eq.s32.totalorder %v1741, 1
  %vm1746 = vcmp.eq.s32.totalorder %v1742, 1
  %1750 = vst [vmem:[#allocation1] ss:$2 sm:$0xff] %v1736
  %s1751 = scalar_lea.vmem [#allocation1], 16
  %1752 = vst [vmem:[%s1751] ss:$2 sm:$0xff] %v1737
  %s1753 = scalar_lea.vmem [#allocation1], 32
  %1754 = vst [vmem:[%s1753] ss:$2 sm:$0xff] %v1738
  %v1755 = vld.sshfl [vmem:[#allocation1] sm:$0xff pattern:$0x75316420]
  %v1756 = vld.sshfl [vmem:[#allocation1 + $0x8] sm:$0xff pattern:$0x75316420]
  %v1757 = vld.sshfl [vmem:[#allocation1 + $0x10] sm:$0xff pattern:$0x75316420]
  %v1758 = vld.sshfl [vmem:[#allocation1 + $0x18] sm:$0xff pattern:$0x75316420]
  %v1759 = vld.sshfl [vmem:[#allocation1 + $0x20] sm:$0xff pattern:$0x75316420]
  %1760 = vrot.lane.b32.xlu0 %v1755, 62
  %v1761 = vpop.permute.xlu0 %1760
  %1762 = vrot.lane.b32.xlu0 %v1756, 62
  %v1763 = vpop.permute.xlu0 %1762
  %1764 = vrot.lane.b32.xlu0 %v1757, 62
  %v1765 = vpop.permute.xlu0 %1764
  %1766 = vrot.lane.b32.xlu0 %v1758, 62
  %v1767 = vpop.permute.xlu0 %1766
  %1768 = vrot.lane.b32.xlu0 %v1759, 62
  %v1769 = vpop.permute.xlu0 %1768
  %vm1770 = vcmask 506880
  %v1771 = vsel %vm1770, %v1761, %v1763
  %v1772 = vsel %vm1770, %v1763, %v1765
  %v1773 = vsel %vm1770, %v1765, %v1767
  %v1774 = vsel %vm1770, %v1767, %v1769
  %v1779 = vsel %vm1743, %v1771, 0.0
  %v1780 = vsel %vm1744, %v1772, 0.0
  %v1781 = vsel %vm1745, %v1773, 0.0
  %v1782 = vsel %vm1746, %v1774, 0.0
  %1783 = vst [vmem:[#allocation2 + $0x160] sm:$0xf] %v1779
  %1784 = vst [vmem:[#allocation2 + $0x168] sm:$0xf] %v1780
  %1785 = vst [vmem:[#allocation2 + $0x170] sm:$0xf] %v1781
  %1786 = vst [vmem:[#allocation2 + $0x178] sm:$0xf] %v1782
  %vm1787 = vmand %vm84, %vm64
  %vm1788 = vmand %vm85, %vm65
  %vm1789 = vmand %vm86, %vm66
  %vm1790 = vmand %vm87, %vm67
  %v1791 = vld [vmem:[%s1] sm:$0xff]
  %v1792 = vld [vmem:[%s1 + $0x8] sm:$0xff]
  %v1793 = vld [vmem:[%s1 + $0x10] sm:$0xf]
  %v1794 = vsel %vm1787, 1, 0
  %v1795 = vsel %vm1788, 1, 0
  %v1796 = vsel %vm1789, 1, 0
  %v1797 = vsel %vm1790, 1, 0
  %vm1798 = vcmp.eq.s32.totalorder %v1794, 1
  %vm1799 = vcmp.eq.s32.totalorder %v1795, 1
  %vm1800 = vcmp.eq.s32.totalorder %v1796, 1
  %vm1801 = vcmp.eq.s32.totalorder %v1797, 1
  %1805 = vst [vmem:[#allocation1] ss:$2 sm:$0xff] %v1791
  %s1806 = scalar_lea.vmem [#allocation1], 16
  %1807 = vst [vmem:[%s1806] ss:$2 sm:$0xff] %v1792
  %s1808 = scalar_lea.vmem [#allocation1], 32
  %1809 = vst [vmem:[%s1808] ss:$2 sm:$0xff] %v1793
  %v1810 = vld.sshfl [vmem:[#allocation1] sm:$0xff pattern:$0x75316420]
  %v1811 = vld.sshfl [vmem:[#allocation1 + $0x8] sm:$0xff pattern:$0x75316420]
  %v1812 = vld.sshfl [vmem:[#allocation1 + $0x10] sm:$0xff pattern:$0x75316420]
  %v1813 = vld.sshfl [vmem:[#allocation1 + $0x18] sm:$0xff pattern:$0x75316420]
  %v1814 = vld.sshfl [vmem:[#allocation1 + $0x20] sm:$0xff pattern:$0x75316420]
  %1815 = vrot.lane.b32.xlu0 %v1810, 61
  %v1816 = vpop.permute.xlu0 %1815
  %1817 = vrot.lane.b32.xlu0 %v1811, 61
  %v1818 = vpop.permute.xlu0 %1817
  %1819 = vrot.lane.b32.xlu0 %v1812, 61
  %v1820 = vpop.permute.xlu0 %1819
  %1821 = vrot.lane.b32.xlu0 %v1813, 61
  %v1822 = vpop.permute.xlu0 %1821
  %1823 = vrot.lane.b32.xlu0 %v1814, 61
  %v1824 = vpop.permute.xlu0 %1823
  %vm1825 = vcmask 498688
  %v1826 = vsel %vm1825, %v1816, %v1818
  %v1827 = vsel %vm1825, %v1818, %v1820
  %v1828 = vsel %vm1825, %v1820, %v1822
  %v1829 = vsel %vm1825, %v1822, %v1824
  %v1834 = vsel %vm1798, %v1826, 0.0
  %v1835 = vsel %vm1799, %v1827, 0.0
  %v1836 = vsel %vm1800, %v1828, 0.0
  %v1837 = vsel %vm1801, %v1829, 0.0
  %v1842 = vrot.slane %v1834, 4
  %v1843 = vrot.slane %v1835, 4
  %v1844 = vrot.slane %v1836, 4
  %v1845 = vrot.slane %v1837, 4
  %1850 = vst [vmem:[#allocation2 + $0x160] sm:$0xf0] %v1842
  %1851 = vst [vmem:[#allocation2 + $0x168] sm:$0xf0] %v1843
  %1852 = vst [vmem:[#allocation2 + $0x170] sm:$0xf0] %v1844
  %1853 = vst [vmem:[#allocation2 + $0x178] sm:$0xf0] %v1845
  %vm1854 = vmand %vm84, %vm68
  %vm1855 = vmand %vm85, %vm69
  %vm1856 = vmand %vm86, %vm70
  %vm1857 = vmand %vm87, %vm71
  %v1858 = vld [vmem:[%s1] sm:$0xff]
  %v1859 = vld [vmem:[%s1 + $0x8] sm:$0xff]
  %v1860 = vld [vmem:[%s1 + $0x10] sm:$0xf]
  %v1861 = vsel %vm1854, 1, 0
  %v1862 = vsel %vm1855, 1, 0
  %v1863 = vsel %vm1856, 1, 0
  %v1864 = vsel %vm1857, 1, 0
  %vm1865 = vcmp.eq.s32.totalorder %v1861, 1
  %vm1866 = vcmp.eq.s32.totalorder %v1862, 1
  %vm1867 = vcmp.eq.s32.totalorder %v1863, 1
  %vm1868 = vcmp.eq.s32.totalorder %v1864, 1
  %1872 = vst [vmem:[#allocation1] ss:$2 sm:$0xff] %v1858
  %s1873 = scalar_lea.vmem [#allocation1], 16
  %1874 = vst [vmem:[%s1873] ss:$2 sm:$0xff] %v1859
  %s1875 = scalar_lea.vmem [#allocation1], 32
  %1876 = vst [vmem:[%s1875] ss:$2 sm:$0xff] %v1860
  %v1877 = vld.sshfl [vmem:[#allocation1] sm:$0xff pattern:$0x75316420]
  %v1878 = vld.sshfl [vmem:[#allocation1 + $0x8] sm:$0xff pattern:$0x75316420]
  %v1879 = vld.sshfl [vmem:[#allocation1 + $0x10] sm:$0xff pattern:$0x75316420]
  %v1880 = vld.sshfl [vmem:[#allocation1 + $0x18] sm:$0xff pattern:$0x75316420]
  %v1881 = vld.sshfl [vmem:[#allocation1 + $0x20] sm:$0xff pattern:$0x75316420]
  %1882 = vrot.lane.b32.xlu0 %v1877, 60
  %v1883 = vpop.permute.xlu0 %1882
  %1884 = vrot.lane.b32.xlu0 %v1878, 60
  %v1885 = vpop.permute.xlu0 %1884
  %1886 = vrot.lane.b32.xlu0 %v1879, 60
  %v1887 = vpop.permute.xlu0 %1886
  %1888 = vrot.lane.b32.xlu0 %v1880, 60
  %v1889 = vpop.permute.xlu0 %1888
  %1890 = vrot.lane.b32.xlu0 %v1881, 60
  %v1891 = vpop.permute.xlu0 %1890
  %vm1892 = vcmask 490496
  %v1893 = vsel %vm1892, %v1883, %v1885
  %v1894 = vsel %vm1892, %v1885, %v1887
  %v1895 = vsel %vm1892, %v1887, %v1889
  %v1896 = vsel %vm1892, %v1889, %v1891
  %v1901 = vsel %vm1865, %v1893, 0.0
  %v1902 = vsel %vm1866, %v1894, 0.0
  %v1903 = vsel %vm1867, %v1895, 0.0
  %v1904 = vsel %vm1868, %v1896, 0.0
  %1905 = vst [vmem:[#allocation2 + $0x180] sm:$0xf] %v1901
  %1906 = vst [vmem:[#allocation2 + $0x188] sm:$0xf] %v1902
  %1907 = vst [vmem:[#allocation2 + $0x190] sm:$0xf] %v1903
  %1908 = vst [vmem:[#allocation2 + $0x198] sm:$0xf] %v1904
  %v1909 = vld [vmem:[%s3] sm:$0xf]
  %v1910 = vld [vmem:[#allocation2] sm:$0xff]
  %v1911 = vld [vmem:[#allocation2 + $0x8] sm:$0xff]
  %v1912 = vld [vmem:[#allocation2 + $0x10] sm:$0xff]
  %v1913 = vld [vmem:[#allocation2 + $0x18] sm:$0xff]
  %v1914 = vld [vmem:[#allocation2 + $0x20] sm:$0xff]
  %v1915 = vld [vmem:[#allocation2 + $0x28] sm:$0xff]
  %v1916 = vld [vmem:[#allocation2 + $0x30] sm:$0xff]
  %v1917 = vld [vmem:[#allocation2 + $0x38] sm:$0xff]
  %v1918 = vld [vmem:[#allocation2 + $0x40] sm:$0xff]
  %v1919 = vld [vmem:[#allocation2 + $0x48] sm:$0xff]
  %v1920 = vld [vmem:[#allocation2 + $0x50] sm:$0xff]
  %v1921 = vld [vmem:[#allocation2 + $0x58] sm:$0xff]
  %v1922 = vld [vmem:[#allocation2 + $0x60] sm:$0xff]
  %v1923 = vld [vmem:[#allocation2 + $0x68] sm:$0xff]
  %v1924 = vld [vmem:[#allocation2 + $0x70] sm:$0xff]
  %v1925 = vld [vmem:[#allocation2 + $0x78] sm:$0xff]
  %v1926 = vld [vmem:[#allocation2 + $0x80] sm:$0xff]
  %v1927 = vld [vmem:[#allocation2 + $0x88] sm:$0xff]
  %v1928 = vld [vmem:[#allocation2 + $0x90] sm:$0xff]
  %v1929 = vld [vmem:[#allocation2 + $0x98] sm:$0xff]
  %v1930 = vld [vmem:[#allocation2 + $0xa0] sm:$0xff]
  %v1931 = vld [vmem:[#allocation2 + $0xa8] sm:$0xff]
  %v1932 = vld [vmem:[#allocation2 + $0xb0] sm:$0xff]
  %v1933 = vld [vmem:[#allocation2 + $0xb8] sm:$0xff]
  %v1934 = vld [vmem:[#allocation2 + $0xc0] sm:$0xff]
  %v1935 = vld [vmem:[#allocation2 + $0xc8] sm:$0xff]
  %v1936 = vld [vmem:[#allocation2 + $0xd0] sm:$0xff]
  %v1937 = vld [vmem:[#allocation2 + $0xd8] sm:$0xff]
  %v1938 = vld [vmem:[#allocation2 + $0xe0] sm:$0xff]
  %v1939 = vld [vmem:[#allocation2 + $0xe8] sm:$0xff]
  %v1940 = vld [vmem:[#allocation2 + $0xf0] sm:$0xff]
  %v1941 = vld [vmem:[#allocation2 + $0xf8] sm:$0xff]
  %v1942 = vld [vmem:[#allocation2 + $0x100] sm:$0xff]
  %v1943 = vld [vmem:[#allocation2 + $0x108] sm:$0xff]
  %v1944 = vld [vmem:[#allocation2 + $0x110] sm:$0xff]
  %v1945 = vld [vmem:[#allocation2 + $0x118] sm:$0xff]
  %v1946 = vld [vmem:[#allocation2 + $0x120] sm:$0xff]
  %v1947 = vld [vmem:[#allocation2 + $0x128] sm:$0xff]
  %v1948 = vld [vmem:[#allocation2 + $0x130] sm:$0xff]
  %v1949 = vld [vmem:[#allocation2 + $0x138] sm:$0xff]
  %v1950 = vld [vmem:[#allocation2 + $0x140] sm:$0xff]
  %v1951 = vld [vmem:[#allocation2 + $0x148] sm:$0xff]
  %v1952 = vld [vmem:[#allocation2 + $0x150] sm:$0xff]
  %v1953 = vld [vmem:[#allocation2 + $0x158] sm:$0xff]
  %v1954 = vld [vmem:[#allocation2 + $0x160] sm:$0xff]
  %v1955 = vld [vmem:[#allocation2 + $0x168] sm:$0xff]
  %v1956 = vld [vmem:[#allocation2 + $0x170] sm:$0xff]
  %v1957 = vld [vmem:[#allocation2 + $0x178] sm:$0xff]
  %v1958 = vld [vmem:[#allocation2 + $0x180] sm:$0xf]
  %v1959 = vld [vmem:[#allocation2 + $0x188] sm:$0xf]
  %v1960 = vld [vmem:[#allocation2 + $0x190] sm:$0xf]
  %v1961 = vld [vmem:[#allocation2 + $0x198] sm:$0xf]
  %vm1962 = vcmask 818176
  %v1964 = vsel %vm1962, %v1909, 0
  %vm1966 = vcmask 1043456
  %v1968 = vsel %vm1966, %v1958, 0
  %v1971 = vsel %vm1966, %v1959, 0
  %v1974 = vsel %vm1966, %v1960, 0
  %v1977 = vsel %vm1966, %v1961, 0
  %1979 = vmatpush.msra.mxu0 0.0
  %1980 = vmatpush.msra.mxu0 0.0
  %1981 = vmatpush.msra.mxu0 0.0
  %v1982 = vand.u32 %v1968, 4294901760
  %1983 = vmatpush.msra.mxu0 %v1982
  %v1984 = vand.u32 %v1954, 4294901760
  %1985 = vmatpush.msra.mxu0 %v1984
  %v1986 = vand.u32 %v1950, 4294901760
  %1987 = vmatpush.msra.mxu0 %v1986
  %v1988 = vand.u32 %v1946, 4294901760
  %1989 = vmatpush.msra.mxu0 %v1988
  %v1990 = vand.u32 %v1942, 4294901760
  %1991 = vmatpush.msra.mxu0 %v1990
  %v1992 = vand.u32 %v1938, 4294901760
  %1993 = vmatpush.msra.mxu0 %v1992
  %v1994 = vand.u32 %v1934, 4294901760
  %1995 = vmatpush.msra.mxu0 %v1994
  %v1996 = vand.u32 %v1930, 4294901760
  %1997 = vmatpush.msra.mxu0 %v1996
  %v1998 = vand.u32 %v1926, 4294901760
  %1999 = vmatpush.msra.mxu0 %v1998
  %v2000 = vand.u32 %v1922, 4294901760
  %2001 = vmatpush.msra.mxu0 %v2000
  %v2002 = vand.u32 %v1918, 4294901760
  %2003 = vmatpush.msra.mxu0 %v2002
  %v2004 = vand.u32 %v1914, 4294901760
  %2005 = vmatpush.msra.mxu0 %v2004
  %v2006 = vand.u32 %v1910, 4294901760
  %2007 = vmatpush.msra.mxu0 %v2006
  %v2008 = vand.u32 %v1964, 4294901760
  %v2009 = vsub.f32 %v1964, %v2008
  %v2010 = vand.u32 %v2009, 4294901760
  %v2011 = vsub.f32 %v2009, %v2010
  %v2012 = vand.u32 %v2011, 4294901760
  %2013 = vmatmul.f32.gmra.mxu0 %v2012
  %v2014 = vpop.f32.mrf.mxu0
  %v2015 = vadd.f32 0.0, %v2014
  %2016 = vdwg.mxu0
  %2017 = vmatpush.msra.mxu0 0.0
  %2018 = vmatpush.msra.mxu0 0.0
  %2019 = vmatpush.msra.mxu0 0.0
  %v2020 = vand.u32 %v1968, 4294901760
  %v2021 = vsub.f32 %v1968, %v2020
  %v2022 = vand.u32 %v2021, 4294901760
  %v2023 = vsub.f32 %v2021, %v2022
  %v2024 = vand.u32 %v2023, 4294901760
  %2025 = vmatpush.msra.mxu0 %v2024
  %v2026 = vand.u32 %v1954, 4294901760
  %v2027 = vsub.f32 %v1954, %v2026
  %v2028 = vand.u32 %v2027, 4294901760
  %v2029 = vsub.f32 %v2027, %v2028
  %v2030 = vand.u32 %v2029, 4294901760
  %2031 = vmatpush.msra.mxu0 %v2030
  %v2032 = vand.u32 %v1950, 4294901760
  %v2033 = vsub.f32 %v1950, %v2032
  %v2034 = vand.u32 %v2033, 4294901760
  %v2035 = vsub.f32 %v2033, %v2034
  %v2036 = vand.u32 %v2035, 4294901760
  %2037 = vmatpush.msra.mxu0 %v2036
  %v2038 = vand.u32 %v1946, 4294901760
  %v2039 = vsub.f32 %v1946, %v2038
  %v2040 = vand.u32 %v2039, 4294901760
  %v2041 = vsub.f32 %v2039, %v2040
  %v2042 = vand.u32 %v2041, 4294901760
  %2043 = vmatpush.msra.mxu0 %v2042
  %v2044 = vand.u32 %v1942, 4294901760
  %v2045 = vsub.f32 %v1942, %v2044
  %v2046 = vand.u32 %v2045, 4294901760
  %v2047 = vsub.f32 %v2045, %v2046
  %v2048 = vand.u32 %v2047, 4294901760
  %2049 = vmatpush.msra.mxu0 %v2048
  %v2050 = vand.u32 %v1938, 4294901760
  %v2051 = vsub.f32 %v1938, %v2050
  %v2052 = vand.u32 %v2051, 4294901760
  %v2053 = vsub.f32 %v2051, %v2052
  %v2054 = vand.u32 %v2053, 4294901760
  %2055 = vmatpush.msra.mxu0 %v2054
  %v2056 = vand.u32 %v1934, 4294901760
  %v2057 = vsub.f32 %v1934, %v2056
  %v2058 = vand.u32 %v2057, 4294901760
  %v2059 = vsub.f32 %v2057, %v2058
  %v2060 = vand.u32 %v2059, 4294901760
  %2061 = vmatpush.msra.mxu0 %v2060
  %v2062 = vand.u32 %v1930, 4294901760
  %v2063 = vsub.f32 %v1930, %v2062
  %v2064 = vand.u32 %v2063, 4294901760
  %v2065 = vsub.f32 %v2063, %v2064
  %v2066 = vand.u32 %v2065, 4294901760
  %2067 = vmatpush.msra.mxu0 %v2066
  %v2068 = vand.u32 %v1926, 4294901760
  %v2069 = vsub.f32 %v1926, %v2068
  %v2070 = vand.u32 %v2069, 4294901760
  %v2071 = vsub.f32 %v2069, %v2070
  %v2072 = vand.u32 %v2071, 4294901760
  %2073 = vmatpush.msra.mxu0 %v2072
  %v2074 = vand.u32 %v1922, 4294901760
  %v2075 = vsub.f32 %v1922, %v2074
  %v2076 = vand.u32 %v2075, 4294901760
  %v2077 = vsub.f32 %v2075, %v2076
  %v2078 = vand.u32 %v2077, 4294901760
  %2079 = vmatpush.msra.mxu0 %v2078
  %v2080 = vand.u32 %v1918, 4294901760
  %v2081 = vsub.f32 %v1918, %v2080
  %v2082 = vand.u32 %v2081, 4294901760
  %v2083 = vsub.f32 %v2081, %v2082
  %v2084 = vand.u32 %v2083, 4294901760
  %2085 = vmatpush.msra.mxu0 %v2084
  %v2086 = vand.u32 %v1914, 4294901760
  %v2087 = vsub.f32 %v1914, %v2086
  %v2088 = vand.u32 %v2087, 4294901760
  %v2089 = vsub.f32 %v2087, %v2088
  %v2090 = vand.u32 %v2089, 4294901760
  %2091 = vmatpush.msra.mxu0 %v2090
  %v2092 = vand.u32 %v1910, 4294901760
  %v2093 = vsub.f32 %v1910, %v2092
  %v2094 = vand.u32 %v2093, 4294901760
  %v2095 = vsub.f32 %v2093, %v2094
  %v2096 = vand.u32 %v2095, 4294901760
  %2097 = vmatpush.msra.mxu0 %v2096
  %v2098 = vand.u32 %v1964, 4294901760
  %2099 = vmatmul.f32.gmra.mxu0 %v2098
  %v2100 = vpop.f32.mrf.mxu0
  %v2101 = vadd.f32 %v2015, %v2100
  %2102 = vdwg.mxu0
  %2103 = vmatpush.msra.mxu0 0.0
  %2104 = vmatpush.msra.mxu0 0.0
  %2105 = vmatpush.msra.mxu0 0.0
  %v2106 = vand.u32 %v1968, 4294901760
  %v2107 = vsub.f32 %v1968, %v2106
  %2108 = vmatpush.msra.mxu0 %v2107
  %v2109 = vand.u32 %v1954, 4294901760
  %v2110 = vsub.f32 %v1954, %v2109
  %2111 = vmatpush.msra.mxu0 %v2110
  %v2112 = vand.u32 %v1950, 4294901760
  %v2113 = vsub.f32 %v1950, %v2112
  %2114 = vmatpush.msra.mxu0 %v2113
  %v2115 = vand.u32 %v1946, 4294901760
  %v2116 = vsub.f32 %v1946, %v2115
  %2117 = vmatpush.msra.mxu0 %v2116
  %v2118 = vand.u32 %v1942, 4294901760
  %v2119 = vsub.f32 %v1942, %v2118
  %2120 = vmatpush.msra.mxu0 %v2119
  %v2121 = vand.u32 %v1938, 4294901760
  %v2122 = vsub.f32 %v1938, %v2121
  %2123 = vmatpush.msra.mxu0 %v2122
  %v2124 = vand.u32 %v1934, 4294901760
  %v2125 = vsub.f32 %v1934, %v2124
  %2126 = vmatpush.msra.mxu0 %v2125
  %v2127 = vand.u32 %v1930, 4294901760
  %v2128 = vsub.f32 %v1930, %v2127
  %2129 = vmatpush.msra.mxu0 %v2128
  %v2130 = vand.u32 %v1926, 4294901760
  %v2131 = vsub.f32 %v1926, %v2130
  %2132 = vmatpush.msra.mxu0 %v2131
  %v2133 = vand.u32 %v1922, 4294901760
  %v2134 = vsub.f32 %v1922, %v2133
  %2135 = vmatpush.msra.mxu0 %v2134
  %v2136 = vand.u32 %v1918, 4294901760
  %v2137 = vsub.f32 %v1918, %v2136
  %2138 = vmatpush.msra.mxu0 %v2137
  %v2139 = vand.u32 %v1914, 4294901760
  %v2140 = vsub.f32 %v1914, %v2139
  %2141 = vmatpush.msra.mxu0 %v2140
  %v2142 = vand.u32 %v1910, 4294901760
  %v2143 = vsub.f32 %v1910, %v2142
  %2144 = vmatpush.msra.mxu0 %v2143
  %v2145 = vand.u32 %v1964, 4294901760
  %v2146 = vsub.f32 %v1964, %v2145
  %2147 = vmatmul.f32.gmra.mxu0 %v2146
  %v2148 = vpop.f32.mrf.mxu0
  %v2149 = vadd.f32 %v2101, %v2148
  %2150 = vdwg.mxu0
  %2151 = vmatpush.msra.mxu0 0.0
  %2152 = vmatpush.msra.mxu0 0.0
  %2153 = vmatpush.msra.mxu0 0.0
  %v2154 = vand.u32 %v1968, 4294901760
  %2155 = vmatpush.msra.mxu0 %v2154
  %v2156 = vand.u32 %v1954, 4294901760
  %2157 = vmatpush.msra.mxu0 %v2156
  %v2158 = vand.u32 %v1950, 4294901760
  %2159 = vmatpush.msra.mxu0 %v2158
  %v2160 = vand.u32 %v1946, 4294901760
  %2161 = vmatpush.msra.mxu0 %v2160
  %v2162 = vand.u32 %v1942, 4294901760
  %2163 = vmatpush.msra.mxu0 %v2162
  %v2164 = vand.u32 %v1938, 4294901760
  %2165 = vmatpush.msra.mxu0 %v2164
  %v2166 = vand.u32 %v1934, 4294901760
  %2167 = vmatpush.msra.mxu0 %v2166
  %v2168 = vand.u32 %v1930, 4294901760
  %2169 = vmatpush.msra.mxu0 %v2168
  %v2170 = vand.u32 %v1926, 4294901760
  %2171 = vmatpush.msra.mxu0 %v2170
  %v2172 = vand.u32 %v1922, 4294901760
  %2173 = vmatpush.msra.mxu0 %v2172
  %v2174 = vand.u32 %v1918, 4294901760
  %2175 = vmatpush.msra.mxu0 %v2174
  %v2176 = vand.u32 %v1914, 4294901760
  %2177 = vmatpush.msra.mxu0 %v2176
  %v2178 = vand.u32 %v1910, 4294901760
  %2179 = vmatpush.msra.mxu0 %v2178
  %v2180 = vand.u32 %v1964, 4294901760
  %v2181 = vsub.f32 %v1964, %v2180
  %v2182 = vand.u32 %v2181, 4294901760
  %2183 = vmatmul.f32.gmra.mxu0 %v2182
  %v2184 = vpop.f32.mrf.mxu0
  %v2185 = vadd.f32 %v2149, %v2184
  %2186 = vdwg.mxu0
  %2187 = vmatpush.msra.mxu0 0.0
  %2188 = vmatpush.msra.mxu0 0.0
  %2189 = vmatpush.msra.mxu0 0.0
  %v2190 = vand.u32 %v1968, 4294901760
  %v2191 = vsub.f32 %v1968, %v2190
  %v2192 = vand.u32 %v2191, 4294901760
  %2193 = vmatpush.msra.mxu0 %v2192
  %v2194 = vand.u32 %v1954, 4294901760
  %v2195 = vsub.f32 %v1954, %v2194
  %v2196 = vand.u32 %v2195, 4294901760
  %2197 = vmatpush.msra.mxu0 %v2196
  %v2198 = vand.u32 %v1950, 4294901760
  %v2199 = vsub.f32 %v1950, %v2198
  %v2200 = vand.u32 %v2199, 4294901760
  %2201 = vmatpush.msra.mxu0 %v2200
  %v2202 = vand.u32 %v1946, 4294901760
  %v2203 = vsub.f32 %v1946, %v2202
  %v2204 = vand.u32 %v2203, 4294901760
  %2205 = vmatpush.msra.mxu0 %v2204
  %v2206 = vand.u32 %v1942, 4294901760
  %v2207 = vsub.f32 %v1942, %v2206
  %v2208 = vand.u32 %v2207, 4294901760
  %2209 = vmatpush.msra.mxu0 %v2208
  %v2210 = vand.u32 %v1938, 4294901760
  %v2211 = vsub.f32 %v1938, %v2210
  %v2212 = vand.u32 %v2211, 4294901760
  %2213 = vmatpush.msra.mxu0 %v2212
  %v2214 = vand.u32 %v1934, 4294901760
  %v2215 = vsub.f32 %v1934, %v2214
  %v2216 = vand.u32 %v2215, 4294901760
  %2217 = vmatpush.msra.mxu0 %v2216
  %v2218 = vand.u32 %v1930, 4294901760
  %v2219 = vsub.f32 %v1930, %v2218
  %v2220 = vand.u32 %v2219, 4294901760
  %2221 = vmatpush.msra.mxu0 %v2220
  %v2222 = vand.u32 %v1926, 4294901760
  %v2223 = vsub.f32 %v1926, %v2222
  %v2224 = vand.u32 %v2223, 4294901760
  %2225 = vmatpush.msra.mxu0 %v2224
  %v2226 = vand.u32 %v1922, 4294901760
  %v2227 = vsub.f32 %v1922, %v2226
  %v2228 = vand.u32 %v2227, 4294901760
  %2229 = vmatpush.msra.mxu0 %v2228
  %v2230 = vand.u32 %v1918, 4294901760
  %v2231 = vsub.f32 %v1918, %v2230
  %v2232 = vand.u32 %v2231, 4294901760
  %2233 = vmatpush.msra.mxu0 %v2232
  %v2234 = vand.u32 %v1914, 4294901760
  %v2235 = vsub.f32 %v1914, %v2234
  %v2236 = vand.u32 %v2235, 4294901760
  %2237 = vmatpush.msra.mxu0 %v2236
  %v2238 = vand.u32 %v1910, 4294901760
  %v2239 = vsub.f32 %v1910, %v2238
  %v2240 = vand.u32 %v2239, 4294901760
  %2241 = vmatpush.msra.mxu0 %v2240
  %v2242 = vand.u32 %v1964, 4294901760
  %2243 = vmatmul.f32.gmra.mxu0 %v2242
  %v2244 = vpop.f32.mrf.mxu0
  %v2245 = vadd.f32 %v2185, %v2244
  %2246 = vdwg.mxu0
  %2247 = vmatpush.msra.mxu0 0.0
  %2248 = vmatpush.msra.mxu0 0.0
  %2249 = vmatpush.msra.mxu0 0.0
  %v2250 = vand.u32 %v1968, 4294901760
  %2251 = vmatpush.msra.mxu0 %v2250
  %v2252 = vand.u32 %v1954, 4294901760
  %2253 = vmatpush.msra.mxu0 %v2252
  %v2254 = vand.u32 %v1950, 4294901760
  %2255 = vmatpush.msra.mxu0 %v2254
  %v2256 = vand.u32 %v1946, 4294901760
  %2257 = vmatpush.msra.mxu0 %v2256
  %v2258 = vand.u32 %v1942, 4294901760
  %2259 = vmatpush.msra.mxu0 %v2258
  %v2260 = vand.u32 %v1938, 4294901760
  %2261 = vmatpush.msra.mxu0 %v2260
  %v2262 = vand.u32 %v1934, 4294901760
  %2263 = vmatpush.msra.mxu0 %v2262
  %v2264 = vand.u32 %v1930, 4294901760
  %2265 = vmatpush.msra.mxu0 %v2264
  %v2266 = vand.u32 %v1926, 4294901760
  %2267 = vmatpush.msra.mxu0 %v2266
  %v2268 = vand.u32 %v1922, 4294901760
  %2269 = vmatpush.msra.mxu0 %v2268
  %v2270 = vand.u32 %v1918, 4294901760
  %2271 = vmatpush.msra.mxu0 %v2270
  %v2272 = vand.u32 %v1914, 4294901760
  %2273 = vmatpush.msra.mxu0 %v2272
  %v2274 = vand.u32 %v1910, 4294901760
  %2275 = vmatpush.msra.mxu0 %v2274
  %v2276 = vand.u32 %v1964, 4294901760
  %2277 = vmatmul.f32.gmra.mxu0 %v2276
  %v2278 = vpop.f32.mrf.mxu0
  %v2279 = vadd.f32 %v2245, %v2278
  %2280 = vdwg.mxu0
  %2281 = vmatpush.msra.mxu0 0.0
  %2282 = vmatpush.msra.mxu0 0.0
  %2283 = vmatpush.msra.mxu0 0.0
  %v2284 = vand.u32 %v1971, 4294901760
  %2285 = vmatpush.msra.mxu0 %v2284
  %v2286 = vand.u32 %v1955, 4294901760
  %2287 = vmatpush.msra.mxu0 %v2286
  %v2288 = vand.u32 %v1951, 4294901760
  %2289 = vmatpush.msra.mxu0 %v2288
  %v2290 = vand.u32 %v1947, 4294901760
  %2291 = vmatpush.msra.mxu0 %v2290
  %v2292 = vand.u32 %v1943, 4294901760
  %2293 = vmatpush.msra.mxu0 %v2292
  %v2294 = vand.u32 %v1939, 4294901760
  %2295 = vmatpush.msra.mxu0 %v2294
  %v2296 = vand.u32 %v1935, 4294901760
  %2297 = vmatpush.msra.mxu0 %v2296
  %v2298 = vand.u32 %v1931, 4294901760
  %2299 = vmatpush.msra.mxu0 %v2298
  %v2300 = vand.u32 %v1927, 4294901760
  %2301 = vmatpush.msra.mxu0 %v2300
  %v2302 = vand.u32 %v1923, 4294901760
  %2303 = vmatpush.msra.mxu0 %v2302
  %v2304 = vand.u32 %v1919, 4294901760
  %2305 = vmatpush.msra.mxu0 %v2304
  %v2306 = vand.u32 %v1915, 4294901760
  %2307 = vmatpush.msra.mxu0 %v2306
  %v2308 = vand.u32 %v1911, 4294901760
  %2309 = vmatpush.msra.mxu0 %v2308
  %v2310 = vand.u32 %v1964, 4294901760
  %v2311 = vsub.f32 %v1964, %v2310
  %v2312 = vand.u32 %v2311, 4294901760
  %v2313 = vsub.f32 %v2311, %v2312
  %v2314 = vand.u32 %v2313, 4294901760
  %2315 = vmatmul.f32.gmra.mxu0 %v2314
  %v2316 = vpop.f32.mrf.mxu0
  %v2317 = vadd.f32 0.0, %v2316
  %2318 = vdwg.mxu0
  %2319 = vmatpush.msra.mxu0 0.0
  %2320 = vmatpush.msra.mxu0 0.0
  %2321 = vmatpush.msra.mxu0 0.0
  %v2322 = vand.u32 %v1971, 4294901760
  %v2323 = vsub.f32 %v1971, %v2322
  %v2324 = vand.u32 %v2323, 4294901760
  %v2325 = vsub.f32 %v2323, %v2324
  %v2326 = vand.u32 %v2325, 4294901760
  %2327 = vmatpush.msra.mxu0 %v2326
  %v2328 = vand.u32 %v1955, 4294901760
  %v2329 = vsub.f32 %v1955, %v2328
  %v2330 = vand.u32 %v2329, 4294901760
  %v2331 = vsub.f32 %v2329, %v2330
  %v2332 = vand.u32 %v2331, 4294901760
  %2333 = vmatpush.msra.mxu0 %v2332
  %v2334 = vand.u32 %v1951, 4294901760
  %v2335 = vsub.f32 %v1951, %v2334
  %v2336 = vand.u32 %v2335, 4294901760
  %v2337 = vsub.f32 %v2335, %v2336
  %v2338 = vand.u32 %v2337, 4294901760
  %2339 = vmatpush.msra.mxu0 %v2338
  %v2340 = vand.u32 %v1947, 4294901760
  %v2341 = vsub.f32 %v1947, %v2340
  %v2342 = vand.u32 %v2341, 4294901760
  %v2343 = vsub.f32 %v2341, %v2342
  %v2344 = vand.u32 %v2343, 4294901760
  %2345 = vmatpush.msra.mxu0 %v2344
  %v2346 = vand.u32 %v1943, 4294901760
  %v2347 = vsub.f32 %v1943, %v2346
  %v2348 = vand.u32 %v2347, 4294901760
  %v2349 = vsub.f32 %v2347, %v2348
  %v2350 = vand.u32 %v2349, 4294901760
  %2351 = vmatpush.msra.mxu0 %v2350
  %v2352 = vand.u32 %v1939, 4294901760
  %v2353 = vsub.f32 %v1939, %v2352
  %v2354 = vand.u32 %v2353, 4294901760
  %v2355 = vsub.f32 %v2353, %v2354
  %v2356 = vand.u32 %v2355, 4294901760
  %2357 = vmatpush.msra.mxu0 %v2356
  %v2358 = vand.u32 %v1935, 4294901760
  %v2359 = vsub.f32 %v1935, %v2358
  %v2360 = vand.u32 %v2359, 4294901760
  %v2361 = vsub.f32 %v2359, %v2360
  %v2362 = vand.u32 %v2361, 4294901760
  %2363 = vmatpush.msra.mxu0 %v2362
  %v2364 = vand.u32 %v1931, 4294901760
  %v2365 = vsub.f32 %v1931, %v2364
  %v2366 = vand.u32 %v2365, 4294901760
  %v2367 = vsub.f32 %v2365, %v2366
  %v2368 = vand.u32 %v2367, 4294901760
  %2369 = vmatpush.msra.mxu0 %v2368
  %v2370 = vand.u32 %v1927, 4294901760
  %v2371 = vsub.f32 %v1927, %v2370
  %v2372 = vand.u32 %v2371, 4294901760
  %v2373 = vsub.f32 %v2371, %v2372
  %v2374 = vand.u32 %v2373, 4294901760
  %2375 = vmatpush.msra.mxu0 %v2374
  %v2376 = vand.u32 %v1923, 4294901760
  %v2377 = vsub.f32 %v1923, %v2376
  %v2378 = vand.u32 %v2377, 4294901760
  %v2379 = vsub.f32 %v2377, %v2378
  %v2380 = vand.u32 %v2379, 4294901760
  %2381 = vmatpush.msra.mxu0 %v2380
  %v2382 = vand.u32 %v1919, 4294901760
  %v2383 = vsub.f32 %v1919, %v2382
  %v2384 = vand.u32 %v2383, 4294901760
  %v2385 = vsub.f32 %v2383, %v2384
  %v2386 = vand.u32 %v2385, 4294901760
  %2387 = vmatpush.msra.mxu0 %v2386
  %v2388 = vand.u32 %v1915, 4294901760
  %v2389 = vsub.f32 %v1915, %v2388
  %v2390 = vand.u32 %v2389, 4294901760
  %v2391 = vsub.f32 %v2389, %v2390
  %v2392 = vand.u32 %v2391, 4294901760
  %2393 = vmatpush.msra.mxu0 %v2392
  %v2394 = vand.u32 %v1911, 4294901760
  %v2395 = vsub.f32 %v1911, %v2394
  %v2396 = vand.u32 %v2395, 4294901760
  %v2397 = vsub.f32 %v2395, %v2396
  %v2398 = vand.u32 %v2397, 4294901760
  %2399 = vmatpush.msra.mxu0 %v2398
  %v2400 = vand.u32 %v1964, 4294901760
  %2401 = vmatmul.f32.gmra.mxu0 %v2400
  %v2402 = vpop.f32.mrf.mxu0
  %v2403 = vadd.f32 %v2317, %v2402
  %2404 = vdwg.mxu0
  %2405 = vmatpush.msra.mxu0 0.0
  %2406 = vmatpush.msra.mxu0 0.0
  %2407 = vmatpush.msra.mxu0 0.0
  %v2408 = vand.u32 %v1971, 4294901760
  %v2409 = vsub.f32 %v1971, %v2408
  %2410 = vmatpush.msra.mxu0 %v2409
  %v2411 = vand.u32 %v1955, 4294901760
  %v2412 = vsub.f32 %v1955, %v2411
  %2413 = vmatpush.msra.mxu0 %v2412
  %v2414 = vand.u32 %v1951, 4294901760
  %v2415 = vsub.f32 %v1951, %v2414
  %2416 = vmatpush.msra.mxu0 %v2415
  %v2417 = vand.u32 %v1947, 4294901760
  %v2418 = vsub.f32 %v1947, %v2417
  %2419 = vmatpush.msra.mxu0 %v2418
  %v2420 = vand.u32 %v1943, 4294901760
  %v2421 = vsub.f32 %v1943, %v2420
  %2422 = vmatpush.msra.mxu0 %v2421
  %v2423 = vand.u32 %v1939, 4294901760
  %v2424 = vsub.f32 %v1939, %v2423
  %2425 = vmatpush.msra.mxu0 %v2424
  %v2426 = vand.u32 %v1935, 4294901760
  %v2427 = vsub.f32 %v1935, %v2426
  %2428 = vmatpush.msra.mxu0 %v2427
  %v2429 = vand.u32 %v1931, 4294901760
  %v2430 = vsub.f32 %v1931, %v2429
  %2431 = vmatpush.msra.mxu0 %v2430
  %v2432 = vand.u32 %v1927, 4294901760
  %v2433 = vsub.f32 %v1927, %v2432
  %2434 = vmatpush.msra.mxu0 %v2433
  %v2435 = vand.u32 %v1923, 4294901760
  %v2436 = vsub.f32 %v1923, %v2435
  %2437 = vmatpush.msra.mxu0 %v2436
  %v2438 = vand.u32 %v1919, 4294901760
  %v2439 = vsub.f32 %v1919, %v2438
  %2440 = vmatpush.msra.mxu0 %v2439
  %v2441 = vand.u32 %v1915, 4294901760
  %v2442 = vsub.f32 %v1915, %v2441
  %2443 = vmatpush.msra.mxu0 %v2442
  %v2444 = vand.u32 %v1911, 4294901760
  %v2445 = vsub.f32 %v1911, %v2444
  %2446 = vmatpush.msra.mxu0 %v2445
  %v2447 = vand.u32 %v1964, 4294901760
  %v2448 = vsub.f32 %v1964, %v2447
  %2449 = vmatmul.f32.gmra.mxu0 %v2448
  %v2450 = vpop.f32.mrf.mxu0
  %v2451 = vadd.f32 %v2403, %v2450
  %2452 = vdwg.mxu0
  %2453 = vmatpush.msra.mxu0 0.0
  %2454 = vmatpush.msra.mxu0 0.0
  %2455 = vmatpush.msra.mxu0 0.0
  %v2456 = vand.u32 %v1971, 4294901760
  %2457 = vmatpush.msra.mxu0 %v2456
  %v2458 = vand.u32 %v1955, 4294901760
  %2459 = vmatpush.msra.mxu0 %v2458
  %v2460 = vand.u32 %v1951, 4294901760
  %2461 = vmatpush.msra.mxu0 %v2460
  %v2462 = vand.u32 %v1947, 4294901760
  %2463 = vmatpush.msra.mxu0 %v2462
  %v2464 = vand.u32 %v1943, 4294901760
  %2465 = vmatpush.msra.mxu0 %v2464
  %v2466 = vand.u32 %v1939, 4294901760
  %2467 = vmatpush.msra.mxu0 %v2466
  %v2468 = vand.u32 %v1935, 4294901760
  %2469 = vmatpush.msra.mxu0 %v2468
  %v2470 = vand.u32 %v1931, 4294901760
  %2471 = vmatpush.msra.mxu0 %v2470
  %v2472 = vand.u32 %v1927, 4294901760
  %2473 = vmatpush.msra.mxu0 %v2472
  %v2474 = vand.u32 %v1923, 4294901760
  %2475 = vmatpush.msra.mxu0 %v2474
  %v2476 = vand.u32 %v1919, 4294901760
  %2477 = vmatpush.msra.mxu0 %v2476
  %v2478 = vand.u32 %v1915, 4294901760
  %2479 = vmatpush.msra.mxu0 %v2478
  %v2480 = vand.u32 %v1911, 4294901760
  %2481 = vmatpush.msra.mxu0 %v2480
  %v2482 = vand.u32 %v1964, 4294901760
  %v2483 = vsub.f32 %v1964, %v2482
  %v2484 = vand.u32 %v2483, 4294901760
  %2485 = vmatmul.f32.gmra.mxu0 %v2484
  %v2486 = vpop.f32.mrf.mxu0
  %v2487 = vadd.f32 %v2451, %v2486
  %2488 = vdwg.mxu0
  %2489 = vmatpush.msra.mxu0 0.0
  %2490 = vmatpush.msra.mxu0 0.0
  %2491 = vmatpush.msra.mxu0 0.0
  %v2492 = vand.u32 %v1971, 4294901760
  %v2493 = vsub.f32 %v1971, %v2492
  %v2494 = vand.u32 %v2493, 4294901760
  %2495 = vmatpush.msra.mxu0 %v2494
  %v2496 = vand.u32 %v1955, 4294901760
  %v2497 = vsub.f32 %v1955, %v2496
  %v2498 = vand.u32 %v2497, 4294901760
  %2499 = vmatpush.msra.mxu0 %v2498
  %v2500 = vand.u32 %v1951, 4294901760
  %v2501 = vsub.f32 %v1951, %v2500
  %v2502 = vand.u32 %v2501, 4294901760
  %2503 = vmatpush.msra.mxu0 %v2502
  %v2504 = vand.u32 %v1947, 4294901760
  %v2505 = vsub.f32 %v1947, %v2504
  %v2506 = vand.u32 %v2505, 4294901760
  %2507 = vmatpush.msra.mxu0 %v2506
  %v2508 = vand.u32 %v1943, 4294901760
  %v2509 = vsub.f32 %v1943, %v2508
  %v2510 = vand.u32 %v2509, 4294901760
  %2511 = vmatpush.msra.mxu0 %v2510
  %v2512 = vand.u32 %v1939, 4294901760
  %v2513 = vsub.f32 %v1939, %v2512
  %v2514 = vand.u32 %v2513, 4294901760
  %2515 = vmatpush.msra.mxu0 %v2514
  %v2516 = vand.u32 %v1935, 4294901760
  %v2517 = vsub.f32 %v1935, %v2516
  %v2518 = vand.u32 %v2517, 4294901760
  %2519 = vmatpush.msra.mxu0 %v2518
  %v2520 = vand.u32 %v1931, 4294901760
  %v2521 = vsub.f32 %v1931, %v2520
  %v2522 = vand.u32 %v2521, 4294901760
  %2523 = vmatpush.msra.mxu0 %v2522
  %v2524 = vand.u32 %v1927, 4294901760
  %v2525 = vsub.f32 %v1927, %v2524
  %v2526 = vand.u32 %v2525, 4294901760
  %2527 = vmatpush.msra.mxu0 %v2526
  %v2528 = vand.u32 %v1923, 4294901760
  %v2529 = vsub.f32 %v1923, %v2528
  %v2530 = vand.u32 %v2529, 4294901760
  %2531 = vmatpush.msra.mxu0 %v2530
  %v2532 = vand.u32 %v1919, 4294901760
  %v2533 = vsub.f32 %v1919, %v2532
  %v2534 = vand.u32 %v2533, 4294901760
  %2535 = vmatpush.msra.mxu0 %v2534
  %v2536 = vand.u32 %v1915, 4294901760
  %v2537 = vsub.f32 %v1915, %v2536
  %v2538 = vand.u32 %v2537, 4294901760
  %2539 = vmatpush.msra.mxu0 %v2538
  %v2540 = vand.u32 %v1911, 4294901760
  %v2541 = vsub.f32 %v1911, %v2540
  %v2542 = vand.u32 %v2541, 4294901760
  %2543 = vmatpush.msra.mxu0 %v2542
  %v2544 = vand.u32 %v1964, 4294901760
  %2545 = vmatmul.f32.gmra.mxu0 %v2544
  %v2546 = vpop.f32.mrf.mxu0
  %v2547 = vadd.f32 %v2487, %v2546
  %2548 = vdwg.mxu0
  %2549 = vmatpush.msra.mxu0 0.0
  %2550 = vmatpush.msra.mxu0 0.0
  %2551 = vmatpush.msra.mxu0 0.0
  %v2552 = vand.u32 %v1971, 4294901760
  %2553 = vmatpush.msra.mxu0 %v2552
  %v2554 = vand.u32 %v1955, 4294901760
  %2555 = vmatpush.msra.mxu0 %v2554
  %v2556 = vand.u32 %v1951, 4294901760
  %2557 = vmatpush.msra.mxu0 %v2556
  %v2558 = vand.u32 %v1947, 4294901760
  %2559 = vmatpush.msra.mxu0 %v2558
  %v2560 = vand.u32 %v1943, 4294901760
  %2561 = vmatpush.msra.mxu0 %v2560
  %v2562 = vand.u32 %v1939, 4294901760
  %2563 = vmatpush.msra.mxu0 %v2562
  %v2564 = vand.u32 %v1935, 4294901760
  %2565 = vmatpush.msra.mxu0 %v2564
  %v2566 = vand.u32 %v1931, 4294901760
  %2567 = vmatpush.msra.mxu0 %v2566
  %v2568 = vand.u32 %v1927, 4294901760
  %2569 = vmatpush.msra.mxu0 %v2568
  %v2570 = vand.u32 %v1923, 4294901760
  %2571 = vmatpush.msra.mxu0 %v2570
  %v2572 = vand.u32 %v1919, 4294901760
  %2573 = vmatpush.msra.mxu0 %v2572
  %v2574 = vand.u32 %v1915, 4294901760
  %2575 = vmatpush.msra.mxu0 %v2574
  %v2576 = vand.u32 %v1911, 4294901760
  %2577 = vmatpush.msra.mxu0 %v2576
  %v2578 = vand.u32 %v1964, 4294901760
  %2579 = vmatmul.f32.gmra.mxu0 %v2578
  %v2580 = vpop.f32.mrf.mxu0
  %v2581 = vadd.f32 %v2547, %v2580
  %2582 = vdwg.mxu0
  %2583 = vmatpush.msra.mxu0 0.0
  %2584 = vmatpush.msra.mxu0 0.0
  %2585 = vmatpush.msra.mxu0 0.0
  %v2586 = vand.u32 %v1974, 4294901760
  %2587 = vmatpush.msra.mxu0 %v2586
  %v2588 = vand.u32 %v1956, 4294901760
  %2589 = vmatpush.msra.mxu0 %v2588
  %v2590 = vand.u32 %v1952, 4294901760
  %2591 = vmatpush.msra.mxu0 %v2590
  %v2592 = vand.u32 %v1948, 4294901760
  %2593 = vmatpush.msra.mxu0 %v2592
  %v2594 = vand.u32 %v1944, 4294901760
  %2595 = vmatpush.msra.mxu0 %v2594
  %v2596 = vand.u32 %v1940, 4294901760
  %2597 = vmatpush.msra.mxu0 %v2596
  %v2598 = vand.u32 %v1936, 4294901760
  %2599 = vmatpush.msra.mxu0 %v2598
  %v2600 = vand.u32 %v1932, 4294901760
  %2601 = vmatpush.msra.mxu0 %v2600
  %v2602 = vand.u32 %v1928, 4294901760
  %2603 = vmatpush.msra.mxu0 %v2602
  %v2604 = vand.u32 %v1924, 4294901760
  %2605 = vmatpush.msra.mxu0 %v2604
  %v2606 = vand.u32 %v1920, 4294901760
  %2607 = vmatpush.msra.mxu0 %v2606
  %v2608 = vand.u32 %v1916, 4294901760
  %2609 = vmatpush.msra.mxu0 %v2608
  %v2610 = vand.u32 %v1912, 4294901760
  %2611 = vmatpush.msra.mxu0 %v2610
  %v2612 = vand.u32 %v1964, 4294901760
  %v2613 = vsub.f32 %v1964, %v2612
  %v2614 = vand.u32 %v2613, 4294901760
  %v2615 = vsub.f32 %v2613, %v2614
  %v2616 = vand.u32 %v2615, 4294901760
  %2617 = vmatmul.f32.gmra.mxu0 %v2616
  %v2618 = vpop.f32.mrf.mxu0
  %v2619 = vadd.f32 0.0, %v2618
  %2620 = vdwg.mxu0
  %2621 = vmatpush.msra.mxu0 0.0
  %2622 = vmatpush.msra.mxu0 0.0
  %2623 = vmatpush.msra.mxu0 0.0
  %v2624 = vand.u32 %v1974, 4294901760
  %v2625 = vsub.f32 %v1974, %v2624
  %v2626 = vand.u32 %v2625, 4294901760
  %v2627 = vsub.f32 %v2625, %v2626
  %v2628 = vand.u32 %v2627, 4294901760
  %2629 = vmatpush.msra.mxu0 %v2628
  %v2630 = vand.u32 %v1956, 4294901760
  %v2631 = vsub.f32 %v1956, %v2630
  %v2632 = vand.u32 %v2631, 4294901760
  %v2633 = vsub.f32 %v2631, %v2632
  %v2634 = vand.u32 %v2633, 4294901760
  %2635 = vmatpush.msra.mxu0 %v2634
  %v2636 = vand.u32 %v1952, 4294901760
  %v2637 = vsub.f32 %v1952, %v2636
  %v2638 = vand.u32 %v2637, 4294901760
  %v2639 = vsub.f32 %v2637, %v2638
  %v2640 = vand.u32 %v2639, 4294901760
  %2641 = vmatpush.msra.mxu0 %v2640
  %v2642 = vand.u32 %v1948, 4294901760
  %v2643 = vsub.f32 %v1948, %v2642
  %v2644 = vand.u32 %v2643, 4294901760
  %v2645 = vsub.f32 %v2643, %v2644
  %v2646 = vand.u32 %v2645, 4294901760
  %2647 = vmatpush.msra.mxu0 %v2646
  %v2648 = vand.u32 %v1944, 4294901760
  %v2649 = vsub.f32 %v1944, %v2648
  %v2650 = vand.u32 %v2649, 4294901760
  %v2651 = vsub.f32 %v2649, %v2650
  %v2652 = vand.u32 %v2651, 4294901760
  %2653 = vmatpush.msra.mxu0 %v2652
  %v2654 = vand.u32 %v1940, 4294901760
  %v2655 = vsub.f32 %v1940, %v2654
  %v2656 = vand.u32 %v2655, 4294901760
  %v2657 = vsub.f32 %v2655, %v2656
  %v2658 = vand.u32 %v2657, 4294901760
  %2659 = vmatpush.msra.mxu0 %v2658
  %v2660 = vand.u32 %v1936, 4294901760
  %v2661 = vsub.f32 %v1936, %v2660
  %v2662 = vand.u32 %v2661, 4294901760
  %v2663 = vsub.f32 %v2661, %v2662
  %v2664 = vand.u32 %v2663, 4294901760
  %2665 = vmatpush.msra.mxu0 %v2664
  %v2666 = vand.u32 %v1932, 4294901760
  %v2667 = vsub.f32 %v1932, %v2666
  %v2668 = vand.u32 %v2667, 4294901760
  %v2669 = vsub.f32 %v2667, %v2668
  %v2670 = vand.u32 %v2669, 4294901760
  %2671 = vmatpush.msra.mxu0 %v2670
  %v2672 = vand.u32 %v1928, 4294901760
  %v2673 = vsub.f32 %v1928, %v2672
  %v2674 = vand.u32 %v2673, 4294901760
  %v2675 = vsub.f32 %v2673, %v2674
  %v2676 = vand.u32 %v2675, 4294901760
  %2677 = vmatpush.msra.mxu0 %v2676
  %v2678 = vand.u32 %v1924, 4294901760
  %v2679 = vsub.f32 %v1924, %v2678
  %v2680 = vand.u32 %v2679, 4294901760
  %v2681 = vsub.f32 %v2679, %v2680
  %v2682 = vand.u32 %v2681, 4294901760
  %2683 = vmatpush.msra.mxu0 %v2682
  %v2684 = vand.u32 %v1920, 4294901760
  %v2685 = vsub.f32 %v1920, %v2684
  %v2686 = vand.u32 %v2685, 4294901760
  %v2687 = vsub.f32 %v2685, %v2686
  %v2688 = vand.u32 %v2687, 4294901760
  %2689 = vmatpush.msra.mxu0 %v2688
  %v2690 = vand.u32 %v1916, 4294901760
  %v2691 = vsub.f32 %v1916, %v2690
  %v2692 = vand.u32 %v2691, 4294901760
  %v2693 = vsub.f32 %v2691, %v2692
  %v2694 = vand.u32 %v2693, 4294901760
  %2695 = vmatpush.msra.mxu0 %v2694
  %v2696 = vand.u32 %v1912, 4294901760
  %v2697 = vsub.f32 %v1912, %v2696
  %v2698 = vand.u32 %v2697, 4294901760
  %v2699 = vsub.f32 %v2697, %v2698
  %v2700 = vand.u32 %v2699, 4294901760
  %2701 = vmatpush.msra.mxu0 %v2700
  %v2702 = vand.u32 %v1964, 4294901760
  %2703 = vmatmul.f32.gmra.mxu0 %v2702
  %v2704 = vpop.f32.mrf.mxu0
  %v2705 = vadd.f32 %v2619, %v2704
  %2706 = vdwg.mxu0
  %2707 = vmatpush.msra.mxu0 0.0
  %2708 = vmatpush.msra.mxu0 0.0
  %2709 = vmatpush.msra.mxu0 0.0
  %v2710 = vand.u32 %v1974, 4294901760
  %v2711 = vsub.f32 %v1974, %v2710
  %2712 = vmatpush.msra.mxu0 %v2711
  %v2713 = vand.u32 %v1956, 4294901760
  %v2714 = vsub.f32 %v1956, %v2713
  %2715 = vmatpush.msra.mxu0 %v2714
  %v2716 = vand.u32 %v1952, 4294901760
  %v2717 = vsub.f32 %v1952, %v2716
  %2718 = vmatpush.msra.mxu0 %v2717
  %v2719 = vand.u32 %v1948, 4294901760
  %v2720 = vsub.f32 %v1948, %v2719
  %2721 = vmatpush.msra.mxu0 %v2720
  %v2722 = vand.u32 %v1944, 4294901760
  %v2723 = vsub.f32 %v1944, %v2722
  %2724 = vmatpush.msra.mxu0 %v2723
  %v2725 = vand.u32 %v1940, 4294901760
  %v2726 = vsub.f32 %v1940, %v2725
  %2727 = vmatpush.msra.mxu0 %v2726
  %v2728 = vand.u32 %v1936, 4294901760
  %v2729 = vsub.f32 %v1936, %v2728
  %2730 = vmatpush.msra.mxu0 %v2729
  %v2731 = vand.u32 %v1932, 4294901760
  %v2732 = vsub.f32 %v1932, %v2731
  %2733 = vmatpush.msra.mxu0 %v2732
  %v2734 = vand.u32 %v1928, 4294901760
  %v2735 = vsub.f32 %v1928, %v2734
  %2736 = vmatpush.msra.mxu0 %v2735
  %v2737 = vand.u32 %v1924, 4294901760
  %v2738 = vsub.f32 %v1924, %v2737
  %2739 = vmatpush.msra.mxu0 %v2738
  %v2740 = vand.u32 %v1920, 4294901760
  %v2741 = vsub.f32 %v1920, %v2740
  %2742 = vmatpush.msra.mxu0 %v2741
  %v2743 = vand.u32 %v1916, 4294901760
  %v2744 = vsub.f32 %v1916, %v2743
  %2745 = vmatpush.msra.mxu0 %v2744
  %v2746 = vand.u32 %v1912, 4294901760
  %v2747 = vsub.f32 %v1912, %v2746
  %2748 = vmatpush.msra.mxu0 %v2747
  %v2749 = vand.u32 %v1964, 4294901760
  %v2750 = vsub.f32 %v1964, %v2749
  %2751 = vmatmul.f32.gmra.mxu0 %v2750
  %v2752 = vpop.f32.mrf.mxu0
  %v2753 = vadd.f32 %v2705, %v2752
  %2754 = vdwg.mxu0
  %2755 = vmatpush.msra.mxu0 0.0
  %2756 = vmatpush.msra.mxu0 0.0
  %2757 = vmatpush.msra.mxu0 0.0
  %v2758 = vand.u32 %v1974, 4294901760
  %2759 = vmatpush.msra.mxu0 %v2758
  %v2760 = vand.u32 %v1956, 4294901760
  %2761 = vmatpush.msra.mxu0 %v2760
  %v2762 = vand.u32 %v1952, 4294901760
  %2763 = vmatpush.msra.mxu0 %v2762
  %v2764 = vand.u32 %v1948, 4294901760
  %2765 = vmatpush.msra.mxu0 %v2764
  %v2766 = vand.u32 %v1944, 4294901760
  %2767 = vmatpush.msra.mxu0 %v2766
  %v2768 = vand.u32 %v1940, 4294901760
  %2769 = vmatpush.msra.mxu0 %v2768
  %v2770 = vand.u32 %v1936, 4294901760
  %2771 = vmatpush.msra.mxu0 %v2770
  %v2772 = vand.u32 %v1932, 4294901760
  %2773 = vmatpush.msra.mxu0 %v2772
  %v2774 = vand.u32 %v1928, 4294901760
  %2775 = vmatpush.msra.mxu0 %v2774
  %v2776 = vand.u32 %v1924, 4294901760
  %2777 = vmatpush.msra.mxu0 %v2776
  %v2778 = vand.u32 %v1920, 4294901760
  %2779 = vmatpush.msra.mxu0 %v2778
  %v2780 = vand.u32 %v1916, 4294901760
  %2781 = vmatpush.msra.mxu0 %v2780
  %v2782 = vand.u32 %v1912, 4294901760
  %2783 = vmatpush.msra.mxu0 %v2782
  %v2784 = vand.u32 %v1964, 4294901760
  %v2785 = vsub.f32 %v1964, %v2784
  %v2786 = vand.u32 %v2785, 4294901760
  %2787 = vmatmul.f32.gmra.mxu0 %v2786
  %v2788 = vpop.f32.mrf.mxu0
  %v2789 = vadd.f32 %v2753, %v2788
  %2790 = vdwg.mxu0
  %2791 = vmatpush.msra.mxu0 0.0
  %2792 = vmatpush.msra.mxu0 0.0
  %2793 = vmatpush.msra.mxu0 0.0
  %v2794 = vand.u32 %v1974, 4294901760
  %v2795 = vsub.f32 %v1974, %v2794
  %v2796 = vand.u32 %v2795, 4294901760
  %2797 = vmatpush.msra.mxu0 %v2796
  %v2798 = vand.u32 %v1956, 4294901760
  %v2799 = vsub.f32 %v1956, %v2798
  %v2800 = vand.u32 %v2799, 4294901760
  %2801 = vmatpush.msra.mxu0 %v2800
  %v2802 = vand.u32 %v1952, 4294901760
  %v2803 = vsub.f32 %v1952, %v2802
  %v2804 = vand.u32 %v2803, 4294901760
  %2805 = vmatpush.msra.mxu0 %v2804
  %v2806 = vand.u32 %v1948, 4294901760
  %v2807 = vsub.f32 %v1948, %v2806
  %v2808 = vand.u32 %v2807, 4294901760
  %2809 = vmatpush.msra.mxu0 %v2808
  %v2810 = vand.u32 %v1944, 4294901760
  %v2811 = vsub.f32 %v1944, %v2810
  %v2812 = vand.u32 %v2811, 4294901760
  %2813 = vmatpush.msra.mxu0 %v2812
  %v2814 = vand.u32 %v1940, 4294901760
  %v2815 = vsub.f32 %v1940, %v2814
  %v2816 = vand.u32 %v2815, 4294901760
  %2817 = vmatpush.msra.mxu0 %v2816
  %v2818 = vand.u32 %v1936, 4294901760
  %v2819 = vsub.f32 %v1936, %v2818
  %v2820 = vand.u32 %v2819, 4294901760
  %2821 = vmatpush.msra.mxu0 %v2820
  %v2822 = vand.u32 %v1932, 4294901760
  %v2823 = vsub.f32 %v1932, %v2822
  %v2824 = vand.u32 %v2823, 4294901760
  %2825 = vmatpush.msra.mxu0 %v2824
  %v2826 = vand.u32 %v1928, 4294901760
  %v2827 = vsub.f32 %v1928, %v2826
  %v2828 = vand.u32 %v2827, 4294901760
  %2829 = vmatpush.msra.mxu0 %v2828
  %v2830 = vand.u32 %v1924, 4294901760
  %v2831 = vsub.f32 %v1924, %v2830
  %v2832 = vand.u32 %v2831, 4294901760
  %2833 = vmatpush.msra.mxu0 %v2832
  %v2834 = vand.u32 %v1920, 4294901760
  %v2835 = vsub.f32 %v1920, %v2834
  %v2836 = vand.u32 %v2835, 4294901760
  %2837 = vmatpush.msra.mxu0 %v2836
  %v2838 = vand.u32 %v1916, 4294901760
  %v2839 = vsub.f32 %v1916, %v2838
  %v2840 = vand.u32 %v2839, 4294901760
  %2841 = vmatpush.msra.mxu0 %v2840
  %v2842 = vand.u32 %v1912, 4294901760
  %v2843 = vsub.f32 %v1912, %v2842
  %v2844 = vand.u32 %v2843, 4294901760
  %2845 = vmatpush.msra.mxu0 %v2844
  %v2846 = vand.u32 %v1964, 4294901760
  %2847 = vmatmul.f32.gmra.mxu0 %v2846
  %v2848 = vpop.f32.mrf.mxu0
  %v2849 = vadd.f32 %v2789, %v2848
  %2850 = vdwg.mxu0
  %2851 = vmatpush.msra.mxu0 0.0
  %2852 = vmatpush.msra.mxu0 0.0
  %2853 = vmatpush.msra.mxu0 0.0
  %v2854 = vand.u32 %v1974, 4294901760
  %2855 = vmatpush.msra.mxu0 %v2854
  %v2856 = vand.u32 %v1956, 4294901760
  %2857 = vmatpush.msra.mxu0 %v2856
  %v2858 = vand.u32 %v1952, 4294901760
  %2859 = vmatpush.msra.mxu0 %v2858
  %v2860 = vand.u32 %v1948, 4294901760
  %2861 = vmatpush.msra.mxu0 %v2860
  %v2862 = vand.u32 %v1944, 4294901760
  %2863 = vmatpush.msra.mxu0 %v2862
  %v2864 = vand.u32 %v1940, 4294901760
  %2865 = vmatpush.msra.mxu0 %v2864
  %v2866 = vand.u32 %v1936, 4294901760
  %2867 = vmatpush.msra.mxu0 %v2866
  %v2868 = vand.u32 %v1932, 4294901760
  %2869 = vmatpush.msra.mxu0 %v2868
  %v2870 = vand.u32 %v1928, 4294901760
  %2871 = vmatpush.msra.mxu0 %v2870
  %v2872 = vand.u32 %v1924, 4294901760
  %2873 = vmatpush.msra.mxu0 %v2872
  %v2874 = vand.u32 %v1920, 4294901760
  %2875 = vmatpush.msra.mxu0 %v2874
  %v2876 = vand.u32 %v1916, 4294901760
  %2877 = vmatpush.msra.mxu0 %v2876
  %v2878 = vand.u32 %v1912, 4294901760
  %2879 = vmatpush.msra.mxu0 %v2878
  %v2880 = vand.u32 %v1964, 4294901760
  %2881 = vmatmul.f32.gmra.mxu0 %v2880
  %v2882 = vpop.f32.mrf.mxu0
  %v2883 = vadd.f32 %v2849, %v2882
  %2884 = vdwg.mxu0
  %2885 = vmatpush.msra.mxu0 0.0
  %2886 = vmatpush.msra.mxu0 0.0
  %2887 = vmatpush.msra.mxu0 0.0
  %v2888 = vand.u32 %v1977, 4294901760
  %2889 = vmatpush.msra.mxu0 %v2888
  %v2890 = vand.u32 %v1957, 4294901760
  %2891 = vmatpush.msra.mxu0 %v2890
  %v2892 = vand.u32 %v1953, 4294901760
  %2893 = vmatpush.msra.mxu0 %v2892
  %v2894 = vand.u32 %v1949, 4294901760
  %2895 = vmatpush.msra.mxu0 %v2894
  %v2896 = vand.u32 %v1945, 4294901760
  %2897 = vmatpush.msra.mxu0 %v2896
  %v2898 = vand.u32 %v1941, 4294901760
  %2899 = vmatpush.msra.mxu0 %v2898
  %v2900 = vand.u32 %v1937, 4294901760
  %2901 = vmatpush.msra.mxu0 %v2900
  %v2902 = vand.u32 %v1933, 4294901760
  %2903 = vmatpush.msra.mxu0 %v2902
  %v2904 = vand.u32 %v1929, 4294901760
  %2905 = vmatpush.msra.mxu0 %v2904
  %v2906 = vand.u32 %v1925, 4294901760
  %2907 = vmatpush.msra.mxu0 %v2906
  %v2908 = vand.u32 %v1921, 4294901760
  %2909 = vmatpush.msra.mxu0 %v2908
  %v2910 = vand.u32 %v1917, 4294901760
  %2911 = vmatpush.msra.mxu0 %v2910
  %v2912 = vand.u32 %v1913, 4294901760
  %2913 = vmatpush.msra.mxu0 %v2912
  %v2914 = vand.u32 %v1964, 4294901760
  %v2915 = vsub.f32 %v1964, %v2914
  %v2916 = vand.u32 %v2915, 4294901760
  %v2917 = vsub.f32 %v2915, %v2916
  %v2918 = vand.u32 %v2917, 4294901760
  %2919 = vmatmul.f32.gmra.mxu0 %v2918
  %v2920 = vpop.f32.mrf.mxu0
  %v2921 = vadd.f32 0.0, %v2920
  %2922 = vdwg.mxu0
  %2923 = vmatpush.msra.mxu0 0.0
  %2924 = vmatpush.msra.mxu0 0.0
  %2925 = vmatpush.msra.mxu0 0.0
  %v2926 = vand.u32 %v1977, 4294901760
  %v2927 = vsub.f32 %v1977, %v2926
  %v2928 = vand.u32 %v2927, 4294901760
  %v2929 = vsub.f32 %v2927, %v2928
  %v2930 = vand.u32 %v2929, 4294901760
  %2931 = vmatpush.msra.mxu0 %v2930
  %v2932 = vand.u32 %v1957, 4294901760
  %v2933 = vsub.f32 %v1957, %v2932
  %v2934 = vand.u32 %v2933, 4294901760
  %v2935 = vsub.f32 %v2933, %v2934
  %v2936 = vand.u32 %v2935, 4294901760
  %2937 = vmatpush.msra.mxu0 %v2936
  %v2938 = vand.u32 %v1953, 4294901760
  %v2939 = vsub.f32 %v1953, %v2938
  %v2940 = vand.u32 %v2939, 4294901760
  %v2941 = vsub.f32 %v2939, %v2940
  %v2942 = vand.u32 %v2941, 4294901760
  %2943 = vmatpush.msra.mxu0 %v2942
  %v2944 = vand.u32 %v1949, 4294901760
  %v2945 = vsub.f32 %v1949, %v2944
  %v2946 = vand.u32 %v2945, 4294901760
  %v2947 = vsub.f32 %v2945, %v2946
  %v2948 = vand.u32 %v2947, 4294901760
  %2949 = vmatpush.msra.mxu0 %v2948
  %v2950 = vand.u32 %v1945, 4294901760
  %v2951 = vsub.f32 %v1945, %v2950
  %v2952 = vand.u32 %v2951, 4294901760
  %v2953 = vsub.f32 %v2951, %v2952
  %v2954 = vand.u32 %v2953, 4294901760
  %2955 = vmatpush.msra.mxu0 %v2954
  %v2956 = vand.u32 %v1941, 4294901760
  %v2957 = vsub.f32 %v1941, %v2956
  %v2958 = vand.u32 %v2957, 4294901760
  %v2959 = vsub.f32 %v2957, %v2958
  %v2960 = vand.u32 %v2959, 4294901760
  %2961 = vmatpush.msra.mxu0 %v2960
  %v2962 = vand.u32 %v1937, 4294901760
  %v2963 = vsub.f32 %v1937, %v2962
  %v2964 = vand.u32 %v2963, 4294901760
  %v2965 = vsub.f32 %v2963, %v2964
  %v2966 = vand.u32 %v2965, 4294901760
  %2967 = vmatpush.msra.mxu0 %v2966
  %v2968 = vand.u32 %v1933, 4294901760
  %v2969 = vsub.f32 %v1933, %v2968
  %v2970 = vand.u32 %v2969, 4294901760
  %v2971 = vsub.f32 %v2969, %v2970
  %v2972 = vand.u32 %v2971, 4294901760
  %2973 = vmatpush.msra.mxu0 %v2972
  %v2974 = vand.u32 %v1929, 4294901760
  %v2975 = vsub.f32 %v1929, %v2974
  %v2976 = vand.u32 %v2975, 4294901760
  %v2977 = vsub.f32 %v2975, %v2976
  %v2978 = vand.u32 %v2977, 4294901760
  %2979 = vmatpush.msra.mxu0 %v2978
  %v2980 = vand.u32 %v1925, 4294901760
  %v2981 = vsub.f32 %v1925, %v2980
  %v2982 = vand.u32 %v2981, 4294901760
  %v2983 = vsub.f32 %v2981, %v2982
  %v2984 = vand.u32 %v2983, 4294901760
  %2985 = vmatpush.msra.mxu0 %v2984
  %v2986 = vand.u32 %v1921, 4294901760
  %v2987 = vsub.f32 %v1921, %v2986
  %v2988 = vand.u32 %v2987, 4294901760
  %v2989 = vsub.f32 %v2987, %v2988
  %v2990 = vand.u32 %v2989, 4294901760
  %2991 = vmatpush.msra.mxu0 %v2990
  %v2992 = vand.u32 %v1917, 4294901760
  %v2993 = vsub.f32 %v1917, %v2992
  %v2994 = vand.u32 %v2993, 4294901760
  %v2995 = vsub.f32 %v2993, %v2994
  %v2996 = vand.u32 %v2995, 4294901760
  %2997 = vmatpush.msra.mxu0 %v2996
  %v2998 = vand.u32 %v1913, 4294901760
  %v2999 = vsub.f32 %v1913, %v2998
  %v3000 = vand.u32 %v2999, 4294901760
  %v3001 = vsub.f32 %v2999, %v3000
  %v3002 = vand.u32 %v3001, 4294901760
  %3003 = vmatpush.msra.mxu0 %v3002
  %v3004 = vand.u32 %v1964, 4294901760
  %3005 = vmatmul.f32.gmra.mxu0 %v3004
  %v3006 = vpop.f32.mrf.mxu0
  %v3007 = vadd.f32 %v2921, %v3006
  %3008 = vdwg.mxu0
  %3009 = vmatpush.msra.mxu0 0.0
  %3010 = vmatpush.msra.mxu0 0.0
  %3011 = vmatpush.msra.mxu0 0.0
  %v3012 = vand.u32 %v1977, 4294901760
  %v3013 = vsub.f32 %v1977, %v3012
  %3014 = vmatpush.msra.mxu0 %v3013
  %v3015 = vand.u32 %v1957, 4294901760
  %v3016 = vsub.f32 %v1957, %v3015
  %3017 = vmatpush.msra.mxu0 %v3016
  %v3018 = vand.u32 %v1953, 4294901760
  %v3019 = vsub.f32 %v1953, %v3018
  %3020 = vmatpush.msra.mxu0 %v3019
  %v3021 = vand.u32 %v1949, 4294901760
  %v3022 = vsub.f32 %v1949, %v3021
  %3023 = vmatpush.msra.mxu0 %v3022
  %v3024 = vand.u32 %v1945, 4294901760
  %v3025 = vsub.f32 %v1945, %v3024
  %3026 = vmatpush.msra.mxu0 %v3025
  %v3027 = vand.u32 %v1941, 4294901760
  %v3028 = vsub.f32 %v1941, %v3027
  %3029 = vmatpush.msra.mxu0 %v3028
  %v3030 = vand.u32 %v1937, 4294901760
  %v3031 = vsub.f32 %v1937, %v3030
  %3032 = vmatpush.msra.mxu0 %v3031
  %v3033 = vand.u32 %v1933, 4294901760
  %v3034 = vsub.f32 %v1933, %v3033
  %3035 = vmatpush.msra.mxu0 %v3034
  %v3036 = vand.u32 %v1929, 4294901760
  %v3037 = vsub.f32 %v1929, %v3036
  %3038 = vmatpush.msra.mxu0 %v3037
  %v3039 = vand.u32 %v1925, 4294901760
  %v3040 = vsub.f32 %v1925, %v3039
  %3041 = vmatpush.msra.mxu0 %v3040
  %v3042 = vand.u32 %v1921, 4294901760
  %v3043 = vsub.f32 %v1921, %v3042
  %3044 = vmatpush.msra.mxu0 %v3043
  %v3045 = vand.u32 %v1917, 4294901760
  %v3046 = vsub.f32 %v1917, %v3045
  %3047 = vmatpush.msra.mxu0 %v3046
  %v3048 = vand.u32 %v1913, 4294901760
  %v3049 = vsub.f32 %v1913, %v3048
  %3050 = vmatpush.msra.mxu0 %v3049
  %v3051 = vand.u32 %v1964, 4294901760
  %v3052 = vsub.f32 %v1964, %v3051
  %3053 = vmatmul.f32.gmra.mxu0 %v3052
  %v3054 = vpop.f32.mrf.mxu0
  %v3055 = vadd.f32 %v3007, %v3054
  %3056 = vdwg.mxu0
  %3057 = vmatpush.msra.mxu0 0.0
  %3058 = vmatpush.msra.mxu0 0.0
  %3059 = vmatpush.msra.mxu0 0.0
  %v3060 = vand.u32 %v1977, 4294901760
  %3061 = vmatpush.msra.mxu0 %v3060
  %v3062 = vand.u32 %v1957, 4294901760
  %3063 = vmatpush.msra.mxu0 %v3062
  %v3064 = vand.u32 %v1953, 4294901760
  %3065 = vmatpush.msra.mxu0 %v3064
  %v3066 = vand.u32 %v1949, 4294901760
  %3067 = vmatpush.msra.mxu0 %v3066
  %v3068 = vand.u32 %v1945, 4294901760
  %3069 = vmatpush.msra.mxu0 %v3068
  %v3070 = vand.u32 %v1941, 4294901760
  %3071 = vmatpush.msra.mxu0 %v3070
  %v3072 = vand.u32 %v1937, 4294901760
  %3073 = vmatpush.msra.mxu0 %v3072
  %v3074 = vand.u32 %v1933, 4294901760
  %3075 = vmatpush.msra.mxu0 %v3074
  %v3076 = vand.u32 %v1929, 4294901760
  %3077 = vmatpush.msra.mxu0 %v3076
  %v3078 = vand.u32 %v1925, 4294901760
  %3079 = vmatpush.msra.mxu0 %v3078
  %v3080 = vand.u32 %v1921, 4294901760
  %3081 = vmatpush.msra.mxu0 %v3080
  %v3082 = vand.u32 %v1917, 4294901760
  %3083 = vmatpush.msra.mxu0 %v3082
  %v3084 = vand.u32 %v1913, 4294901760
  %3085 = vmatpush.msra.mxu0 %v3084
  %v3086 = vand.u32 %v1964, 4294901760
  %v3087 = vsub.f32 %v1964, %v3086
  %v3088 = vand.u32 %v3087, 4294901760
  %3089 = vmatmul.f32.gmra.mxu0 %v3088
  %v3090 = vpop.f32.mrf.mxu0
  %v3091 = vadd.f32 %v3055, %v3090
  %3092 = vdwg.mxu0
  %3093 = vmatpush.msra.mxu0 0.0
  %3094 = vmatpush.msra.mxu0 0.0
  %3095 = vmatpush.msra.mxu0 0.0
  %v3096 = vand.u32 %v1977, 4294901760
  %v3097 = vsub.f32 %v1977, %v3096
  %v3098 = vand.u32 %v3097, 4294901760
  %3099 = vmatpush.msra.mxu0 %v3098
  %v3100 = vand.u32 %v1957, 4294901760
  %v3101 = vsub.f32 %v1957, %v3100
  %v3102 = vand.u32 %v3101, 4294901760
  %3103 = vmatpush.msra.mxu0 %v3102
  %v3104 = vand.u32 %v1953, 4294901760
  %v3105 = vsub.f32 %v1953, %v3104
  %v3106 = vand.u32 %v3105, 4294901760
  %3107 = vmatpush.msra.mxu0 %v3106
  %v3108 = vand.u32 %v1949, 4294901760
  %v3109 = vsub.f32 %v1949, %v3108
  %v3110 = vand.u32 %v3109, 4294901760
  %3111 = vmatpush.msra.mxu0 %v3110
  %v3112 = vand.u32 %v1945, 4294901760
  %v3113 = vsub.f32 %v1945, %v3112
  %v3114 = vand.u32 %v3113, 4294901760
  %3115 = vmatpush.msra.mxu0 %v3114
  %v3116 = vand.u32 %v1941, 4294901760
  %v3117 = vsub.f32 %v1941, %v3116
  %v3118 = vand.u32 %v3117, 4294901760
  %3119 = vmatpush.msra.mxu0 %v3118
  %v3120 = vand.u32 %v1937, 4294901760
  %v3121 = vsub.f32 %v1937, %v3120
  %v3122 = vand.u32 %v3121, 4294901760
  %3123 = vmatpush.msra.mxu0 %v3122
  %v3124 = vand.u32 %v1933, 4294901760
  %v3125 = vsub.f32 %v1933, %v3124
  %v3126 = vand.u32 %v3125, 4294901760
  %3127 = vmatpush.msra.mxu0 %v3126
  %v3128 = vand.u32 %v1929, 4294901760
  %v3129 = vsub.f32 %v1929, %v3128
  %v3130 = vand.u32 %v3129, 4294901760
  %3131 = vmatpush.msra.mxu0 %v3130
  %v3132 = vand.u32 %v1925, 4294901760
  %v3133 = vsub.f32 %v1925, %v3132
  %v3134 = vand.u32 %v3133, 4294901760
  %3135 = vmatpush.msra.mxu0 %v3134
  %v3136 = vand.u32 %v1921, 4294901760
  %v3137 = vsub.f32 %v1921, %v3136
  %v3138 = vand.u32 %v3137, 4294901760
  %3139 = vmatpush.msra.mxu0 %v3138
  %v3140 = vand.u32 %v1917, 4294901760
  %v3141 = vsub.f32 %v1917, %v3140
  %v3142 = vand.u32 %v3141, 4294901760
  %3143 = vmatpush.msra.mxu0 %v3142
  %v3144 = vand.u32 %v1913, 4294901760
  %v3145 = vsub.f32 %v1913, %v3144
  %v3146 = vand.u32 %v3145, 4294901760
  %3147 = vmatpush.msra.mxu0 %v3146
  %v3148 = vand.u32 %v1964, 4294901760
  %3149 = vmatmul.f32.gmra.mxu0 %v3148
  %v3150 = vpop.f32.mrf.mxu0
  %v3151 = vadd.f32 %v3091, %v3150
  %3152 = vdwg.mxu0
  %3153 = vmatpush.msra.mxu0 0.0
  %3154 = vmatpush.msra.mxu0 0.0
  %3155 = vmatpush.msra.mxu0 0.0
  %v3156 = vand.u32 %v1977, 4294901760
  %3157 = vmatpush.msra.mxu0 %v3156
  %v3158 = vand.u32 %v1957, 4294901760
  %3159 = vmatpush.msra.mxu0 %v3158
  %v3160 = vand.u32 %v1953, 4294901760
  %3161 = vmatpush.msra.mxu0 %v3160
  %v3162 = vand.u32 %v1949, 4294901760
  %3163 = vmatpush.msra.mxu0 %v3162
  %v3164 = vand.u32 %v1945, 4294901760
  %3165 = vmatpush.msra.mxu0 %v3164
  %v3166 = vand.u32 %v1941, 4294901760
  %3167 = vmatpush.msra.mxu0 %v3166
  %v3168 = vand.u32 %v1937, 4294901760
  %3169 = vmatpush.msra.mxu0 %v3168
  %v3170 = vand.u32 %v1933, 4294901760
  %3171 = vmatpush.msra.mxu0 %v3170
  %v3172 = vand.u32 %v1929, 4294901760
  %3173 = vmatpush.msra.mxu0 %v3172
  %v3174 = vand.u32 %v1925, 4294901760
  %3175 = vmatpush.msra.mxu0 %v3174
  %v3176 = vand.u32 %v1921, 4294901760
  %3177 = vmatpush.msra.mxu0 %v3176
  %v3178 = vand.u32 %v1917, 4294901760
  %3179 = vmatpush.msra.mxu0 %v3178
  %v3180 = vand.u32 %v1913, 4294901760
  %3181 = vmatpush.msra.mxu0 %v3180
  %v3182 = vand.u32 %v1964, 4294901760
  %3183 = vmatmul.f32.gmra.mxu0 %v3182
  %v3184 = vpop.f32.mrf.mxu0
  %v3185 = vadd.f32 %v3151, %v3184
  %3186 = vdwg.mxu0
  %s3187 = scalar_lea.vmem %s3, 4
  %v3188 = vld [vmem:[%s3187] sm:$0xf]
  %v3190 = vsel %vm1962, %v3188, 0
  %3192 = vmatpush.msra.mxu0 0.0
  %3193 = vmatpush.msra.mxu0 0.0
  %3194 = vmatpush.msra.mxu0 0.0
  %v3195 = vand.u32 %v1968, 4294901760
  %3196 = vmatpush.msra.mxu0 %v3195
  %v3197 = vand.u32 %v1954, 4294901760
  %3198 = vmatpush.msra.mxu0 %v3197
  %v3199 = vand.u32 %v1950, 4294901760
  %3200 = vmatpush.msra.mxu0 %v3199
  %v3201 = vand.u32 %v1946, 4294901760
  %3202 = vmatpush.msra.mxu0 %v3201
  %v3203 = vand.u32 %v1942, 4294901760
  %3204 = vmatpush.msra.mxu0 %v3203
  %v3205 = vand.u32 %v1938, 4294901760
  %3206 = vmatpush.msra.mxu0 %v3205
  %v3207 = vand.u32 %v1934, 4294901760
  %3208 = vmatpush.msra.mxu0 %v3207
  %v3209 = vand.u32 %v1930, 4294901760
  %3210 = vmatpush.msra.mxu0 %v3209
  %v3211 = vand.u32 %v1926, 4294901760
  %3212 = vmatpush.msra.mxu0 %v3211
  %v3213 = vand.u32 %v1922, 4294901760
  %3214 = vmatpush.msra.mxu0 %v3213
  %v3215 = vand.u32 %v1918, 4294901760
  %3216 = vmatpush.msra.mxu0 %v3215
  %v3217 = vand.u32 %v1914, 4294901760
  %3218 = vmatpush.msra.mxu0 %v3217
  %v3219 = vand.u32 %v1910, 4294901760
  %3220 = vmatpush.msra.mxu0 %v3219
  %v3221 = vand.u32 %v3190, 4294901760
  %v3222 = vsub.f32 %v3190, %v3221
  %v3223 = vand.u32 %v3222, 4294901760
  %v3224 = vsub.f32 %v3222, %v3223
  %v3225 = vand.u32 %v3224, 4294901760
  %3226 = vmatmul.f32.gmra.mxu0 %v3225
  %v3227 = vpop.f32.mrf.mxu0
  %v3228 = vadd.f32 0.0, %v3227
  %3229 = vdwg.mxu0
  %3230 = vmatpush.msra.mxu0 0.0
  %3231 = vmatpush.msra.mxu0 0.0
  %3232 = vmatpush.msra.mxu0 0.0
  %v3233 = vand.u32 %v1968, 4294901760
  %v3234 = vsub.f32 %v1968, %v3233
  %v3235 = vand.u32 %v3234, 4294901760
  %v3236 = vsub.f32 %v3234, %v3235
  %v3237 = vand.u32 %v3236, 4294901760
  %3238 = vmatpush.msra.mxu0 %v3237
  %v3239 = vand.u32 %v1954, 4294901760
  %v3240 = vsub.f32 %v1954, %v3239
  %v3241 = vand.u32 %v3240, 4294901760
  %v3242 = vsub.f32 %v3240, %v3241
  %v3243 = vand.u32 %v3242, 4294901760
  %3244 = vmatpush.msra.mxu0 %v3243
  %v3245 = vand.u32 %v1950, 4294901760
  %v3246 = vsub.f32 %v1950, %v3245
  %v3247 = vand.u32 %v3246, 4294901760
  %v3248 = vsub.f32 %v3246, %v3247
  %v3249 = vand.u32 %v3248, 4294901760
  %3250 = vmatpush.msra.mxu0 %v3249
  %v3251 = vand.u32 %v1946, 4294901760
  %v3252 = vsub.f32 %v1946, %v3251
  %v3253 = vand.u32 %v3252, 4294901760
  %v3254 = vsub.f32 %v3252, %v3253
  %v3255 = vand.u32 %v3254, 4294901760
  %3256 = vmatpush.msra.mxu0 %v3255
  %v3257 = vand.u32 %v1942, 4294901760
  %v3258 = vsub.f32 %v1942, %v3257
  %v3259 = vand.u32 %v3258, 4294901760
  %v3260 = vsub.f32 %v3258, %v3259
  %v3261 = vand.u32 %v3260, 4294901760
  %3262 = vmatpush.msra.mxu0 %v3261
  %v3263 = vand.u32 %v1938, 4294901760
  %v3264 = vsub.f32 %v1938, %v3263
  %v3265 = vand.u32 %v3264, 4294901760
  %v3266 = vsub.f32 %v3264, %v3265
  %v3267 = vand.u32 %v3266, 4294901760
  %3268 = vmatpush.msra.mxu0 %v3267
  %v3269 = vand.u32 %v1934, 4294901760
  %v3270 = vsub.f32 %v1934, %v3269
  %v3271 = vand.u32 %v3270, 4294901760
  %v3272 = vsub.f32 %v3270, %v3271
  %v3273 = vand.u32 %v3272, 4294901760
  %3274 = vmatpush.msra.mxu0 %v3273
  %v3275 = vand.u32 %v1930, 4294901760
  %v3276 = vsub.f32 %v1930, %v3275
  %v3277 = vand.u32 %v3276, 4294901760
  %v3278 = vsub.f32 %v3276, %v3277
  %v3279 = vand.u32 %v3278, 4294901760
  %3280 = vmatpush.msra.mxu0 %v3279
  %v3281 = vand.u32 %v1926, 4294901760
  %v3282 = vsub.f32 %v1926, %v3281
  %v3283 = vand.u32 %v3282, 4294901760
  %v3284 = vsub.f32 %v3282, %v3283
  %v3285 = vand.u32 %v3284, 4294901760
  %3286 = vmatpush.msra.mxu0 %v3285
  %v3287 = vand.u32 %v1922, 4294901760
  %v3288 = vsub.f32 %v1922, %v3287
  %v3289 = vand.u32 %v3288, 4294901760
  %v3290 = vsub.f32 %v3288, %v3289
  %v3291 = vand.u32 %v3290, 4294901760
  %3292 = vmatpush.msra.mxu0 %v3291
  %v3293 = vand.u32 %v1918, 4294901760
  %v3294 = vsub.f32 %v1918, %v3293
  %v3295 = vand.u32 %v3294, 4294901760
  %v3296 = vsub.f32 %v3294, %v3295
  %v3297 = vand.u32 %v3296, 4294901760
  %3298 = vmatpush.msra.mxu0 %v3297
  %v3299 = vand.u32 %v1914, 4294901760
  %v3300 = vsub.f32 %v1914, %v3299
  %v3301 = vand.u32 %v3300, 4294901760
  %v3302 = vsub.f32 %v3300, %v3301
  %v3303 = vand.u32 %v3302, 4294901760
  %3304 = vmatpush.msra.mxu0 %v3303
  %v3305 = vand.u32 %v1910, 4294901760
  %v3306 = vsub.f32 %v1910, %v3305
  %v3307 = vand.u32 %v3306, 4294901760
  %v3308 = vsub.f32 %v3306, %v3307
  %v3309 = vand.u32 %v3308, 4294901760
  %3310 = vmatpush.msra.mxu0 %v3309
  %v3311 = vand.u32 %v3190, 4294901760
  %3312 = vmatmul.f32.gmra.mxu0 %v3311
  %v3313 = vpop.f32.mrf.mxu0
  %v3314 = vadd.f32 %v3228, %v3313
  %3315 = vdwg.mxu0
  %3316 = vmatpush.msra.mxu0 0.0
  %3317 = vmatpush.msra.mxu0 0.0
  %3318 = vmatpush.msra.mxu0 0.0
  %v3319 = vand.u32 %v1968, 4294901760
  %v3320 = vsub.f32 %v1968, %v3319
  %3321 = vmatpush.msra.mxu0 %v3320
  %v3322 = vand.u32 %v1954, 4294901760
  %v3323 = vsub.f32 %v1954, %v3322
  %3324 = vmatpush.msra.mxu0 %v3323
  %v3325 = vand.u32 %v1950, 4294901760
  %v3326 = vsub.f32 %v1950, %v3325
  %3327 = vmatpush.msra.mxu0 %v3326
  %v3328 = vand.u32 %v1946, 4294901760
  %v3329 = vsub.f32 %v1946, %v3328
  %3330 = vmatpush.msra.mxu0 %v3329
  %v3331 = vand.u32 %v1942, 4294901760
  %v3332 = vsub.f32 %v1942, %v3331
  %3333 = vmatpush.msra.mxu0 %v3332
  %v3334 = vand.u32 %v1938, 4294901760
  %v3335 = vsub.f32 %v1938, %v3334
  %3336 = vmatpush.msra.mxu0 %v3335
  %v3337 = vand.u32 %v1934, 4294901760
  %v3338 = vsub.f32 %v1934, %v3337
  %3339 = vmatpush.msra.mxu0 %v3338
  %v3340 = vand.u32 %v1930, 4294901760
  %v3341 = vsub.f32 %v1930, %v3340
  %3342 = vmatpush.msra.mxu0 %v3341
  %v3343 = vand.u32 %v1926, 4294901760
  %v3344 = vsub.f32 %v1926, %v3343
  %3345 = vmatpush.msra.mxu0 %v3344
  %v3346 = vand.u32 %v1922, 4294901760
  %v3347 = vsub.f32 %v1922, %v3346
  %3348 = vmatpush.msra.mxu0 %v3347
  %v3349 = vand.u32 %v1918, 4294901760
  %v3350 = vsub.f32 %v1918, %v3349
  %3351 = vmatpush.msra.mxu0 %v3350
  %v3352 = vand.u32 %v1914, 4294901760
  %v3353 = vsub.f32 %v1914, %v3352
  %3354 = vmatpush.msra.mxu0 %v3353
  %v3355 = vand.u32 %v1910, 4294901760
  %v3356 = vsub.f32 %v1910, %v3355
  %3357 = vmatpush.msra.mxu0 %v3356
  %v3358 = vand.u32 %v3190, 4294901760
  %v3359 = vsub.f32 %v3190, %v3358
  %3360 = vmatmul.f32.gmra.mxu0 %v3359
  %v3361 = vpop.f32.mrf.mxu0
  %v3362 = vadd.f32 %v3314, %v3361
  %3363 = vdwg.mxu0
  %3364 = vmatpush.msra.mxu0 0.0
  %3365 = vmatpush.msra.mxu0 0.0
  %3366 = vmatpush.msra.mxu0 0.0
  %v3367 = vand.u32 %v1968, 4294901760
  %3368 = vmatpush.msra.mxu0 %v3367
  %v3369 = vand.u32 %v1954, 4294901760
  %3370 = vmatpush.msra.mxu0 %v3369
  %v3371 = vand.u32 %v1950, 4294901760
  %3372 = vmatpush.msra.mxu0 %v3371
  %v3373 = vand.u32 %v1946, 4294901760
  %3374 = vmatpush.msra.mxu0 %v3373
  %v3375 = vand.u32 %v1942, 4294901760
  %3376 = vmatpush.msra.mxu0 %v3375
  %v3377 = vand.u32 %v1938, 4294901760
  %3378 = vmatpush.msra.mxu0 %v3377
  %v3379 = vand.u32 %v1934, 4294901760
  %3380 = vmatpush.msra.mxu0 %v3379
  %v3381 = vand.u32 %v1930, 4294901760
  %3382 = vmatpush.msra.mxu0 %v3381
  %v3383 = vand.u32 %v1926, 4294901760
  %3384 = vmatpush.msra.mxu0 %v3383
  %v3385 = vand.u32 %v1922, 4294901760
  %3386 = vmatpush.msra.mxu0 %v3385
  %v3387 = vand.u32 %v1918, 4294901760
  %3388 = vmatpush.msra.mxu0 %v3387
  %v3389 = vand.u32 %v1914, 4294901760
  %3390 = vmatpush.msra.mxu0 %v3389
  %v3391 = vand.u32 %v1910, 4294901760
  %3392 = vmatpush.msra.mxu0 %v3391
  %v3393 = vand.u32 %v3190, 4294901760
  %v3394 = vsub.f32 %v3190, %v3393
  %v3395 = vand.u32 %v3394, 4294901760
  %3396 = vmatmul.f32.gmra.mxu0 %v3395
  %v3397 = vpop.f32.mrf.mxu0
  %v3398 = vadd.f32 %v3362, %v3397
  %3399 = vdwg.mxu0
  %3400 = vmatpush.msra.mxu0 0.0
  %3401 = vmatpush.msra.mxu0 0.0
  %3402 = vmatpush.msra.mxu0 0.0
  %v3403 = vand.u32 %v1968, 4294901760
  %v3404 = vsub.f32 %v1968, %v3403
  %v3405 = vand.u32 %v3404, 4294901760
  %3406 = vmatpush.msra.mxu0 %v3405
  %v3407 = vand.u32 %v1954, 4294901760
  %v3408 = vsub.f32 %v1954, %v3407
  %v3409 = vand.u32 %v3408, 4294901760
  %3410 = vmatpush.msra.mxu0 %v3409
  %v3411 = vand.u32 %v1950, 4294901760
  %v3412 = vsub.f32 %v1950, %v3411
  %v3413 = vand.u32 %v3412, 4294901760
  %3414 = vmatpush.msra.mxu0 %v3413
  %v3415 = vand.u32 %v1946, 4294901760
  %v3416 = vsub.f32 %v1946, %v3415
  %v3417 = vand.u32 %v3416, 4294901760
  %3418 = vmatpush.msra.mxu0 %v3417
  %v3419 = vand.u32 %v1942, 4294901760
  %v3420 = vsub.f32 %v1942, %v3419
  %v3421 = vand.u32 %v3420, 4294901760
  %3422 = vmatpush.msra.mxu0 %v3421
  %v3423 = vand.u32 %v1938, 4294901760
  %v3424 = vsub.f32 %v1938, %v3423
  %v3425 = vand.u32 %v3424, 4294901760
  %3426 = vmatpush.msra.mxu0 %v3425
  %v3427 = vand.u32 %v1934, 4294901760
  %v3428 = vsub.f32 %v1934, %v3427
  %v3429 = vand.u32 %v3428, 4294901760
  %3430 = vmatpush.msra.mxu0 %v3429
  %v3431 = vand.u32 %v1930, 4294901760
  %v3432 = vsub.f32 %v1930, %v3431
  %v3433 = vand.u32 %v3432, 4294901760
  %3434 = vmatpush.msra.mxu0 %v3433
  %v3435 = vand.u32 %v1926, 4294901760
  %v3436 = vsub.f32 %v1926, %v3435
  %v3437 = vand.u32 %v3436, 4294901760
  %3438 = vmatpush.msra.mxu0 %v3437
  %v3439 = vand.u32 %v1922, 4294901760
  %v3440 = vsub.f32 %v1922, %v3439
  %v3441 = vand.u32 %v3440, 4294901760
  %3442 = vmatpush.msra.mxu0 %v3441
  %v3443 = vand.u32 %v1918, 4294901760
  %v3444 = vsub.f32 %v1918, %v3443
  %v3445 = vand.u32 %v3444, 4294901760
  %3446 = vmatpush.msra.mxu0 %v3445
  %v3447 = vand.u32 %v1914, 4294901760
  %v3448 = vsub.f32 %v1914, %v3447
  %v3449 = vand.u32 %v3448, 4294901760
  %3450 = vmatpush.msra.mxu0 %v3449
  %v3451 = vand.u32 %v1910, 4294901760
  %v3452 = vsub.f32 %v1910, %v3451
  %v3453 = vand.u32 %v3452, 4294901760
  %3454 = vmatpush.msra.mxu0 %v3453
  %v3455 = vand.u32 %v3190, 4294901760
  %3456 = vmatmul.f32.gmra.mxu0 %v3455
  %v3457 = vpop.f32.mrf.mxu0
  %v3458 = vadd.f32 %v3398, %v3457
  %3459 = vdwg.mxu0
  %3460 = vmatpush.msra.mxu0 0.0
  %3461 = vmatpush.msra.mxu0 0.0
  %3462 = vmatpush.msra.mxu0 0.0
  %v3463 = vand.u32 %v1968, 4294901760
  %3464 = vmatpush.msra.mxu0 %v3463
  %v3465 = vand.u32 %v1954, 4294901760
  %3466 = vmatpush.msra.mxu0 %v3465
  %v3467 = vand.u32 %v1950, 4294901760
  %3468 = vmatpush.msra.mxu0 %v3467
  %v3469 = vand.u32 %v1946, 4294901760
  %3470 = vmatpush.msra.mxu0 %v3469
  %v3471 = vand.u32 %v1942, 4294901760
  %3472 = vmatpush.msra.mxu0 %v3471
  %v3473 = vand.u32 %v1938, 4294901760
  %3474 = vmatpush.msra.mxu0 %v3473
  %v3475 = vand.u32 %v1934, 4294901760
  %3476 = vmatpush.msra.mxu0 %v3475
  %v3477 = vand.u32 %v1930, 4294901760
  %3478 = vmatpush.msra.mxu0 %v3477
  %v3479 = vand.u32 %v1926, 4294901760
  %3480 = vmatpush.msra.mxu0 %v3479
  %v3481 = vand.u32 %v1922, 4294901760
  %3482 = vmatpush.msra.mxu0 %v3481
  %v3483 = vand.u32 %v1918, 4294901760
  %3484 = vmatpush.msra.mxu0 %v3483
  %v3485 = vand.u32 %v1914, 4294901760
  %3486 = vmatpush.msra.mxu0 %v3485
  %v3487 = vand.u32 %v1910, 4294901760
  %3488 = vmatpush.msra.mxu0 %v3487
  %v3489 = vand.u32 %v3190, 4294901760
  %3490 = vmatmul.f32.gmra.mxu0 %v3489
  %v3491 = vpop.f32.mrf.mxu0
  %v3492 = vadd.f32 %v3458, %v3491
  %3493 = vdwg.mxu0
  %3494 = vmatpush.msra.mxu0 0.0
  %3495 = vmatpush.msra.mxu0 0.0
  %3496 = vmatpush.msra.mxu0 0.0
  %v3497 = vand.u32 %v1971, 4294901760
  %3498 = vmatpush.msra.mxu0 %v3497
  %v3499 = vand.u32 %v1955, 4294901760
  %3500 = vmatpush.msra.mxu0 %v3499
  %v3501 = vand.u32 %v1951, 4294901760
  %3502 = vmatpush.msra.mxu0 %v3501
  %v3503 = vand.u32 %v1947, 4294901760
  %3504 = vmatpush.msra.mxu0 %v3503
  %v3505 = vand.u32 %v1943, 4294901760
  %3506 = vmatpush.msra.mxu0 %v3505
  %v3507 = vand.u32 %v1939, 4294901760
  %3508 = vmatpush.msra.mxu0 %v3507
  %v3509 = vand.u32 %v1935, 4294901760
  %3510 = vmatpush.msra.mxu0 %v3509
  %v3511 = vand.u32 %v1931, 4294901760
  %3512 = vmatpush.msra.mxu0 %v3511
  %v3513 = vand.u32 %v1927, 4294901760
  %3514 = vmatpush.msra.mxu0 %v3513
  %v3515 = vand.u32 %v1923, 4294901760
  %3516 = vmatpush.msra.mxu0 %v3515
  %v3517 = vand.u32 %v1919, 4294901760
  %3518 = vmatpush.msra.mxu0 %v3517
  %v3519 = vand.u32 %v1915, 4294901760
  %3520 = vmatpush.msra.mxu0 %v3519
  %v3521 = vand.u32 %v1911, 4294901760
  %3522 = vmatpush.msra.mxu0 %v3521
  %v3523 = vand.u32 %v3190, 4294901760
  %v3524 = vsub.f32 %v3190, %v3523
  %v3525 = vand.u32 %v3524, 4294901760
  %v3526 = vsub.f32 %v3524, %v3525
  %v3527 = vand.u32 %v3526, 4294901760
  %3528 = vmatmul.f32.gmra.mxu0 %v3527
  %v3529 = vpop.f32.mrf.mxu0
  %v3530 = vadd.f32 0.0, %v3529
  %3531 = vdwg.mxu0
  %3532 = vmatpush.msra.mxu0 0.0
  %3533 = vmatpush.msra.mxu0 0.0
  %3534 = vmatpush.msra.mxu0 0.0
  %v3535 = vand.u32 %v1971, 4294901760
  %v3536 = vsub.f32 %v1971, %v3535
  %v3537 = vand.u32 %v3536, 4294901760
  %v3538 = vsub.f32 %v3536, %v3537
  %v3539 = vand.u32 %v3538, 4294901760
  %3540 = vmatpush.msra.mxu0 %v3539
  %v3541 = vand.u32 %v1955, 4294901760
  %v3542 = vsub.f32 %v1955, %v3541
  %v3543 = vand.u32 %v3542, 4294901760
  %v3544 = vsub.f32 %v3542, %v3543
  %v3545 = vand.u32 %v3544, 4294901760
  %3546 = vmatpush.msra.mxu0 %v3545
  %v3547 = vand.u32 %v1951, 4294901760
  %v3548 = vsub.f32 %v1951, %v3547
  %v3549 = vand.u32 %v3548, 4294901760
  %v3550 = vsub.f32 %v3548, %v3549
  %v3551 = vand.u32 %v3550, 4294901760
  %3552 = vmatpush.msra.mxu0 %v3551
  %v3553 = vand.u32 %v1947, 4294901760
  %v3554 = vsub.f32 %v1947, %v3553
  %v3555 = vand.u32 %v3554, 4294901760
  %v3556 = vsub.f32 %v3554, %v3555
  %v3557 = vand.u32 %v3556, 4294901760
  %3558 = vmatpush.msra.mxu0 %v3557
  %v3559 = vand.u32 %v1943, 4294901760
  %v3560 = vsub.f32 %v1943, %v3559
  %v3561 = vand.u32 %v3560, 4294901760
  %v3562 = vsub.f32 %v3560, %v3561
  %v3563 = vand.u32 %v3562, 4294901760
  %3564 = vmatpush.msra.mxu0 %v3563
  %v3565 = vand.u32 %v1939, 4294901760
  %v3566 = vsub.f32 %v1939, %v3565
  %v3567 = vand.u32 %v3566, 4294901760
  %v3568 = vsub.f32 %v3566, %v3567
  %v3569 = vand.u32 %v3568, 4294901760
  %3570 = vmatpush.msra.mxu0 %v3569
  %v3571 = vand.u32 %v1935, 4294901760
  %v3572 = vsub.f32 %v1935, %v3571
  %v3573 = vand.u32 %v3572, 4294901760
  %v3574 = vsub.f32 %v3572, %v3573
  %v3575 = vand.u32 %v3574, 4294901760
  %3576 = vmatpush.msra.mxu0 %v3575
  %v3577 = vand.u32 %v1931, 4294901760
  %v3578 = vsub.f32 %v1931, %v3577
  %v3579 = vand.u32 %v3578, 4294901760
  %v3580 = vsub.f32 %v3578, %v3579
  %v3581 = vand.u32 %v3580, 4294901760
  %3582 = vmatpush.msra.mxu0 %v3581
  %v3583 = vand.u32 %v1927, 4294901760
  %v3584 = vsub.f32 %v1927, %v3583
  %v3585 = vand.u32 %v3584, 4294901760
  %v3586 = vsub.f32 %v3584, %v3585
  %v3587 = vand.u32 %v3586, 4294901760
  %3588 = vmatpush.msra.mxu0 %v3587
  %v3589 = vand.u32 %v1923, 4294901760
  %v3590 = vsub.f32 %v1923, %v3589
  %v3591 = vand.u32 %v3590, 4294901760
  %v3592 = vsub.f32 %v3590, %v3591
  %v3593 = vand.u32 %v3592, 4294901760
  %3594 = vmatpush.msra.mxu0 %v3593
  %v3595 = vand.u32 %v1919, 4294901760
  %v3596 = vsub.f32 %v1919, %v3595
  %v3597 = vand.u32 %v3596, 4294901760
  %v3598 = vsub.f32 %v3596, %v3597
  %v3599 = vand.u32 %v3598, 4294901760
  %3600 = vmatpush.msra.mxu0 %v3599
  %v3601 = vand.u32 %v1915, 4294901760
  %v3602 = vsub.f32 %v1915, %v3601
  %v3603 = vand.u32 %v3602, 4294901760
  %v3604 = vsub.f32 %v3602, %v3603
  %v3605 = vand.u32 %v3604, 4294901760
  %3606 = vmatpush.msra.mxu0 %v3605
  %v3607 = vand.u32 %v1911, 4294901760
  %v3608 = vsub.f32 %v1911, %v3607
  %v3609 = vand.u32 %v3608, 4294901760
  %v3610 = vsub.f32 %v3608, %v3609
  %v3611 = vand.u32 %v3610, 4294901760
  %3612 = vmatpush.msra.mxu0 %v3611
  %v3613 = vand.u32 %v3190, 4294901760
  %3614 = vmatmul.f32.gmra.mxu0 %v3613
  %v3615 = vpop.f32.mrf.mxu0
  %v3616 = vadd.f32 %v3530, %v3615
  %3617 = vdwg.mxu0
  %3618 = vmatpush.msra.mxu0 0.0
  %3619 = vmatpush.msra.mxu0 0.0
  %3620 = vmatpush.msra.mxu0 0.0
  %v3621 = vand.u32 %v1971, 4294901760
  %v3622 = vsub.f32 %v1971, %v3621
  %3623 = vmatpush.msra.mxu0 %v3622
  %v3624 = vand.u32 %v1955, 4294901760
  %v3625 = vsub.f32 %v1955, %v3624
  %3626 = vmatpush.msra.mxu0 %v3625
  %v3627 = vand.u32 %v1951, 4294901760
  %v3628 = vsub.f32 %v1951, %v3627
  %3629 = vmatpush.msra.mxu0 %v3628
  %v3630 = vand.u32 %v1947, 4294901760
  %v3631 = vsub.f32 %v1947, %v3630
  %3632 = vmatpush.msra.mxu0 %v3631
  %v3633 = vand.u32 %v1943, 4294901760
  %v3634 = vsub.f32 %v1943, %v3633
  %3635 = vmatpush.msra.mxu0 %v3634
  %v3636 = vand.u32 %v1939, 4294901760
  %v3637 = vsub.f32 %v1939, %v3636
  %3638 = vmatpush.msra.mxu0 %v3637
  %v3639 = vand.u32 %v1935, 4294901760
  %v3640 = vsub.f32 %v1935, %v3639
  %3641 = vmatpush.msra.mxu0 %v3640
  %v3642 = vand.u32 %v1931, 4294901760
  %v3643 = vsub.f32 %v1931, %v3642
  %3644 = vmatpush.msra.mxu0 %v3643
  %v3645 = vand.u32 %v1927, 4294901760
  %v3646 = vsub.f32 %v1927, %v3645
  %3647 = vmatpush.msra.mxu0 %v3646
  %v3648 = vand.u32 %v1923, 4294901760
  %v3649 = vsub.f32 %v1923, %v3648
  %3650 = vmatpush.msra.mxu0 %v3649
  %v3651 = vand.u32 %v1919, 4294901760
  %v3652 = vsub.f32 %v1919, %v3651
  %3653 = vmatpush.msra.mxu0 %v3652
  %v3654 = vand.u32 %v1915, 4294901760
  %v3655 = vsub.f32 %v1915, %v3654
  %3656 = vmatpush.msra.mxu0 %v3655
  %v3657 = vand.u32 %v1911, 4294901760
  %v3658 = vsub.f32 %v1911, %v3657
  %3659 = vmatpush.msra.mxu0 %v3658
  %v3660 = vand.u32 %v3190, 4294901760
  %v3661 = vsub.f32 %v3190, %v3660
  %3662 = vmatmul.f32.gmra.mxu0 %v3661
  %v3663 = vpop.f32.mrf.mxu0
  %v3664 = vadd.f32 %v3616, %v3663
  %3665 = vdwg.mxu0
  %3666 = vmatpush.msra.mxu0 0.0
  %3667 = vmatpush.msra.mxu0 0.0
  %3668 = vmatpush.msra.mxu0 0.0
  %v3669 = vand.u32 %v1971, 4294901760
  %3670 = vmatpush.msra.mxu0 %v3669
  %v3671 = vand.u32 %v1955, 4294901760
  %3672 = vmatpush.msra.mxu0 %v3671
  %v3673 = vand.u32 %v1951, 4294901760
  %3674 = vmatpush.msra.mxu0 %v3673
  %v3675 = vand.u32 %v1947, 4294901760
  %3676 = vmatpush.msra.mxu0 %v3675
  %v3677 = vand.u32 %v1943, 4294901760
  %3678 = vmatpush.msra.mxu0 %v3677
  %v3679 = vand.u32 %v1939, 4294901760
  %3680 = vmatpush.msra.mxu0 %v3679
  %v3681 = vand.u32 %v1935, 4294901760
  %3682 = vmatpush.msra.mxu0 %v3681
  %v3683 = vand.u32 %v1931, 4294901760
  %3684 = vmatpush.msra.mxu0 %v3683
  %v3685 = vand.u32 %v1927, 4294901760
  %3686 = vmatpush.msra.mxu0 %v3685
  %v3687 = vand.u32 %v1923, 4294901760
  %3688 = vmatpush.msra.mxu0 %v3687
  %v3689 = vand.u32 %v1919, 4294901760
  %3690 = vmatpush.msra.mxu0 %v3689
  %v3691 = vand.u32 %v1915, 4294901760
  %3692 = vmatpush.msra.mxu0 %v3691
  %v3693 = vand.u32 %v1911, 4294901760
  %3694 = vmatpush.msra.mxu0 %v3693
  %v3695 = vand.u32 %v3190, 4294901760
  %v3696 = vsub.f32 %v3190, %v3695
  %v3697 = vand.u32 %v3696, 4294901760
  %3698 = vmatmul.f32.gmra.mxu0 %v3697
  %v3699 = vpop.f32.mrf.mxu0
  %v3700 = vadd.f32 %v3664, %v3699
  %3701 = vdwg.mxu0
  %3702 = vmatpush.msra.mxu0 0.0
  %3703 = vmatpush.msra.mxu0 0.0
  %3704 = vmatpush.msra.mxu0 0.0
  %v3705 = vand.u32 %v1971, 4294901760
  %v3706 = vsub.f32 %v1971, %v3705
  %v3707 = vand.u32 %v3706, 4294901760
  %3708 = vmatpush.msra.mxu0 %v3707
  %v3709 = vand.u32 %v1955, 4294901760
  %v3710 = vsub.f32 %v1955, %v3709
  %v3711 = vand.u32 %v3710, 4294901760
  %3712 = vmatpush.msra.mxu0 %v3711
  %v3713 = vand.u32 %v1951, 4294901760
  %v3714 = vsub.f32 %v1951, %v3713
  %v3715 = vand.u32 %v3714, 4294901760
  %3716 = vmatpush.msra.mxu0 %v3715
  %v3717 = vand.u32 %v1947, 4294901760
  %v3718 = vsub.f32 %v1947, %v3717
  %v3719 = vand.u32 %v3718, 4294901760
  %3720 = vmatpush.msra.mxu0 %v3719
  %v3721 = vand.u32 %v1943, 4294901760
  %v3722 = vsub.f32 %v1943, %v3721
  %v3723 = vand.u32 %v3722, 4294901760
  %3724 = vmatpush.msra.mxu0 %v3723
  %v3725 = vand.u32 %v1939, 4294901760
  %v3726 = vsub.f32 %v1939, %v3725
  %v3727 = vand.u32 %v3726, 4294901760
  %3728 = vmatpush.msra.mxu0 %v3727
  %v3729 = vand.u32 %v1935, 4294901760
  %v3730 = vsub.f32 %v1935, %v3729
  %v3731 = vand.u32 %v3730, 4294901760
  %3732 = vmatpush.msra.mxu0 %v3731
  %v3733 = vand.u32 %v1931, 4294901760
  %v3734 = vsub.f32 %v1931, %v3733
  %v3735 = vand.u32 %v3734, 4294901760
  %3736 = vmatpush.msra.mxu0 %v3735
  %v3737 = vand.u32 %v1927, 4294901760
  %v3738 = vsub.f32 %v1927, %v3737
  %v3739 = vand.u32 %v3738, 4294901760
  %3740 = vmatpush.msra.mxu0 %v3739
  %v3741 = vand.u32 %v1923, 4294901760
  %v3742 = vsub.f32 %v1923, %v3741
  %v3743 = vand.u32 %v3742, 4294901760
  %3744 = vmatpush.msra.mxu0 %v3743
  %v3745 = vand.u32 %v1919, 4294901760
  %v3746 = vsub.f32 %v1919, %v3745
  %v3747 = vand.u32 %v3746, 4294901760
  %3748 = vmatpush.msra.mxu0 %v3747
  %v3749 = vand.u32 %v1915, 4294901760
  %v3750 = vsub.f32 %v1915, %v3749
  %v3751 = vand.u32 %v3750, 4294901760
  %3752 = vmatpush.msra.mxu0 %v3751
  %v3753 = vand.u32 %v1911, 4294901760
  %v3754 = vsub.f32 %v1911, %v3753
  %v3755 = vand.u32 %v3754, 4294901760
  %3756 = vmatpush.msra.mxu0 %v3755
  %v3757 = vand.u32 %v3190, 4294901760
  %3758 = vmatmul.f32.gmra.mxu0 %v3757
  %v3759 = vpop.f32.mrf.mxu0
  %v3760 = vadd.f32 %v3700, %v3759
  %3761 = vdwg.mxu0
  %3762 = vmatpush.msra.mxu0 0.0
  %3763 = vmatpush.msra.mxu0 0.0
  %3764 = vmatpush.msra.mxu0 0.0
  %v3765 = vand.u32 %v1971, 4294901760
  %3766 = vmatpush.msra.mxu0 %v3765
  %v3767 = vand.u32 %v1955, 4294901760
  %3768 = vmatpush.msra.mxu0 %v3767
  %v3769 = vand.u32 %v1951, 4294901760
  %3770 = vmatpush.msra.mxu0 %v3769
  %v3771 = vand.u32 %v1947, 4294901760
  %3772 = vmatpush.msra.mxu0 %v3771
  %v3773 = vand.u32 %v1943, 4294901760
  %3774 = vmatpush.msra.mxu0 %v3773
  %v3775 = vand.u32 %v1939, 4294901760
  %3776 = vmatpush.msra.mxu0 %v3775
  %v3777 = vand.u32 %v1935, 4294901760
  %3778 = vmatpush.msra.mxu0 %v3777
  %v3779 = vand.u32 %v1931, 4294901760
  %3780 = vmatpush.msra.mxu0 %v3779
  %v3781 = vand.u32 %v1927, 4294901760
  %3782 = vmatpush.msra.mxu0 %v3781
  %v3783 = vand.u32 %v1923, 4294901760
  %3784 = vmatpush.msra.mxu0 %v3783
  %v3785 = vand.u32 %v1919, 4294901760
  %3786 = vmatpush.msra.mxu0 %v3785
  %v3787 = vand.u32 %v1915, 4294901760
  %3788 = vmatpush.msra.mxu0 %v3787
  %v3789 = vand.u32 %v1911, 4294901760
  %3790 = vmatpush.msra.mxu0 %v3789
  %v3791 = vand.u32 %v3190, 4294901760
  %3792 = vmatmul.f32.gmra.mxu0 %v3791
  %v3793 = vpop.f32.mrf.mxu0
  %v3794 = vadd.f32 %v3760, %v3793
  %3795 = vdwg.mxu0
  %3796 = vmatpush.msra.mxu0 0.0
  %3797 = vmatpush.msra.mxu0 0.0
  %3798 = vmatpush.msra.mxu0 0.0
  %v3799 = vand.u32 %v1974, 4294901760
  %3800 = vmatpush.msra.mxu0 %v3799
  %v3801 = vand.u32 %v1956, 4294901760
  %3802 = vmatpush.msra.mxu0 %v3801
  %v3803 = vand.u32 %v1952, 4294901760
  %3804 = vmatpush.msra.mxu0 %v3803
  %v3805 = vand.u32 %v1948, 4294901760
  %3806 = vmatpush.msra.mxu0 %v3805
  %v3807 = vand.u32 %v1944, 4294901760
  %3808 = vmatpush.msra.mxu0 %v3807
  %v3809 = vand.u32 %v1940, 4294901760
  %3810 = vmatpush.msra.mxu0 %v3809
  %v3811 = vand.u32 %v1936, 4294901760
  %3812 = vmatpush.msra.mxu0 %v3811
  %v3813 = vand.u32 %v1932, 4294901760
  %3814 = vmatpush.msra.mxu0 %v3813
  %v3815 = vand.u32 %v1928, 4294901760
  %3816 = vmatpush.msra.mxu0 %v3815
  %v3817 = vand.u32 %v1924, 4294901760
  %3818 = vmatpush.msra.mxu0 %v3817
  %v3819 = vand.u32 %v1920, 4294901760
  %3820 = vmatpush.msra.mxu0 %v3819
  %v3821 = vand.u32 %v1916, 4294901760
  %3822 = vmatpush.msra.mxu0 %v3821
  %v3823 = vand.u32 %v1912, 4294901760
  %3824 = vmatpush.msra.mxu0 %v3823
  %v3825 = vand.u32 %v3190, 4294901760
  %v3826 = vsub.f32 %v3190, %v3825
  %v3827 = vand.u32 %v3826, 4294901760
  %v3828 = vsub.f32 %v3826, %v3827
  %v3829 = vand.u32 %v3828, 4294901760
  %3830 = vmatmul.f32.gmra.mxu0 %v3829
  %v3831 = vpop.f32.mrf.mxu0
  %v3832 = vadd.f32 0.0, %v3831
  %3833 = vdwg.mxu0
  %3834 = vmatpush.msra.mxu0 0.0
  %3835 = vmatpush.msra.mxu0 0.0
  %3836 = vmatpush.msra.mxu0 0.0
  %v3837 = vand.u32 %v1974, 4294901760
  %v3838 = vsub.f32 %v1974, %v3837
  %v3839 = vand.u32 %v3838, 4294901760
  %v3840 = vsub.f32 %v3838, %v3839
  %v3841 = vand.u32 %v3840, 4294901760
  %3842 = vmatpush.msra.mxu0 %v3841
  %v3843 = vand.u32 %v1956, 4294901760
  %v3844 = vsub.f32 %v1956, %v3843
  %v3845 = vand.u32 %v3844, 4294901760
  %v3846 = vsub.f32 %v3844, %v3845
  %v3847 = vand.u32 %v3846, 4294901760
  %3848 = vmatpush.msra.mxu0 %v3847
  %v3849 = vand.u32 %v1952, 4294901760
  %v3850 = vsub.f32 %v1952, %v3849
  %v3851 = vand.u32 %v3850, 4294901760
  %v3852 = vsub.f32 %v3850, %v3851
  %v3853 = vand.u32 %v3852, 4294901760
  %3854 = vmatpush.msra.mxu0 %v3853
  %v3855 = vand.u32 %v1948, 4294901760
  %v3856 = vsub.f32 %v1948, %v3855
  %v3857 = vand.u32 %v3856, 4294901760
  %v3858 = vsub.f32 %v3856, %v3857
  %v3859 = vand.u32 %v3858, 4294901760
  %3860 = vmatpush.msra.mxu0 %v3859
  %v3861 = vand.u32 %v1944, 4294901760
  %v3862 = vsub.f32 %v1944, %v3861
  %v3863 = vand.u32 %v3862, 4294901760
  %v3864 = vsub.f32 %v3862, %v3863
  %v3865 = vand.u32 %v3864, 4294901760
  %3866 = vmatpush.msra.mxu0 %v3865
  %v3867 = vand.u32 %v1940, 4294901760
  %v3868 = vsub.f32 %v1940, %v3867
  %v3869 = vand.u32 %v3868, 4294901760
  %v3870 = vsub.f32 %v3868, %v3869
  %v3871 = vand.u32 %v3870, 4294901760
  %3872 = vmatpush.msra.mxu0 %v3871
  %v3873 = vand.u32 %v1936, 4294901760
  %v3874 = vsub.f32 %v1936, %v3873
  %v3875 = vand.u32 %v3874, 4294901760
  %v3876 = vsub.f32 %v3874, %v3875
  %v3877 = vand.u32 %v3876, 4294901760
  %3878 = vmatpush.msra.mxu0 %v3877
  %v3879 = vand.u32 %v1932, 4294901760
  %v3880 = vsub.f32 %v1932, %v3879
  %v3881 = vand.u32 %v3880, 4294901760
  %v3882 = vsub.f32 %v3880, %v3881
  %v3883 = vand.u32 %v3882, 4294901760
  %3884 = vmatpush.msra.mxu0 %v3883
  %v3885 = vand.u32 %v1928, 4294901760
  %v3886 = vsub.f32 %v1928, %v3885
  %v3887 = vand.u32 %v3886, 4294901760
  %v3888 = vsub.f32 %v3886, %v3887
  %v3889 = vand.u32 %v3888, 4294901760
  %3890 = vmatpush.msra.mxu0 %v3889
  %v3891 = vand.u32 %v1924, 4294901760
  %v3892 = vsub.f32 %v1924, %v3891
  %v3893 = vand.u32 %v3892, 4294901760
  %v3894 = vsub.f32 %v3892, %v3893
  %v3895 = vand.u32 %v3894, 4294901760
  %3896 = vmatpush.msra.mxu0 %v3895
  %v3897 = vand.u32 %v1920, 4294901760
  %v3898 = vsub.f32 %v1920, %v3897
  %v3899 = vand.u32 %v3898, 4294901760
  %v3900 = vsub.f32 %v3898, %v3899
  %v3901 = vand.u32 %v3900, 4294901760
  %3902 = vmatpush.msra.mxu0 %v3901
  %v3903 = vand.u32 %v1916, 4294901760
  %v3904 = vsub.f32 %v1916, %v3903
  %v3905 = vand.u32 %v3904, 4294901760
  %v3906 = vsub.f32 %v3904, %v3905
  %v3907 = vand.u32 %v3906, 4294901760
  %3908 = vmatpush.msra.mxu0 %v3907
  %v3909 = vand.u32 %v1912, 4294901760
  %v3910 = vsub.f32 %v1912, %v3909
  %v3911 = vand.u32 %v3910, 4294901760
  %v3912 = vsub.f32 %v3910, %v3911
  %v3913 = vand.u32 %v3912, 4294901760
  %3914 = vmatpush.msra.mxu0 %v3913
  %v3915 = vand.u32 %v3190, 4294901760
  %3916 = vmatmul.f32.gmra.mxu0 %v3915
  %v3917 = vpop.f32.mrf.mxu0
  %v3918 = vadd.f32 %v3832, %v3917
  %3919 = vdwg.mxu0
  %3920 = vmatpush.msra.mxu0 0.0
  %3921 = vmatpush.msra.mxu0 0.0
  %3922 = vmatpush.msra.mxu0 0.0
  %v3923 = vand.u32 %v1974, 4294901760
  %v3924 = vsub.f32 %v1974, %v3923
  %3925 = vmatpush.msra.mxu0 %v3924
  %v3926 = vand.u32 %v1956, 4294901760
  %v3927 = vsub.f32 %v1956, %v3926
  %3928 = vmatpush.msra.mxu0 %v3927
  %v3929 = vand.u32 %v1952, 4294901760
  %v3930 = vsub.f32 %v1952, %v3929
  %3931 = vmatpush.msra.mxu0 %v3930
  %v3932 = vand.u32 %v1948, 4294901760
  %v3933 = vsub.f32 %v1948, %v3932
  %3934 = vmatpush.msra.mxu0 %v3933
  %v3935 = vand.u32 %v1944, 4294901760
  %v3936 = vsub.f32 %v1944, %v3935
  %3937 = vmatpush.msra.mxu0 %v3936
  %v3938 = vand.u32 %v1940, 4294901760
  %v3939 = vsub.f32 %v1940, %v3938
  %3940 = vmatpush.msra.mxu0 %v3939
  %v3941 = vand.u32 %v1936, 4294901760
  %v3942 = vsub.f32 %v1936, %v3941
  %3943 = vmatpush.msra.mxu0 %v3942
  %v3944 = vand.u32 %v1932, 4294901760
  %v3945 = vsub.f32 %v1932, %v3944
  %3946 = vmatpush.msra.mxu0 %v3945
  %v3947 = vand.u32 %v1928, 4294901760
  %v3948 = vsub.f32 %v1928, %v3947
  %3949 = vmatpush.msra.mxu0 %v3948
  %v3950 = vand.u32 %v1924, 4294901760
  %v3951 = vsub.f32 %v1924, %v3950
  %3952 = vmatpush.msra.mxu0 %v3951
  %v3953 = vand.u32 %v1920, 4294901760
  %v3954 = vsub.f32 %v1920, %v3953
  %3955 = vmatpush.msra.mxu0 %v3954
  %v3956 = vand.u32 %v1916, 4294901760
  %v3957 = vsub.f32 %v1916, %v3956
  %3958 = vmatpush.msra.mxu0 %v3957
  %v3959 = vand.u32 %v1912, 4294901760
  %v3960 = vsub.f32 %v1912, %v3959
  %3961 = vmatpush.msra.mxu0 %v3960
  %v3962 = vand.u32 %v3190, 4294901760
  %v3963 = vsub.f32 %v3190, %v3962
  %3964 = vmatmul.f32.gmra.mxu0 %v3963
  %v3965 = vpop.f32.mrf.mxu0
  %v3966 = vadd.f32 %v3918, %v3965
  %3967 = vdwg.mxu0
  %3968 = vmatpush.msra.mxu0 0.0
  %3969 = vmatpush.msra.mxu0 0.0
  %3970 = vmatpush.msra.mxu0 0.0
  %v3971 = vand.u32 %v1974, 4294901760
  %3972 = vmatpush.msra.mxu0 %v3971
  %v3973 = vand.u32 %v1956, 4294901760
  %3974 = vmatpush.msra.mxu0 %v3973
  %v3975 = vand.u32 %v1952, 4294901760
  %3976 = vmatpush.msra.mxu0 %v3975
  %v3977 = vand.u32 %v1948, 4294901760
  %3978 = vmatpush.msra.mxu0 %v3977
  %v3979 = vand.u32 %v1944, 4294901760
  %3980 = vmatpush.msra.mxu0 %v3979
  %v3981 = vand.u32 %v1940, 4294901760
  %3982 = vmatpush.msra.mxu0 %v3981
  %v3983 = vand.u32 %v1936, 4294901760
  %3984 = vmatpush.msra.mxu0 %v3983
  %v3985 = vand.u32 %v1932, 4294901760
  %3986 = vmatpush.msra.mxu0 %v3985
  %v3987 = vand.u32 %v1928, 4294901760
  %3988 = vmatpush.msra.mxu0 %v3987
  %v3989 = vand.u32 %v1924, 4294901760
  %3990 = vmatpush.msra.mxu0 %v3989
  %v3991 = vand.u32 %v1920, 4294901760
  %3992 = vmatpush.msra.mxu0 %v3991
  %v3993 = vand.u32 %v1916, 4294901760
  %3994 = vmatpush.msra.mxu0 %v3993
  %v3995 = vand.u32 %v1912, 4294901760
  %3996 = vmatpush.msra.mxu0 %v3995
  %v3997 = vand.u32 %v3190, 4294901760
  %v3998 = vsub.f32 %v3190, %v3997
  %v3999 = vand.u32 %v3998, 4294901760
  %4000 = vmatmul.f32.gmra.mxu0 %v3999
  %v4001 = vpop.f32.mrf.mxu0
  %v4002 = vadd.f32 %v3966, %v4001
  %4003 = vdwg.mxu0
  %4004 = vmatpush.msra.mxu0 0.0
  %4005 = vmatpush.msra.mxu0 0.0
  %4006 = vmatpush.msra.mxu0 0.0
  %v4007 = vand.u32 %v1974, 4294901760
  %v4008 = vsub.f32 %v1974, %v4007
  %v4009 = vand.u32 %v4008, 4294901760
  %4010 = vmatpush.msra.mxu0 %v4009
  %v4011 = vand.u32 %v1956, 4294901760
  %v4012 = vsub.f32 %v1956, %v4011
  %v4013 = vand.u32 %v4012, 4294901760
  %4014 = vmatpush.msra.mxu0 %v4013
  %v4015 = vand.u32 %v1952, 4294901760
  %v4016 = vsub.f32 %v1952, %v4015
  %v4017 = vand.u32 %v4016, 4294901760
  %4018 = vmatpush.msra.mxu0 %v4017
  %v4019 = vand.u32 %v1948, 4294901760
  %v4020 = vsub.f32 %v1948, %v4019
  %v4021 = vand.u32 %v4020, 4294901760
  %4022 = vmatpush.msra.mxu0 %v4021
  %v4023 = vand.u32 %v1944, 4294901760
  %v4024 = vsub.f32 %v1944, %v4023
  %v4025 = vand.u32 %v4024, 4294901760
  %4026 = vmatpush.msra.mxu0 %v4025
  %v4027 = vand.u32 %v1940, 4294901760
  %v4028 = vsub.f32 %v1940, %v4027
  %v4029 = vand.u32 %v4028, 4294901760
  %4030 = vmatpush.msra.mxu0 %v4029
  %v4031 = vand.u32 %v1936, 4294901760
  %v4032 = vsub.f32 %v1936, %v4031
  %v4033 = vand.u32 %v4032, 4294901760
  %4034 = vmatpush.msra.mxu0 %v4033
  %v4035 = vand.u32 %v1932, 4294901760
  %v4036 = vsub.f32 %v1932, %v4035
  %v4037 = vand.u32 %v4036, 4294901760
  %4038 = vmatpush.msra.mxu0 %v4037
  %v4039 = vand.u32 %v1928, 4294901760
  %v4040 = vsub.f32 %v1928, %v4039
  %v4041 = vand.u32 %v4040, 4294901760
  %4042 = vmatpush.msra.mxu0 %v4041
  %v4043 = vand.u32 %v1924, 4294901760
  %v4044 = vsub.f32 %v1924, %v4043
  %v4045 = vand.u32 %v4044, 4294901760
  %4046 = vmatpush.msra.mxu0 %v4045
  %v4047 = vand.u32 %v1920, 4294901760
  %v4048 = vsub.f32 %v1920, %v4047
  %v4049 = vand.u32 %v4048, 4294901760
  %4050 = vmatpush.msra.mxu0 %v4049
  %v4051 = vand.u32 %v1916, 4294901760
  %v4052 = vsub.f32 %v1916, %v4051
  %v4053 = vand.u32 %v4052, 4294901760
  %4054 = vmatpush.msra.mxu0 %v4053
  %v4055 = vand.u32 %v1912, 4294901760
  %v4056 = vsub.f32 %v1912, %v4055
  %v4057 = vand.u32 %v4056, 4294901760
  %4058 = vmatpush.msra.mxu0 %v4057
  %v4059 = vand.u32 %v3190, 4294901760
  %4060 = vmatmul.f32.gmra.mxu0 %v4059
  %v4061 = vpop.f32.mrf.mxu0
  %v4062 = vadd.f32 %v4002, %v4061
  %4063 = vdwg.mxu0
  %4064 = vmatpush.msra.mxu0 0.0
  %4065 = vmatpush.msra.mxu0 0.0
  %4066 = vmatpush.msra.mxu0 0.0
  %v4067 = vand.u32 %v1974, 4294901760
  %4068 = vmatpush.msra.mxu0 %v4067
  %v4069 = vand.u32 %v1956, 4294901760
  %4070 = vmatpush.msra.mxu0 %v4069
  %v4071 = vand.u32 %v1952, 4294901760
  %4072 = vmatpush.msra.mxu0 %v4071
  %v4073 = vand.u32 %v1948, 4294901760
  %4074 = vmatpush.msra.mxu0 %v4073
  %v4075 = vand.u32 %v1944, 4294901760
  %4076 = vmatpush.msra.mxu0 %v4075
  %v4077 = vand.u32 %v1940, 4294901760
  %4078 = vmatpush.msra.mxu0 %v4077
  %v4079 = vand.u32 %v1936, 4294901760
  %4080 = vmatpush.msra.mxu0 %v4079
  %v4081 = vand.u32 %v1932, 4294901760
  %4082 = vmatpush.msra.mxu0 %v4081
  %v4083 = vand.u32 %v1928, 4294901760
  %4084 = vmatpush.msra.mxu0 %v4083
  %v4085 = vand.u32 %v1924, 4294901760
  %4086 = vmatpush.msra.mxu0 %v4085
  %v4087 = vand.u32 %v1920, 4294901760
  %4088 = vmatpush.msra.mxu0 %v4087
  %v4089 = vand.u32 %v1916, 4294901760
  %4090 = vmatpush.msra.mxu0 %v4089
  %v4091 = vand.u32 %v1912, 4294901760
  %4092 = vmatpush.msra.mxu0 %v4091
  %v4093 = vand.u32 %v3190, 4294901760
  %4094 = vmatmul.f32.gmra.mxu0 %v4093
  %v4095 = vpop.f32.mrf.mxu0
  %v4096 = vadd.f32 %v4062, %v4095
  %4097 = vdwg.mxu0
  %4098 = vmatpush.msra.mxu0 0.0
  %4099 = vmatpush.msra.mxu0 0.0
  %4100 = vmatpush.msra.mxu0 0.0
  %v4101 = vand.u32 %v1977, 4294901760
  %4102 = vmatpush.msra.mxu0 %v4101
  %v4103 = vand.u32 %v1957, 4294901760
  %4104 = vmatpush.msra.mxu0 %v4103
  %v4105 = vand.u32 %v1953, 4294901760
  %4106 = vmatpush.msra.mxu0 %v4105
  %v4107 = vand.u32 %v1949, 4294901760
  %4108 = vmatpush.msra.mxu0 %v4107
  %v4109 = vand.u32 %v1945, 4294901760
  %4110 = vmatpush.msra.mxu0 %v4109
  %v4111 = vand.u32 %v1941, 4294901760
  %4112 = vmatpush.msra.mxu0 %v4111
  %v4113 = vand.u32 %v1937, 4294901760
  %4114 = vmatpush.msra.mxu0 %v4113
  %v4115 = vand.u32 %v1933, 4294901760
  %4116 = vmatpush.msra.mxu0 %v4115
  %v4117 = vand.u32 %v1929, 4294901760
  %4118 = vmatpush.msra.mxu0 %v4117
  %v4119 = vand.u32 %v1925, 4294901760
  %4120 = vmatpush.msra.mxu0 %v4119
  %v4121 = vand.u32 %v1921, 4294901760
  %4122 = vmatpush.msra.mxu0 %v4121
  %v4123 = vand.u32 %v1917, 4294901760
  %4124 = vmatpush.msra.mxu0 %v4123
  %v4125 = vand.u32 %v1913, 4294901760
  %4126 = vmatpush.msra.mxu0 %v4125
  %v4127 = vand.u32 %v3190, 4294901760
  %v4128 = vsub.f32 %v3190, %v4127
  %v4129 = vand.u32 %v4128, 4294901760
  %v4130 = vsub.f32 %v4128, %v4129
  %v4131 = vand.u32 %v4130, 4294901760
  %4132 = vmatmul.f32.gmra.mxu0 %v4131
  %v4133 = vpop.f32.mrf.mxu0
  %v4134 = vadd.f32 0.0, %v4133
  %4135 = vdwg.mxu0
  %4136 = vmatpush.msra.mxu0 0.0
  %4137 = vmatpush.msra.mxu0 0.0
  %4138 = vmatpush.msra.mxu0 0.0
  %v4139 = vand.u32 %v1977, 4294901760
  %v4140 = vsub.f32 %v1977, %v4139
  %v4141 = vand.u32 %v4140, 4294901760
  %v4142 = vsub.f32 %v4140, %v4141
  %v4143 = vand.u32 %v4142, 4294901760
  %4144 = vmatpush.msra.mxu0 %v4143
  %v4145 = vand.u32 %v1957, 4294901760
  %v4146 = vsub.f32 %v1957, %v4145
  %v4147 = vand.u32 %v4146, 4294901760
  %v4148 = vsub.f32 %v4146, %v4147
  %v4149 = vand.u32 %v4148, 4294901760
  %4150 = vmatpush.msra.mxu0 %v4149
  %v4151 = vand.u32 %v1953, 4294901760
  %v4152 = vsub.f32 %v1953, %v4151
  %v4153 = vand.u32 %v4152, 4294901760
  %v4154 = vsub.f32 %v4152, %v4153
  %v4155 = vand.u32 %v4154, 4294901760
  %4156 = vmatpush.msra.mxu0 %v4155
  %v4157 = vand.u32 %v1949, 4294901760
  %v4158 = vsub.f32 %v1949, %v4157
  %v4159 = vand.u32 %v4158, 4294901760
  %v4160 = vsub.f32 %v4158, %v4159
  %v4161 = vand.u32 %v4160, 4294901760
  %4162 = vmatpush.msra.mxu0 %v4161
  %v4163 = vand.u32 %v1945, 4294901760
  %v4164 = vsub.f32 %v1945, %v4163
  %v4165 = vand.u32 %v4164, 4294901760
  %v4166 = vsub.f32 %v4164, %v4165
  %v4167 = vand.u32 %v4166, 4294901760
  %4168 = vmatpush.msra.mxu0 %v4167
  %v4169 = vand.u32 %v1941, 4294901760
  %v4170 = vsub.f32 %v1941, %v4169
  %v4171 = vand.u32 %v4170, 4294901760
  %v4172 = vsub.f32 %v4170, %v4171
  %v4173 = vand.u32 %v4172, 4294901760
  %4174 = vmatpush.msra.mxu0 %v4173
  %v4175 = vand.u32 %v1937, 4294901760
  %v4176 = vsub.f32 %v1937, %v4175
  %v4177 = vand.u32 %v4176, 4294901760
  %v4178 = vsub.f32 %v4176, %v4177
  %v4179 = vand.u32 %v4178, 4294901760
  %4180 = vmatpush.msra.mxu0 %v4179
  %v4181 = vand.u32 %v1933, 4294901760
  %v4182 = vsub.f32 %v1933, %v4181
  %v4183 = vand.u32 %v4182, 4294901760
  %v4184 = vsub.f32 %v4182, %v4183
  %v4185 = vand.u32 %v4184, 4294901760
  %4186 = vmatpush.msra.mxu0 %v4185
  %v4187 = vand.u32 %v1929, 4294901760
  %v4188 = vsub.f32 %v1929, %v4187
  %v4189 = vand.u32 %v4188, 4294901760
  %v4190 = vsub.f32 %v4188, %v4189
  %v4191 = vand.u32 %v4190, 4294901760
  %4192 = vmatpush.msra.mxu0 %v4191
  %v4193 = vand.u32 %v1925, 4294901760
  %v4194 = vsub.f32 %v1925, %v4193
  %v4195 = vand.u32 %v4194, 4294901760
  %v4196 = vsub.f32 %v4194, %v4195
  %v4197 = vand.u32 %v4196, 4294901760
  %4198 = vmatpush.msra.mxu0 %v4197
  %v4199 = vand.u32 %v1921, 4294901760
  %v4200 = vsub.f32 %v1921, %v4199
  %v4201 = vand.u32 %v4200, 4294901760
  %v4202 = vsub.f32 %v4200, %v4201
  %v4203 = vand.u32 %v4202, 4294901760
  %4204 = vmatpush.msra.mxu0 %v4203
  %v4205 = vand.u32 %v1917, 4294901760
  %v4206 = vsub.f32 %v1917, %v4205
  %v4207 = vand.u32 %v4206, 4294901760
  %v4208 = vsub.f32 %v4206, %v4207
  %v4209 = vand.u32 %v4208, 4294901760
  %4210 = vmatpush.msra.mxu0 %v4209
  %v4211 = vand.u32 %v1913, 4294901760
  %v4212 = vsub.f32 %v1913, %v4211
  %v4213 = vand.u32 %v4212, 4294901760
  %v4214 = vsub.f32 %v4212, %v4213
  %v4215 = vand.u32 %v4214, 4294901760
  %4216 = vmatpush.msra.mxu0 %v4215
  %v4217 = vand.u32 %v3190, 4294901760
  %4218 = vmatmul.f32.gmra.mxu0 %v4217
  %v4219 = vpop.f32.mrf.mxu0
  %v4220 = vadd.f32 %v4134, %v4219
  %4221 = vdwg.mxu0
  %4222 = vmatpush.msra.mxu0 0.0
  %4223 = vmatpush.msra.mxu0 0.0
  %4224 = vmatpush.msra.mxu0 0.0
  %v4225 = vand.u32 %v1977, 4294901760
  %v4226 = vsub.f32 %v1977, %v4225
  %4227 = vmatpush.msra.mxu0 %v4226
  %v4228 = vand.u32 %v1957, 4294901760
  %v4229 = vsub.f32 %v1957, %v4228
  %4230 = vmatpush.msra.mxu0 %v4229
  %v4231 = vand.u32 %v1953, 4294901760
  %v4232 = vsub.f32 %v1953, %v4231
  %4233 = vmatpush.msra.mxu0 %v4232
  %v4234 = vand.u32 %v1949, 4294901760
  %v4235 = vsub.f32 %v1949, %v4234
  %4236 = vmatpush.msra.mxu0 %v4235
  %v4237 = vand.u32 %v1945, 4294901760
  %v4238 = vsub.f32 %v1945, %v4237
  %4239 = vmatpush.msra.mxu0 %v4238
  %v4240 = vand.u32 %v1941, 4294901760
  %v4241 = vsub.f32 %v1941, %v4240
  %4242 = vmatpush.msra.mxu0 %v4241
  %v4243 = vand.u32 %v1937, 4294901760
  %v4244 = vsub.f32 %v1937, %v4243
  %4245 = vmatpush.msra.mxu0 %v4244
  %v4246 = vand.u32 %v1933, 4294901760
  %v4247 = vsub.f32 %v1933, %v4246
  %4248 = vmatpush.msra.mxu0 %v4247
  %v4249 = vand.u32 %v1929, 4294901760
  %v4250 = vsub.f32 %v1929, %v4249
  %4251 = vmatpush.msra.mxu0 %v4250
  %v4252 = vand.u32 %v1925, 4294901760
  %v4253 = vsub.f32 %v1925, %v4252
  %4254 = vmatpush.msra.mxu0 %v4253
  %v4255 = vand.u32 %v1921, 4294901760
  %v4256 = vsub.f32 %v1921, %v4255
  %4257 = vmatpush.msra.mxu0 %v4256
  %v4258 = vand.u32 %v1917, 4294901760
  %v4259 = vsub.f32 %v1917, %v4258
  %4260 = vmatpush.msra.mxu0 %v4259
  %v4261 = vand.u32 %v1913, 4294901760
  %v4262 = vsub.f32 %v1913, %v4261
  %4263 = vmatpush.msra.mxu0 %v4262
  %v4264 = vand.u32 %v3190, 4294901760
  %v4265 = vsub.f32 %v3190, %v4264
  %4266 = vmatmul.f32.gmra.mxu0 %v4265
  %v4267 = vpop.f32.mrf.mxu0
  %v4268 = vadd.f32 %v4220, %v4267
  %4269 = vdwg.mxu0
  %4270 = vmatpush.msra.mxu0 0.0
  %4271 = vmatpush.msra.mxu0 0.0
  %4272 = vmatpush.msra.mxu0 0.0
  %v4273 = vand.u32 %v1977, 4294901760
  %4274 = vmatpush.msra.mxu0 %v4273
  %v4275 = vand.u32 %v1957, 4294901760
  %4276 = vmatpush.msra.mxu0 %v4275
  %v4277 = vand.u32 %v1953, 4294901760
  %4278 = vmatpush.msra.mxu0 %v4277
  %v4279 = vand.u32 %v1949, 4294901760
  %4280 = vmatpush.msra.mxu0 %v4279
  %v4281 = vand.u32 %v1945, 4294901760
  %4282 = vmatpush.msra.mxu0 %v4281
  %v4283 = vand.u32 %v1941, 4294901760
  %4284 = vmatpush.msra.mxu0 %v4283
  %v4285 = vand.u32 %v1937, 4294901760
  %4286 = vmatpush.msra.mxu0 %v4285
  %v4287 = vand.u32 %v1933, 4294901760
  %4288 = vmatpush.msra.mxu0 %v4287
  %v4289 = vand.u32 %v1929, 4294901760
  %4290 = vmatpush.msra.mxu0 %v4289
  %v4291 = vand.u32 %v1925, 4294901760
  %4292 = vmatpush.msra.mxu0 %v4291
  %v4293 = vand.u32 %v1921, 4294901760
  %4294 = vmatpush.msra.mxu0 %v4293
  %v4295 = vand.u32 %v1917, 4294901760
  %4296 = vmatpush.msra.mxu0 %v4295
  %v4297 = vand.u32 %v1913, 4294901760
  %4298 = vmatpush.msra.mxu0 %v4297
  %v4299 = vand.u32 %v3190, 4294901760
  %v4300 = vsub.f32 %v3190, %v4299
  %v4301 = vand.u32 %v4300, 4294901760
  %4302 = vmatmul.f32.gmra.mxu0 %v4301
  %v4303 = vpop.f32.mrf.mxu0
  %v4304 = vadd.f32 %v4268, %v4303
  %4305 = vdwg.mxu0
  %4306 = vmatpush.msra.mxu0 0.0
  %4307 = vmatpush.msra.mxu0 0.0
  %4308 = vmatpush.msra.mxu0 0.0
  %v4309 = vand.u32 %v1977, 4294901760
  %v4310 = vsub.f32 %v1977, %v4309
  %v4311 = vand.u32 %v4310, 4294901760
  %4312 = vmatpush.msra.mxu0 %v4311
  %v4313 = vand.u32 %v1957, 4294901760
  %v4314 = vsub.f32 %v1957, %v4313
  %v4315 = vand.u32 %v4314, 4294901760
  %4316 = vmatpush.msra.mxu0 %v4315
  %v4317 = vand.u32 %v1953, 4294901760
  %v4318 = vsub.f32 %v1953, %v4317
  %v4319 = vand.u32 %v4318, 4294901760
  %4320 = vmatpush.msra.mxu0 %v4319
  %v4321 = vand.u32 %v1949, 4294901760
  %v4322 = vsub.f32 %v1949, %v4321
  %v4323 = vand.u32 %v4322, 4294901760
  %4324 = vmatpush.msra.mxu0 %v4323
  %v4325 = vand.u32 %v1945, 4294901760
  %v4326 = vsub.f32 %v1945, %v4325
  %v4327 = vand.u32 %v4326, 4294901760
  %4328 = vmatpush.msra.mxu0 %v4327
  %v4329 = vand.u32 %v1941, 4294901760
  %v4330 = vsub.f32 %v1941, %v4329
  %v4331 = vand.u32 %v4330, 4294901760
  %4332 = vmatpush.msra.mxu0 %v4331
  %v4333 = vand.u32 %v1937, 4294901760
  %v4334 = vsub.f32 %v1937, %v4333
  %v4335 = vand.u32 %v4334, 4294901760
  %4336 = vmatpush.msra.mxu0 %v4335
  %v4337 = vand.u32 %v1933, 4294901760
  %v4338 = vsub.f32 %v1933, %v4337
  %v4339 = vand.u32 %v4338, 4294901760
  %4340 = vmatpush.msra.mxu0 %v4339
  %v4341 = vand.u32 %v1929, 4294901760
  %v4342 = vsub.f32 %v1929, %v4341
  %v4343 = vand.u32 %v4342, 4294901760
  %4344 = vmatpush.msra.mxu0 %v4343
  %v4345 = vand.u32 %v1925, 4294901760
  %v4346 = vsub.f32 %v1925, %v4345
  %v4347 = vand.u32 %v4346, 4294901760
  %4348 = vmatpush.msra.mxu0 %v4347
  %v4349 = vand.u32 %v1921, 4294901760
  %v4350 = vsub.f32 %v1921, %v4349
  %v4351 = vand.u32 %v4350, 4294901760
  %4352 = vmatpush.msra.mxu0 %v4351
  %v4353 = vand.u32 %v1917, 4294901760
  %v4354 = vsub.f32 %v1917, %v4353
  %v4355 = vand.u32 %v4354, 4294901760
  %4356 = vmatpush.msra.mxu0 %v4355
  %v4357 = vand.u32 %v1913, 4294901760
  %v4358 = vsub.f32 %v1913, %v4357
  %v4359 = vand.u32 %v4358, 4294901760
  %4360 = vmatpush.msra.mxu0 %v4359
  %v4361 = vand.u32 %v3190, 4294901760
  %4362 = vmatmul.f32.gmra.mxu0 %v4361
  %v4363 = vpop.f32.mrf.mxu0
  %v4364 = vadd.f32 %v4304, %v4363
  %4365 = vdwg.mxu0
  %4366 = vmatpush.msra.mxu0 0.0
  %4367 = vmatpush.msra.mxu0 0.0
  %4368 = vmatpush.msra.mxu0 0.0
  %v4369 = vand.u32 %v1977, 4294901760
  %4370 = vmatpush.msra.mxu0 %v4369
  %v4371 = vand.u32 %v1957, 4294901760
  %4372 = vmatpush.msra.mxu0 %v4371
  %v4373 = vand.u32 %v1953, 4294901760
  %4374 = vmatpush.msra.mxu0 %v4373
  %v4375 = vand.u32 %v1949, 4294901760
  %4376 = vmatpush.msra.mxu0 %v4375
  %v4377 = vand.u32 %v1945, 4294901760
  %4378 = vmatpush.msra.mxu0 %v4377
  %v4379 = vand.u32 %v1941, 4294901760
  %4380 = vmatpush.msra.mxu0 %v4379
  %v4381 = vand.u32 %v1937, 4294901760
  %4382 = vmatpush.msra.mxu0 %v4381
  %v4383 = vand.u32 %v1933, 4294901760
  %4384 = vmatpush.msra.mxu0 %v4383
  %v4385 = vand.u32 %v1929, 4294901760
  %4386 = vmatpush.msra.mxu0 %v4385
  %v4387 = vand.u32 %v1925, 4294901760
  %4388 = vmatpush.msra.mxu0 %v4387
  %v4389 = vand.u32 %v1921, 4294901760
  %4390 = vmatpush.msra.mxu0 %v4389
  %v4391 = vand.u32 %v1917, 4294901760
  %4392 = vmatpush.msra.mxu0 %v4391
  %v4393 = vand.u32 %v1913, 4294901760
  %4394 = vmatpush.msra.mxu0 %v4393
  %v4395 = vand.u32 %v3190, 4294901760
  %4396 = vmatmul.f32.gmra.mxu0 %v4395
  %v4397 = vpop.f32.mrf.mxu0
  %v4398 = vadd.f32 %v4364, %v4397
  %4399 = vdwg.mxu0
  %s4400 = scalar_lea.vmem %s3, 8
  %v4401 = vld [vmem:[%s4400] sm:$0xf]
  %v4403 = vsel %vm1962, %v4401, 0
  %4405 = vmatpush.msra.mxu0 0.0
  %4406 = vmatpush.msra.mxu0 0.0
  %4407 = vmatpush.msra.mxu0 0.0
  %v4408 = vand.u32 %v1968, 4294901760
  %4409 = vmatpush.msra.mxu0 %v4408
  %v4410 = vand.u32 %v1954, 4294901760
  %4411 = vmatpush.msra.mxu0 %v4410
  %v4412 = vand.u32 %v1950, 4294901760
  %4413 = vmatpush.msra.mxu0 %v4412
  %v4414 = vand.u32 %v1946, 4294901760
  %4415 = vmatpush.msra.mxu0 %v4414
  %v4416 = vand.u32 %v1942, 4294901760
  %4417 = vmatpush.msra.mxu0 %v4416
  %v4418 = vand.u32 %v1938, 4294901760
  %4419 = vmatpush.msra.mxu0 %v4418
  %v4420 = vand.u32 %v1934, 4294901760
  %4421 = vmatpush.msra.mxu0 %v4420
  %v4422 = vand.u32 %v1930, 4294901760
  %4423 = vmatpush.msra.mxu0 %v4422
  %v4424 = vand.u32 %v1926, 4294901760
  %4425 = vmatpush.msra.mxu0 %v4424
  %v4426 = vand.u32 %v1922, 4294901760
  %4427 = vmatpush.msra.mxu0 %v4426
  %v4428 = vand.u32 %v1918, 4294901760
  %4429 = vmatpush.msra.mxu0 %v4428
  %v4430 = vand.u32 %v1914, 4294901760
  %4431 = vmatpush.msra.mxu0 %v4430
  %v4432 = vand.u32 %v1910, 4294901760
  %4433 = vmatpush.msra.mxu0 %v4432
  %v4434 = vand.u32 %v4403, 4294901760
  %v4435 = vsub.f32 %v4403, %v4434
  %v4436 = vand.u32 %v4435, 4294901760
  %v4437 = vsub.f32 %v4435, %v4436
  %v4438 = vand.u32 %v4437, 4294901760
  %4439 = vmatmul.f32.gmra.mxu0 %v4438
  %v4440 = vpop.f32.mrf.mxu0
  %v4441 = vadd.f32 0.0, %v4440
  %4442 = vdwg.mxu0
  %4443 = vmatpush.msra.mxu0 0.0
  %4444 = vmatpush.msra.mxu0 0.0
  %4445 = vmatpush.msra.mxu0 0.0
  %v4446 = vand.u32 %v1968, 4294901760
  %v4447 = vsub.f32 %v1968, %v4446
  %v4448 = vand.u32 %v4447, 4294901760
  %v4449 = vsub.f32 %v4447, %v4448
  %v4450 = vand.u32 %v4449, 4294901760
  %4451 = vmatpush.msra.mxu0 %v4450
  %v4452 = vand.u32 %v1954, 4294901760
  %v4453 = vsub.f32 %v1954, %v4452
  %v4454 = vand.u32 %v4453, 4294901760
  %v4455 = vsub.f32 %v4453, %v4454
  %v4456 = vand.u32 %v4455, 4294901760
  %4457 = vmatpush.msra.mxu0 %v4456
  %v4458 = vand.u32 %v1950, 4294901760
  %v4459 = vsub.f32 %v1950, %v4458
  %v4460 = vand.u32 %v4459, 4294901760
  %v4461 = vsub.f32 %v4459, %v4460
  %v4462 = vand.u32 %v4461, 4294901760
  %4463 = vmatpush.msra.mxu0 %v4462
  %v4464 = vand.u32 %v1946, 4294901760
  %v4465 = vsub.f32 %v1946, %v4464
  %v4466 = vand.u32 %v4465, 4294901760
  %v4467 = vsub.f32 %v4465, %v4466
  %v4468 = vand.u32 %v4467, 4294901760
  %4469 = vmatpush.msra.mxu0 %v4468
  %v4470 = vand.u32 %v1942, 4294901760
  %v4471 = vsub.f32 %v1942, %v4470
  %v4472 = vand.u32 %v4471, 4294901760
  %v4473 = vsub.f32 %v4471, %v4472
  %v4474 = vand.u32 %v4473, 4294901760
  %4475 = vmatpush.msra.mxu0 %v4474
  %v4476 = vand.u32 %v1938, 4294901760
  %v4477 = vsub.f32 %v1938, %v4476
  %v4478 = vand.u32 %v4477, 4294901760
  %v4479 = vsub.f32 %v4477, %v4478
  %v4480 = vand.u32 %v4479, 4294901760
  %4481 = vmatpush.msra.mxu0 %v4480
  %v4482 = vand.u32 %v1934, 4294901760
  %v4483 = vsub.f32 %v1934, %v4482
  %v4484 = vand.u32 %v4483, 4294901760
  %v4485 = vsub.f32 %v4483, %v4484
  %v4486 = vand.u32 %v4485, 4294901760
  %4487 = vmatpush.msra.mxu0 %v4486
  %v4488 = vand.u32 %v1930, 4294901760
  %v4489 = vsub.f32 %v1930, %v4488
  %v4490 = vand.u32 %v4489, 4294901760
  %v4491 = vsub.f32 %v4489, %v4490
  %v4492 = vand.u32 %v4491, 4294901760
  %4493 = vmatpush.msra.mxu0 %v4492
  %v4494 = vand.u32 %v1926, 4294901760
  %v4495 = vsub.f32 %v1926, %v4494
  %v4496 = vand.u32 %v4495, 4294901760
  %v4497 = vsub.f32 %v4495, %v4496
  %v4498 = vand.u32 %v4497, 4294901760
  %4499 = vmatpush.msra.mxu0 %v4498
  %v4500 = vand.u32 %v1922, 4294901760
  %v4501 = vsub.f32 %v1922, %v4500
  %v4502 = vand.u32 %v4501, 4294901760
  %v4503 = vsub.f32 %v4501, %v4502
  %v4504 = vand.u32 %v4503, 4294901760
  %4505 = vmatpush.msra.mxu0 %v4504
  %v4506 = vand.u32 %v1918, 4294901760
  %v4507 = vsub.f32 %v1918, %v4506
  %v4508 = vand.u32 %v4507, 4294901760
  %v4509 = vsub.f32 %v4507, %v4508
  %v4510 = vand.u32 %v4509, 4294901760
  %4511 = vmatpush.msra.mxu0 %v4510
  %v4512 = vand.u32 %v1914, 4294901760
  %v4513 = vsub.f32 %v1914, %v4512
  %v4514 = vand.u32 %v4513, 4294901760
  %v4515 = vsub.f32 %v4513, %v4514
  %v4516 = vand.u32 %v4515, 4294901760
  %4517 = vmatpush.msra.mxu0 %v4516
  %v4518 = vand.u32 %v1910, 4294901760
  %v4519 = vsub.f32 %v1910, %v4518
  %v4520 = vand.u32 %v4519, 4294901760
  %v4521 = vsub.f32 %v4519, %v4520
  %v4522 = vand.u32 %v4521, 4294901760
  %4523 = vmatpush.msra.mxu0 %v4522
  %v4524 = vand.u32 %v4403, 4294901760
  %4525 = vmatmul.f32.gmra.mxu0 %v4524
  %v4526 = vpop.f32.mrf.mxu0
  %v4527 = vadd.f32 %v4441, %v4526
  %4528 = vdwg.mxu0
  %4529 = vmatpush.msra.mxu0 0.0
  %4530 = vmatpush.msra.mxu0 0.0
  %4531 = vmatpush.msra.mxu0 0.0
  %v4532 = vand.u32 %v1968, 4294901760
  %v4533 = vsub.f32 %v1968, %v4532
  %4534 = vmatpush.msra.mxu0 %v4533
  %v4535 = vand.u32 %v1954, 4294901760
  %v4536 = vsub.f32 %v1954, %v4535
  %4537 = vmatpush.msra.mxu0 %v4536
  %v4538 = vand.u32 %v1950, 4294901760
  %v4539 = vsub.f32 %v1950, %v4538
  %4540 = vmatpush.msra.mxu0 %v4539
  %v4541 = vand.u32 %v1946, 4294901760
  %v4542 = vsub.f32 %v1946, %v4541
  %4543 = vmatpush.msra.mxu0 %v4542
  %v4544 = vand.u32 %v1942, 4294901760
  %v4545 = vsub.f32 %v1942, %v4544
  %4546 = vmatpush.msra.mxu0 %v4545
  %v4547 = vand.u32 %v1938, 4294901760
  %v4548 = vsub.f32 %v1938, %v4547
  %4549 = vmatpush.msra.mxu0 %v4548
  %v4550 = vand.u32 %v1934, 4294901760
  %v4551 = vsub.f32 %v1934, %v4550
  %4552 = vmatpush.msra.mxu0 %v4551
  %v4553 = vand.u32 %v1930, 4294901760
  %v4554 = vsub.f32 %v1930, %v4553
  %4555 = vmatpush.msra.mxu0 %v4554
  %v4556 = vand.u32 %v1926, 4294901760
  %v4557 = vsub.f32 %v1926, %v4556
  %4558 = vmatpush.msra.mxu0 %v4557
  %v4559 = vand.u32 %v1922, 4294901760
  %v4560 = vsub.f32 %v1922, %v4559
  %4561 = vmatpush.msra.mxu0 %v4560
  %v4562 = vand.u32 %v1918, 4294901760
  %v4563 = vsub.f32 %v1918, %v4562
  %4564 = vmatpush.msra.mxu0 %v4563
  %v4565 = vand.u32 %v1914, 4294901760
  %v4566 = vsub.f32 %v1914, %v4565
  %4567 = vmatpush.msra.mxu0 %v4566
  %v4568 = vand.u32 %v1910, 4294901760
  %v4569 = vsub.f32 %v1910, %v4568
  %4570 = vmatpush.msra.mxu0 %v4569
  %v4571 = vand.u32 %v4403, 4294901760
  %v4572 = vsub.f32 %v4403, %v4571
  %4573 = vmatmul.f32.gmra.mxu0 %v4572
  %v4574 = vpop.f32.mrf.mxu0
  %v4575 = vadd.f32 %v4527, %v4574
  %4576 = vdwg.mxu0
  %4577 = vmatpush.msra.mxu0 0.0
  %4578 = vmatpush.msra.mxu0 0.0
  %4579 = vmatpush.msra.mxu0 0.0
  %v4580 = vand.u32 %v1968, 4294901760
  %4581 = vmatpush.msra.mxu0 %v4580
  %v4582 = vand.u32 %v1954, 4294901760
  %4583 = vmatpush.msra.mxu0 %v4582
  %v4584 = vand.u32 %v1950, 4294901760
  %4585 = vmatpush.msra.mxu0 %v4584
  %v4586 = vand.u32 %v1946, 4294901760
  %4587 = vmatpush.msra.mxu0 %v4586
  %v4588 = vand.u32 %v1942, 4294901760
  %4589 = vmatpush.msra.mxu0 %v4588
  %v4590 = vand.u32 %v1938, 4294901760
  %4591 = vmatpush.msra.mxu0 %v4590
  %v4592 = vand.u32 %v1934, 4294901760
  %4593 = vmatpush.msra.mxu0 %v4592
  %v4594 = vand.u32 %v1930, 4294901760
  %4595 = vmatpush.msra.mxu0 %v4594
  %v4596 = vand.u32 %v1926, 4294901760
  %4597 = vmatpush.msra.mxu0 %v4596
  %v4598 = vand.u32 %v1922, 4294901760
  %4599 = vmatpush.msra.mxu0 %v4598
  %v4600 = vand.u32 %v1918, 4294901760
  %4601 = vmatpush.msra.mxu0 %v4600
  %v4602 = vand.u32 %v1914, 4294901760
  %4603 = vmatpush.msra.mxu0 %v4602
  %v4604 = vand.u32 %v1910, 4294901760
  %4605 = vmatpush.msra.mxu0 %v4604
  %v4606 = vand.u32 %v4403, 4294901760
  %v4607 = vsub.f32 %v4403, %v4606
  %v4608 = vand.u32 %v4607, 4294901760
  %4609 = vmatmul.f32.gmra.mxu0 %v4608
  %v4610 = vpop.f32.mrf.mxu0
  %v4611 = vadd.f32 %v4575, %v4610
  %4612 = vdwg.mxu0
  %4613 = vmatpush.msra.mxu0 0.0
  %4614 = vmatpush.msra.mxu0 0.0
  %4615 = vmatpush.msra.mxu0 0.0
  %v4616 = vand.u32 %v1968, 4294901760
  %v4617 = vsub.f32 %v1968, %v4616
  %v4618 = vand.u32 %v4617, 4294901760
  %4619 = vmatpush.msra.mxu0 %v4618
  %v4620 = vand.u32 %v1954, 4294901760
  %v4621 = vsub.f32 %v1954, %v4620
  %v4622 = vand.u32 %v4621, 4294901760
  %4623 = vmatpush.msra.mxu0 %v4622
  %v4624 = vand.u32 %v1950, 4294901760
  %v4625 = vsub.f32 %v1950, %v4624
  %v4626 = vand.u32 %v4625, 4294901760
  %4627 = vmatpush.msra.mxu0 %v4626
  %v4628 = vand.u32 %v1946, 4294901760
  %v4629 = vsub.f32 %v1946, %v4628
  %v4630 = vand.u32 %v4629, 4294901760
  %4631 = vmatpush.msra.mxu0 %v4630
  %v4632 = vand.u32 %v1942, 4294901760
  %v4633 = vsub.f32 %v1942, %v4632
  %v4634 = vand.u32 %v4633, 4294901760
  %4635 = vmatpush.msra.mxu0 %v4634
  %v4636 = vand.u32 %v1938, 4294901760
  %v4637 = vsub.f32 %v1938, %v4636
  %v4638 = vand.u32 %v4637, 4294901760
  %4639 = vmatpush.msra.mxu0 %v4638
  %v4640 = vand.u32 %v1934, 4294901760
  %v4641 = vsub.f32 %v1934, %v4640
  %v4642 = vand.u32 %v4641, 4294901760
  %4643 = vmatpush.msra.mxu0 %v4642
  %v4644 = vand.u32 %v1930, 4294901760
  %v4645 = vsub.f32 %v1930, %v4644
  %v4646 = vand.u32 %v4645, 4294901760
  %4647 = vmatpush.msra.mxu0 %v4646
  %v4648 = vand.u32 %v1926, 4294901760
  %v4649 = vsub.f32 %v1926, %v4648
  %v4650 = vand.u32 %v4649, 4294901760
  %4651 = vmatpush.msra.mxu0 %v4650
  %v4652 = vand.u32 %v1922, 4294901760
  %v4653 = vsub.f32 %v1922, %v4652
  %v4654 = vand.u32 %v4653, 4294901760
  %4655 = vmatpush.msra.mxu0 %v4654
  %v4656 = vand.u32 %v1918, 4294901760
  %v4657 = vsub.f32 %v1918, %v4656
  %v4658 = vand.u32 %v4657, 4294901760
  %4659 = vmatpush.msra.mxu0 %v4658
  %v4660 = vand.u32 %v1914, 4294901760
  %v4661 = vsub.f32 %v1914, %v4660
  %v4662 = vand.u32 %v4661, 4294901760
  %4663 = vmatpush.msra.mxu0 %v4662
  %v4664 = vand.u32 %v1910, 4294901760
  %v4665 = vsub.f32 %v1910, %v4664
  %v4666 = vand.u32 %v4665, 4294901760
  %4667 = vmatpush.msra.mxu0 %v4666
  %v4668 = vand.u32 %v4403, 4294901760
  %4669 = vmatmul.f32.gmra.mxu0 %v4668
  %v4670 = vpop.f32.mrf.mxu0
  %v4671 = vadd.f32 %v4611, %v4670
  %4672 = vdwg.mxu0
  %4673 = vmatpush.msra.mxu0 0.0
  %4674 = vmatpush.msra.mxu0 0.0
  %4675 = vmatpush.msra.mxu0 0.0
  %v4676 = vand.u32 %v1968, 4294901760
  %4677 = vmatpush.msra.mxu0 %v4676
  %v4678 = vand.u32 %v1954, 4294901760
  %4679 = vmatpush.msra.mxu0 %v4678
  %v4680 = vand.u32 %v1950, 4294901760
  %4681 = vmatpush.msra.mxu0 %v4680
  %v4682 = vand.u32 %v1946, 4294901760
  %4683 = vmatpush.msra.mxu0 %v4682
  %v4684 = vand.u32 %v1942, 4294901760
  %4685 = vmatpush.msra.mxu0 %v4684
  %v4686 = vand.u32 %v1938, 4294901760
  %4687 = vmatpush.msra.mxu0 %v4686
  %v4688 = vand.u32 %v1934, 4294901760
  %4689 = vmatpush.msra.mxu0 %v4688
  %v4690 = vand.u32 %v1930, 4294901760
  %4691 = vmatpush.msra.mxu0 %v4690
  %v4692 = vand.u32 %v1926, 4294901760
  %4693 = vmatpush.msra.mxu0 %v4692
  %v4694 = vand.u32 %v1922, 4294901760
  %4695 = vmatpush.msra.mxu0 %v4694
  %v4696 = vand.u32 %v1918, 4294901760
  %4697 = vmatpush.msra.mxu0 %v4696
  %v4698 = vand.u32 %v1914, 4294901760
  %4699 = vmatpush.msra.mxu0 %v4698
  %v4700 = vand.u32 %v1910, 4294901760
  %4701 = vmatpush.msra.mxu0 %v4700
  %v4702 = vand.u32 %v4403, 4294901760
  %4703 = vmatmul.f32.gmra.mxu0 %v4702
  %v4704 = vpop.f32.mrf.mxu0
  %v4705 = vadd.f32 %v4671, %v4704
  %4706 = vdwg.mxu0
  %4707 = vmatpush.msra.mxu0 0.0
  %4708 = vmatpush.msra.mxu0 0.0
  %4709 = vmatpush.msra.mxu0 0.0
  %v4710 = vand.u32 %v1971, 4294901760
  %4711 = vmatpush.msra.mxu0 %v4710
  %v4712 = vand.u32 %v1955, 4294901760
  %4713 = vmatpush.msra.mxu0 %v4712
  %v4714 = vand.u32 %v1951, 4294901760
  %4715 = vmatpush.msra.mxu0 %v4714
  %v4716 = vand.u32 %v1947, 4294901760
  %4717 = vmatpush.msra.mxu0 %v4716
  %v4718 = vand.u32 %v1943, 4294901760
  %4719 = vmatpush.msra.mxu0 %v4718
  %v4720 = vand.u32 %v1939, 4294901760
  %4721 = vmatpush.msra.mxu0 %v4720
  %v4722 = vand.u32 %v1935, 4294901760
  %4723 = vmatpush.msra.mxu0 %v4722
  %v4724 = vand.u32 %v1931, 4294901760
  %4725 = vmatpush.msra.mxu0 %v4724
  %v4726 = vand.u32 %v1927, 4294901760
  %4727 = vmatpush.msra.mxu0 %v4726
  %v4728 = vand.u32 %v1923, 4294901760
  %4729 = vmatpush.msra.mxu0 %v4728
  %v4730 = vand.u32 %v1919, 4294901760
  %4731 = vmatpush.msra.mxu0 %v4730
  %v4732 = vand.u32 %v1915, 4294901760
  %4733 = vmatpush.msra.mxu0 %v4732
  %v4734 = vand.u32 %v1911, 4294901760
  %4735 = vmatpush.msra.mxu0 %v4734
  %v4736 = vand.u32 %v4403, 4294901760
  %v4737 = vsub.f32 %v4403, %v4736
  %v4738 = vand.u32 %v4737, 4294901760
  %v4739 = vsub.f32 %v4737, %v4738
  %v4740 = vand.u32 %v4739, 4294901760
  %4741 = vmatmul.f32.gmra.mxu0 %v4740
  %v4742 = vpop.f32.mrf.mxu0
  %v4743 = vadd.f32 0.0, %v4742
  %4744 = vdwg.mxu0
  %4745 = vmatpush.msra.mxu0 0.0
  %4746 = vmatpush.msra.mxu0 0.0
  %4747 = vmatpush.msra.mxu0 0.0
  %v4748 = vand.u32 %v1971, 4294901760
  %v4749 = vsub.f32 %v1971, %v4748
  %v4750 = vand.u32 %v4749, 4294901760
  %v4751 = vsub.f32 %v4749, %v4750
  %v4752 = vand.u32 %v4751, 4294901760
  %4753 = vmatpush.msra.mxu0 %v4752
  %v4754 = vand.u32 %v1955, 4294901760
  %v4755 = vsub.f32 %v1955, %v4754
  %v4756 = vand.u32 %v4755, 4294901760
  %v4757 = vsub.f32 %v4755, %v4756
  %v4758 = vand.u32 %v4757, 4294901760
  %4759 = vmatpush.msra.mxu0 %v4758
  %v4760 = vand.u32 %v1951, 4294901760
  %v4761 = vsub.f32 %v1951, %v4760
  %v4762 = vand.u32 %v4761, 4294901760
  %v4763 = vsub.f32 %v4761, %v4762
  %v4764 = vand.u32 %v4763, 4294901760
  %4765 = vmatpush.msra.mxu0 %v4764
  %v4766 = vand.u32 %v1947, 4294901760
  %v4767 = vsub.f32 %v1947, %v4766
  %v4768 = vand.u32 %v4767, 4294901760
  %v4769 = vsub.f32 %v4767, %v4768
  %v4770 = vand.u32 %v4769, 4294901760
  %4771 = vmatpush.msra.mxu0 %v4770
  %v4772 = vand.u32 %v1943, 4294901760
  %v4773 = vsub.f32 %v1943, %v4772
  %v4774 = vand.u32 %v4773, 4294901760
  %v4775 = vsub.f32 %v4773, %v4774
  %v4776 = vand.u32 %v4775, 4294901760
  %4777 = vmatpush.msra.mxu0 %v4776
  %v4778 = vand.u32 %v1939, 4294901760
  %v4779 = vsub.f32 %v1939, %v4778
  %v4780 = vand.u32 %v4779, 4294901760
  %v4781 = vsub.f32 %v4779, %v4780
  %v4782 = vand.u32 %v4781, 4294901760
  %4783 = vmatpush.msra.mxu0 %v4782
  %v4784 = vand.u32 %v1935, 4294901760
  %v4785 = vsub.f32 %v1935, %v4784
  %v4786 = vand.u32 %v4785, 4294901760
  %v4787 = vsub.f32 %v4785, %v4786
  %v4788 = vand.u32 %v4787, 4294901760
  %4789 = vmatpush.msra.mxu0 %v4788
  %v4790 = vand.u32 %v1931, 4294901760
  %v4791 = vsub.f32 %v1931, %v4790
  %v4792 = vand.u32 %v4791, 4294901760
  %v4793 = vsub.f32 %v4791, %v4792
  %v4794 = vand.u32 %v4793, 4294901760
  %4795 = vmatpush.msra.mxu0 %v4794
  %v4796 = vand.u32 %v1927, 4294901760
  %v4797 = vsub.f32 %v1927, %v4796
  %v4798 = vand.u32 %v4797, 4294901760
  %v4799 = vsub.f32 %v4797, %v4798
  %v4800 = vand.u32 %v4799, 4294901760
  %4801 = vmatpush.msra.mxu0 %v4800
  %v4802 = vand.u32 %v1923, 4294901760
  %v4803 = vsub.f32 %v1923, %v4802
  %v4804 = vand.u32 %v4803, 4294901760
  %v4805 = vsub.f32 %v4803, %v4804
  %v4806 = vand.u32 %v4805, 4294901760
  %4807 = vmatpush.msra.mxu0 %v4806
  %v4808 = vand.u32 %v1919, 4294901760
  %v4809 = vsub.f32 %v1919, %v4808
  %v4810 = vand.u32 %v4809, 4294901760
  %v4811 = vsub.f32 %v4809, %v4810
  %v4812 = vand.u32 %v4811, 4294901760
  %4813 = vmatpush.msra.mxu0 %v4812
  %v4814 = vand.u32 %v1915, 4294901760
  %v4815 = vsub.f32 %v1915, %v4814
  %v4816 = vand.u32 %v4815, 4294901760
  %v4817 = vsub.f32 %v4815, %v4816
  %v4818 = vand.u32 %v4817, 4294901760
  %4819 = vmatpush.msra.mxu0 %v4818
  %v4820 = vand.u32 %v1911, 4294901760
  %v4821 = vsub.f32 %v1911, %v4820
  %v4822 = vand.u32 %v4821, 4294901760
  %v4823 = vsub.f32 %v4821, %v4822
  %v4824 = vand.u32 %v4823, 4294901760
  %4825 = vmatpush.msra.mxu0 %v4824
  %v4826 = vand.u32 %v4403, 4294901760
  %4827 = vmatmul.f32.gmra.mxu0 %v4826
  %v4828 = vpop.f32.mrf.mxu0
  %v4829 = vadd.f32 %v4743, %v4828
  %4830 = vdwg.mxu0
  %4831 = vmatpush.msra.mxu0 0.0
  %4832 = vmatpush.msra.mxu0 0.0
  %4833 = vmatpush.msra.mxu0 0.0
  %v4834 = vand.u32 %v1971, 4294901760
  %v4835 = vsub.f32 %v1971, %v4834
  %4836 = vmatpush.msra.mxu0 %v4835
  %v4837 = vand.u32 %v1955, 4294901760
  %v4838 = vsub.f32 %v1955, %v4837
  %4839 = vmatpush.msra.mxu0 %v4838
  %v4840 = vand.u32 %v1951, 4294901760
  %v4841 = vsub.f32 %v1951, %v4840
  %4842 = vmatpush.msra.mxu0 %v4841
  %v4843 = vand.u32 %v1947, 4294901760
  %v4844 = vsub.f32 %v1947, %v4843
  %4845 = vmatpush.msra.mxu0 %v4844
  %v4846 = vand.u32 %v1943, 4294901760
  %v4847 = vsub.f32 %v1943, %v4846
  %4848 = vmatpush.msra.mxu0 %v4847
  %v4849 = vand.u32 %v1939, 4294901760
  %v4850 = vsub.f32 %v1939, %v4849
  %4851 = vmatpush.msra.mxu0 %v4850
  %v4852 = vand.u32 %v1935, 4294901760
  %v4853 = vsub.f32 %v1935, %v4852
  %4854 = vmatpush.msra.mxu0 %v4853
  %v4855 = vand.u32 %v1931, 4294901760
  %v4856 = vsub.f32 %v1931, %v4855
  %4857 = vmatpush.msra.mxu0 %v4856
  %v4858 = vand.u32 %v1927, 4294901760
  %v4859 = vsub.f32 %v1927, %v4858
  %4860 = vmatpush.msra.mxu0 %v4859
  %v4861 = vand.u32 %v1923, 4294901760
  %v4862 = vsub.f32 %v1923, %v4861
  %4863 = vmatpush.msra.mxu0 %v4862
  %v4864 = vand.u32 %v1919, 4294901760
  %v4865 = vsub.f32 %v1919, %v4864
  %4866 = vmatpush.msra.mxu0 %v4865
  %v4867 = vand.u32 %v1915, 4294901760
  %v4868 = vsub.f32 %v1915, %v4867
  %4869 = vmatpush.msra.mxu0 %v4868
  %v4870 = vand.u32 %v1911, 4294901760
  %v4871 = vsub.f32 %v1911, %v4870
  %4872 = vmatpush.msra.mxu0 %v4871
  %v4873 = vand.u32 %v4403, 4294901760
  %v4874 = vsub.f32 %v4403, %v4873
  %4875 = vmatmul.f32.gmra.mxu0 %v4874
  %v4876 = vpop.f32.mrf.mxu0
  %v4877 = vadd.f32 %v4829, %v4876
  %4878 = vdwg.mxu0
  %4879 = vmatpush.msra.mxu0 0.0
  %4880 = vmatpush.msra.mxu0 0.0
  %4881 = vmatpush.msra.mxu0 0.0
  %v4882 = vand.u32 %v1971, 4294901760
  %4883 = vmatpush.msra.mxu0 %v4882
  %v4884 = vand.u32 %v1955, 4294901760
  %4885 = vmatpush.msra.mxu0 %v4884
  %v4886 = vand.u32 %v1951, 4294901760
  %4887 = vmatpush.msra.mxu0 %v4886
  %v4888 = vand.u32 %v1947, 4294901760
  %4889 = vmatpush.msra.mxu0 %v4888
  %v4890 = vand.u32 %v1943, 4294901760
  %4891 = vmatpush.msra.mxu0 %v4890
  %v4892 = vand.u32 %v1939, 4294901760
  %4893 = vmatpush.msra.mxu0 %v4892
  %v4894 = vand.u32 %v1935, 4294901760
  %4895 = vmatpush.msra.mxu0 %v4894
  %v4896 = vand.u32 %v1931, 4294901760
  %4897 = vmatpush.msra.mxu0 %v4896
  %v4898 = vand.u32 %v1927, 4294901760
  %4899 = vmatpush.msra.mxu0 %v4898
  %v4900 = vand.u32 %v1923, 4294901760
  %4901 = vmatpush.msra.mxu0 %v4900
  %v4902 = vand.u32 %v1919, 4294901760
  %4903 = vmatpush.msra.mxu0 %v4902
  %v4904 = vand.u32 %v1915, 4294901760
  %4905 = vmatpush.msra.mxu0 %v4904
  %v4906 = vand.u32 %v1911, 4294901760
  %4907 = vmatpush.msra.mxu0 %v4906
  %v4908 = vand.u32 %v4403, 4294901760
  %v4909 = vsub.f32 %v4403, %v4908
  %v4910 = vand.u32 %v4909, 4294901760
  %4911 = vmatmul.f32.gmra.mxu0 %v4910
  %v4912 = vpop.f32.mrf.mxu0
  %v4913 = vadd.f32 %v4877, %v4912
  %4914 = vdwg.mxu0
  %4915 = vmatpush.msra.mxu0 0.0
  %4916 = vmatpush.msra.mxu0 0.0
  %4917 = vmatpush.msra.mxu0 0.0
  %v4918 = vand.u32 %v1971, 4294901760
  %v4919 = vsub.f32 %v1971, %v4918
  %v4920 = vand.u32 %v4919, 4294901760
  %4921 = vmatpush.msra.mxu0 %v4920
  %v4922 = vand.u32 %v1955, 4294901760
  %v4923 = vsub.f32 %v1955, %v4922
  %v4924 = vand.u32 %v4923, 4294901760
  %4925 = vmatpush.msra.mxu0 %v4924
  %v4926 = vand.u32 %v1951, 4294901760
  %v4927 = vsub.f32 %v1951, %v4926
  %v4928 = vand.u32 %v4927, 4294901760
  %4929 = vmatpush.msra.mxu0 %v4928
  %v4930 = vand.u32 %v1947, 4294901760
  %v4931 = vsub.f32 %v1947, %v4930
  %v4932 = vand.u32 %v4931, 4294901760
  %4933 = vmatpush.msra.mxu0 %v4932
  %v4934 = vand.u32 %v1943, 4294901760
  %v4935 = vsub.f32 %v1943, %v4934
  %v4936 = vand.u32 %v4935, 4294901760
  %4937 = vmatpush.msra.mxu0 %v4936
  %v4938 = vand.u32 %v1939, 4294901760
  %v4939 = vsub.f32 %v1939, %v4938
  %v4940 = vand.u32 %v4939, 4294901760
  %4941 = vmatpush.msra.mxu0 %v4940
  %v4942 = vand.u32 %v1935, 4294901760
  %v4943 = vsub.f32 %v1935, %v4942
  %v4944 = vand.u32 %v4943, 4294901760
  %4945 = vmatpush.msra.mxu0 %v4944
  %v4946 = vand.u32 %v1931, 4294901760
  %v4947 = vsub.f32 %v1931, %v4946
  %v4948 = vand.u32 %v4947, 4294901760
  %4949 = vmatpush.msra.mxu0 %v4948
  %v4950 = vand.u32 %v1927, 4294901760
  %v4951 = vsub.f32 %v1927, %v4950
  %v4952 = vand.u32 %v4951, 4294901760
  %4953 = vmatpush.msra.mxu0 %v4952
  %v4954 = vand.u32 %v1923, 4294901760
  %v4955 = vsub.f32 %v1923, %v4954
  %v4956 = vand.u32 %v4955, 4294901760
  %4957 = vmatpush.msra.mxu0 %v4956
  %v4958 = vand.u32 %v1919, 4294901760
  %v4959 = vsub.f32 %v1919, %v4958
  %v4960 = vand.u32 %v4959, 4294901760
  %4961 = vmatpush.msra.mxu0 %v4960
  %v4962 = vand.u32 %v1915, 4294901760
  %v4963 = vsub.f32 %v1915, %v4962
  %v4964 = vand.u32 %v4963, 4294901760
  %4965 = vmatpush.msra.mxu0 %v4964
  %v4966 = vand.u32 %v1911, 4294901760
  %v4967 = vsub.f32 %v1911, %v4966
  %v4968 = vand.u32 %v4967, 4294901760
  %4969 = vmatpush.msra.mxu0 %v4968
  %v4970 = vand.u32 %v4403, 4294901760
  %4971 = vmatmul.f32.gmra.mxu0 %v4970
  %v4972 = vpop.f32.mrf.mxu0
  %v4973 = vadd.f32 %v4913, %v4972
  %4974 = vdwg.mxu0
  %4975 = vmatpush.msra.mxu0 0.0
  %4976 = vmatpush.msra.mxu0 0.0
  %4977 = vmatpush.msra.mxu0 0.0
  %v4978 = vand.u32 %v1971, 4294901760
  %4979 = vmatpush.msra.mxu0 %v4978
  %v4980 = vand.u32 %v1955, 4294901760
  %4981 = vmatpush.msra.mxu0 %v4980
  %v4982 = vand.u32 %v1951, 4294901760
  %4983 = vmatpush.msra.mxu0 %v4982
  %v4984 = vand.u32 %v1947, 4294901760
  %4985 = vmatpush.msra.mxu0 %v4984
  %v4986 = vand.u32 %v1943, 4294901760
  %4987 = vmatpush.msra.mxu0 %v4986
  %v4988 = vand.u32 %v1939, 4294901760
  %4989 = vmatpush.msra.mxu0 %v4988
  %v4990 = vand.u32 %v1935, 4294901760
  %4991 = vmatpush.msra.mxu0 %v4990
  %v4992 = vand.u32 %v1931, 4294901760
  %4993 = vmatpush.msra.mxu0 %v4992
  %v4994 = vand.u32 %v1927, 4294901760
  %4995 = vmatpush.msra.mxu0 %v4994
  %v4996 = vand.u32 %v1923, 4294901760
  %4997 = vmatpush.msra.mxu0 %v4996
  %v4998 = vand.u32 %v1919, 4294901760
  %4999 = vmatpush.msra.mxu0 %v4998
  %v5000 = vand.u32 %v1915, 4294901760
  %5001 = vmatpush.msra.mxu0 %v5000
  %v5002 = vand.u32 %v1911, 4294901760
  %5003 = vmatpush.msra.mxu0 %v5002
  %v5004 = vand.u32 %v4403, 4294901760
  %5005 = vmatmul.f32.gmra.mxu0 %v5004
  %v5006 = vpop.f32.mrf.mxu0
  %v5007 = vadd.f32 %v4973, %v5006
  %5008 = vdwg.mxu0
  %5009 = vmatpush.msra.mxu0 0.0
  %5010 = vmatpush.msra.mxu0 0.0
  %5011 = vmatpush.msra.mxu0 0.0
  %v5012 = vand.u32 %v1974, 4294901760
  %5013 = vmatpush.msra.mxu0 %v5012
  %v5014 = vand.u32 %v1956, 4294901760
  %5015 = vmatpush.msra.mxu0 %v5014
  %v5016 = vand.u32 %v1952, 4294901760
  %5017 = vmatpush.msra.mxu0 %v5016
  %v5018 = vand.u32 %v1948, 4294901760
  %5019 = vmatpush.msra.mxu0 %v5018
  %v5020 = vand.u32 %v1944, 4294901760
  %5021 = vmatpush.msra.mxu0 %v5020
  %v5022 = vand.u32 %v1940, 4294901760
  %5023 = vmatpush.msra.mxu0 %v5022
  %v5024 = vand.u32 %v1936, 4294901760
  %5025 = vmatpush.msra.mxu0 %v5024
  %v5026 = vand.u32 %v1932, 4294901760
  %5027 = vmatpush.msra.mxu0 %v5026
  %v5028 = vand.u32 %v1928, 4294901760
  %5029 = vmatpush.msra.mxu0 %v5028
  %v5030 = vand.u32 %v1924, 4294901760
  %5031 = vmatpush.msra.mxu0 %v5030
  %v5032 = vand.u32 %v1920, 4294901760
  %5033 = vmatpush.msra.mxu0 %v5032
  %v5034 = vand.u32 %v1916, 4294901760
  %5035 = vmatpush.msra.mxu0 %v5034
  %v5036 = vand.u32 %v1912, 4294901760
  %5037 = vmatpush.msra.mxu0 %v5036
  %v5038 = vand.u32 %v4403, 4294901760
  %v5039 = vsub.f32 %v4403, %v5038
  %v5040 = vand.u32 %v5039, 4294901760
  %v5041 = vsub.f32 %v5039, %v5040
  %v5042 = vand.u32 %v5041, 4294901760
  %5043 = vmatmul.f32.gmra.mxu0 %v5042
  %v5044 = vpop.f32.mrf.mxu0
  %v5045 = vadd.f32 0.0, %v5044
  %5046 = vdwg.mxu0
  %5047 = vmatpush.msra.mxu0 0.0
  %5048 = vmatpush.msra.mxu0 0.0
  %5049 = vmatpush.msra.mxu0 0.0
  %v5050 = vand.u32 %v1974, 4294901760
  %v5051 = vsub.f32 %v1974, %v5050
  %v5052 = vand.u32 %v5051, 4294901760
  %v5053 = vsub.f32 %v5051, %v5052
  %v5054 = vand.u32 %v5053, 4294901760
  %5055 = vmatpush.msra.mxu0 %v5054
  %v5056 = vand.u32 %v1956, 4294901760
  %v5057 = vsub.f32 %v1956, %v5056
  %v5058 = vand.u32 %v5057, 4294901760
  %v5059 = vsub.f32 %v5057, %v5058
  %v5060 = vand.u32 %v5059, 4294901760
  %5061 = vmatpush.msra.mxu0 %v5060
  %v5062 = vand.u32 %v1952, 4294901760
  %v5063 = vsub.f32 %v1952, %v5062
  %v5064 = vand.u32 %v5063, 4294901760
  %v5065 = vsub.f32 %v5063, %v5064
  %v5066 = vand.u32 %v5065, 4294901760
  %5067 = vmatpush.msra.mxu0 %v5066
  %v5068 = vand.u32 %v1948, 4294901760
  %v5069 = vsub.f32 %v1948, %v5068
  %v5070 = vand.u32 %v5069, 4294901760
  %v5071 = vsub.f32 %v5069, %v5070
  %v5072 = vand.u32 %v5071, 4294901760
  %5073 = vmatpush.msra.mxu0 %v5072
  %v5074 = vand.u32 %v1944, 4294901760
  %v5075 = vsub.f32 %v1944, %v5074
  %v5076 = vand.u32 %v5075, 4294901760
  %v5077 = vsub.f32 %v5075, %v5076
  %v5078 = vand.u32 %v5077, 4294901760
  %5079 = vmatpush.msra.mxu0 %v5078
  %v5080 = vand.u32 %v1940, 4294901760
  %v5081 = vsub.f32 %v1940, %v5080
  %v5082 = vand.u32 %v5081, 4294901760
  %v5083 = vsub.f32 %v5081, %v5082
  %v5084 = vand.u32 %v5083, 4294901760
  %5085 = vmatpush.msra.mxu0 %v5084
  %v5086 = vand.u32 %v1936, 4294901760
  %v5087 = vsub.f32 %v1936, %v5086
  %v5088 = vand.u32 %v5087, 4294901760
  %v5089 = vsub.f32 %v5087, %v5088
  %v5090 = vand.u32 %v5089, 4294901760
  %5091 = vmatpush.msra.mxu0 %v5090
  %v5092 = vand.u32 %v1932, 4294901760
  %v5093 = vsub.f32 %v1932, %v5092
  %v5094 = vand.u32 %v5093, 4294901760
  %v5095 = vsub.f32 %v5093, %v5094
  %v5096 = vand.u32 %v5095, 4294901760
  %5097 = vmatpush.msra.mxu0 %v5096
  %v5098 = vand.u32 %v1928, 4294901760
  %v5099 = vsub.f32 %v1928, %v5098
  %v5100 = vand.u32 %v5099, 4294901760
  %v5101 = vsub.f32 %v5099, %v5100
  %v5102 = vand.u32 %v5101, 4294901760
  %5103 = vmatpush.msra.mxu0 %v5102
  %v5104 = vand.u32 %v1924, 4294901760
  %v5105 = vsub.f32 %v1924, %v5104
  %v5106 = vand.u32 %v5105, 4294901760
  %v5107 = vsub.f32 %v5105, %v5106
  %v5108 = vand.u32 %v5107, 4294901760
  %5109 = vmatpush.msra.mxu0 %v5108
  %v5110 = vand.u32 %v1920, 4294901760
  %v5111 = vsub.f32 %v1920, %v5110
  %v5112 = vand.u32 %v5111, 4294901760
  %v5113 = vsub.f32 %v5111, %v5112
  %v5114 = vand.u32 %v5113, 4294901760
  %5115 = vmatpush.msra.mxu0 %v5114
  %v5116 = vand.u32 %v1916, 4294901760
  %v5117 = vsub.f32 %v1916, %v5116
  %v5118 = vand.u32 %v5117, 4294901760
  %v5119 = vsub.f32 %v5117, %v5118
  %v5120 = vand.u32 %v5119, 4294901760
  %5121 = vmatpush.msra.mxu0 %v5120
  %v5122 = vand.u32 %v1912, 4294901760
  %v5123 = vsub.f32 %v1912, %v5122
  %v5124 = vand.u32 %v5123, 4294901760
  %v5125 = vsub.f32 %v5123, %v5124
  %v5126 = vand.u32 %v5125, 4294901760
  %5127 = vmatpush.msra.mxu0 %v5126
  %v5128 = vand.u32 %v4403, 4294901760
  %5129 = vmatmul.f32.gmra.mxu0 %v5128
  %v5130 = vpop.f32.mrf.mxu0
  %v5131 = vadd.f32 %v5045, %v5130
  %5132 = vdwg.mxu0
  %5133 = vmatpush.msra.mxu0 0.0
  %5134 = vmatpush.msra.mxu0 0.0
  %5135 = vmatpush.msra.mxu0 0.0
  %v5136 = vand.u32 %v1974, 4294901760
  %v5137 = vsub.f32 %v1974, %v5136
  %5138 = vmatpush.msra.mxu0 %v5137
  %v5139 = vand.u32 %v1956, 4294901760
  %v5140 = vsub.f32 %v1956, %v5139
  %5141 = vmatpush.msra.mxu0 %v5140
  %v5142 = vand.u32 %v1952, 4294901760
  %v5143 = vsub.f32 %v1952, %v5142
  %5144 = vmatpush.msra.mxu0 %v5143
  %v5145 = vand.u32 %v1948, 4294901760
  %v5146 = vsub.f32 %v1948, %v5145
  %5147 = vmatpush.msra.mxu0 %v5146
  %v5148 = vand.u32 %v1944, 4294901760
  %v5149 = vsub.f32 %v1944, %v5148
  %5150 = vmatpush.msra.mxu0 %v5149
  %v5151 = vand.u32 %v1940, 4294901760
  %v5152 = vsub.f32 %v1940, %v5151
  %5153 = vmatpush.msra.mxu0 %v5152
  %v5154 = vand.u32 %v1936, 4294901760
  %v5155 = vsub.f32 %v1936, %v5154
  %5156 = vmatpush.msra.mxu0 %v5155
  %v5157 = vand.u32 %v1932, 4294901760
  %v5158 = vsub.f32 %v1932, %v5157
  %5159 = vmatpush.msra.mxu0 %v5158
  %v5160 = vand.u32 %v1928, 4294901760
  %v5161 = vsub.f32 %v1928, %v5160
  %5162 = vmatpush.msra.mxu0 %v5161
  %v5163 = vand.u32 %v1924, 4294901760
  %v5164 = vsub.f32 %v1924, %v5163
  %5165 = vmatpush.msra.mxu0 %v5164
  %v5166 = vand.u32 %v1920, 4294901760
  %v5167 = vsub.f32 %v1920, %v5166
  %5168 = vmatpush.msra.mxu0 %v5167
  %v5169 = vand.u32 %v1916, 4294901760
  %v5170 = vsub.f32 %v1916, %v5169
  %5171 = vmatpush.msra.mxu0 %v5170
  %v5172 = vand.u32 %v1912, 4294901760
  %v5173 = vsub.f32 %v1912, %v5172
  %5174 = vmatpush.msra.mxu0 %v5173
  %v5175 = vand.u32 %v4403, 4294901760
  %v5176 = vsub.f32 %v4403, %v5175
  %5177 = vmatmul.f32.gmra.mxu0 %v5176
  %v5178 = vpop.f32.mrf.mxu0
  %v5179 = vadd.f32 %v5131, %v5178
  %5180 = vdwg.mxu0
  %5181 = vmatpush.msra.mxu0 0.0
  %5182 = vmatpush.msra.mxu0 0.0
  %5183 = vmatpush.msra.mxu0 0.0
  %v5184 = vand.u32 %v1974, 4294901760
  %5185 = vmatpush.msra.mxu0 %v5184
  %v5186 = vand.u32 %v1956, 4294901760
  %5187 = vmatpush.msra.mxu0 %v5186
  %v5188 = vand.u32 %v1952, 4294901760
  %5189 = vmatpush.msra.mxu0 %v5188
  %v5190 = vand.u32 %v1948, 4294901760
  %5191 = vmatpush.msra.mxu0 %v5190
  %v5192 = vand.u32 %v1944, 4294901760
  %5193 = vmatpush.msra.mxu0 %v5192
  %v5194 = vand.u32 %v1940, 4294901760
  %5195 = vmatpush.msra.mxu0 %v5194
  %v5196 = vand.u32 %v1936, 4294901760
  %5197 = vmatpush.msra.mxu0 %v5196
  %v5198 = vand.u32 %v1932, 4294901760
  %5199 = vmatpush.msra.mxu0 %v5198
  %v5200 = vand.u32 %v1928, 4294901760
  %5201 = vmatpush.msra.mxu0 %v5200
  %v5202 = vand.u32 %v1924, 4294901760
  %5203 = vmatpush.msra.mxu0 %v5202
  %v5204 = vand.u32 %v1920, 4294901760
  %5205 = vmatpush.msra.mxu0 %v5204
  %v5206 = vand.u32 %v1916, 4294901760
  %5207 = vmatpush.msra.mxu0 %v5206
  %v5208 = vand.u32 %v1912, 4294901760
  %5209 = vmatpush.msra.mxu0 %v5208
  %v5210 = vand.u32 %v4403, 4294901760
  %v5211 = vsub.f32 %v4403, %v5210
  %v5212 = vand.u32 %v5211, 4294901760
  %5213 = vmatmul.f32.gmra.mxu0 %v5212
  %v5214 = vpop.f32.mrf.mxu0
  %v5215 = vadd.f32 %v5179, %v5214
  %5216 = vdwg.mxu0
  %5217 = vmatpush.msra.mxu0 0.0
  %5218 = vmatpush.msra.mxu0 0.0
  %5219 = vmatpush.msra.mxu0 0.0
  %v5220 = vand.u32 %v1974, 4294901760
  %v5221 = vsub.f32 %v1974, %v5220
  %v5222 = vand.u32 %v5221, 4294901760
  %5223 = vmatpush.msra.mxu0 %v5222
  %v5224 = vand.u32 %v1956, 4294901760
  %v5225 = vsub.f32 %v1956, %v5224
  %v5226 = vand.u32 %v5225, 4294901760
  %5227 = vmatpush.msra.mxu0 %v5226
  %v5228 = vand.u32 %v1952, 4294901760
  %v5229 = vsub.f32 %v1952, %v5228
  %v5230 = vand.u32 %v5229, 4294901760
  %5231 = vmatpush.msra.mxu0 %v5230
  %v5232 = vand.u32 %v1948, 4294901760
  %v5233 = vsub.f32 %v1948, %v5232
  %v5234 = vand.u32 %v5233, 4294901760
  %5235 = vmatpush.msra.mxu0 %v5234
  %v5236 = vand.u32 %v1944, 4294901760
  %v5237 = vsub.f32 %v1944, %v5236
  %v5238 = vand.u32 %v5237, 4294901760
  %5239 = vmatpush.msra.mxu0 %v5238
  %v5240 = vand.u32 %v1940, 4294901760
  %v5241 = vsub.f32 %v1940, %v5240
  %v5242 = vand.u32 %v5241, 4294901760
  %5243 = vmatpush.msra.mxu0 %v5242
  %v5244 = vand.u32 %v1936, 4294901760
  %v5245 = vsub.f32 %v1936, %v5244
  %v5246 = vand.u32 %v5245, 4294901760
  %5247 = vmatpush.msra.mxu0 %v5246
  %v5248 = vand.u32 %v1932, 4294901760
  %v5249 = vsub.f32 %v1932, %v5248
  %v5250 = vand.u32 %v5249, 4294901760
  %5251 = vmatpush.msra.mxu0 %v5250
  %v5252 = vand.u32 %v1928, 4294901760
  %v5253 = vsub.f32 %v1928, %v5252
  %v5254 = vand.u32 %v5253, 4294901760
  %5255 = vmatpush.msra.mxu0 %v5254
  %v5256 = vand.u32 %v1924, 4294901760
  %v5257 = vsub.f32 %v1924, %v5256
  %v5258 = vand.u32 %v5257, 4294901760
  %5259 = vmatpush.msra.mxu0 %v5258
  %v5260 = vand.u32 %v1920, 4294901760
  %v5261 = vsub.f32 %v1920, %v5260
  %v5262 = vand.u32 %v5261, 4294901760
  %5263 = vmatpush.msra.mxu0 %v5262
  %v5264 = vand.u32 %v1916, 4294901760
  %v5265 = vsub.f32 %v1916, %v5264
  %v5266 = vand.u32 %v5265, 4294901760
  %5267 = vmatpush.msra.mxu0 %v5266
  %v5268 = vand.u32 %v1912, 4294901760
  %v5269 = vsub.f32 %v1912, %v5268
  %v5270 = vand.u32 %v5269, 4294901760
  %5271 = vmatpush.msra.mxu0 %v5270
  %v5272 = vand.u32 %v4403, 4294901760
  %5273 = vmatmul.f32.gmra.mxu0 %v5272
  %v5274 = vpop.f32.mrf.mxu0
  %v5275 = vadd.f32 %v5215, %v5274
  %5276 = vdwg.mxu0
  %5277 = vmatpush.msra.mxu0 0.0
  %5278 = vmatpush.msra.mxu0 0.0
  %5279 = vmatpush.msra.mxu0 0.0
  %v5280 = vand.u32 %v1974, 4294901760
  %5281 = vmatpush.msra.mxu0 %v5280
  %v5282 = vand.u32 %v1956, 4294901760
  %5283 = vmatpush.msra.mxu0 %v5282
  %v5284 = vand.u32 %v1952, 4294901760
  %5285 = vmatpush.msra.mxu0 %v5284
  %v5286 = vand.u32 %v1948, 4294901760
  %5287 = vmatpush.msra.mxu0 %v5286
  %v5288 = vand.u32 %v1944, 4294901760
  %5289 = vmatpush.msra.mxu0 %v5288
  %v5290 = vand.u32 %v1940, 4294901760
  %5291 = vmatpush.msra.mxu0 %v5290
  %v5292 = vand.u32 %v1936, 4294901760
  %5293 = vmatpush.msra.mxu0 %v5292
  %v5294 = vand.u32 %v1932, 4294901760
  %5295 = vmatpush.msra.mxu0 %v5294
  %v5296 = vand.u32 %v1928, 4294901760
  %5297 = vmatpush.msra.mxu0 %v5296
  %v5298 = vand.u32 %v1924, 4294901760
  %5299 = vmatpush.msra.mxu0 %v5298
  %v5300 = vand.u32 %v1920, 4294901760
  %5301 = vmatpush.msra.mxu0 %v5300
  %v5302 = vand.u32 %v1916, 4294901760
  %5303 = vmatpush.msra.mxu0 %v5302
  %v5304 = vand.u32 %v1912, 4294901760
  %5305 = vmatpush.msra.mxu0 %v5304
  %v5306 = vand.u32 %v4403, 4294901760
  %5307 = vmatmul.f32.gmra.mxu0 %v5306
  %v5308 = vpop.f32.mrf.mxu0
  %v5309 = vadd.f32 %v5275, %v5308
  %5310 = vdwg.mxu0
  %5311 = vmatpush.msra.mxu0 0.0
  %5312 = vmatpush.msra.mxu0 0.0
  %5313 = vmatpush.msra.mxu0 0.0
  %v5314 = vand.u32 %v1977, 4294901760
  %5315 = vmatpush.msra.mxu0 %v5314
  %v5316 = vand.u32 %v1957, 4294901760
  %5317 = vmatpush.msra.mxu0 %v5316
  %v5318 = vand.u32 %v1953, 4294901760
  %5319 = vmatpush.msra.mxu0 %v5318
  %v5320 = vand.u32 %v1949, 4294901760
  %5321 = vmatpush.msra.mxu0 %v5320
  %v5322 = vand.u32 %v1945, 4294901760
  %5323 = vmatpush.msra.mxu0 %v5322
  %v5324 = vand.u32 %v1941, 4294901760
  %5325 = vmatpush.msra.mxu0 %v5324
  %v5326 = vand.u32 %v1937, 4294901760
  %5327 = vmatpush.msra.mxu0 %v5326
  %v5328 = vand.u32 %v1933, 4294901760
  %5329 = vmatpush.msra.mxu0 %v5328
  %v5330 = vand.u32 %v1929, 4294901760
  %5331 = vmatpush.msra.mxu0 %v5330
  %v5332 = vand.u32 %v1925, 4294901760
  %5333 = vmatpush.msra.mxu0 %v5332
  %v5334 = vand.u32 %v1921, 4294901760
  %5335 = vmatpush.msra.mxu0 %v5334
  %v5336 = vand.u32 %v1917, 4294901760
  %5337 = vmatpush.msra.mxu0 %v5336
  %v5338 = vand.u32 %v1913, 4294901760
  %5339 = vmatpush.msra.mxu0 %v5338
  %v5340 = vand.u32 %v4403, 4294901760
  %v5341 = vsub.f32 %v4403, %v5340
  %v5342 = vand.u32 %v5341, 4294901760
  %v5343 = vsub.f32 %v5341, %v5342
  %v5344 = vand.u32 %v5343, 4294901760
  %5345 = vmatmul.f32.gmra.mxu0 %v5344
  %v5346 = vpop.f32.mrf.mxu0
  %v5347 = vadd.f32 0.0, %v5346
  %5348 = vdwg.mxu0
  %5349 = vmatpush.msra.mxu0 0.0
  %5350 = vmatpush.msra.mxu0 0.0
  %5351 = vmatpush.msra.mxu0 0.0
  %v5352 = vand.u32 %v1977, 4294901760
  %v5353 = vsub.f32 %v1977, %v5352
  %v5354 = vand.u32 %v5353, 4294901760
  %v5355 = vsub.f32 %v5353, %v5354
  %v5356 = vand.u32 %v5355, 4294901760
  %5357 = vmatpush.msra.mxu0 %v5356
  %v5358 = vand.u32 %v1957, 4294901760
  %v5359 = vsub.f32 %v1957, %v5358
  %v5360 = vand.u32 %v5359, 4294901760
  %v5361 = vsub.f32 %v5359, %v5360
  %v5362 = vand.u32 %v5361, 4294901760
  %5363 = vmatpush.msra.mxu0 %v5362
  %v5364 = vand.u32 %v1953, 4294901760
  %v5365 = vsub.f32 %v1953, %v5364
  %v5366 = vand.u32 %v5365, 4294901760
  %v5367 = vsub.f32 %v5365, %v5366
  %v5368 = vand.u32 %v5367, 4294901760
  %5369 = vmatpush.msra.mxu0 %v5368
  %v5370 = vand.u32 %v1949, 4294901760
  %v5371 = vsub.f32 %v1949, %v5370
  %v5372 = vand.u32 %v5371, 4294901760
  %v5373 = vsub.f32 %v5371, %v5372
  %v5374 = vand.u32 %v5373, 4294901760
  %5375 = vmatpush.msra.mxu0 %v5374
  %v5376 = vand.u32 %v1945, 4294901760
  %v5377 = vsub.f32 %v1945, %v5376
  %v5378 = vand.u32 %v5377, 4294901760
  %v5379 = vsub.f32 %v5377, %v5378
  %v5380 = vand.u32 %v5379, 4294901760
  %5381 = vmatpush.msra.mxu0 %v5380
  %v5382 = vand.u32 %v1941, 4294901760
  %v5383 = vsub.f32 %v1941, %v5382
  %v5384 = vand.u32 %v5383, 4294901760
  %v5385 = vsub.f32 %v5383, %v5384
  %v5386 = vand.u32 %v5385, 4294901760
  %5387 = vmatpush.msra.mxu0 %v5386
  %v5388 = vand.u32 %v1937, 4294901760
  %v5389 = vsub.f32 %v1937, %v5388
  %v5390 = vand.u32 %v5389, 4294901760
  %v5391 = vsub.f32 %v5389, %v5390
  %v5392 = vand.u32 %v5391, 4294901760
  %5393 = vmatpush.msra.mxu0 %v5392
  %v5394 = vand.u32 %v1933, 4294901760
  %v5395 = vsub.f32 %v1933, %v5394
  %v5396 = vand.u32 %v5395, 4294901760
  %v5397 = vsub.f32 %v5395, %v5396
  %v5398 = vand.u32 %v5397, 4294901760
  %5399 = vmatpush.msra.mxu0 %v5398
  %v5400 = vand.u32 %v1929, 4294901760
  %v5401 = vsub.f32 %v1929, %v5400
  %v5402 = vand.u32 %v5401, 4294901760
  %v5403 = vsub.f32 %v5401, %v5402
  %v5404 = vand.u32 %v5403, 4294901760
  %5405 = vmatpush.msra.mxu0 %v5404
  %v5406 = vand.u32 %v1925, 4294901760
  %v5407 = vsub.f32 %v1925, %v5406
  %v5408 = vand.u32 %v5407, 4294901760
  %v5409 = vsub.f32 %v5407, %v5408
  %v5410 = vand.u32 %v5409, 4294901760
  %5411 = vmatpush.msra.mxu0 %v5410
  %v5412 = vand.u32 %v1921, 4294901760
  %v5413 = vsub.f32 %v1921, %v5412
  %v5414 = vand.u32 %v5413, 4294901760
  %v5415 = vsub.f32 %v5413, %v5414
  %v5416 = vand.u32 %v5415, 4294901760
  %5417 = vmatpush.msra.mxu0 %v5416
  %v5418 = vand.u32 %v1917, 4294901760
  %v5419 = vsub.f32 %v1917, %v5418
  %v5420 = vand.u32 %v5419, 4294901760
  %v5421 = vsub.f32 %v5419, %v5420
  %v5422 = vand.u32 %v5421, 4294901760
  %5423 = vmatpush.msra.mxu0 %v5422
  %v5424 = vand.u32 %v1913, 4294901760
  %v5425 = vsub.f32 %v1913, %v5424
  %v5426 = vand.u32 %v5425, 4294901760
  %v5427 = vsub.f32 %v5425, %v5426
  %v5428 = vand.u32 %v5427, 4294901760
  %5429 = vmatpush.msra.mxu0 %v5428
  %v5430 = vand.u32 %v4403, 4294901760
  %5431 = vmatmul.f32.gmra.mxu0 %v5430
  %v5432 = vpop.f32.mrf.mxu0
  %v5433 = vadd.f32 %v5347, %v5432
  %5434 = vdwg.mxu0
  %5435 = vmatpush.msra.mxu0 0.0
  %5436 = vmatpush.msra.mxu0 0.0
  %5437 = vmatpush.msra.mxu0 0.0
  %v5438 = vand.u32 %v1977, 4294901760
  %v5439 = vsub.f32 %v1977, %v5438
  %5440 = vmatpush.msra.mxu0 %v5439
  %v5441 = vand.u32 %v1957, 4294901760
  %v5442 = vsub.f32 %v1957, %v5441
  %5443 = vmatpush.msra.mxu0 %v5442
  %v5444 = vand.u32 %v1953, 4294901760
  %v5445 = vsub.f32 %v1953, %v5444
  %5446 = vmatpush.msra.mxu0 %v5445
  %v5447 = vand.u32 %v1949, 4294901760
  %v5448 = vsub.f32 %v1949, %v5447
  %5449 = vmatpush.msra.mxu0 %v5448
  %v5450 = vand.u32 %v1945, 4294901760
  %v5451 = vsub.f32 %v1945, %v5450
  %5452 = vmatpush.msra.mxu0 %v5451
  %v5453 = vand.u32 %v1941, 4294901760
  %v5454 = vsub.f32 %v1941, %v5453
  %5455 = vmatpush.msra.mxu0 %v5454
  %v5456 = vand.u32 %v1937, 4294901760
  %v5457 = vsub.f32 %v1937, %v5456
  %5458 = vmatpush.msra.mxu0 %v5457
  %v5459 = vand.u32 %v1933, 4294901760
  %v5460 = vsub.f32 %v1933, %v5459
  %5461 = vmatpush.msra.mxu0 %v5460
  %v5462 = vand.u32 %v1929, 4294901760
  %v5463 = vsub.f32 %v1929, %v5462
  %5464 = vmatpush.msra.mxu0 %v5463
  %v5465 = vand.u32 %v1925, 4294901760
  %v5466 = vsub.f32 %v1925, %v5465
  %5467 = vmatpush.msra.mxu0 %v5466
  %v5468 = vand.u32 %v1921, 4294901760
  %v5469 = vsub.f32 %v1921, %v5468
  %5470 = vmatpush.msra.mxu0 %v5469
  %v5471 = vand.u32 %v1917, 4294901760
  %v5472 = vsub.f32 %v1917, %v5471
  %5473 = vmatpush.msra.mxu0 %v5472
  %v5474 = vand.u32 %v1913, 4294901760
  %v5475 = vsub.f32 %v1913, %v5474
  %5476 = vmatpush.msra.mxu0 %v5475
  %v5477 = vand.u32 %v4403, 4294901760
  %v5478 = vsub.f32 %v4403, %v5477
  %5479 = vmatmul.f32.gmra.mxu0 %v5478
  %v5480 = vpop.f32.mrf.mxu0
  %v5481 = vadd.f32 %v5433, %v5480
  %5482 = vdwg.mxu0
  %5483 = vmatpush.msra.mxu0 0.0
  %5484 = vmatpush.msra.mxu0 0.0
  %5485 = vmatpush.msra.mxu0 0.0
  %v5486 = vand.u32 %v1977, 4294901760
  %5487 = vmatpush.msra.mxu0 %v5486
  %v5488 = vand.u32 %v1957, 4294901760
  %5489 = vmatpush.msra.mxu0 %v5488
  %v5490 = vand.u32 %v1953, 4294901760
  %5491 = vmatpush.msra.mxu0 %v5490
  %v5492 = vand.u32 %v1949, 4294901760
  %5493 = vmatpush.msra.mxu0 %v5492
  %v5494 = vand.u32 %v1945, 4294901760
  %5495 = vmatpush.msra.mxu0 %v5494
  %v5496 = vand.u32 %v1941, 4294901760
  %5497 = vmatpush.msra.mxu0 %v5496
  %v5498 = vand.u32 %v1937, 4294901760
  %5499 = vmatpush.msra.mxu0 %v5498
  %v5500 = vand.u32 %v1933, 4294901760
  %5501 = vmatpush.msra.mxu0 %v5500
  %v5502 = vand.u32 %v1929, 4294901760
  %5503 = vmatpush.msra.mxu0 %v5502
  %v5504 = vand.u32 %v1925, 4294901760
  %5505 = vmatpush.msra.mxu0 %v5504
  %v5506 = vand.u32 %v1921, 4294901760
  %5507 = vmatpush.msra.mxu0 %v5506
  %v5508 = vand.u32 %v1917, 4294901760
  %5509 = vmatpush.msra.mxu0 %v5508
  %v5510 = vand.u32 %v1913, 4294901760
  %5511 = vmatpush.msra.mxu0 %v5510
  %v5512 = vand.u32 %v4403, 4294901760
  %v5513 = vsub.f32 %v4403, %v5512
  %v5514 = vand.u32 %v5513, 4294901760
  %5515 = vmatmul.f32.gmra.mxu0 %v5514
  %v5516 = vpop.f32.mrf.mxu0
  %v5517 = vadd.f32 %v5481, %v5516
  %5518 = vdwg.mxu0
  %5519 = vmatpush.msra.mxu0 0.0
  %5520 = vmatpush.msra.mxu0 0.0
  %5521 = vmatpush.msra.mxu0 0.0
  %v5522 = vand.u32 %v1977, 4294901760
  %v5523 = vsub.f32 %v1977, %v5522
  %v5524 = vand.u32 %v5523, 4294901760
  %5525 = vmatpush.msra.mxu0 %v5524
  %v5526 = vand.u32 %v1957, 4294901760
  %v5527 = vsub.f32 %v1957, %v5526
  %v5528 = vand.u32 %v5527, 4294901760
  %5529 = vmatpush.msra.mxu0 %v5528
  %v5530 = vand.u32 %v1953, 4294901760
  %v5531 = vsub.f32 %v1953, %v5530
  %v5532 = vand.u32 %v5531, 4294901760
  %5533 = vmatpush.msra.mxu0 %v5532
  %v5534 = vand.u32 %v1949, 4294901760
  %v5535 = vsub.f32 %v1949, %v5534
  %v5536 = vand.u32 %v5535, 4294901760
  %5537 = vmatpush.msra.mxu0 %v5536
  %v5538 = vand.u32 %v1945, 4294901760
  %v5539 = vsub.f32 %v1945, %v5538
  %v5540 = vand.u32 %v5539, 4294901760
  %5541 = vmatpush.msra.mxu0 %v5540
  %v5542 = vand.u32 %v1941, 4294901760
  %v5543 = vsub.f32 %v1941, %v5542
  %v5544 = vand.u32 %v5543, 4294901760
  %5545 = vmatpush.msra.mxu0 %v5544
  %v5546 = vand.u32 %v1937, 4294901760
  %v5547 = vsub.f32 %v1937, %v5546
  %v5548 = vand.u32 %v5547, 4294901760
  %5549 = vmatpush.msra.mxu0 %v5548
  %v5550 = vand.u32 %v1933, 4294901760
  %v5551 = vsub.f32 %v1933, %v5550
  %v5552 = vand.u32 %v5551, 4294901760
  %5553 = vmatpush.msra.mxu0 %v5552
  %v5554 = vand.u32 %v1929, 4294901760
  %v5555 = vsub.f32 %v1929, %v5554
  %v5556 = vand.u32 %v5555, 4294901760
  %5557 = vmatpush.msra.mxu0 %v5556
  %v5558 = vand.u32 %v1925, 4294901760
  %v5559 = vsub.f32 %v1925, %v5558
  %v5560 = vand.u32 %v5559, 4294901760
  %5561 = vmatpush.msra.mxu0 %v5560
  %v5562 = vand.u32 %v1921, 4294901760
  %v5563 = vsub.f32 %v1921, %v5562
  %v5564 = vand.u32 %v5563, 4294901760
  %5565 = vmatpush.msra.mxu0 %v5564
  %v5566 = vand.u32 %v1917, 4294901760
  %v5567 = vsub.f32 %v1917, %v5566
  %v5568 = vand.u32 %v5567, 4294901760
  %5569 = vmatpush.msra.mxu0 %v5568
  %v5570 = vand.u32 %v1913, 4294901760
  %v5571 = vsub.f32 %v1913, %v5570
  %v5572 = vand.u32 %v5571, 4294901760
  %5573 = vmatpush.msra.mxu0 %v5572
  %v5574 = vand.u32 %v4403, 4294901760
  %5575 = vmatmul.f32.gmra.mxu0 %v5574
  %v5576 = vpop.f32.mrf.mxu0
  %v5577 = vadd.f32 %v5517, %v5576
  %5578 = vdwg.mxu0
  %5579 = vmatpush.msra.mxu0 0.0
  %5580 = vmatpush.msra.mxu0 0.0
  %5581 = vmatpush.msra.mxu0 0.0
  %v5582 = vand.u32 %v1977, 4294901760
  %5583 = vmatpush.msra.mxu0 %v5582
  %v5584 = vand.u32 %v1957, 4294901760
  %5585 = vmatpush.msra.mxu0 %v5584
  %v5586 = vand.u32 %v1953, 4294901760
  %5587 = vmatpush.msra.mxu0 %v5586
  %v5588 = vand.u32 %v1949, 4294901760
  %5589 = vmatpush.msra.mxu0 %v5588
  %v5590 = vand.u32 %v1945, 4294901760
  %5591 = vmatpush.msra.mxu0 %v5590
  %v5592 = vand.u32 %v1941, 4294901760
  %5593 = vmatpush.msra.mxu0 %v5592
  %v5594 = vand.u32 %v1937, 4294901760
  %5595 = vmatpush.msra.mxu0 %v5594
  %v5596 = vand.u32 %v1933, 4294901760
  %5597 = vmatpush.msra.mxu0 %v5596
  %v5598 = vand.u32 %v1929, 4294901760
  %5599 = vmatpush.msra.mxu0 %v5598
  %v5600 = vand.u32 %v1925, 4294901760
  %5601 = vmatpush.msra.mxu0 %v5600
  %v5602 = vand.u32 %v1921, 4294901760
  %5603 = vmatpush.msra.mxu0 %v5602
  %v5604 = vand.u32 %v1917, 4294901760
  %5605 = vmatpush.msra.mxu0 %v5604
  %v5606 = vand.u32 %v1913, 4294901760
  %5607 = vmatpush.msra.mxu0 %v5606
  %v5608 = vand.u32 %v4403, 4294901760
  %5609 = vmatmul.f32.gmra.mxu0 %v5608
  %v5610 = vpop.f32.mrf.mxu0
  %v5611 = vadd.f32 %v5577, %v5610
  %5612 = vdwg.mxu0
  %v5614 = vperm.slane %v42, 0
  %5615 = vset.pattern.permute.xlu0 1
  %5616 = vperm.xlu0 %5615, %v5614
  %v5617 = vpop.permute.xlu0 %5616
  %v5619 = vmul.f32 %v5617, %v987
  %v5620 = vmul.f32 %v5617, %v988
  %v5621 = vmul.f32 %v5617, %v989
  %v5622 = vsel %vm1966, %v1543, 0.0
  %v5623 = vsel %vm1966, %v1544, 0.0
  %v5624 = vadd.f32 %v5622, %v5623
  %v5625 = vsel %vm1966, %v1545, 0.0
  %v5626 = vadd.f32 %v5624, %v5625
  %v5627 = vsel %vm1966, %v1546, 0.0
  %v5628 = vadd.f32 %v5626, %v5627
  %5629 = vadd.xlane.f32.xlu0 %v5628
  %v5630 = vpop.xlane.xlu0 %5629
  %v5631 = vmul.f32 %v5630, 0.001953125
  %v5632 = vsub.f32 %v1543, %v5631
  %v5633 = vsub.f32 %v1544, %v5631
  %v5634 = vsub.f32 %v1545, %v5631
  %v5635 = vsub.f32 %v1546, %v5631
  %v5636 = vmul.f32 %v5632, %v5632
  %v5637 = vmul.f32 %v5633, %v5633
  %v5638 = vmul.f32 %v5634, %v5634
  %v5639 = vmul.f32 %v5635, %v5635
  %v5640 = vsel %vm1966, %v5636, 0.0
  %v5641 = vsel %vm1966, %v5637, 0.0
  %v5642 = vadd.f32 %v5640, %v5641
  %v5643 = vsel %vm1966, %v5638, 0.0
  %v5644 = vadd.f32 %v5642, %v5643
  %v5645 = vsel %vm1966, %v5639, 0.0
  %v5646 = vadd.f32 %v5644, %v5645
  %5647 = vadd.xlane.f32.xlu0 %v5646
  %v5648 = vpop.xlane.xlu0 %5647
  %v5649 = vmul.f32 %v5648, 0.001953125
  %v5650 = vadd.f32 %v5649, 1e-05
  %v5651 = vrsqrt.pop %v5650
  %v5652 = vmul.f32 %v5651, %v5650
  %v5653 = vmul.f32 %v5652, %v5651
  %v5654 = vmul.f32 0.5, %v5653
  %v5655 = vsub.f32 1.5, %v5654
  %v5656 = vmul.f32 %v5651, %v5655
  %vm5657 = vweird.f32 %v5650
  %vm5658 = vweird.f32 %v5651
  %vm5659 = vmor %vm5657, %vm5658
  %v5660 = vsel %vm5659, %v5651, %v5656
  %v5662 = vmul.f32 %v5614, %v5660
  %5664 = vset.pattern.permute.xlu0 2
  %5665 = vperm.xlu0 %5664, %v5662
  %v5666 = vpop.permute.xlu0 %5665
  %v5668 = vmul.f32 %v5632, %v5666
  %v5669 = vmul.f32 %v5633, %v5666
  %v5670 = vmul.f32 %v5634, %v5666
  %v5671 = vmul.f32 %v5635, %v5666
  %v5676 = vrot.slane %v5669, 4
  %v5677 = vrot.slane %v5671, 4
  %v5678 = vsel %vm1966, %v5668, %v5676
  %v5679 = vsel %vm1966, %v5670, %v5677
  %5680 = vrot.lane.b32.xlu0 %v5678, 34
  %v5681 = vpop.permute.xlu0 %5680
  %5682 = vrot.lane.b32.xlu0 %v5679, 34
  %v5683 = vpop.permute.xlu0 %5682
  %v5684 = vrot.slane %v5681, 4
  %v5685 = vrot.slane %v5683, 4
  %vm5686 = vcmask 277504
  %v5687 = vsel %vm5686, %v5684, %v5681
  %v5688 = vsel %vm1966, %v5684, %v5685
  %v5689 = vsel %vm5686, %v5688, %v5683
  %v5693 = vadd.f32 %v5619, %v5687
  %v5694 = vadd.f32 %v5620, %v5689
  %v5695 = vadd.f32 %v5621, %v5685
  %v5696 = vsel %vm1966, %v4705, 0.0
  %v5697 = vsel %vm1966, %v5007, 0.0
  %v5698 = vadd.f32 %v5696, %v5697
  %v5699 = vsel %vm1966, %v5309, 0.0
  %v5700 = vadd.f32 %v5698, %v5699
  %v5701 = vsel %vm1966, %v5611, 0.0
  %v5702 = vadd.f32 %v5700, %v5701
  %5703 = vadd.xlane.f32.xlu0 %v5702
  %v5704 = vpop.xlane.xlu0 %5703
  %v5705 = vmul.f32 %v5704, 0.001953125
  %v5706 = vsub.f32 %v4705, %v5705
  %v5707 = vsub.f32 %v5007, %v5705
  %v5708 = vsub.f32 %v5309, %v5705
  %v5709 = vsub.f32 %v5611, %v5705
  %v5710 = vmul.f32 %v5706, %v5706
  %v5711 = vmul.f32 %v5707, %v5707
  %v5712 = vmul.f32 %v5708, %v5708
  %v5713 = vmul.f32 %v5709, %v5709
  %v5714 = vsel %vm1966, %v5710, 0.0
  %v5715 = vsel %vm1966, %v5711, 0.0
  %v5716 = vadd.f32 %v5714, %v5715
  %v5717 = vsel %vm1966, %v5712, 0.0
  %v5718 = vadd.f32 %v5716, %v5717
  %v5719 = vsel %vm1966, %v5713, 0.0
  %v5720 = vadd.f32 %v5718, %v5719
  %5721 = vadd.xlane.f32.xlu0 %v5720
  %v5722 = vpop.xlane.xlu0 %5721
  %v5723 = vmul.f32 %v5722, 0.001953125
  %v5724 = vadd.f32 %v5723, 1e-05
  %v5725 = vrsqrt.pop %v5724
  %v5726 = vmul.f32 %v5725, %v5724
  %v5727 = vmul.f32 %v5726, %v5725
  %v5728 = vmul.f32 0.5, %v5727
  %v5729 = vsub.f32 1.5, %v5728
  %v5730 = vmul.f32 %v5725, %v5729
  %vm5731 = vweird.f32 %v5724
  %vm5732 = vweird.f32 %v5725
  %vm5733 = vmor %vm5731, %vm5732
  %v5734 = vsel %vm5733, %v5725, %v5730
  %v5735 = vmul.f32 %v5614, %v5734
  %5737 = vset.pattern.permute.xlu0 3
  %5738 = vperm.xlu0 %5737, %v5735
  %v5739 = vpop.permute.xlu0 %5738
  %v5741 = vmul.f32 %v5706, %v5739
  %v5742 = vmul.f32 %v5707, %v5739
  %v5743 = vmul.f32 %v5708, %v5739
  %v5744 = vmul.f32 %v5709, %v5739
  %v5749 = vrot.slane %v5742, 4
  %v5750 = vrot.slane %v5744, 4
  %v5751 = vsel %vm1966, %v5741, %v5749
  %v5752 = vsel %vm1966, %v5743, %v5750
  %5753 = vrot.lane.b32.xlu0 %v5751, 34
  %v5754 = vpop.permute.xlu0 %5753
  %5755 = vrot.lane.b32.xlu0 %v5752, 34
  %v5756 = vpop.permute.xlu0 %5755
  %v5757 = vrot.slane %v5754, 4
  %v5758 = vrot.slane %v5756, 4
  %v5759 = vsel %vm5686, %v5757, %v5754
  %v5760 = vsel %vm1966, %v5757, %v5758
  %v5761 = vsel %vm5686, %v5760, %v5756
  %v5765 = vadd.f32 %v5693, %v5759
  %v5766 = vadd.f32 %v5694, %v5761
  %v5767 = vadd.f32 %v5695, %v5758
  %v5768 = vsel %vm1966, %v3492, 0.0
  %v5769 = vsel %vm1966, %v3794, 0.0
  %v5770 = vadd.f32 %v5768, %v5769
  %v5771 = vsel %vm1966, %v4096, 0.0
  %v5772 = vadd.f32 %v5770, %v5771
  %v5773 = vsel %vm1966, %v4398, 0.0
  %v5774 = vadd.f32 %v5772, %v5773
  %5775 = vadd.xlane.f32.xlu0 %v5774
  %v5776 = vpop.xlane.xlu0 %5775
  %v5777 = vmul.f32 %v5776, 0.001953125
  %v5778 = vsub.f32 %v3492, %v5777
  %v5779 = vsub.f32 %v3794, %v5777
  %v5780 = vsub.f32 %v4096, %v5777
  %v5781 = vsub.f32 %v4398, %v5777
  %v5782 = vmul.f32 %v5778, %v5778
  %v5783 = vmul.f32 %v5779, %v5779
  %v5784 = vmul.f32 %v5780, %v5780
  %v5785 = vmul.f32 %v5781, %v5781
  %v5786 = vsel %vm1966, %v5782, 0.0
  %v5787 = vsel %vm1966, %v5783, 0.0
  %v5788 = vadd.f32 %v5786, %v5787
  %v5789 = vsel %vm1966, %v5784, 0.0
  %v5790 = vadd.f32 %v5788, %v5789
  %v5791 = vsel %vm1966, %v5785, 0.0
  %v5792 = vadd.f32 %v5790, %v5791
  %5793 = vadd.xlane.f32.xlu0 %v5792
  %v5794 = vpop.xlane.xlu0 %5793
  %v5795 = vmul.f32 %v5794, 0.001953125
  %v5796 = vadd.f32 %v5795, 1e-05
  %v5797 = vrsqrt.pop %v5796
  %v5798 = vmul.f32 %v5797, %v5796
  %v5799 = vmul.f32 %v5798, %v5797
  %v5800 = vmul.f32 0.5, %v5799
  %v5801 = vsub.f32 1.5, %v5800
  %v5802 = vmul.f32 %v5797, %v5801
  %vm5803 = vweird.f32 %v5796
  %vm5804 = vweird.f32 %v5797
  %vm5805 = vmor %vm5803, %vm5804
  %v5806 = vsel %vm5805, %v5797, %v5802
  %v5807 = vmul.f32 %v5614, %v5806
  %5809 = vset.pattern.permute.xlu0 4
  %5810 = vperm.xlu0 %5809, %v5807
  %v5811 = vpop.permute.xlu0 %5810
  %v5813 = vmul.f32 %v5778, %v5811
  %v5814 = vmul.f32 %v5779, %v5811
  %v5815 = vmul.f32 %v5780, %v5811
  %v5816 = vmul.f32 %v5781, %v5811
  %v5821 = vrot.slane %v5814, 4
  %v5822 = vrot.slane %v5816, 4
  %v5823 = vsel %vm1966, %v5813, %v5821
  %v5824 = vsel %vm1966, %v5815, %v5822
  %5825 = vrot.lane.b32.xlu0 %v5823, 34
  %v5826 = vpop.permute.xlu0 %5825
  %5827 = vrot.lane.b32.xlu0 %v5824, 34
  %v5828 = vpop.permute.xlu0 %5827
  %v5829 = vrot.slane %v5826, 4
  %v5830 = vrot.slane %v5828, 4
  %v5831 = vsel %vm5686, %v5829, %v5826
  %v5832 = vsel %vm1966, %v5829, %v5830
  %v5833 = vsel %vm5686, %v5832, %v5828
  %v5837 = vadd.f32 %v5765, %v5831
  %v5838 = vadd.f32 %v5766, %v5833
  %v5839 = vadd.f32 %v5767, %v5830
  %v5840 = vsel %vm1966, %v2279, 0.0
  %v5841 = vsel %vm1966, %v2581, 0.0
  %v5842 = vadd.f32 %v5840, %v5841
  %v5843 = vsel %vm1966, %v2883, 0.0
  %v5844 = vadd.f32 %v5842, %v5843
  %v5845 = vsel %vm1966, %v3185, 0.0
  %v5846 = vadd.f32 %v5844, %v5845
  %5847 = vadd.xlane.f32.xlu0 %v5846
  %v5848 = vpop.xlane.xlu0 %5847
  %v5849 = vmul.f32 %v5848, 0.001953125
  %v5850 = vsub.f32 %v2279, %v5849
  %v5851 = vsub.f32 %v2581, %v5849
  %v5852 = vsub.f32 %v2883, %v5849
  %v5853 = vsub.f32 %v3185, %v5849
  %v5854 = vmul.f32 %v5850, %v5850
  %v5855 = vmul.f32 %v5851, %v5851
  %v5856 = vmul.f32 %v5852, %v5852
  %v5857 = vmul.f32 %v5853, %v5853
  %v5858 = vsel %vm1966, %v5854, 0.0
  %v5859 = vsel %vm1966, %v5855, 0.0
  %v5860 = vadd.f32 %v5858, %v5859
  %v5861 = vsel %vm1966, %v5856, 0.0
  %v5862 = vadd.f32 %v5860, %v5861
  %v5863 = vsel %vm1966, %v5857, 0.0
  %v5864 = vadd.f32 %v5862, %v5863
  %5865 = vadd.xlane.f32.xlu0 %v5864
  %v5866 = vpop.xlane.xlu0 %5865
  %v5867 = vmul.f32 %v5866, 0.001953125
  %v5868 = vadd.f32 %v5867, 1e-05
  %v5869 = vrsqrt.pop %v5868
  %v5870 = vmul.f32 %v5869, %v5868
  %v5871 = vmul.f32 %v5870, %v5869
  %v5872 = vmul.f32 0.5, %v5871
  %v5873 = vsub.f32 1.5, %v5872
  %v5874 = vmul.f32 %v5869, %v5873
  %vm5875 = vweird.f32 %v5868
  %vm5876 = vweird.f32 %v5869
  %vm5877 = vmor %vm5875, %vm5876
  %v5878 = vsel %vm5877, %v5869, %v5874
  %v5879 = vmul.f32 %v5614, %v5878
  %5881 = vset.pattern.permute.xlu0 5
  %5882 = vperm.xlu0 %5881, %v5879
  %v5883 = vpop.permute.xlu0 %5882
  %v5885 = vmul.f32 %v5850, %v5883
  %v5886 = vmul.f32 %v5851, %v5883
  %v5887 = vmul.f32 %v5852, %v5883
  %v5888 = vmul.f32 %v5853, %v5883
  %v5893 = vrot.slane %v5886, 4
  %v5894 = vrot.slane %v5888, 4
  %v5895 = vsel %vm1966, %v5885, %v5893
  %v5896 = vsel %vm1966, %v5887, %v5894
  %5897 = vrot.lane.b32.xlu0 %v5895, 34
  %v5898 = vpop.permute.xlu0 %5897
  %5899 = vrot.lane.b32.xlu0 %v5896, 34
  %v5900 = vpop.permute.xlu0 %5899
  %v5901 = vrot.slane %v5898, 4
  %v5902 = vrot.slane %v5900, 4
  %v5903 = vsel %vm5686, %v5901, %v5898
  %v5904 = vsel %vm1966, %v5901, %v5902
  %v5905 = vsel %vm5686, %v5904, %v5900
  %v5909 = vadd.f32 %v5837, %v5903
  %v5910 = vadd.f32 %v5838, %v5905
  %v5911 = vadd.f32 %v5839, %v5902
  %5915 = vrot.lane.b32.xlu0 %v5909, 94
  %v5916 = vpop.permute.xlu0 %5915
  %5917 = vrot.lane.b32.xlu0 %v5910, 94
  %v5918 = vpop.permute.xlu0 %5917
  %5919 = vrot.lane.b32.xlu0 %v5911, 94
  %v5920 = vpop.permute.xlu0 %5919
  %v5921 = vrot.slane %v5916, 4
  %v5922 = vrot.slane %v5918, 4
  %v5923 = vrot.slane %v5920, 4
  %v5924 = vsel %vm1966, %v5921, %v5922
  %v5925 = vsel %vm974, %v5916, %v5924
  %v5926 = vsel %vm1966, %v5922, %v5923
  %v5927 = vsel %vm974, %v5918, %v5926
  %5930 = vst [vmem:[%s4] sm:$0xff] %v5925
  %5931 = vst [vmem:[%s4 + $0x8] sm:$0xff] %v5927
  // Predicated region
  $region18: #{mixed_op_pallas.1} parent=0 // pred_check
    _
  $region19: #{mixed_op_pallas.1} parent=0 // pred_check_branch
    %5933 = sbr.rel (0) target = $region21
  $region20: #{mixed_op_pallas.1} parent=0 // pred_region
    _
  $region21: #{mixed_op_pallas.1} parent=0 // pred_fallthru
    _
  // Predicated region
  $region22: #{mixed_op_pallas.1} parent=0 // pred_check
    _
  $region23: #{mixed_op_pallas.1} parent=0 // pred_check_branch
    %5935 = sbr.rel (0) target = $region25
  $region24: #{mixed_op_pallas.1} parent=0 // pred_region
    _
  $region25: #{mixed_op_pallas.1} parent=0 // pred_fallthru
    _

</llo_original>
